<compile_context>
chip_gen: v7x
topology: tpu7x:2x2x1
jax: 0.10.0
libtpu: 0.0.40
codegen_flags: <defaults>
</compile_context>

<pallas_src>
import jax
import jax.numpy as jnp
from jax.experimental import pallas as pl
from jax.experimental.pallas import tpu as pltpu


# ----------------------------- Pallas kernels -----------------------------

def _conv_pool_bn_relu(t_ref, w_ref, scale_ref, shift_ref):
    """Fused Conv3x3 -> MaxPool2x2 -> BN(eval) -> ReLU on one Q-tile.

    t_ref:     (4, Q, K) bf16.  Slab c = 2*u0 + v0 is the im2col row for the
               conv output at pixel (2*ho + u0, 2*wo + v0): the 9 taps
               concatenated along K ( (kh*3+kw)*Cin + cin ), zero-padded to K.
    w_ref:     (K, 128) bf16.   reshape of (3,3,Cin,Cout) weights, rows padded
               to K and columns padded to 128 with zeros.
    scale_ref: (1, 128) f32  =  gamma / sqrt(var + eps)         (0 on pad lanes)
    shift_ref: (1, 128) f32  =  beta + scale*(conv_bias - mean) (0 on pad lanes)
    Returns (Q, 128) f32.
    """
    w = w_ref[...]                                     # weights reused by all 4 dots
    pooled = None
    for c in range(4):                                 # sequential corners -> small live set
        acc = jnp.dot(t_ref[c], w, preferred_element_type=jnp.float32)   # (Q, 128) f32
        pooled = acc if pooled is None else jnp.maximum(pooled, acc)
    # MaxPool done; BN affine (conv bias folded into shift) + ReLU, in f32.
    return jnp.maximum(pooled * scale_ref[...] + shift_ref[...], 0.0)


def _conv_block_kernel(t_ref, w_ref, scale_ref, shift_ref, o_ref):
    y = _conv_pool_bn_relu(t_ref, w_ref, scale_ref, shift_ref)
    o_ref[...] = y.astype(o_ref.dtype)                 # lane-dense (Q, 128) bf16 store


def _head_kernel(t_ref, w_ref, scale_ref, shift_ref, fcw_ref, fcb_ref, o_ref):
    # Last conv block + AdaptiveAvgPool2d((1,1)) + Flatten + Linear, fused.
    y = _conv_pool_bn_relu(t_ref, w_ref, scale_ref, shift_ref)   # (4*N, 128) f32
    n_batch = o_ref.shape[0]
    # Global average pool: each batch element owns 4 consecutive rows (2x2 spatial).
    parts = [jnp.sum(y[4 * b:4 * (b + 1), :], axis=0, keepdims=True)
             for b in range(n_batch)]
    gap = jnp.concatenate(parts, axis=0) * 0.25                  # (N, 128) f32
    o_ref[...] = (jnp.dot(gap.astype(jnp.bfloat16), fcw_ref[...],
                          preferred_element_type=jnp.float32)
                  + fcb_ref[...])                                # (N, 128) f32 logits (padded)


# ------------------------------ call wrappers ------------------------------

_VMEM_LIMIT = 32 * 1024 * 1024   # well under v7x's 64 MiB physical / 32 MiB scoped default


def conv_block(taps, w, scale, shift, *, q_tile=256):
    """taps (4,Q,K) bf16, w (K,128) bf16, scale/shift (1,128) f32 -> (Q,128) bf16."""
    _, q, k = taps.shape
    cout = w.shape[-1]
    if q % q_tile != 0:
        q_tile = q                     # small layers: single whole-array block
    grid = (q // q_tile,)
    flops = 2 * 4 * q * k * cout
    bytes_accessed = int(taps.size * 2 + w.size * 2
                         + (scale.size + shift.size) * 4 + q * cout * 2)
    return pl.pallas_call(
        _conv_block_kernel,
        out_shape=jax.ShapeDtypeStruct((q, cout), jnp.bfloat16),
        grid=grid,
        in_specs=[
            pl.BlockSpec((4, q_tile, k), lambda i: (0, i, 0)),
            pl.BlockSpec(w.shape, lambda i: (0, 0)),
            pl.BlockSpec(scale.shape, lambda i: (0, 0)),
            pl.BlockSpec(shift.shape, lambda i: (0, 0)),
        ],
        out_specs=pl.BlockSpec((q_tile, cout), lambda i: (i, 0)),
        compiler_params=pltpu.CompilerParams(
            dimension_semantics=("parallel",),        # Q-tiles are independent (v7x 2nd TC)
            vmem_limit_bytes=_VMEM_LIMIT),
        cost_estimate=pl.CostEstimate(flops=int(flops), transcendentals=0,
                                      bytes_accessed=bytes_accessed),
    )(taps, w, scale, shift)


def conv_head(taps, w, scale, shift, fc_w, fc_b, n_batch):
    """Last conv block + GAP + Linear; returns (N, 128) f32 padded logits."""
    _, q, k = taps.shape
    flops = 2 * 4 * q * k * 128 + 2 * n_batch * 128 * 128
    bytes_accessed = int(taps.size * 2 + w.size * 2 + fc_w.size * 2
                         + (scale.size + shift.size + fc_b.size) * 4
                         + n_batch * 128 * 4)
    return pl.pallas_call(
        _head_kernel,
        out_shape=jax.ShapeDtypeStruct((n_batch, 128), jnp.float32),
        grid=(1,),
        in_specs=[
            pl.BlockSpec(taps.shape, lambda i: (0, 0, 0)),
            pl.BlockSpec(w.shape, lambda i: (0, 0)),
            pl.BlockSpec(scale.shape, lambda i: (0, 0)),
            pl.BlockSpec(shift.shape, lambda i: (0, 0)),
            pl.BlockSpec(fc_w.shape, lambda i: (0, 0)),
            pl.BlockSpec(fc_b.shape, lambda i: (0, 0)),
        ],
        out_specs=pl.BlockSpec((n_batch, 128), lambda i: (0, 0)),
        compiler_params=pltpu.CompilerParams(
            dimension_semantics=("arbitrary",),
            vmem_limit_bytes=_VMEM_LIMIT),
        cost_estimate=pl.CostEstimate(flops=int(flops), transcendentals=0,
                                      bytes_accessed=bytes_accessed),
    )(taps, w, scale, shift, fc_w, fc_b)


# ------------------------------- JAX glue ----------------------------------

def build_corner_taps(x_nhwc, k_pad):
    """Per-corner im2col slabs feeding a fused conv+pool kernel.

    Returns (4, N*Ho*Wo, k_pad) bf16 where slab c = 2*u0 + v0 holds, for each
    pooled pixel row q = (n, ho, wo), the 9 taps of the conv output at pixel
    (2*ho + u0, 2*wo + v0), concatenated along the last axis in
    (kh*3 + kw)*Cin + cin order (zero-padded up to k_pad lanes).
    """
    n, h, w, c = x_nhwc.shape
    ho, wo = h // 2, w // 2
    xp = jnp.pad(x_nhwc, ((0, 0), (1, 1), (1, 1), (0, 0)))
    corners = []
    for u0 in range(2):
        for v0 in range(2):
            taps = []
            for kh in range(3):
                for kw in range(3):
                    s = xp[:, u0 + kh::2, v0 + kw::2, :][:, :ho, :wo, :]  # (N,Ho,Wo,C)
                    taps.append(s.reshape(n * ho * wo, c))
            corners.append(jnp.concatenate(taps, axis=-1))               # (Q, 9C)
    t = jnp.stack(corners, axis=0)                                        # (4, Q, 9C)
    if k_pad > 9 * c:
        t = jnp.pad(t, ((0, 0), (0, 0), (0, k_pad - 9 * c)))
    return t.astype(jnp.bfloat16)


def init_params(key):
    """Deterministic, PyTorch-shaped synthetic parameters in kernel-ready layout."""
    specs = [(3, 16), (16, 32), (32, 64), (64, 128)]
    eps = 1e-5
    params = {}
    for i, (cin, cout) in enumerate(specs):
        key, k1, k2 = jax.random.split(key, 3)
        bound = 1.0 / (cin * 9) ** 0.5
        w = jax.random.uniform(k1, (3, 3, cin, cout), jnp.float32, -bound, bound)
        b = jax.random.uniform(k2, (cout,), jnp.float32, -bound, bound)
        if i > 0:
            # Previous layer's activation channels are padded to 128 (zeros), so
            # pad cin -> 128 with zero rows; exact.
            w = jnp.pad(w, ((0, 0), (0, 0), (0, 128 - cin), (0, 0)))
        wk = w.reshape(9 * w.shape[2], cout)          # (9*Cin, Cout), tap-major rows
        k_target = 128 if i == 0 else 9 * 128         # layer 0: K 27 -> 128
        wk = jnp.pad(wk, ((0, k_target - wk.shape[0]), (0, 128 - cout)))
        params[f"conv{i}_w"] = wk.astype(jnp.bfloat16)            # (K, 128)
        # BatchNorm2d fresh init: gamma=1, beta=0, running_mean=0, running_var=1.
        gamma = jnp.ones((cout,), jnp.float32)
        beta = jnp.zeros((cout,), jnp.float32)
        rmean = jnp.zeros((cout,), jnp.float32)
        rvar = jnp.ones((cout,), jnp.float32)
        scale = gamma / jnp.sqrt(rvar + eps)
        shift = beta + scale * (b - rmean)            # conv bias folded into BN shift
        params[f"bn{i}_scale"] = jnp.pad(scale, (0, 128 - cout)).reshape(1, 128)
        params[f"bn{i}_shift"] = jnp.pad(shift, (0, 128 - cout)).reshape(1, 128)
    key, k1, k2 = jax.random.split(key, 3)
    bound = 1.0 / 128.0 ** 0.5
    fc_w = jax.random.uniform(k1, (128, 10), jnp.float32, -bound, bound)
    fc_b = jax.random.uniform(k2, (10,), jnp.float32, -bound, bound)
    # Pad 10 logits out to a lane-friendly 128; the wrapper slices back to 10.
    params["fc_w"] = jnp.pad(fc_w, ((0, 0), (0, 118))).astype(jnp.bfloat16)
    params["fc_b"] = jnp.pad(fc_b, (0, 118)).reshape(1, 128).astype(jnp.float32)
    return params


@jax.jit
def cnn_forward(x_nchw, params):
    # Public interface mirrors PyTorch NCHW; kernels run on NHWC-derived slabs.
    x = jnp.transpose(x_nchw, (0, 2, 3, 1)).astype(jnp.float32)   # (N, 32, 32, 3)
    n, h, w, _ = x.shape
    for i in range(3):
        taps = build_corner_taps(x, params[f"conv{i}_w"].shape[0])
        y = conv_block(taps, params[f"conv{i}_w"],
                       params[f"bn{i}_scale"], params[f"bn{i}_shift"])
        h, w = h // 2, w // 2
        x = y.reshape(n, h, w, 128)        # channels padded to 128 (zeros), lane-dense
        # TODO(synk): Dropout(0.2) in training mode would need a pltpu PRNG mask;
        # it is the inference-mode identity here.
    # Last block: conv+pool+BN+ReLU + global-average-pool + Linear, fused.
    taps = build_corner_taps(x, params["conv3_w"].shape[0])       # 2x2 spatial remain
    logits_padded = conv_head(taps, params["conv3_w"],
                              params["bn3_scale"], params["bn3_shift"],
                              params["fc_w"], params["fc_b"], n)  # (N, 128)
    return logits_padded[:, :10]                                  # (N, 10)


if __name__ == "__main__":
    key = jax.random.PRNGKey(0)
    pkey, xkey = jax.random.split(key)
    params = init_params(pkey)
    # CIFAR-10-shaped input, small batch (32x32 so the four 2x2 pools + the
    # final 2x2 global average stay valid).
    x = jax.random.normal(xkey, (2, 3, 32, 32), jnp.float32)
    out = cnn_forward(x, params)
    jax.block_until_ready(out)
    assert out.shape == (2, 10) and out.dtype == jnp.float32
    print("KERNEL_OK")
</pallas_src>

<mosaic_0001>
module attributes {stable_mosaic.version = 11 : i64} {
  func.func @_conv_block_kernel(%arg0: i32, %arg1: memref<4x256x128xbf16, #tpu.memory_space<vmem>>, %arg2: memref<128x128xbf16, #tpu.memory_space<vmem>>, %arg3: memref<1x128xf32, #tpu.memory_space<vmem>>, %arg4: memref<1x128xf32, #tpu.memory_space<vmem>>, %arg5: memref<256x128xbf16, #tpu.memory_space<vmem>>) attributes {dimension_semantics = [#tpu.dimension_semantics<parallel>], iteration_bounds = array<i64: 2>, scalar_prefetch = 0 : i64, scratch_operands = 0 : i64, tpu.core_type = #tpu.core_type<tc>, window_params = [{transform_indices = @transform_0, window_bounds = array<i64: 4, 256, 128>}, {pipeline_mode = #tpu.pipeline_mode<synchronous>, transform_indices = @transform_1, window_bounds = array<i64: 128, 128>}, {pipeline_mode = #tpu.pipeline_mode<synchronous>, transform_indices = @transform_2, window_bounds = array<i64: 1, 128>}, {pipeline_mode = #tpu.pipeline_mode<synchronous>, transform_indices = @transform_3, window_bounds = array<i64: 1, 128>}, {transform_indices = @transform_4, window_bounds = array<i64: 256, 128>}]} {
    %c0 = arith.constant 0 : index
    %c0_0 = arith.constant 0 : index
    %0 = vector.load %arg2[%c0, %c0_0] : memref<128x128xbf16, #tpu.memory_space<vmem>>, vector<128x128xbf16>
    %c0_1 = arith.constant 0 : index
    %c0_2 = arith.constant 0 : index
    %c0_3 = arith.constant 0 : index
    %1 = vector.load %arg1[%c0_1, %c0_2, %c0_3] : memref<4x256x128xbf16, #tpu.memory_space<vmem>>, vector<1x256x128xbf16>
    %2 = vector.shape_cast %1 : vector<1x256x128xbf16> to vector<256x128xbf16>
    %cst = arith.constant dense<0.000000e+00> : vector<256x128xf32>
    %3 = tpu.matmul %2, %0, %cst {dimension_numbers = #tpu.dot_dimension_numbers<[1], [0], [0], [1], [0, 0, 1, 1], [], []>} : vector<256x128xbf16>, vector<128x128xbf16>, vector<256x128xf32> -> vector<256x128xf32>
    %c1 = arith.constant 1 : index
    %c0_4 = arith.constant 0 : index
    %c0_5 = arith.constant 0 : index
    %4 = vector.load %arg1[%c1, %c0_4, %c0_5] : memref<4x256x128xbf16, #tpu.memory_space<vmem>>, vector<1x256x128xbf16>
    %5 = vector.shape_cast %4 : vector<1x256x128xbf16> to vector<256x128xbf16>
    %cst_6 = arith.constant dense<0.000000e+00> : vector<256x128xf32>
    %6 = tpu.matmul %5, %0, %cst_6 {dimension_numbers = #tpu.dot_dimension_numbers<[1], [0], [0], [1], [0, 0, 1, 1], [], []>} : vector<256x128xbf16>, vector<128x128xbf16>, vector<256x128xf32> -> vector<256x128xf32>
    %7 = arith.maximumf %3, %6 : vector<256x128xf32>
    %c2 = arith.constant 2 : index
    %c0_7 = arith.constant 0 : index
    %c0_8 = arith.constant 0 : index
    %8 = vector.load %arg1[%c2, %c0_7, %c0_8] : memref<4x256x128xbf16, #tpu.memory_space<vmem>>, vector<1x256x128xbf16>
    %9 = vector.shape_cast %8 : vector<1x256x128xbf16> to vector<256x128xbf16>
    %cst_9 = arith.constant dense<0.000000e+00> : vector<256x128xf32>
    %10 = tpu.matmul %9, %0, %cst_9 {dimension_numbers = #tpu.dot_dimension_numbers<[1], [0], [0], [1], [0, 0, 1, 1], [], []>} : vector<256x128xbf16>, vector<128x128xbf16>, vector<256x128xf32> -> vector<256x128xf32>
    %11 = arith.maximumf %7, %10 : vector<256x128xf32>
    %c3 = arith.constant 3 : index
    %c0_10 = arith.constant 0 : index
    %c0_11 = arith.constant 0 : index
    %12 = vector.load %arg1[%c3, %c0_10, %c0_11] : memref<4x256x128xbf16, #tpu.memory_space<vmem>>, vector<1x256x128xbf16>
    %13 = vector.shape_cast %12 : vector<1x256x128xbf16> to vector<256x128xbf16>
    %cst_12 = arith.constant dense<0.000000e+00> : vector<256x128xf32>
    %14 = tpu.matmul %13, %0, %cst_12 {dimension_numbers = #tpu.dot_dimension_numbers<[1], [0], [0], [1], [0, 0, 1, 1], [], []>} : vector<256x128xbf16>, vector<128x128xbf16>, vector<256x128xf32> -> vector<256x128xf32>
    %15 = arith.maximumf %11, %14 : vector<256x128xf32>
    %c0_13 = arith.constant 0 : index
    %c0_14 = arith.constant 0 : index
    %16 = vector.load %arg3[%c0_13, %c0_14] : memref<1x128xf32, #tpu.memory_space<vmem>>, vector<1x128xf32>
    %17 = vector.broadcast %16 : vector<1x128xf32> to vector<256x128xf32>
    %18 = arith.mulf %15, %17 : vector<256x128xf32>
    %c0_15 = arith.constant 0 : index
    %c0_16 = arith.constant 0 : index
    %19 = vector.load %arg4[%c0_15, %c0_16] : memref<1x128xf32, #tpu.memory_space<vmem>>, vector<1x128xf32>
    %20 = vector.broadcast %19 : vector<1x128xf32> to vector<256x128xf32>
    %21 = arith.addf %18, %20 : vector<256x128xf32>
    %cst_17 = arith.constant 0.000000e+00 : f32
    %22 = vector.broadcast %cst_17 : f32 to vector<256x128xf32>
    %23 = arith.maximumf %21, %22 : vector<256x128xf32>
    %24 = arith.truncf %23 : vector<256x128xf32> to vector<256x128xbf16>
    %c0_18 = arith.constant 0 : index
    %c0_19 = arith.constant 0 : index
    %25 = vector.load %arg5[%c0_18, %c0_19] : memref<256x128xbf16, #tpu.memory_space<vmem>>, vector<256x128xbf16>
    tpu.vector_store %arg5[%c0_18, %c0_19], %24 {strides = array<i32>} : memref<256x128xbf16, #tpu.memory_space<vmem>>, vector<256x128xbf16>,
    return
  }
  func.func @transform_0(%arg0: i32) -> (i32, i32, i32) {
    %c0_i32 = arith.constant 0 : i32
    %c0_i32_0 = arith.constant 0 : i32
    %c0_i32_1 = arith.constant 0 : i32
    return %c0_i32, %arg0, %c0_i32_0 : i32, i32, i32
  }
  func.func @transform_1(%arg0: i32) -> (i32, i32) {
    %c0_i32 = arith.constant 0 : i32
    %c0_i32_0 = arith.constant 0 : i32
    %c0_i32_1 = arith.constant 0 : i32
    return %c0_i32, %c0_i32_0 : i32, i32
  }
  func.func @transform_2(%arg0: i32) -> (i32, i32) {
    %c0_i32 = arith.constant 0 : i32
    %c0_i32_0 = arith.constant 0 : i32
    %c0_i32_1 = arith.constant 0 : i32
    return %c0_i32, %c0_i32_0 : i32, i32
  }
  func.func @transform_3(%arg0: i32) -> (i32, i32) {
    %c0_i32 = arith.constant 0 : i32
    %c0_i32_0 = arith.constant 0 : i32
    %c0_i32_1 = arith.constant 0 : i32
    return %c0_i32, %c0_i32_0 : i32, i32
  }
  func.func @transform_4(%arg0: i32) -> (i32, i32) {
    %c0_i32 = arith.constant 0 : i32
    %c0_i32_0 = arith.constant 0 : i32
    return %arg0, %c0_i32 : i32, i32
  }
}

module attributes {stable_mosaic.version = 11 : i64} {
  func.func @_conv_block_kernel(%arg0: i32, %arg1: memref<4x128x1152xbf16, #tpu.memory_space<vmem>>, %arg2: memref<1152x128xbf16, #tpu.memory_space<vmem>>, %arg3: memref<1x128xf32, #tpu.memory_space<vmem>>, %arg4: memref<1x128xf32, #tpu.memory_space<vmem>>, %arg5: memref<128x128xbf16, #tpu.memory_space<vmem>>) attributes {dimension_semantics = [#tpu.dimension_semantics<parallel>], iteration_bounds = array<i64: 1>, scalar_prefetch = 0 : i64, scratch_operands = 0 : i64, tpu.core_type = #tpu.core_type<tc>, window_params = [{transform_indices = @transform_0, window_bounds = array<i64: 4, 128, 1152>}, {pipeline_mode = #tpu.pipeline_mode<synchronous>, transform_indices = @transform_1, window_bounds = array<i64: 1152, 128>}, {pipeline_mode = #tpu.pipeline_mode<synchronous>, transform_indices = @transform_2, window_bounds = array<i64: 1, 128>}, {pipeline_mode = #tpu.pipeline_mode<synchronous>, transform_indices = @transform_3, window_bounds = array<i64: 1, 128>}, {transform_indices = @transform_4, window_bounds = array<i64: 128, 128>}]} {
    %c0 = arith.constant 0 : index
    %c0_0 = arith.constant 0 : index
    %0 = vector.load %arg2[%c0, %c0_0] : memref<1152x128xbf16, #tpu.memory_space<vmem>>, vector<1152x128xbf16>
    %c0_1 = arith.constant 0 : index
    %c0_2 = arith.constant 0 : index
    %c0_3 = arith.constant 0 : index
    %1 = vector.load %arg1[%c0_1, %c0_2, %c0_3] : memref<4x128x1152xbf16, #tpu.memory_space<vmem>>, vector<1x128x1152xbf16>
    %2 = vector.shape_cast %1 : vector<1x128x1152xbf16> to vector<128x1152xbf16>
    %cst = arith.constant dense<0.000000e+00> : vector<128x128xf32>
    %3 = tpu.matmul %2, %0, %cst {dimension_numbers = #tpu.dot_dimension_numbers<[1], [0], [0], [1], [0, 0, 1, 1], [], []>} : vector<128x1152xbf16>, vector<1152x128xbf16>, vector<128x128xf32> -> vector<128x128xf32>
    %c1 = arith.constant 1 : index
    %c0_4 = arith.constant 0 : index
    %c0_5 = arith.constant 0 : index
    %4 = vector.load %arg1[%c1, %c0_4, %c0_5] : memref<4x128x1152xbf16, #tpu.memory_space<vmem>>, vector<1x128x1152xbf16>
    %5 = vector.shape_cast %4 : vector<1x128x1152xbf16> to vector<128x1152xbf16>
    %cst_6 = arith.constant dense<0.000000e+00> : vector<128x128xf32>
    %6 = tpu.matmul %5, %0, %cst_6 {dimension_numbers = #tpu.dot_dimension_numbers<[1], [0], [0], [1], [0, 0, 1, 1], [], []>} : vector<128x1152xbf16>, vector<1152x128xbf16>, vector<128x128xf32> -> vector<128x128xf32>
    %7 = arith.maximumf %3, %6 : vector<128x128xf32>
    %c2 = arith.constant 2 : index
    %c0_7 = arith.constant 0 : index
    %c0_8 = arith.constant 0 : index
    %8 = vector.load %arg1[%c2, %c0_7, %c0_8] : memref<4x128x1152xbf16, #tpu.memory_space<vmem>>, vector<1x128x1152xbf16>
    %9 = vector.shape_cast %8 : vector<1x128x1152xbf16> to vector<128x1152xbf16>
    %cst_9 = arith.constant dense<0.000000e+00> : vector<128x128xf32>
    %10 = tpu.matmul %9, %0, %cst_9 {dimension_numbers = #tpu.dot_dimension_numbers<[1], [0], [0], [1], [0, 0, 1, 1], [], []>} : vector<128x1152xbf16>, vector<1152x128xbf16>, vector<128x128xf32> -> vector<128x128xf32>
    %11 = arith.maximumf %7, %10 : vector<128x128xf32>
    %c3 = arith.constant 3 : index
    %c0_10 = arith.constant 0 : index
    %c0_11 = arith.constant 0 : index
    %12 = vector.load %arg1[%c3, %c0_10, %c0_11] : memref<4x128x1152xbf16, #tpu.memory_space<vmem>>, vector<1x128x1152xbf16>
    %13 = vector.shape_cast %12 : vector<1x128x1152xbf16> to vector<128x1152xbf16>
    %cst_12 = arith.constant dense<0.000000e+00> : vector<128x128xf32>
    %14 = tpu.matmul %13, %0, %cst_12 {dimension_numbers = #tpu.dot_dimension_numbers<[1], [0], [0], [1], [0, 0, 1, 1], [], []>} : vector<128x1152xbf16>, vector<1152x128xbf16>, vector<128x128xf32> -> vector<128x128xf32>
    %15 = arith.maximumf %11, %14 : vector<128x128xf32>
    %c0_13 = arith.constant 0 : index
    %c0_14 = arith.constant 0 : index
    %16 = vector.load %arg3[%c0_13, %c0_14] : memref<1x128xf32, #tpu.memory_space<vmem>>, vector<1x128xf32>
    %17 = vector.broadcast %16 : vector<1x128xf32> to vector<128x128xf32>
    %18 = arith.mulf %15, %17 : vector<128x128xf32>
    %c0_15 = arith.constant 0 : index
    %c0_16 = arith.constant 0 : index
    %19 = vector.load %arg4[%c0_15, %c0_16] : memref<1x128xf32, #tpu.memory_space<vmem>>, vector<1x128xf32>
    %20 = vector.broadcast %19 : vector<1x128xf32> to vector<128x128xf32>
    %21 = arith.addf %18, %20 : vector<128x128xf32>
    %cst_17 = arith.constant 0.000000e+00 : f32
    %22 = vector.broadcast %cst_17 : f32 to vector<128x128xf32>
    %23 = arith.maximumf %21, %22 : vector<128x128xf32>
    %24 = arith.truncf %23 : vector<128x128xf32> to vector<128x128xbf16>
    %c0_18 = arith.constant 0 : index
    %c0_19 = arith.constant 0 : index
    %25 = vector.load %arg5[%c0_18, %c0_19] : memref<128x128xbf16, #tpu.memory_space<vmem>>, vector<128x128xbf16>
    tpu.vector_store %arg5[%c0_18, %c0_19], %24 {strides = array<i32>} : memref<128x128xbf16, #tpu.memory_space<vmem>>, vector<128x128xbf16>,
    return
  }
  func.func @transform_0(%arg0: i32) -> (i32, i32, i32) {
    %c0_i32 = arith.constant 0 : i32
    %c0_i32_0 = arith.constant 0 : i32
    %c0_i32_1 = arith.constant 0 : i32
    return %c0_i32, %arg0, %c0_i32_0 : i32, i32, i32
  }
  func.func @transform_1(%arg0: i32) -> (i32, i32) {
    %c0_i32 = arith.constant 0 : i32
    %c0_i32_0 = arith.constant 0 : i32
    %c0_i32_1 = arith.constant 0 : i32
    return %c0_i32, %c0_i32_0 : i32, i32
  }
  func.func @transform_2(%arg0: i32) -> (i32, i32) {
    %c0_i32 = arith.constant 0 : i32
    %c0_i32_0 = arith.constant 0 : i32
    %c0_i32_1 = arith.constant 0 : i32
    return %c0_i32, %c0_i32_0 : i32, i32
  }
  func.func @transform_3(%arg0: i32) -> (i32, i32) {
    %c0_i32 = arith.constant 0 : i32
    %c0_i32_0 = arith.constant 0 : i32
    %c0_i32_1 = arith.constant 0 : i32
    return %c0_i32, %c0_i32_0 : i32, i32
  }
  func.func @transform_4(%arg0: i32) -> (i32, i32) {
    %c0_i32 = arith.constant 0 : i32
    %c0_i32_0 = arith.constant 0 : i32
    return %arg0, %c0_i32 : i32, i32
  }
}

module attributes {stable_mosaic.version = 11 : i64} {
  func.func @_conv_block_kernel(%arg0: i32, %arg1: memref<4x32x1152xbf16, #tpu.memory_space<vmem>>, %arg2: memref<1152x128xbf16, #tpu.memory_space<vmem>>, %arg3: memref<1x128xf32, #tpu.memory_space<vmem>>, %arg4: memref<1x128xf32, #tpu.memory_space<vmem>>, %arg5: memref<32x128xbf16, #tpu.memory_space<vmem>>) attributes {dimension_semantics = [#tpu.dimension_semantics<parallel>], iteration_bounds = array<i64: 1>, scalar_prefetch = 0 : i64, scratch_operands = 0 : i64, tpu.core_type = #tpu.core_type<tc>, window_params = [{transform_indices = @transform_0, window_bounds = array<i64: 4, 32, 1152>}, {pipeline_mode = #tpu.pipeline_mode<synchronous>, transform_indices = @transform_1, window_bounds = array<i64: 1152, 128>}, {pipeline_mode = #tpu.pipeline_mode<synchronous>, transform_indices = @transform_2, window_bounds = array<i64: 1, 128>}, {pipeline_mode = #tpu.pipeline_mode<synchronous>, transform_indices = @transform_3, window_bounds = array<i64: 1, 128>}, {transform_indices = @transform_4, window_bounds = array<i64: 32, 128>}]} {
    %c0 = arith.constant 0 : index
    %c0_0 = arith.constant 0 : index
    %0 = vector.load %arg2[%c0, %c0_0] : memref<1152x128xbf16, #tpu.memory_space<vmem>>, vector<1152x128xbf16>
    %c0_1 = arith.constant 0 : index
    %c0_2 = arith.constant 0 : index
    %c0_3 = arith.constant 0 : index
    %1 = vector.load %arg1[%c0_1, %c0_2, %c0_3] : memref<4x32x1152xbf16, #tpu.memory_space<vmem>>, vector<1x32x1152xbf16>
    %2 = vector.shape_cast %1 : vector<1x32x1152xbf16> to vector<32x1152xbf16>
    %cst = arith.constant dense<0.000000e+00> : vector<32x128xf32>
    %3 = tpu.matmul %2, %0, %cst {dimension_numbers = #tpu.dot_dimension_numbers<[1], [0], [0], [1], [0, 0, 1, 1], [], []>} : vector<32x1152xbf16>, vector<1152x128xbf16>, vector<32x128xf32> -> vector<32x128xf32>
    %c1 = arith.constant 1 : index
    %c0_4 = arith.constant 0 : index
    %c0_5 = arith.constant 0 : index
    %4 = vector.load %arg1[%c1, %c0_4, %c0_5] : memref<4x32x1152xbf16, #tpu.memory_space<vmem>>, vector<1x32x1152xbf16>
    %5 = vector.shape_cast %4 : vector<1x32x1152xbf16> to vector<32x1152xbf16>
    %cst_6 = arith.constant dense<0.000000e+00> : vector<32x128xf32>
    %6 = tpu.matmul %5, %0, %cst_6 {dimension_numbers = #tpu.dot_dimension_numbers<[1], [0], [0], [1], [0, 0, 1, 1], [], []>} : vector<32x1152xbf16>, vector<1152x128xbf16>, vector<32x128xf32> -> vector<32x128xf32>
    %7 = arith.maximumf %3, %6 : vector<32x128xf32>
    %c2 = arith.constant 2 : index
    %c0_7 = arith.constant 0 : index
    %c0_8 = arith.constant 0 : index
    %8 = vector.load %arg1[%c2, %c0_7, %c0_8] : memref<4x32x1152xbf16, #tpu.memory_space<vmem>>, vector<1x32x1152xbf16>
    %9 = vector.shape_cast %8 : vector<1x32x1152xbf16> to vector<32x1152xbf16>
    %cst_9 = arith.constant dense<0.000000e+00> : vector<32x128xf32>
    %10 = tpu.matmul %9, %0, %cst_9 {dimension_numbers = #tpu.dot_dimension_numbers<[1], [0], [0], [1], [0, 0, 1, 1], [], []>} : vector<32x1152xbf16>, vector<1152x128xbf16>, vector<32x128xf32> -> vector<32x128xf32>
    %11 = arith.maximumf %7, %10 : vector<32x128xf32>
    %c3 = arith.constant 3 : index
    %c0_10 = arith.constant 0 : index
    %c0_11 = arith.constant 0 : index
    %12 = vector.load %arg1[%c3, %c0_10, %c0_11] : memref<4x32x1152xbf16, #tpu.memory_space<vmem>>, vector<1x32x1152xbf16>
    %13 = vector.shape_cast %12 : vector<1x32x1152xbf16> to vector<32x1152xbf16>
    %cst_12 = arith.constant dense<0.000000e+00> : vector<32x128xf32>
    %14 = tpu.matmul %13, %0, %cst_12 {dimension_numbers = #tpu.dot_dimension_numbers<[1], [0], [0], [1], [0, 0, 1, 1], [], []>} : vector<32x1152xbf16>, vector<1152x128xbf16>, vector<32x128xf32> -> vector<32x128xf32>
    %15 = arith.maximumf %11, %14 : vector<32x128xf32>
    %c0_13 = arith.constant 0 : index
    %c0_14 = arith.constant 0 : index
    %16 = vector.load %arg3[%c0_13, %c0_14] : memref<1x128xf32, #tpu.memory_space<vmem>>, vector<1x128xf32>
    %17 = vector.broadcast %16 : vector<1x128xf32> to vector<32x128xf32>
    %18 = arith.mulf %15, %17 : vector<32x128xf32>
    %c0_15 = arith.constant 0 : index
    %c0_16 = arith.constant 0 : index
    %19 = vector.load %arg4[%c0_15, %c0_16] : memref<1x128xf32, #tpu.memory_space<vmem>>, vector<1x128xf32>
    %20 = vector.broadcast %19 : vector<1x128xf32> to vector<32x128xf32>
    %21 = arith.addf %18, %20 : vector<32x128xf32>
    %cst_17 = arith.constant 0.000000e+00 : f32
    %22 = vector.broadcast %cst_17 : f32 to vector<32x128xf32>
    %23 = arith.maximumf %21, %22 : vector<32x128xf32>
    %24 = arith.truncf %23 : vector<32x128xf32> to vector<32x128xbf16>
    %c0_18 = arith.constant 0 : index
    %c0_19 = arith.constant 0 : index
    %25 = vector.load %arg5[%c0_18, %c0_19] : memref<32x128xbf16, #tpu.memory_space<vmem>>, vector<32x128xbf16>
    tpu.vector_store %arg5[%c0_18, %c0_19], %24 {strides = array<i32>} : memref<32x128xbf16, #tpu.memory_space<vmem>>, vector<32x128xbf16>,
    return
  }
  func.func @transform_0(%arg0: i32) -> (i32, i32, i32) {
    %c0_i32 = arith.constant 0 : i32
    %c0_i32_0 = arith.constant 0 : i32
    %c0_i32_1 = arith.constant 0 : i32
    return %c0_i32, %arg0, %c0_i32_0 : i32, i32, i32
  }
  func.func @transform_1(%arg0: i32) -> (i32, i32) {
    %c0_i32 = arith.constant 0 : i32
    %c0_i32_0 = arith.constant 0 : i32
    %c0_i32_1 = arith.constant 0 : i32
    return %c0_i32, %c0_i32_0 : i32, i32
  }
  func.func @transform_2(%arg0: i32) -> (i32, i32) {
    %c0_i32 = arith.constant 0 : i32
    %c0_i32_0 = arith.constant 0 : i32
    %c0_i32_1 = arith.constant 0 : i32
    return %c0_i32, %c0_i32_0 : i32, i32
  }
  func.func @transform_3(%arg0: i32) -> (i32, i32) {
    %c0_i32 = arith.constant 0 : i32
    %c0_i32_0 = arith.constant 0 : i32
    %c0_i32_1 = arith.constant 0 : i32
    return %c0_i32, %c0_i32_0 : i32, i32
  }
  func.func @transform_4(%arg0: i32) -> (i32, i32) {
    %c0_i32 = arith.constant 0 : i32
    %c0_i32_0 = arith.constant 0 : i32
    return %arg0, %c0_i32 : i32, i32
  }
}

module attributes {stable_mosaic.version = 11 : i64} {
  func.func @_head_kernel(%arg0: i32, %arg1: memref<4x8x1152xbf16, #tpu.memory_space<vmem>>, %arg2: memref<1152x128xbf16, #tpu.memory_space<vmem>>, %arg3: memref<1x128xf32, #tpu.memory_space<vmem>>, %arg4: memref<1x128xf32, #tpu.memory_space<vmem>>, %arg5: memref<128x128xbf16, #tpu.memory_space<vmem>>, %arg6: memref<1x128xf32, #tpu.memory_space<vmem>>, %arg7: memref<2x128xf32, #tpu.memory_space<vmem>>) attributes {dimension_semantics = [#tpu.dimension_semantics<arbitrary>], iteration_bounds = array<i64: 1>, scalar_prefetch = 0 : i64, scratch_operands = 0 : i64, tpu.core_type = #tpu.core_type<tc>, window_params = [{pipeline_mode = #tpu.pipeline_mode<synchronous>, transform_indices = @transform_0, window_bounds = array<i64: 4, 8, 1152>}, {pipeline_mode = #tpu.pipeline_mode<synchronous>, transform_indices = @transform_1, window_bounds = array<i64: 1152, 128>}, {pipeline_mode = #tpu.pipeline_mode<synchronous>, transform_indices = @transform_2, window_bounds = array<i64: 1, 128>}, {pipeline_mode = #tpu.pipeline_mode<synchronous>, transform_indices = @transform_3, window_bounds = array<i64: 1, 128>}, {pipeline_mode = #tpu.pipeline_mode<synchronous>, transform_indices = @transform_4, window_bounds = array<i64: 128, 128>}, {pipeline_mode = #tpu.pipeline_mode<synchronous>, transform_indices = @transform_5, window_bounds = array<i64: 1, 128>}, {pipeline_mode = #tpu.pipeline_mode<synchronous>, transform_indices = @transform_6, window_bounds = array<i64: 2, 128>}]} {
    %c0 = arith.constant 0 : index
    %c0_0 = arith.constant 0 : index
    %0 = vector.load %arg2[%c0, %c0_0] : memref<1152x128xbf16, #tpu.memory_space<vmem>>, vector<1152x128xbf16>
    %c0_1 = arith.constant 0 : index
    %c0_2 = arith.constant 0 : index
    %c0_3 = arith.constant 0 : index
    %1 = vector.load %arg1[%c0_1, %c0_2, %c0_3] : memref<4x8x1152xbf16, #tpu.memory_space<vmem>>, vector<1x8x1152xbf16>
    %2 = vector.shape_cast %1 : vector<1x8x1152xbf16> to vector<8x1152xbf16>
    %cst = arith.constant dense<0.000000e+00> : vector<8x128xf32>
    %3 = tpu.matmul %2, %0, %cst {dimension_numbers = #tpu.dot_dimension_numbers<[1], [0], [0], [1], [0, 0, 1, 1], [], []>} : vector<8x1152xbf16>, vector<1152x128xbf16>, vector<8x128xf32> -> vector<8x128xf32>
    %c1 = arith.constant 1 : index
    %c0_4 = arith.constant 0 : index
    %c0_5 = arith.constant 0 : index
    %4 = vector.load %arg1[%c1, %c0_4, %c0_5] : memref<4x8x1152xbf16, #tpu.memory_space<vmem>>, vector<1x8x1152xbf16>
    %5 = vector.shape_cast %4 : vector<1x8x1152xbf16> to vector<8x1152xbf16>
    %cst_6 = arith.constant dense<0.000000e+00> : vector<8x128xf32>
    %6 = tpu.matmul %5, %0, %cst_6 {dimension_numbers = #tpu.dot_dimension_numbers<[1], [0], [0], [1], [0, 0, 1, 1], [], []>} : vector<8x1152xbf16>, vector<1152x128xbf16>, vector<8x128xf32> -> vector<8x128xf32>
    %7 = arith.maximumf %3, %6 : vector<8x128xf32>
    %c2 = arith.constant 2 : index
    %c0_7 = arith.constant 0 : index
    %c0_8 = arith.constant 0 : index
    %8 = vector.load %arg1[%c2, %c0_7, %c0_8] : memref<4x8x1152xbf16, #tpu.memory_space<vmem>>, vector<1x8x1152xbf16>
    %9 = vector.shape_cast %8 : vector<1x8x1152xbf16> to vector<8x1152xbf16>
    %cst_9 = arith.constant dense<0.000000e+00> : vector<8x128xf32>
    %10 = tpu.matmul %9, %0, %cst_9 {dimension_numbers = #tpu.dot_dimension_numbers<[1], [0], [0], [1], [0, 0, 1, 1], [], []>} : vector<8x1152xbf16>, vector<1152x128xbf16>, vector<8x128xf32> -> vector<8x128xf32>
    %11 = arith.maximumf %7, %10 : vector<8x128xf32>
    %c3 = arith.constant 3 : index
    %c0_10 = arith.constant 0 : index
    %c0_11 = arith.constant 0 : index
    %12 = vector.load %arg1[%c3, %c0_10, %c0_11] : memref<4x8x1152xbf16, #tpu.memory_space<vmem>>, vector<1x8x1152xbf16>
    %13 = vector.shape_cast %12 : vector<1x8x1152xbf16> to vector<8x1152xbf16>
    %cst_12 = arith.constant dense<0.000000e+00> : vector<8x128xf32>
    %14 = tpu.matmul %13, %0, %cst_12 {dimension_numbers = #tpu.dot_dimension_numbers<[1], [0], [0], [1], [0, 0, 1, 1], [], []>} : vector<8x1152xbf16>, vector<1152x128xbf16>, vector<8x128xf32> -> vector<8x128xf32>
    %15 = arith.maximumf %11, %14 : vector<8x128xf32>
    %c0_13 = arith.constant 0 : index
    %c0_14 = arith.constant 0 : index
    %16 = vector.load %arg3[%c0_13, %c0_14] : memref<1x128xf32, #tpu.memory_space<vmem>>, vector<1x128xf32>
    %17 = vector.broadcast %16 : vector<1x128xf32> to vector<8x128xf32>
    %18 = arith.mulf %15, %17 : vector<8x128xf32>
    %c0_15 = arith.constant 0 : index
    %c0_16 = arith.constant 0 : index
    %19 = vector.load %arg4[%c0_15, %c0_16] : memref<1x128xf32, #tpu.memory_space<vmem>>, vector<1x128xf32>
    %20 = vector.broadcast %19 : vector<1x128xf32> to vector<8x128xf32>
    %21 = arith.addf %18, %20 : vector<8x128xf32>
    %cst_17 = arith.constant 0.000000e+00 : f32
    %22 = vector.broadcast %cst_17 : f32 to vector<8x128xf32>
    %23 = arith.maximumf %21, %22 : vector<8x128xf32>
    %24 = vector.extract_strided_slice %23 {offsets = [0, 0], sizes = [4, 128], strides = [1, 1]} : vector<8x128xf32> to vector<4x128xf32>
    %cst_18 = arith.constant dense<0.000000e+00> : vector<128xf32>
    %25 = vector.multi_reduction <add>, %24, %cst_18 [0] : vector<4x128xf32> to vector<128xf32>
    %26 = vector.shape_cast %25 : vector<128xf32> to vector<1x128xf32>
    %27 = vector.extract_strided_slice %23 {offsets = [4, 0], sizes = [4, 128], strides = [1, 1]} : vector<8x128xf32> to vector<4x128xf32>
    %cst_19 = arith.constant dense<0.000000e+00> : vector<128xf32>
    %28 = vector.multi_reduction <add>, %27, %cst_19 [0] : vector<4x128xf32> to vector<128xf32>
    %29 = vector.shape_cast %28 : vector<128xf32> to vector<1x128xf32>
    %30 = tpu.concatenate %26, %29 in 0 : vector<1x128xf32>, vector<1x128xf32> -> vector<2x128xf32>
    %cst_20 = arith.constant 2.500000e-01 : f32
    %31 = vector.broadcast %cst_20 : f32 to vector<2x128xf32>
    %32 = arith.mulf %30, %31 : vector<2x128xf32>
    %33 = arith.truncf %32 : vector<2x128xf32> to vector<2x128xbf16>
    %c0_21 = arith.constant 0 : index
    %c0_22 = arith.constant 0 : index
    %34 = vector.load %arg5[%c0_21, %c0_22] : memref<128x128xbf16, #tpu.memory_space<vmem>>, vector<128x128xbf16>
    %cst_23 = arith.constant dense<0.000000e+00> : vector<2x128xf32>
    %35 = tpu.matmul %33, %34, %cst_23 {dimension_numbers = #tpu.dot_dimension_numbers<[1], [0], [0], [1], [0, 0, 1, 1], [], []>} : vector<2x128xbf16>, vector<128x128xbf16>, vector<2x128xf32> -> vector<2x128xf32>
    %c0_24 = arith.constant 0 : index
    %c0_25 = arith.constant 0 : index
    %36 = vector.load %arg6[%c0_24, %c0_25] : memref<1x128xf32, #tpu.memory_space<vmem>>, vector<1x128xf32>
    %37 = vector.broadcast %36 : vector<1x128xf32> to vector<2x128xf32>
    %38 = arith.addf %35, %37 : vector<2x128xf32>
    %c0_26 = arith.constant 0 : index
    %c0_27 = arith.constant 0 : index
    %39 = vector.load %arg7[%c0_26, %c0_27] : memref<2x128xf32, #tpu.memory_space<vmem>>, vector<2x128xf32>
    tpu.vector_store %arg7[%c0_26, %c0_27], %38 {strides = array<i32>} : memref<2x128xf32, #tpu.memory_space<vmem>>, vector<2x128xf32>,
    return
  }
  func.func @transform_0(%arg0: i32) -> (i32, i32, i32) {
    %c0_i32 = arith.constant 0 : i32
    %c0_i32_0 = arith.constant 0 : i32
    %c0_i32_1 = arith.constant 0 : i32
    %c0_i32_2 = arith.constant 0 : i32
    return %c0_i32, %c0_i32_0, %c0_i32_1 : i32, i32, i32
  }
  func.func @transform_1(%arg0: i32) -> (i32, i32) {
    %c0_i32 = arith.constant 0 : i32
    %c0_i32_0 = arith.constant 0 : i32
    %c0_i32_1 = arith.constant 0 : i32
    return %c0_i32, %c0_i32_0 : i32, i32
  }
  func.func @transform_2(%arg0: i32) -> (i32, i32) {
    %c0_i32 = arith.constant 0 : i32
    %c0_i32_0 = arith.constant 0 : i32
    %c0_i32_1 = arith.constant 0 : i32
    return %c0_i32, %c0_i32_0 : i32, i32
  }
  func.func @transform_3(%arg0: i32) -> (i32, i32) {
    %c0_i32 = arith.constant 0 : i32
    %c0_i32_0 = arith.constant 0 : i32
    %c0_i32_1 = arith.constant 0 : i32
    return %c0_i32, %c0_i32_0 : i32, i32
  }
  func.func @transform_4(%arg0: i32) -> (i32, i32) {
    %c0_i32 = arith.constant 0 : i32
    %c0_i32_0 = arith.constant 0 : i32
    %c0_i32_1 = arith.constant 0 : i32
    return %c0_i32, %c0_i32_0 : i32, i32
  }
  func.func @transform_5(%arg0: i32) -> (i32, i32) {
    %c0_i32 = arith.constant 0 : i32
    %c0_i32_0 = arith.constant 0 : i32
    %c0_i32_1 = arith.constant 0 : i32
    return %c0_i32, %c0_i32_0 : i32, i32
  }
  func.func @transform_6(%arg0: i32) -> (i32, i32) {
    %c0_i32 = arith.constant 0 : i32
    %c0_i32_0 = arith.constant 0 : i32
    %c0_i32_1 = arith.constant 0 : i32
    return %c0_i32, %c0_i32_0 : i32, i32
  }
}

</mosaic_0001>

<llo_original>
// kernel: cnn_forward.4
$region0: #{cnn_forward.4}
  #allocation0 [shape = 'u32[]', space=smem, size = 0x4, offset = 0x4, fixed_abs, tag = 'smem constant byte address 0x4 - core index']
  #allocation1 [shape = 'u32[144,128]{1,0:T(1,128)}', space=vmem, size = 0x12000, scoped, tag = 'internal scratch']
  %s0 = inlined_call_operand.vmem [shape: bf16[4,512,128], index: 0, kind: input, shape index: {}]
  %s1 = inlined_call_operand.vmem [shape: bf16[128,128], index: 1, kind: input, shape index: {}]
  %s2 = inlined_call_operand.vmem [shape: f32[1,128], index: 2, kind: input, shape index: {}]
  %s3 = inlined_call_operand.vmem [shape: f32[1,128], index: 3, kind: input, shape index: {}]
  %s4 = inlined_call_operand.vmem [shape: bf16[512,128], index: 4, kind: output, shape index: {}]
  %s5 = sld [smem:[#allocation0]]
  $region90: #{cnn_forward.4} parent=0
    _
  %s7 = ssub.s32 1, %s5
  %s8 = scalar_select 0, %s7, %s5
  $region1: #{cnn_forward.4} parent=0
    #allocation2 [shape = 'u8[524288]{0}', space=vmem, size = 0x80000, scoped, tag = 'input window, operand 0']
    loop: start=0, step=1, limit=4
    $region2: #{cnn_forward.4} parent=1 // loop_pre_header
      _
    $region3: #{cnn_forward.4} parent=1 // loop_header
      %s10 = sphi 0, %s14
      %p11 = scmp.ge.s32.totalorder %s10, 4
      %s20 = sphi 0, %s22
      %s23 = sphi 0, %s20
      %s24 = sphi 0, %s23
      %s40 = sphi 0, %s24
      %s44 = sphi 0, %s44
      %s46 = sphi 0, %s44
      %s47 = sphi 0, %s46
      %s61 = sphi 0, %s47
      %s65 = sphi 0, %s65
      %s67 = sphi 0, %s65
      %s68 = sphi 0, %s67
      %s82 = sphi 0, %s68
      %s86 = sphi 0, %s86
      %s88 = sphi 0, %s86
      %s89 = sphi 0, %s88
      %s103 = sphi 0, %s89
      %s109 = sphi 0, %s111
      %s112 = sphi 0, %s109
      %s113 = sphi 0, %s112
      %s129 = sphi 0, %s113
    $region4: #{cnn_forward.4} parent=1 // loop_header_branch
      %13 = sbr.rel (%p11) target = $region8
    $region5: #{cnn_forward.4} parent=1 // loop_body
      %s15 = ssub.s32 %s10, 1
      %s16 = ssub.s32 %s10, 2
      %s17 = sadd.s32 %s10, 1
      %s18 = ssub.s32 %s10, %s17
      %p19 = scmp.eq.s32.totalorder %s18, 0
      %s21 = sadd.s32 %s20, 1
      %s22 = scalar_select %p19, %s20, %s21
      %p25 = pneg %p19
      %p26 = scmp.eq.s32.totalorder %s10, 1
      %p27 = por %p25, %p26
      %p28 = scmp.ne.s32.totalorder %s20, %s23
      %p29 = scmp.eq.s32.totalorder %s10, 0
      %p30 = por %p28, %p29
      %p31 = scmp.ne.s32.totalorder %s20, %s23
      %p32 = scmp.eq.s32.totalorder %s15, 1
      %p33 = por %p31, %p32
      %p34 = scmp.ne.s32.totalorder %s23, %s24
      %p35 = scmp.eq.s32.totalorder %s15, 0
      %p36 = por %p34, %p35
      %p37 = scmp.ne.s32.totalorder %s23, %s24
      %p38 = scmp.eq.s32.totalorder %s16, 1
      %p39 = por %p37, %p38
      %p41 = scmp.ne.s32.totalorder %s24, %s40
      %p42 = scmp.eq.s32.totalorder %s16, 0
      %p43 = por %p41, %p42
      %s45 = sadd.s32 %s44, 1
      %p48 = scmp.eq.s32.totalorder %s10, 1
      %p49 = scmp.ne.s32.totalorder %s44, %s46
      %p50 = scmp.eq.s32.totalorder %s10, 0
      %p51 = por %p49, %p50
      %p52 = scmp.ne.s32.totalorder %s44, %s46
      %p53 = scmp.eq.s32.totalorder %s15, 1
      %p54 = por %p52, %p53
      %p55 = scmp.ne.s32.totalorder %s46, %s47
      %p56 = scmp.eq.s32.totalorder %s15, 0
      %p57 = por %p55, %p56
      %p58 = scmp.ne.s32.totalorder %s46, %s47
      %p59 = scmp.eq.s32.totalorder %s16, 1
      %p60 = por %p58, %p59
      %p62 = scmp.ne.s32.totalorder %s47, %s61
      %p63 = scmp.eq.s32.totalorder %s16, 0
      %p64 = por %p62, %p63
      %s66 = sadd.s32 %s65, 1
      %p69 = scmp.eq.s32.totalorder %s10, 1
      %p70 = scmp.ne.s32.totalorder %s65, %s67
      %p71 = scmp.eq.s32.totalorder %s10, 0
      %p72 = por %p70, %p71
      %p73 = scmp.ne.s32.totalorder %s65, %s67
      %p74 = scmp.eq.s32.totalorder %s15, 1
      %p75 = por %p73, %p74
      %p76 = scmp.ne.s32.totalorder %s67, %s68
      %p77 = scmp.eq.s32.totalorder %s15, 0
      %p78 = por %p76, %p77
      %p79 = scmp.ne.s32.totalorder %s67, %s68
      %p80 = scmp.eq.s32.totalorder %s16, 1
      %p81 = por %p79, %p80
      %p83 = scmp.ne.s32.totalorder %s68, %s82
      %p84 = scmp.eq.s32.totalorder %s16, 0
      %p85 = por %p83, %p84
      %s87 = sadd.s32 %s86, 1
      %p90 = scmp.eq.s32.totalorder %s10, 1
      %p91 = scmp.ne.s32.totalorder %s86, %s88
      %p92 = scmp.eq.s32.totalorder %s10, 0
      %p93 = por %p91, %p92
      %p94 = scmp.ne.s32.totalorder %s86, %s88
      %p95 = scmp.eq.s32.totalorder %s15, 1
      %p96 = por %p94, %p95
      %p97 = scmp.ne.s32.totalorder %s88, %s89
      %p98 = scmp.eq.s32.totalorder %s15, 0
      %p99 = por %p97, %p98
      %p100 = scmp.ne.s32.totalorder %s88, %s89
      %p101 = scmp.eq.s32.totalorder %s16, 1
      %p102 = por %p100, %p101
      %p104 = scmp.ne.s32.totalorder %s89, %s103
      %p105 = scmp.eq.s32.totalorder %s16, 0
      %p106 = por %p104, %p105
      %s107 = ssub.s32 %s10, %s17
      %p108 = scmp.eq.s32.totalorder %s107, 0
      %s110 = sadd.s32 %s109, 1
      %s111 = scalar_select %p108, %s109, %s110
      %p114 = pneg %p108
      %p115 = scmp.eq.s32.totalorder %s10, 1
      %p116 = por %p114, %p115
      %p117 = scmp.ne.s32.totalorder %s109, %s112
      %p118 = scmp.eq.s32.totalorder %s10, 0
      %p119 = por %p117, %p118
      %p120 = scmp.ne.s32.totalorder %s109, %s112
      %p121 = scmp.eq.s32.totalorder %s15, 1
      %p122 = por %p120, %p121
      %p123 = scmp.ne.s32.totalorder %s112, %s113
      %p124 = scmp.eq.s32.totalorder %s15, 0
      %p125 = por %p123, %p124
      %p126 = scmp.ne.s32.totalorder %s112, %s113
      %p127 = scmp.eq.s32.totalorder %s16, 1
      %p128 = por %p126, %p127
      %p130 = scmp.ne.s32.totalorder %s113, %s129
      %p131 = scmp.eq.s32.totalorder %s16, 0
      %p132 = por %p130, %p131
      %p133 = scmp.le.s32.totalorder 1, %s10
      %p134 = scmp.lt.s32.totalorder %s10, 3
      %p135 = pnand %p133, %p134
      %p136 = pneg %p135
      // Predicated region
      $region9: #{cnn_forward.4} parent=5 // pred_check
        _
      $region10: #{cnn_forward.4} parent=5 // pred_check_branch
        %138 = sbr.rel (%p135) target = $region12
      $region11: #{cnn_forward.4} parent=5 // pred_region
        %s139 = ssub.s32 %s10, 1
        // Predicated region
        $region13: #{cnn_forward.4} parent=11 // pred_check
          %p140 = pneg %p57
        $region14: #{cnn_forward.4} parent=11 // pred_check_branch
          %142 = sbr.rel (%p140) target = $region16
        $region15: #{cnn_forward.4} parent=11 // pred_region
          _
        $region16: #{cnn_forward.4} parent=11 // pred_fallthru
          _
        // Predicated region
        $region17: #{cnn_forward.4} parent=11 // pred_check
          %p143 = pneg %p78
        $region18: #{cnn_forward.4} parent=11 // pred_check_branch
          %145 = sbr.rel (%p143) target = $region20
        $region19: #{cnn_forward.4} parent=11 // pred_region
          _
        $region20: #{cnn_forward.4} parent=11 // pred_fallthru
          _
        // Predicated region
        $region21: #{cnn_forward.4} parent=11 // pred_check
          %p146 = pneg %p99
        $region22: #{cnn_forward.4} parent=11 // pred_check_branch
          %148 = sbr.rel (%p146) target = $region24
        $region23: #{cnn_forward.4} parent=11 // pred_region
          _
        $region24: #{cnn_forward.4} parent=11 // pred_fallthru
          _
      $region12: #{cnn_forward.4} parent=5 // pred_fallthru
        _
      %p149 = scmp.lt.s32.totalorder %s10, 2
      // Predicated region
      $region25: #{cnn_forward.4} parent=5 // pred_check
        %p150 = pneg %p149
      $region26: #{cnn_forward.4} parent=5 // pred_check_branch
        %152 = sbr.rel (%p150) target = $region28
      $region27: #{cnn_forward.4} parent=5 // pred_region
        // Predicated region
        $region29: #{cnn_forward.4} parent=27 // pred_check
          %p153 = pneg %p30
        $region30: #{cnn_forward.4} parent=27 // pred_check_branch
          %155 = sbr.rel (%p153) target = $region32
        $region31: #{cnn_forward.4} parent=27 // pred_region
          %s156 = sand.u32 %s20, 1
          %s157 = sand.u32 %s20, 1
          %s158 = smul.addr %s157, 512
          %s159 = scalar_lea.vmem [#allocation2], %s158
          %s160 = smul.u32 32, %s10
          %s161 = smul.addr %s160, 4
          %s162 = scalar_lea.vmem %s0, %s161
          // Predicated region
          $region33: #{cnn_forward.4} parent=31 // pred_check
            _
          $region34: #{cnn_forward.4} parent=31 // pred_check_branch
            %164 = sbr.rel (0) target = $region36
          $region35: #{cnn_forward.4} parent=31 // pred_region
            // Predicated region
            $region37: #{cnn_forward.4} parent=35 // pred_check
              _
            $region38: #{cnn_forward.4} parent=35 // pred_check_branch
              %166 = sbr.rel target = $region40
            $region39: #{cnn_forward.4} parent=35 // pred_region
              // Predicated region
              $region52: #{cnn_forward.4} parent=39 // pred_check
                _
              $region53: #{cnn_forward.4} parent=39 // pred_check_branch
                %435 = sbr.rel (0) target = $region55
              $region54: #{cnn_forward.4} parent=39 // pred_region
                loop: start=0, step=1, limit=1
                $region56: #{cnn_forward.4} parent=54 // loop_pre_header
                  _
                $region57: #{cnn_forward.4} parent=54 // loop_header
                  %s437 = sphi 0, %s441
                  %p438 = scmp.ge.s32.totalorder %s437, 1
                  %s442 = sphi %s162, %s162
                  %s443 = sphi %s159, %s159
                $region58: #{cnn_forward.4} parent=54 // loop_header_branch
                  %440 = sbr.rel (%p438) target = $region62
                $region59: #{cnn_forward.4} parent=54 // loop_body
                  _
                $region60: #{cnn_forward.4} parent=54 // loop_footer
                  %s441 = sadd.s32 1, %s437
                $region61: #{cnn_forward.4} parent=54 // loop_footer_branch
                  %436 = sbr.rel target = $region57
                $region62: #{cnn_forward.4} parent=54 // loop_exit
                  _
                loop: start=0, step=1, limit=1
                $region63: #{cnn_forward.4} parent=54 // loop_pre_header
                  _
                $region64: #{cnn_forward.4} parent=54 // loop_header
                  %s446 = sphi 0, %s450
                  %p447 = scmp.ge.s32.totalorder %s446, 1
                  %s451 = sphi %s162, %s162
                  %s452 = sphi %s159, %s159
                $region65: #{cnn_forward.4} parent=54 // loop_header_branch
                  %449 = sbr.rel (%p447) target = $region69
                $region66: #{cnn_forward.4} parent=54 // loop_body
                  %v453 = vld [vmem:[%s451] sm:$0xf]
                  %454 = vst [vmem:[%s452] sm:$0xf] %v453
                  %v455 = vld [vmem:[%s451 + $0x4] sm:$0xf]
                  %456 = vst [vmem:[%s452 + $0x4] sm:$0xf] %v455
                  %v457 = vld [vmem:[%s451 + $0x8] sm:$0xf]
                  %458 = vst [vmem:[%s452 + $0x8] sm:$0xf] %v457
                  %v459 = vld [vmem:[%s451 + $0xc] sm:$0xf]
                  %460 = vst [vmem:[%s452 + $0xc] sm:$0xf] %v459
                  %v461 = vld [vmem:[%s451 + $0x10] sm:$0xf]
                  %462 = vst [vmem:[%s452 + $0x10] sm:$0xf] %v461
                  %v463 = vld [vmem:[%s451 + $0x14] sm:$0xf]
                  %464 = vst [vmem:[%s452 + $0x14] sm:$0xf] %v463
                  %v465 = vld [vmem:[%s451 + $0x18] sm:$0xf]
                  %466 = vst [vmem:[%s452 + $0x18] sm:$0xf] %v465
                  %v467 = vld [vmem:[%s451 + $0x1c] sm:$0xf]
                  %468 = vst [vmem:[%s452 + $0x1c] sm:$0xf] %v467
                  %v469 = vld [vmem:[%s451 + $0x20] sm:$0xf]
                  %470 = vst [vmem:[%s452 + $0x20] sm:$0xf] %v469
                  %v471 = vld [vmem:[%s451 + $0x24] sm:$0xf]
                  %472 = vst [vmem:[%s452 + $0x24] sm:$0xf] %v471
                  %v473 = vld [vmem:[%s451 + $0x28] sm:$0xf]
                  %474 = vst [vmem:[%s452 + $0x28] sm:$0xf] %v473
                  %v475 = vld [vmem:[%s451 + $0x2c] sm:$0xf]
                  %476 = vst [vmem:[%s452 + $0x2c] sm:$0xf] %v475
                  %v477 = vld [vmem:[%s451 + $0x30] sm:$0xf]
                  %478 = vst [vmem:[%s452 + $0x30] sm:$0xf] %v477
                  %v479 = vld [vmem:[%s451 + $0x34] sm:$0xf]
                  %480 = vst [vmem:[%s452 + $0x34] sm:$0xf] %v479
                  %v481 = vld [vmem:[%s451 + $0x38] sm:$0xf]
                  %482 = vst [vmem:[%s452 + $0x38] sm:$0xf] %v481
                  %v483 = vld [vmem:[%s451 + $0x3c] sm:$0xf]
                  %484 = vst [vmem:[%s452 + $0x3c] sm:$0xf] %v483
                  %v485 = vld [vmem:[%s451 + $0x40] sm:$0xf]
                  %486 = vst [vmem:[%s452 + $0x40] sm:$0xf] %v485
                  %v487 = vld [vmem:[%s451 + $0x44] sm:$0xf]
                  %488 = vst [vmem:[%s452 + $0x44] sm:$0xf] %v487
                  %v489 = vld [vmem:[%s451 + $0x48] sm:$0xf]
                  %490 = vst [vmem:[%s452 + $0x48] sm:$0xf] %v489
                  %v491 = vld [vmem:[%s451 + $0x4c] sm:$0xf]
                  %492 = vst [vmem:[%s452 + $0x4c] sm:$0xf] %v491
                  %v493 = vld [vmem:[%s451 + $0x50] sm:$0xf]
                  %494 = vst [vmem:[%s452 + $0x50] sm:$0xf] %v493
                  %v495 = vld [vmem:[%s451 + $0x54] sm:$0xf]
                  %496 = vst [vmem:[%s452 + $0x54] sm:$0xf] %v495
                  %v497 = vld [vmem:[%s451 + $0x58] sm:$0xf]
                  %498 = vst [vmem:[%s452 + $0x58] sm:$0xf] %v497
                  %v499 = vld [vmem:[%s451 + $0x5c] sm:$0xf]
                  %500 = vst [vmem:[%s452 + $0x5c] sm:$0xf] %v499
                  %v501 = vld [vmem:[%s451 + $0x60] sm:$0xf]
                  %502 = vst [vmem:[%s452 + $0x60] sm:$0xf] %v501
                  %v503 = vld [vmem:[%s451 + $0x64] sm:$0xf]
                  %504 = vst [vmem:[%s452 + $0x64] sm:$0xf] %v503
                  %v505 = vld [vmem:[%s451 + $0x68] sm:$0xf]
                  %506 = vst [vmem:[%s452 + $0x68] sm:$0xf] %v505
                  %v507 = vld [vmem:[%s451 + $0x6c] sm:$0xf]
                  %508 = vst [vmem:[%s452 + $0x6c] sm:$0xf] %v507
                  %v509 = vld [vmem:[%s451 + $0x70] sm:$0xf]
                  %510 = vst [vmem:[%s452 + $0x70] sm:$0xf] %v509
                  %v511 = vld [vmem:[%s451 + $0x74] sm:$0xf]
                  %512 = vst [vmem:[%s452 + $0x74] sm:$0xf] %v511
                  %v513 = vld [vmem:[%s451 + $0x78] sm:$0xf]
                  %514 = vst [vmem:[%s452 + $0x78] sm:$0xf] %v513
                  %v515 = vld [vmem:[%s451 + $0x7c] sm:$0xf]
                  %516 = vst [vmem:[%s452 + $0x7c] sm:$0xf] %v515
                  %v517 = vld [vmem:[%s451 + $0x100] sm:$0xf]
                  %518 = vst [vmem:[%s452 + $0x80] sm:$0xf] %v517
                  %v519 = vld [vmem:[%s451 + $0x104] sm:$0xf]
                  %520 = vst [vmem:[%s452 + $0x84] sm:$0xf] %v519
                  %v521 = vld [vmem:[%s451 + $0x108] sm:$0xf]
                  %522 = vst [vmem:[%s452 + $0x88] sm:$0xf] %v521
                  %v523 = vld [vmem:[%s451 + $0x10c] sm:$0xf]
                  %524 = vst [vmem:[%s452 + $0x8c] sm:$0xf] %v523
                  %v525 = vld [vmem:[%s451 + $0x110] sm:$0xf]
                  %526 = vst [vmem:[%s452 + $0x90] sm:$0xf] %v525
                  %v527 = vld [vmem:[%s451 + $0x114] sm:$0xf]
                  %528 = vst [vmem:[%s452 + $0x94] sm:$0xf] %v527
                  %v529 = vld [vmem:[%s451 + $0x118] sm:$0xf]
                  %530 = vst [vmem:[%s452 + $0x98] sm:$0xf] %v529
                  %v531 = vld [vmem:[%s451 + $0x11c] sm:$0xf]
                  %532 = vst [vmem:[%s452 + $0x9c] sm:$0xf] %v531
                  %v533 = vld [vmem:[%s451 + $0x120] sm:$0xf]
                  %534 = vst [vmem:[%s452 + $0xa0] sm:$0xf] %v533
                  %v535 = vld [vmem:[%s451 + $0x124] sm:$0xf]
                  %536 = vst [vmem:[%s452 + $0xa4] sm:$0xf] %v535
                  %v537 = vld [vmem:[%s451 + $0x128] sm:$0xf]
                  %538 = vst [vmem:[%s452 + $0xa8] sm:$0xf] %v537
                  %v539 = vld [vmem:[%s451 + $0x12c] sm:$0xf]
                  %540 = vst [vmem:[%s452 + $0xac] sm:$0xf] %v539
                  %v541 = vld [vmem:[%s451 + $0x130] sm:$0xf]
                  %542 = vst [vmem:[%s452 + $0xb0] sm:$0xf] %v541
                  %v543 = vld [vmem:[%s451 + $0x134] sm:$0xf]
                  %544 = vst [vmem:[%s452 + $0xb4] sm:$0xf] %v543
                  %v545 = vld [vmem:[%s451 + $0x138] sm:$0xf]
                  %546 = vst [vmem:[%s452 + $0xb8] sm:$0xf] %v545
                  %v547 = vld [vmem:[%s451 + $0x13c] sm:$0xf]
                  %548 = vst [vmem:[%s452 + $0xbc] sm:$0xf] %v547
                  %v549 = vld [vmem:[%s451 + $0x140] sm:$0xf]
                  %550 = vst [vmem:[%s452 + $0xc0] sm:$0xf] %v549
                  %v551 = vld [vmem:[%s451 + $0x144] sm:$0xf]
                  %552 = vst [vmem:[%s452 + $0xc4] sm:$0xf] %v551
                  %v553 = vld [vmem:[%s451 + $0x148] sm:$0xf]
                  %554 = vst [vmem:[%s452 + $0xc8] sm:$0xf] %v553
                  %v555 = vld [vmem:[%s451 + $0x14c] sm:$0xf]
                  %556 = vst [vmem:[%s452 + $0xcc] sm:$0xf] %v555
                  %v557 = vld [vmem:[%s451 + $0x150] sm:$0xf]
                  %558 = vst [vmem:[%s452 + $0xd0] sm:$0xf] %v557
                  %v559 = vld [vmem:[%s451 + $0x154] sm:$0xf]
                  %560 = vst [vmem:[%s452 + $0xd4] sm:$0xf] %v559
                  %v561 = vld [vmem:[%s451 + $0x158] sm:$0xf]
                  %562 = vst [vmem:[%s452 + $0xd8] sm:$0xf] %v561
                  %v563 = vld [vmem:[%s451 + $0x15c] sm:$0xf]
                  %564 = vst [vmem:[%s452 + $0xdc] sm:$0xf] %v563
                  %v565 = vld [vmem:[%s451 + $0x160] sm:$0xf]
                  %566 = vst [vmem:[%s452 + $0xe0] sm:$0xf] %v565
                  %v567 = vld [vmem:[%s451 + $0x164] sm:$0xf]
                  %568 = vst [vmem:[%s452 + $0xe4] sm:$0xf] %v567
                  %v569 = vld [vmem:[%s451 + $0x168] sm:$0xf]
                  %570 = vst [vmem:[%s452 + $0xe8] sm:$0xf] %v569
                  %v571 = vld [vmem:[%s451 + $0x16c] sm:$0xf]
                  %572 = vst [vmem:[%s452 + $0xec] sm:$0xf] %v571
                  %v573 = vld [vmem:[%s451 + $0x170] sm:$0xf]
                  %574 = vst [vmem:[%s452 + $0xf0] sm:$0xf] %v573
                  %v575 = vld [vmem:[%s451 + $0x174] sm:$0xf]
                  %576 = vst [vmem:[%s452 + $0xf4] sm:$0xf] %v575
                  %v577 = vld [vmem:[%s451 + $0x178] sm:$0xf]
                  %578 = vst [vmem:[%s452 + $0xf8] sm:$0xf] %v577
                  %v579 = vld [vmem:[%s451 + $0x17c] sm:$0xf]
                  %580 = vst [vmem:[%s452 + $0xfc] sm:$0xf] %v579
                  %v581 = vld [vmem:[%s451 + $0x200] sm:$0xf]
                  %582 = vst [vmem:[%s452 + $0x100] sm:$0xf] %v581
                  %v583 = vld [vmem:[%s451 + $0x204] sm:$0xf]
                  %584 = vst [vmem:[%s452 + $0x104] sm:$0xf] %v583
                  %v585 = vld [vmem:[%s451 + $0x208] sm:$0xf]
                  %586 = vst [vmem:[%s452 + $0x108] sm:$0xf] %v585
                  %v587 = vld [vmem:[%s451 + $0x20c] sm:$0xf]
                  %588 = vst [vmem:[%s452 + $0x10c] sm:$0xf] %v587
                  %v589 = vld [vmem:[%s451 + $0x210] sm:$0xf]
                  %590 = vst [vmem:[%s452 + $0x110] sm:$0xf] %v589
                  %v591 = vld [vmem:[%s451 + $0x214] sm:$0xf]
                  %592 = vst [vmem:[%s452 + $0x114] sm:$0xf] %v591
                  %v593 = vld [vmem:[%s451 + $0x218] sm:$0xf]
                  %594 = vst [vmem:[%s452 + $0x118] sm:$0xf] %v593
                  %v595 = vld [vmem:[%s451 + $0x21c] sm:$0xf]
                  %596 = vst [vmem:[%s452 + $0x11c] sm:$0xf] %v595
                  %v597 = vld [vmem:[%s451 + $0x220] sm:$0xf]
                  %598 = vst [vmem:[%s452 + $0x120] sm:$0xf] %v597
                  %v599 = vld [vmem:[%s451 + $0x224] sm:$0xf]
                  %600 = vst [vmem:[%s452 + $0x124] sm:$0xf] %v599
                  %v601 = vld [vmem:[%s451 + $0x228] sm:$0xf]
                  %602 = vst [vmem:[%s452 + $0x128] sm:$0xf] %v601
                  %v603 = vld [vmem:[%s451 + $0x22c] sm:$0xf]
                  %604 = vst [vmem:[%s452 + $0x12c] sm:$0xf] %v603
                  %v605 = vld [vmem:[%s451 + $0x230] sm:$0xf]
                  %606 = vst [vmem:[%s452 + $0x130] sm:$0xf] %v605
                  %v607 = vld [vmem:[%s451 + $0x234] sm:$0xf]
                  %608 = vst [vmem:[%s452 + $0x134] sm:$0xf] %v607
                  %v609 = vld [vmem:[%s451 + $0x238] sm:$0xf]
                  %610 = vst [vmem:[%s452 + $0x138] sm:$0xf] %v609
                  %v611 = vld [vmem:[%s451 + $0x23c] sm:$0xf]
                  %612 = vst [vmem:[%s452 + $0x13c] sm:$0xf] %v611
                  %v613 = vld [vmem:[%s451 + $0x240] sm:$0xf]
                  %614 = vst [vmem:[%s452 + $0x140] sm:$0xf] %v613
                  %v615 = vld [vmem:[%s451 + $0x244] sm:$0xf]
                  %616 = vst [vmem:[%s452 + $0x144] sm:$0xf] %v615
                  %v617 = vld [vmem:[%s451 + $0x248] sm:$0xf]
                  %618 = vst [vmem:[%s452 + $0x148] sm:$0xf] %v617
                  %v619 = vld [vmem:[%s451 + $0x24c] sm:$0xf]
                  %620 = vst [vmem:[%s452 + $0x14c] sm:$0xf] %v619
                  %v621 = vld [vmem:[%s451 + $0x250] sm:$0xf]
                  %622 = vst [vmem:[%s452 + $0x150] sm:$0xf] %v621
                  %v623 = vld [vmem:[%s451 + $0x254] sm:$0xf]
                  %624 = vst [vmem:[%s452 + $0x154] sm:$0xf] %v623
                  %v625 = vld [vmem:[%s451 + $0x258] sm:$0xf]
                  %626 = vst [vmem:[%s452 + $0x158] sm:$0xf] %v625
                  %v627 = vld [vmem:[%s451 + $0x25c] sm:$0xf]
                  %628 = vst [vmem:[%s452 + $0x15c] sm:$0xf] %v627
                  %v629 = vld [vmem:[%s451 + $0x260] sm:$0xf]
                  %630 = vst [vmem:[%s452 + $0x160] sm:$0xf] %v629
                  %v631 = vld [vmem:[%s451 + $0x264] sm:$0xf]
                  %632 = vst [vmem:[%s452 + $0x164] sm:$0xf] %v631
                  %v633 = vld [vmem:[%s451 + $0x268] sm:$0xf]
                  %634 = vst [vmem:[%s452 + $0x168] sm:$0xf] %v633
                  %v635 = vld [vmem:[%s451 + $0x26c] sm:$0xf]
                  %636 = vst [vmem:[%s452 + $0x16c] sm:$0xf] %v635
                  %v637 = vld [vmem:[%s451 + $0x270] sm:$0xf]
                  %638 = vst [vmem:[%s452 + $0x170] sm:$0xf] %v637
                  %v639 = vld [vmem:[%s451 + $0x274] sm:$0xf]
                  %640 = vst [vmem:[%s452 + $0x174] sm:$0xf] %v639
                  %v641 = vld [vmem:[%s451 + $0x278] sm:$0xf]
                  %642 = vst [vmem:[%s452 + $0x178] sm:$0xf] %v641
                  %v643 = vld [vmem:[%s451 + $0x27c] sm:$0xf]
                  %644 = vst [vmem:[%s452 + $0x17c] sm:$0xf] %v643
                  %v645 = vld [vmem:[%s451 + $0x300] sm:$0xf]
                  %646 = vst [vmem:[%s452 + $0x180] sm:$0xf] %v645
                  %v647 = vld [vmem:[%s451 + $0x304] sm:$0xf]
                  %648 = vst [vmem:[%s452 + $0x184] sm:$0xf] %v647
                  %v649 = vld [vmem:[%s451 + $0x308] sm:$0xf]
                  %650 = vst [vmem:[%s452 + $0x188] sm:$0xf] %v649
                  %v651 = vld [vmem:[%s451 + $0x30c] sm:$0xf]
                  %652 = vst [vmem:[%s452 + $0x18c] sm:$0xf] %v651
                  %v653 = vld [vmem:[%s451 + $0x310] sm:$0xf]
                  %654 = vst [vmem:[%s452 + $0x190] sm:$0xf] %v653
                  %v655 = vld [vmem:[%s451 + $0x314] sm:$0xf]
                  %656 = vst [vmem:[%s452 + $0x194] sm:$0xf] %v655
                  %v657 = vld [vmem:[%s451 + $0x318] sm:$0xf]
                  %658 = vst [vmem:[%s452 + $0x198] sm:$0xf] %v657
                  %v659 = vld [vmem:[%s451 + $0x31c] sm:$0xf]
                  %660 = vst [vmem:[%s452 + $0x19c] sm:$0xf] %v659
                  %v661 = vld [vmem:[%s451 + $0x320] sm:$0xf]
                  %662 = vst [vmem:[%s452 + $0x1a0] sm:$0xf] %v661
                  %v663 = vld [vmem:[%s451 + $0x324] sm:$0xf]
                  %664 = vst [vmem:[%s452 + $0x1a4] sm:$0xf] %v663
                  %v665 = vld [vmem:[%s451 + $0x328] sm:$0xf]
                  %666 = vst [vmem:[%s452 + $0x1a8] sm:$0xf] %v665
                  %v667 = vld [vmem:[%s451 + $0x32c] sm:$0xf]
                  %668 = vst [vmem:[%s452 + $0x1ac] sm:$0xf] %v667
                  %v669 = vld [vmem:[%s451 + $0x330] sm:$0xf]
                  %670 = vst [vmem:[%s452 + $0x1b0] sm:$0xf] %v669
                  %v671 = vld [vmem:[%s451 + $0x334] sm:$0xf]
                  %672 = vst [vmem:[%s452 + $0x1b4] sm:$0xf] %v671
                  %v673 = vld [vmem:[%s451 + $0x338] sm:$0xf]
                  %674 = vst [vmem:[%s452 + $0x1b8] sm:$0xf] %v673
                  %v675 = vld [vmem:[%s451 + $0x33c] sm:$0xf]
                  %676 = vst [vmem:[%s452 + $0x1bc] sm:$0xf] %v675
                  %v677 = vld [vmem:[%s451 + $0x340] sm:$0xf]
                  %678 = vst [vmem:[%s452 + $0x1c0] sm:$0xf] %v677
                  %v679 = vld [vmem:[%s451 + $0x344] sm:$0xf]
                  %680 = vst [vmem:[%s452 + $0x1c4] sm:$0xf] %v679
                  %v681 = vld [vmem:[%s451 + $0x348] sm:$0xf]
                  %682 = vst [vmem:[%s452 + $0x1c8] sm:$0xf] %v681
                  %v683 = vld [vmem:[%s451 + $0x34c] sm:$0xf]
                  %684 = vst [vmem:[%s452 + $0x1cc] sm:$0xf] %v683
                  %v685 = vld [vmem:[%s451 + $0x350] sm:$0xf]
                  %686 = vst [vmem:[%s452 + $0x1d0] sm:$0xf] %v685
                  %v687 = vld [vmem:[%s451 + $0x354] sm:$0xf]
                  %688 = vst [vmem:[%s452 + $0x1d4] sm:$0xf] %v687
                  %v689 = vld [vmem:[%s451 + $0x358] sm:$0xf]
                  %690 = vst [vmem:[%s452 + $0x1d8] sm:$0xf] %v689
                  %v691 = vld [vmem:[%s451 + $0x35c] sm:$0xf]
                  %692 = vst [vmem:[%s452 + $0x1dc] sm:$0xf] %v691
                  %v693 = vld [vmem:[%s451 + $0x360] sm:$0xf]
                  %694 = vst [vmem:[%s452 + $0x1e0] sm:$0xf] %v693
                  %v695 = vld [vmem:[%s451 + $0x364] sm:$0xf]
                  %696 = vst [vmem:[%s452 + $0x1e4] sm:$0xf] %v695
                  %v697 = vld [vmem:[%s451 + $0x368] sm:$0xf]
                  %698 = vst [vmem:[%s452 + $0x1e8] sm:$0xf] %v697
                  %v699 = vld [vmem:[%s451 + $0x36c] sm:$0xf]
                  %700 = vst [vmem:[%s452 + $0x1ec] sm:$0xf] %v699
                  %v701 = vld [vmem:[%s451 + $0x370] sm:$0xf]
                  %702 = vst [vmem:[%s452 + $0x1f0] sm:$0xf] %v701
                  %v703 = vld [vmem:[%s451 + $0x374] sm:$0xf]
                  %704 = vst [vmem:[%s452 + $0x1f4] sm:$0xf] %v703
                  %v705 = vld [vmem:[%s451 + $0x378] sm:$0xf]
                  %706 = vst [vmem:[%s452 + $0x1f8] sm:$0xf] %v705
                  %v707 = vld [vmem:[%s451 + $0x37c] sm:$0xf]
                  %708 = vst [vmem:[%s452 + $0x1fc] sm:$0xf] %v707
                $region67: #{cnn_forward.4} parent=54 // loop_footer
                  %s450 = sadd.s32 1, %s446
                $region68: #{cnn_forward.4} parent=54 // loop_footer_branch
                  %445 = sbr.rel target = $region64
                $region69: #{cnn_forward.4} parent=54 // loop_exit
                  _
              $region55: #{cnn_forward.4} parent=39 // pred_fallthru
                _
            $region40: #{cnn_forward.4} parent=35 // pred_fallthru
              _
            // Predicated region
            $region41: #{cnn_forward.4} parent=35 // pred_check
              _
            $region42: #{cnn_forward.4} parent=35 // pred_check_branch
              %168 = sbr.rel (0) target = $region44
            $region43: #{cnn_forward.4} parent=35 // pred_region
              loop: start=0, step=1, limit=1
              $region45: #{cnn_forward.4} parent=43 // loop_pre_header
                _
              $region46: #{cnn_forward.4} parent=43 // loop_header
                %s171 = sphi 0, %s175
                %p172 = scmp.ge.s32.totalorder %s171, 1
                %s176 = sphi %s162, %s162
                %s177 = sphi %s159, %s159
              $region47: #{cnn_forward.4} parent=43 // loop_header_branch
                %174 = sbr.rel (%p172) target = $region51
              $region48: #{cnn_forward.4} parent=43 // loop_body
                %v178 = vld [vmem:[%s176] sm:$0xf]
                %179 = vst [vmem:[%s177] sm:$0xf] %v178
                %v180 = vld [vmem:[%s176 + $0x4] sm:$0xf]
                %181 = vst [vmem:[%s177 + $0x4] sm:$0xf] %v180
                %v182 = vld [vmem:[%s176 + $0x8] sm:$0xf]
                %183 = vst [vmem:[%s177 + $0x8] sm:$0xf] %v182
                %v184 = vld [vmem:[%s176 + $0xc] sm:$0xf]
                %185 = vst [vmem:[%s177 + $0xc] sm:$0xf] %v184
                %v186 = vld [vmem:[%s176 + $0x10] sm:$0xf]
                %187 = vst [vmem:[%s177 + $0x10] sm:$0xf] %v186
                %v188 = vld [vmem:[%s176 + $0x14] sm:$0xf]
                %189 = vst [vmem:[%s177 + $0x14] sm:$0xf] %v188
                %v190 = vld [vmem:[%s176 + $0x18] sm:$0xf]
                %191 = vst [vmem:[%s177 + $0x18] sm:$0xf] %v190
                %v192 = vld [vmem:[%s176 + $0x1c] sm:$0xf]
                %193 = vst [vmem:[%s177 + $0x1c] sm:$0xf] %v192
                %v194 = vld [vmem:[%s176 + $0x20] sm:$0xf]
                %195 = vst [vmem:[%s177 + $0x20] sm:$0xf] %v194
                %v196 = vld [vmem:[%s176 + $0x24] sm:$0xf]
                %197 = vst [vmem:[%s177 + $0x24] sm:$0xf] %v196
                %v198 = vld [vmem:[%s176 + $0x28] sm:$0xf]
                %199 = vst [vmem:[%s177 + $0x28] sm:$0xf] %v198
                %v200 = vld [vmem:[%s176 + $0x2c] sm:$0xf]
                %201 = vst [vmem:[%s177 + $0x2c] sm:$0xf] %v200
                %v202 = vld [vmem:[%s176 + $0x30] sm:$0xf]
                %203 = vst [vmem:[%s177 + $0x30] sm:$0xf] %v202
                %v204 = vld [vmem:[%s176 + $0x34] sm:$0xf]
                %205 = vst [vmem:[%s177 + $0x34] sm:$0xf] %v204
                %v206 = vld [vmem:[%s176 + $0x38] sm:$0xf]
                %207 = vst [vmem:[%s177 + $0x38] sm:$0xf] %v206
                %v208 = vld [vmem:[%s176 + $0x3c] sm:$0xf]
                %209 = vst [vmem:[%s177 + $0x3c] sm:$0xf] %v208
                %v210 = vld [vmem:[%s176 + $0x40] sm:$0xf]
                %211 = vst [vmem:[%s177 + $0x40] sm:$0xf] %v210
                %v212 = vld [vmem:[%s176 + $0x44] sm:$0xf]
                %213 = vst [vmem:[%s177 + $0x44] sm:$0xf] %v212
                %v214 = vld [vmem:[%s176 + $0x48] sm:$0xf]
                %215 = vst [vmem:[%s177 + $0x48] sm:$0xf] %v214
                %v216 = vld [vmem:[%s176 + $0x4c] sm:$0xf]
                %217 = vst [vmem:[%s177 + $0x4c] sm:$0xf] %v216
                %v218 = vld [vmem:[%s176 + $0x50] sm:$0xf]
                %219 = vst [vmem:[%s177 + $0x50] sm:$0xf] %v218
                %v220 = vld [vmem:[%s176 + $0x54] sm:$0xf]
                %221 = vst [vmem:[%s177 + $0x54] sm:$0xf] %v220
                %v222 = vld [vmem:[%s176 + $0x58] sm:$0xf]
                %223 = vst [vmem:[%s177 + $0x58] sm:$0xf] %v222
                %v224 = vld [vmem:[%s176 + $0x5c] sm:$0xf]
                %225 = vst [vmem:[%s177 + $0x5c] sm:$0xf] %v224
                %v226 = vld [vmem:[%s176 + $0x60] sm:$0xf]
                %227 = vst [vmem:[%s177 + $0x60] sm:$0xf] %v226
                %v228 = vld [vmem:[%s176 + $0x64] sm:$0xf]
                %229 = vst [vmem:[%s177 + $0x64] sm:$0xf] %v228
                %v230 = vld [vmem:[%s176 + $0x68] sm:$0xf]
                %231 = vst [vmem:[%s177 + $0x68] sm:$0xf] %v230
                %v232 = vld [vmem:[%s176 + $0x6c] sm:$0xf]
                %233 = vst [vmem:[%s177 + $0x6c] sm:$0xf] %v232
                %v234 = vld [vmem:[%s176 + $0x70] sm:$0xf]
                %235 = vst [vmem:[%s177 + $0x70] sm:$0xf] %v234
                %v236 = vld [vmem:[%s176 + $0x74] sm:$0xf]
                %237 = vst [vmem:[%s177 + $0x74] sm:$0xf] %v236
                %v238 = vld [vmem:[%s176 + $0x78] sm:$0xf]
                %239 = vst [vmem:[%s177 + $0x78] sm:$0xf] %v238
                %v240 = vld [vmem:[%s176 + $0x7c] sm:$0xf]
                %241 = vst [vmem:[%s177 + $0x7c] sm:$0xf] %v240
                %v242 = vld [vmem:[%s176 + $0x100] sm:$0xf]
                %243 = vst [vmem:[%s177 + $0x80] sm:$0xf] %v242
                %v244 = vld [vmem:[%s176 + $0x104] sm:$0xf]
                %245 = vst [vmem:[%s177 + $0x84] sm:$0xf] %v244
                %v246 = vld [vmem:[%s176 + $0x108] sm:$0xf]
                %247 = vst [vmem:[%s177 + $0x88] sm:$0xf] %v246
                %v248 = vld [vmem:[%s176 + $0x10c] sm:$0xf]
                %249 = vst [vmem:[%s177 + $0x8c] sm:$0xf] %v248
                %v250 = vld [vmem:[%s176 + $0x110] sm:$0xf]
                %251 = vst [vmem:[%s177 + $0x90] sm:$0xf] %v250
                %v252 = vld [vmem:[%s176 + $0x114] sm:$0xf]
                %253 = vst [vmem:[%s177 + $0x94] sm:$0xf] %v252
                %v254 = vld [vmem:[%s176 + $0x118] sm:$0xf]
                %255 = vst [vmem:[%s177 + $0x98] sm:$0xf] %v254
                %v256 = vld [vmem:[%s176 + $0x11c] sm:$0xf]
                %257 = vst [vmem:[%s177 + $0x9c] sm:$0xf] %v256
                %v258 = vld [vmem:[%s176 + $0x120] sm:$0xf]
                %259 = vst [vmem:[%s177 + $0xa0] sm:$0xf] %v258
                %v260 = vld [vmem:[%s176 + $0x124] sm:$0xf]
                %261 = vst [vmem:[%s177 + $0xa4] sm:$0xf] %v260
                %v262 = vld [vmem:[%s176 + $0x128] sm:$0xf]
                %263 = vst [vmem:[%s177 + $0xa8] sm:$0xf] %v262
                %v264 = vld [vmem:[%s176 + $0x12c] sm:$0xf]
                %265 = vst [vmem:[%s177 + $0xac] sm:$0xf] %v264
                %v266 = vld [vmem:[%s176 + $0x130] sm:$0xf]
                %267 = vst [vmem:[%s177 + $0xb0] sm:$0xf] %v266
                %v268 = vld [vmem:[%s176 + $0x134] sm:$0xf]
                %269 = vst [vmem:[%s177 + $0xb4] sm:$0xf] %v268
                %v270 = vld [vmem:[%s176 + $0x138] sm:$0xf]
                %271 = vst [vmem:[%s177 + $0xb8] sm:$0xf] %v270
                %v272 = vld [vmem:[%s176 + $0x13c] sm:$0xf]
                %273 = vst [vmem:[%s177 + $0xbc] sm:$0xf] %v272
                %v274 = vld [vmem:[%s176 + $0x140] sm:$0xf]
                %275 = vst [vmem:[%s177 + $0xc0] sm:$0xf] %v274
                %v276 = vld [vmem:[%s176 + $0x144] sm:$0xf]
                %277 = vst [vmem:[%s177 + $0xc4] sm:$0xf] %v276
                %v278 = vld [vmem:[%s176 + $0x148] sm:$0xf]
                %279 = vst [vmem:[%s177 + $0xc8] sm:$0xf] %v278
                %v280 = vld [vmem:[%s176 + $0x14c] sm:$0xf]
                %281 = vst [vmem:[%s177 + $0xcc] sm:$0xf] %v280
                %v282 = vld [vmem:[%s176 + $0x150] sm:$0xf]
                %283 = vst [vmem:[%s177 + $0xd0] sm:$0xf] %v282
                %v284 = vld [vmem:[%s176 + $0x154] sm:$0xf]
                %285 = vst [vmem:[%s177 + $0xd4] sm:$0xf] %v284
                %v286 = vld [vmem:[%s176 + $0x158] sm:$0xf]
                %287 = vst [vmem:[%s177 + $0xd8] sm:$0xf] %v286
                %v288 = vld [vmem:[%s176 + $0x15c] sm:$0xf]
                %289 = vst [vmem:[%s177 + $0xdc] sm:$0xf] %v288
                %v290 = vld [vmem:[%s176 + $0x160] sm:$0xf]
                %291 = vst [vmem:[%s177 + $0xe0] sm:$0xf] %v290
                %v292 = vld [vmem:[%s176 + $0x164] sm:$0xf]
                %293 = vst [vmem:[%s177 + $0xe4] sm:$0xf] %v292
                %v294 = vld [vmem:[%s176 + $0x168] sm:$0xf]
                %295 = vst [vmem:[%s177 + $0xe8] sm:$0xf] %v294
                %v296 = vld [vmem:[%s176 + $0x16c] sm:$0xf]
                %297 = vst [vmem:[%s177 + $0xec] sm:$0xf] %v296
                %v298 = vld [vmem:[%s176 + $0x170] sm:$0xf]
                %299 = vst [vmem:[%s177 + $0xf0] sm:$0xf] %v298
                %v300 = vld [vmem:[%s176 + $0x174] sm:$0xf]
                %301 = vst [vmem:[%s177 + $0xf4] sm:$0xf] %v300
                %v302 = vld [vmem:[%s176 + $0x178] sm:$0xf]
                %303 = vst [vmem:[%s177 + $0xf8] sm:$0xf] %v302
                %v304 = vld [vmem:[%s176 + $0x17c] sm:$0xf]
                %305 = vst [vmem:[%s177 + $0xfc] sm:$0xf] %v304
                %v306 = vld [vmem:[%s176 + $0x200] sm:$0xf]
                %307 = vst [vmem:[%s177 + $0x100] sm:$0xf] %v306
                %v308 = vld [vmem:[%s176 + $0x204] sm:$0xf]
                %309 = vst [vmem:[%s177 + $0x104] sm:$0xf] %v308
                %v310 = vld [vmem:[%s176 + $0x208] sm:$0xf]
                %311 = vst [vmem:[%s177 + $0x108] sm:$0xf] %v310
                %v312 = vld [vmem:[%s176 + $0x20c] sm:$0xf]
                %313 = vst [vmem:[%s177 + $0x10c] sm:$0xf] %v312
                %v314 = vld [vmem:[%s176 + $0x210] sm:$0xf]
                %315 = vst [vmem:[%s177 + $0x110] sm:$0xf] %v314
                %v316 = vld [vmem:[%s176 + $0x214] sm:$0xf]
                %317 = vst [vmem:[%s177 + $0x114] sm:$0xf] %v316
                %v318 = vld [vmem:[%s176 + $0x218] sm:$0xf]
                %319 = vst [vmem:[%s177 + $0x118] sm:$0xf] %v318
                %v320 = vld [vmem:[%s176 + $0x21c] sm:$0xf]
                %321 = vst [vmem:[%s177 + $0x11c] sm:$0xf] %v320
                %v322 = vld [vmem:[%s176 + $0x220] sm:$0xf]
                %323 = vst [vmem:[%s177 + $0x120] sm:$0xf] %v322
                %v324 = vld [vmem:[%s176 + $0x224] sm:$0xf]
                %325 = vst [vmem:[%s177 + $0x124] sm:$0xf] %v324
                %v326 = vld [vmem:[%s176 + $0x228] sm:$0xf]
                %327 = vst [vmem:[%s177 + $0x128] sm:$0xf] %v326
                %v328 = vld [vmem:[%s176 + $0x22c] sm:$0xf]
                %329 = vst [vmem:[%s177 + $0x12c] sm:$0xf] %v328
                %v330 = vld [vmem:[%s176 + $0x230] sm:$0xf]
                %331 = vst [vmem:[%s177 + $0x130] sm:$0xf] %v330
                %v332 = vld [vmem:[%s176 + $0x234] sm:$0xf]
                %333 = vst [vmem:[%s177 + $0x134] sm:$0xf] %v332
                %v334 = vld [vmem:[%s176 + $0x238] sm:$0xf]
                %335 = vst [vmem:[%s177 + $0x138] sm:$0xf] %v334
                %v336 = vld [vmem:[%s176 + $0x23c] sm:$0xf]
                %337 = vst [vmem:[%s177 + $0x13c] sm:$0xf] %v336
                %v338 = vld [vmem:[%s176 + $0x240] sm:$0xf]
                %339 = vst [vmem:[%s177 + $0x140] sm:$0xf] %v338
                %v340 = vld [vmem:[%s176 + $0x244] sm:$0xf]
                %341 = vst [vmem:[%s177 + $0x144] sm:$0xf] %v340
                %v342 = vld [vmem:[%s176 + $0x248] sm:$0xf]
                %343 = vst [vmem:[%s177 + $0x148] sm:$0xf] %v342
                %v344 = vld [vmem:[%s176 + $0x24c] sm:$0xf]
                %345 = vst [vmem:[%s177 + $0x14c] sm:$0xf] %v344
                %v346 = vld [vmem:[%s176 + $0x250] sm:$0xf]
                %347 = vst [vmem:[%s177 + $0x150] sm:$0xf] %v346
                %v348 = vld [vmem:[%s176 + $0x254] sm:$0xf]
                %349 = vst [vmem:[%s177 + $0x154] sm:$0xf] %v348
                %v350 = vld [vmem:[%s176 + $0x258] sm:$0xf]
                %351 = vst [vmem:[%s177 + $0x158] sm:$0xf] %v350
                %v352 = vld [vmem:[%s176 + $0x25c] sm:$0xf]
                %353 = vst [vmem:[%s177 + $0x15c] sm:$0xf] %v352
                %v354 = vld [vmem:[%s176 + $0x260] sm:$0xf]
                %355 = vst [vmem:[%s177 + $0x160] sm:$0xf] %v354
                %v356 = vld [vmem:[%s176 + $0x264] sm:$0xf]
                %357 = vst [vmem:[%s177 + $0x164] sm:$0xf] %v356
                %v358 = vld [vmem:[%s176 + $0x268] sm:$0xf]
                %359 = vst [vmem:[%s177 + $0x168] sm:$0xf] %v358
                %v360 = vld [vmem:[%s176 + $0x26c] sm:$0xf]
                %361 = vst [vmem:[%s177 + $0x16c] sm:$0xf] %v360
                %v362 = vld [vmem:[%s176 + $0x270] sm:$0xf]
                %363 = vst [vmem:[%s177 + $0x170] sm:$0xf] %v362
                %v364 = vld [vmem:[%s176 + $0x274] sm:$0xf]
                %365 = vst [vmem:[%s177 + $0x174] sm:$0xf] %v364
                %v366 = vld [vmem:[%s176 + $0x278] sm:$0xf]
                %367 = vst [vmem:[%s177 + $0x178] sm:$0xf] %v366
                %v368 = vld [vmem:[%s176 + $0x27c] sm:$0xf]
                %369 = vst [vmem:[%s177 + $0x17c] sm:$0xf] %v368
                %v370 = vld [vmem:[%s176 + $0x300] sm:$0xf]
                %371 = vst [vmem:[%s177 + $0x180] sm:$0xf] %v370
                %v372 = vld [vmem:[%s176 + $0x304] sm:$0xf]
                %373 = vst [vmem:[%s177 + $0x184] sm:$0xf] %v372
                %v374 = vld [vmem:[%s176 + $0x308] sm:$0xf]
                %375 = vst [vmem:[%s177 + $0x188] sm:$0xf] %v374
                %v376 = vld [vmem:[%s176 + $0x30c] sm:$0xf]
                %377 = vst [vmem:[%s177 + $0x18c] sm:$0xf] %v376
                %v378 = vld [vmem:[%s176 + $0x310] sm:$0xf]
                %379 = vst [vmem:[%s177 + $0x190] sm:$0xf] %v378
                %v380 = vld [vmem:[%s176 + $0x314] sm:$0xf]
                %381 = vst [vmem:[%s177 + $0x194] sm:$0xf] %v380
                %v382 = vld [vmem:[%s176 + $0x318] sm:$0xf]
                %383 = vst [vmem:[%s177 + $0x198] sm:$0xf] %v382
                %v384 = vld [vmem:[%s176 + $0x31c] sm:$0xf]
                %385 = vst [vmem:[%s177 + $0x19c] sm:$0xf] %v384
                %v386 = vld [vmem:[%s176 + $0x320] sm:$0xf]
                %387 = vst [vmem:[%s177 + $0x1a0] sm:$0xf] %v386
                %v388 = vld [vmem:[%s176 + $0x324] sm:$0xf]
                %389 = vst [vmem:[%s177 + $0x1a4] sm:$0xf] %v388
                %v390 = vld [vmem:[%s176 + $0x328] sm:$0xf]
                %391 = vst [vmem:[%s177 + $0x1a8] sm:$0xf] %v390
                %v392 = vld [vmem:[%s176 + $0x32c] sm:$0xf]
                %393 = vst [vmem:[%s177 + $0x1ac] sm:$0xf] %v392
                %v394 = vld [vmem:[%s176 + $0x330] sm:$0xf]
                %395 = vst [vmem:[%s177 + $0x1b0] sm:$0xf] %v394
                %v396 = vld [vmem:[%s176 + $0x334] sm:$0xf]
                %397 = vst [vmem:[%s177 + $0x1b4] sm:$0xf] %v396
                %v398 = vld [vmem:[%s176 + $0x338] sm:$0xf]
                %399 = vst [vmem:[%s177 + $0x1b8] sm:$0xf] %v398
                %v400 = vld [vmem:[%s176 + $0x33c] sm:$0xf]
                %401 = vst [vmem:[%s177 + $0x1bc] sm:$0xf] %v400
                %v402 = vld [vmem:[%s176 + $0x340] sm:$0xf]
                %403 = vst [vmem:[%s177 + $0x1c0] sm:$0xf] %v402
                %v404 = vld [vmem:[%s176 + $0x344] sm:$0xf]
                %405 = vst [vmem:[%s177 + $0x1c4] sm:$0xf] %v404
                %v406 = vld [vmem:[%s176 + $0x348] sm:$0xf]
                %407 = vst [vmem:[%s177 + $0x1c8] sm:$0xf] %v406
                %v408 = vld [vmem:[%s176 + $0x34c] sm:$0xf]
                %409 = vst [vmem:[%s177 + $0x1cc] sm:$0xf] %v408
                %v410 = vld [vmem:[%s176 + $0x350] sm:$0xf]
                %411 = vst [vmem:[%s177 + $0x1d0] sm:$0xf] %v410
                %v412 = vld [vmem:[%s176 + $0x354] sm:$0xf]
                %413 = vst [vmem:[%s177 + $0x1d4] sm:$0xf] %v412
                %v414 = vld [vmem:[%s176 + $0x358] sm:$0xf]
                %415 = vst [vmem:[%s177 + $0x1d8] sm:$0xf] %v414
                %v416 = vld [vmem:[%s176 + $0x35c] sm:$0xf]
                %417 = vst [vmem:[%s177 + $0x1dc] sm:$0xf] %v416
                %v418 = vld [vmem:[%s176 + $0x360] sm:$0xf]
                %419 = vst [vmem:[%s177 + $0x1e0] sm:$0xf] %v418
                %v420 = vld [vmem:[%s176 + $0x364] sm:$0xf]
                %421 = vst [vmem:[%s177 + $0x1e4] sm:$0xf] %v420
                %v422 = vld [vmem:[%s176 + $0x368] sm:$0xf]
                %423 = vst [vmem:[%s177 + $0x1e8] sm:$0xf] %v422
                %v424 = vld [vmem:[%s176 + $0x36c] sm:$0xf]
                %425 = vst [vmem:[%s177 + $0x1ec] sm:$0xf] %v424
                %v426 = vld [vmem:[%s176 + $0x370] sm:$0xf]
                %427 = vst [vmem:[%s177 + $0x1f0] sm:$0xf] %v426
                %v428 = vld [vmem:[%s176 + $0x374] sm:$0xf]
                %429 = vst [vmem:[%s177 + $0x1f4] sm:$0xf] %v428
                %v430 = vld [vmem:[%s176 + $0x378] sm:$0xf]
                %431 = vst [vmem:[%s177 + $0x1f8] sm:$0xf] %v430
                %v432 = vld [vmem:[%s176 + $0x37c] sm:$0xf]
                %433 = vst [vmem:[%s177 + $0x1fc] sm:$0xf] %v432
              $region49: #{cnn_forward.4} parent=43 // loop_footer
                %s175 = sadd.s32 1, %s171
              $region50: #{cnn_forward.4} parent=43 // loop_footer_branch
                %170 = sbr.rel target = $region46
              $region51: #{cnn_forward.4} parent=43 // loop_exit
                _
            $region44: #{cnn_forward.4} parent=35 // pred_fallthru
              _
          $region36: #{cnn_forward.4} parent=31 // pred_fallthru
            _
          %709 = vnop
        $region32: #{cnn_forward.4} parent=27 // pred_fallthru
          _
      $region28: #{cnn_forward.4} parent=5 // pred_fallthru
        _
      %p710 = scmp.le.s32.totalorder 1, %s10
      %p711 = scmp.lt.s32.totalorder %s10, 3
      %p712 = pnand %p710, %p711
      %p713 = pneg %p712
      // Predicated region
      $region70: #{cnn_forward.4} parent=5 // pred_check
        _
      $region71: #{cnn_forward.4} parent=5 // pred_check_branch
        %715 = sbr.rel (%p712) target = $region73
      $region72: #{cnn_forward.4} parent=5 // pred_region
        %s716 = ssub.s32 %s10, 1
        %s717 = sand.u32 %s23, 1
        %s718 = sand.u32 %s23, 1
        %s719 = smul.addr %s718, 512
        %s720 = scalar_lea.vmem [#allocation2], %s719
        // Predicated region
        $region74: #{cnn_forward.4} parent=72 // pred_check
          %p721 = pneg %p36
        $region75: #{cnn_forward.4} parent=72 // pred_check_branch
          %723 = sbr.rel (%p721) target = $region77
        $region76: #{cnn_forward.4} parent=72 // pred_region
          _
        $region77: #{cnn_forward.4} parent=72 // pred_fallthru
          _
        %s724 = sand.u32 %s23, 1
        %s725 = sand.u32 %s23, 1
        %s726 = smul.addr %s725, 512
        %s727 = scalar_lea.vmem [#allocation2], %s726
        %p728 = pneg %p36
        %p729 = pneg %p33
        %p730 = pneg %p57
        %p731 = pneg %p54
        %p732 = pneg %p78
        %p733 = pneg %p75
        %p734 = pneg %p99
        %p735 = pneg %p96
        %p736 = pneg %p125
        %p737 = pneg %p122
        %s738 = smul.u32 32, %s15
        %p739 = scmp.lt.s32.totalorder %s738, 63
        %s740 = scalar_select %p739, %s738, 63
        %s741 = smul.addr %s740, 4
        %s742 = scalar_lea.vmem %s4, %s741
        %s743 = smul.u32 32, %s15
        %s744 = smul.u32 32, %s15
        %p745 = scmp.lt.s32.totalorder %s744, 63
        %s746 = scalar_select %p745, %s744, 63
        %s747 = smul.addr %s746, 4
        %s748 = scalar_lea.vmem %s4, %s747
        %s749 = smul.u32 32, %s15
        %v751 = vld [vmem:[%s1] sm:$0xf]
        %v752 = vld [vmem:[%s1 + $0x4] sm:$0xf]
        %v753 = vld [vmem:[%s1 + $0x8] sm:$0xf]
        %v754 = vld [vmem:[%s1 + $0xc] sm:$0xf]
        %v755 = vld [vmem:[%s1 + $0x10] sm:$0xf]
        %v756 = vld [vmem:[%s1 + $0x14] sm:$0xf]
        %v757 = vld [vmem:[%s1 + $0x18] sm:$0xf]
        %v758 = vld [vmem:[%s1 + $0x1c] sm:$0xf]
        %v759 = vld [vmem:[%s1 + $0x20] sm:$0xf]
        %v760 = vld [vmem:[%s1 + $0x24] sm:$0xf]
        %v761 = vld [vmem:[%s1 + $0x28] sm:$0xf]
        %v762 = vld [vmem:[%s1 + $0x2c] sm:$0xf]
        %v763 = vld [vmem:[%s1 + $0x30] sm:$0xf]
        %v764 = vld [vmem:[%s1 + $0x34] sm:$0xf]
        %v765 = vld [vmem:[%s1 + $0x38] sm:$0xf]
        %v766 = vld [vmem:[%s1 + $0x3c] sm:$0xf]
        %v767 = vld [vmem:[%s720] sm:$0xf]
        %v768 = vld [vmem:[%s720 + $0x4] sm:$0xf]
        %v769 = vld [vmem:[%s720 + $0x8] sm:$0xf]
        %v770 = vld [vmem:[%s720 + $0xc] sm:$0xf]
        %v771 = vld [vmem:[%s720 + $0x10] sm:$0xf]
        %v772 = vld [vmem:[%s720 + $0x14] sm:$0xf]
        %v773 = vld [vmem:[%s720 + $0x18] sm:$0xf]
        %v774 = vld [vmem:[%s720 + $0x1c] sm:$0xf]
        %v775 = vld [vmem:[%s720 + $0x20] sm:$0xf]
        %v776 = vld [vmem:[%s720 + $0x24] sm:$0xf]
        %v777 = vld [vmem:[%s720 + $0x28] sm:$0xf]
        %v778 = vld [vmem:[%s720 + $0x2c] sm:$0xf]
        %v779 = vld [vmem:[%s720 + $0x30] sm:$0xf]
        %v780 = vld [vmem:[%s720 + $0x34] sm:$0xf]
        %v781 = vld [vmem:[%s720 + $0x38] sm:$0xf]
        %v782 = vld [vmem:[%s720 + $0x3c] sm:$0xf]
        %v783 = vld [vmem:[%s720 + $0x40] sm:$0xf]
        %v784 = vld [vmem:[%s720 + $0x44] sm:$0xf]
        %v785 = vld [vmem:[%s720 + $0x48] sm:$0xf]
        %v786 = vld [vmem:[%s720 + $0x4c] sm:$0xf]
        %v787 = vld [vmem:[%s720 + $0x50] sm:$0xf]
        %v788 = vld [vmem:[%s720 + $0x54] sm:$0xf]
        %v789 = vld [vmem:[%s720 + $0x58] sm:$0xf]
        %v790 = vld [vmem:[%s720 + $0x5c] sm:$0xf]
        %v791 = vld [vmem:[%s720 + $0x60] sm:$0xf]
        %v792 = vld [vmem:[%s720 + $0x64] sm:$0xf]
        %v793 = vld [vmem:[%s720 + $0x68] sm:$0xf]
        %v794 = vld [vmem:[%s720 + $0x6c] sm:$0xf]
        %v795 = vld [vmem:[%s720 + $0x70] sm:$0xf]
        %v796 = vld [vmem:[%s720 + $0x74] sm:$0xf]
        %v797 = vld [vmem:[%s720 + $0x78] sm:$0xf]
        %v798 = vld [vmem:[%s720 + $0x7c] sm:$0xf]
        %v831 = vunpack.c.l.b16 %v767
        %v832 = vunpack.c.l.b16 %v768
        %v833 = vunpack.c.l.b16 %v769
        %v834 = vunpack.c.l.b16 %v770
        %v835 = vunpack.c.l.b16 %v771
        %v836 = vunpack.c.l.b16 %v772
        %v837 = vunpack.c.l.b16 %v773
        %v838 = vunpack.c.l.b16 %v774
        %v839 = vunpack.c.l.b16 %v775
        %v840 = vunpack.c.l.b16 %v776
        %v841 = vunpack.c.l.b16 %v777
        %v842 = vunpack.c.l.b16 %v778
        %v843 = vunpack.c.l.b16 %v779
        %v844 = vunpack.c.l.b16 %v780
        %v845 = vunpack.c.l.b16 %v781
        %v846 = vunpack.c.l.b16 %v782
        %v847 = vunpack.c.l.b16 %v783
        %v848 = vunpack.c.l.b16 %v784
        %v849 = vunpack.c.l.b16 %v785
        %v850 = vunpack.c.l.b16 %v786
        %v851 = vunpack.c.l.b16 %v787
        %v852 = vunpack.c.l.b16 %v788
        %v853 = vunpack.c.l.b16 %v789
        %v854 = vunpack.c.l.b16 %v790
        %v855 = vunpack.c.l.b16 %v791
        %v856 = vunpack.c.l.b16 %v792
        %v857 = vunpack.c.l.b16 %v793
        %v858 = vunpack.c.l.b16 %v794
        %v859 = vunpack.c.l.b16 %v795
        %v860 = vunpack.c.l.b16 %v796
        %v861 = vunpack.c.l.b16 %v797
        %v862 = vunpack.c.l.b16 %v798
        %v863 = vpack.c.b16 %v832, %v831
        %v864 = vpack.c.b16 %v834, %v833
        %v865 = vpack.c.b16 %v836, %v835
        %v866 = vpack.c.b16 %v838, %v837
        %v867 = vpack.c.b16 %v840, %v839
        %v868 = vpack.c.b16 %v842, %v841
        %v869 = vpack.c.b16 %v844, %v843
        %v870 = vpack.c.b16 %v846, %v845
        %v871 = vpack.c.b16 %v848, %v847
        %v872 = vpack.c.b16 %v850, %v849
        %v873 = vpack.c.b16 %v852, %v851
        %v874 = vpack.c.b16 %v854, %v853
        %v875 = vpack.c.b16 %v856, %v855
        %v876 = vpack.c.b16 %v858, %v857
        %v877 = vpack.c.b16 %v860, %v859
        %v878 = vpack.c.b16 %v862, %v861
        %v911 = vunpack.c.l.b16 %v751
        %v912 = vunpack.c.l.b16 %v752
        %v913 = vunpack.c.l.b16 %v753
        %v914 = vunpack.c.l.b16 %v754
        %v915 = vunpack.c.l.b16 %v755
        %v916 = vunpack.c.l.b16 %v756
        %v917 = vunpack.c.l.b16 %v757
        %v918 = vunpack.c.l.b16 %v758
        %v919 = vunpack.c.l.b16 %v759
        %v920 = vunpack.c.l.b16 %v760
        %v921 = vunpack.c.l.b16 %v761
        %v922 = vunpack.c.l.b16 %v762
        %v923 = vunpack.c.l.b16 %v763
        %v924 = vunpack.c.l.b16 %v764
        %v925 = vunpack.c.l.b16 %v765
        %v926 = vunpack.c.l.b16 %v766
        %v927 = vpack.c.b16 %v912, %v911
        %v928 = vpack.c.b16 %v914, %v913
        %v929 = vpack.c.b16 %v916, %v915
        %v930 = vpack.c.b16 %v918, %v917
        %v931 = vpack.c.b16 %v920, %v919
        %v932 = vpack.c.b16 %v922, %v921
        %v933 = vpack.c.b16 %v924, %v923
        %v934 = vpack.c.b16 %v926, %v925
        %943 = vmatprep.subr.bf16.mxu0 0
        %944 = vmatpush1.bf16.msra.mxu0 %v927
        %945 = vmatprep.subr.bf16.mxu0 0
        %946 = vmatpush1.bf16.msra.mxu0 %v928
        %947 = vmatprep.subr.bf16.mxu0 0
        %948 = vmatpush1.bf16.msra.mxu0 %v929
        %949 = vmatprep.subr.bf16.mxu0 0
        %950 = vmatpush1.bf16.msra.mxu0 %v930
        %951 = vmatprep.subr.bf16.mxu0 0
        %952 = vmatpush1.bf16.msra.mxu0 %v931
        %953 = vmatprep.subr.bf16.mxu0 0
        %954 = vmatpush1.bf16.msra.mxu0 %v932
        %955 = vmatprep.subr.bf16.mxu0 0
        %956 = vmatpush1.bf16.msra.mxu0 %v933
        %957 = vmatprep.subr.bf16.mxu0 0
        %958 = vmatpush1.bf16.msra.mxu0 %v934
        %959 = vmatprep.subr.bf16.mxu0 0
        %960 = vmatpush1.bf16.msra.mxu0 0
        %961 = vmatprep.subr.bf16.mxu0 0
        %962 = vmatpush1.bf16.msra.mxu0 0
        %963 = vmatprep.subr.bf16.mxu0 0
        %964 = vmatpush1.bf16.msra.mxu0 0
        %965 = vmatprep.subr.bf16.mxu0 0
        %966 = vmatpush1.bf16.msra.mxu0 0
        %967 = vmatprep.subr.bf16.mxu0 0
        %968 = vmatpush1.bf16.msra.mxu0 0
        %969 = vmatprep.subr.bf16.mxu0 0
        %970 = vmatpush1.bf16.msra.mxu0 0
        %971 = vmatprep.subr.bf16.mxu0 0
        %972 = vmatpush1.bf16.msra.mxu0 0
        %973 = vmatprep.subr.bf16.mxu0 0
        %974 = vmatpush1.bf16.msra.mxu0 0
        %975 = vmatprep.mubr.bf16.mxu0 0
        %976 = vmatmul.mubr.bf16.gmra.mrb[0].mxu0 %v863
        %v977 = vpop.f32.mrb[0].mxu0
        %v978 = vadd.f32 0.0, %v977
        %v979 = vpop.f32.mrb[0].mxu0
        %v980 = vpop.f32.mrb[0].mxu0
        %v981 = vadd.f32 0.0, %v980
        %v982 = vpop.f32.mrb[0].mxu0
        %983 = vmatprep.mubr.bf16.mxu0 0
        %984 = vmatmul.mubr.bf16.gmra.mrb[0].mxu0 %v864
        %v985 = vpop.f32.mrb[0].mxu0
        %v986 = vadd.f32 0.0, %v985
        %v987 = vpop.f32.mrb[0].mxu0
        %v988 = vpop.f32.mrb[0].mxu0
        %v989 = vadd.f32 0.0, %v988
        %v990 = vpop.f32.mrb[0].mxu0
        %991 = vmatprep.mubr.bf16.mxu0 0
        %992 = vmatmul.mubr.bf16.gmra.mrb[0].mxu0 %v865
        %v993 = vpop.f32.mrb[0].mxu0
        %v994 = vadd.f32 0.0, %v993
        %v995 = vpop.f32.mrb[0].mxu0
        %v996 = vpop.f32.mrb[0].mxu0
        %v997 = vadd.f32 0.0, %v996
        %v998 = vpop.f32.mrb[0].mxu0
        %999 = vmatprep.mubr.bf16.mxu0 0
        %1000 = vmatmul.mubr.bf16.gmra.mrb[0].mxu0 %v866
        %v1001 = vpop.f32.mrb[0].mxu0
        %v1002 = vadd.f32 0.0, %v1001
        %v1003 = vpop.f32.mrb[0].mxu0
        %v1004 = vpop.f32.mrb[0].mxu0
        %v1005 = vadd.f32 0.0, %v1004
        %v1006 = vpop.f32.mrb[0].mxu0
        %1007 = vmatprep.mubr.bf16.mxu0 0
        %1008 = vmatmul.mubr.bf16.gmra.mrb[0].mxu0 %v867
        %v1009 = vpop.f32.mrb[0].mxu0
        %v1010 = vadd.f32 0.0, %v1009
        %v1011 = vpop.f32.mrb[0].mxu0
        %v1012 = vpop.f32.mrb[0].mxu0
        %v1013 = vadd.f32 0.0, %v1012
        %v1014 = vpop.f32.mrb[0].mxu0
        %1015 = vmatprep.mubr.bf16.mxu0 0
        %1016 = vmatmul.mubr.bf16.gmra.mrb[0].mxu0 %v868
        %v1017 = vpop.f32.mrb[0].mxu0
        %v1018 = vadd.f32 0.0, %v1017
        %v1019 = vpop.f32.mrb[0].mxu0
        %v1020 = vpop.f32.mrb[0].mxu0
        %v1021 = vadd.f32 0.0, %v1020
        %v1022 = vpop.f32.mrb[0].mxu0
        %1023 = vmatprep.mubr.bf16.mxu0 0
        %1024 = vmatmul.mubr.bf16.gmra.mrb[0].mxu0 %v869
        %v1025 = vpop.f32.mrb[0].mxu0
        %v1026 = vadd.f32 0.0, %v1025
        %v1027 = vpop.f32.mrb[0].mxu0
        %v1028 = vpop.f32.mrb[0].mxu0
        %v1029 = vadd.f32 0.0, %v1028
        %v1030 = vpop.f32.mrb[0].mxu0
        %1031 = vmatprep.mubr.bf16.mxu0 0
        %1032 = vmatmul.mubr.bf16.gmra.mrb[0].mxu0 %v870
        %v1033 = vpop.f32.mrb[0].mxu0
        %v1034 = vadd.f32 0.0, %v1033
        %v1035 = vpop.f32.mrb[0].mxu0
        %v1036 = vpop.f32.mrb[0].mxu0
        %v1037 = vadd.f32 0.0, %v1036
        %v1038 = vpop.f32.mrb[0].mxu0
        %1039 = vmatprep.mubr.bf16.mxu0 0
        %1040 = vmatmul.mubr.bf16.gmra.mrb[0].mxu0 %v871
        %v1041 = vpop.f32.mrb[0].mxu0
        %v1042 = vadd.f32 0.0, %v1041
        %v1043 = vpop.f32.mrb[0].mxu0
        %v1044 = vpop.f32.mrb[0].mxu0
        %v1045 = vadd.f32 0.0, %v1044
        %v1046 = vpop.f32.mrb[0].mxu0
        %1047 = vmatprep.mubr.bf16.mxu0 0
        %1048 = vmatmul.mubr.bf16.gmra.mrb[0].mxu0 %v872
        %v1049 = vpop.f32.mrb[0].mxu0
        %v1050 = vadd.f32 0.0, %v1049
        %v1051 = vpop.f32.mrb[0].mxu0
        %v1052 = vpop.f32.mrb[0].mxu0
        %v1053 = vadd.f32 0.0, %v1052
        %v1054 = vpop.f32.mrb[0].mxu0
        %1055 = vmatprep.mubr.bf16.mxu0 0
        %1056 = vmatmul.mubr.bf16.gmra.mrb[0].mxu0 %v873
        %v1057 = vpop.f32.mrb[0].mxu0
        %v1058 = vadd.f32 0.0, %v1057
        %v1059 = vpop.f32.mrb[0].mxu0
        %v1060 = vpop.f32.mrb[0].mxu0
        %v1061 = vadd.f32 0.0, %v1060
        %v1062 = vpop.f32.mrb[0].mxu0
        %1063 = vmatprep.mubr.bf16.mxu0 0
        %1064 = vmatmul.mubr.bf16.gmra.mrb[0].mxu0 %v874
        %v1065 = vpop.f32.mrb[0].mxu0
        %v1066 = vadd.f32 0.0, %v1065
        %v1067 = vpop.f32.mrb[0].mxu0
        %v1068 = vpop.f32.mrb[0].mxu0
        %v1069 = vadd.f32 0.0, %v1068
        %v1070 = vpop.f32.mrb[0].mxu0
        %1071 = vmatprep.mubr.bf16.mxu0 0
        %1072 = vmatmul.mubr.bf16.gmra.mrb[0].mxu0 %v875
        %v1073 = vpop.f32.mrb[0].mxu0
        %v1074 = vadd.f32 0.0, %v1073
        %v1075 = vpop.f32.mrb[0].mxu0
        %v1076 = vpop.f32.mrb[0].mxu0
        %v1077 = vadd.f32 0.0, %v1076
        %v1078 = vpop.f32.mrb[0].mxu0
        %1079 = vmatprep.mubr.bf16.mxu0 0
        %1080 = vmatmul.mubr.bf16.gmra.mrb[0].mxu0 %v876
        %v1081 = vpop.f32.mrb[0].mxu0
        %v1082 = vadd.f32 0.0, %v1081
        %v1083 = vpop.f32.mrb[0].mxu0
        %v1084 = vpop.f32.mrb[0].mxu0
        %v1085 = vadd.f32 0.0, %v1084
        %v1086 = vpop.f32.mrb[0].mxu0
        %1087 = vmatprep.mubr.bf16.mxu0 0
        %1088 = vmatmul.mubr.bf16.gmra.mrb[0].mxu0 %v877
        %v1089 = vpop.f32.mrb[0].mxu0
        %v1090 = vadd.f32 0.0, %v1089
        %v1091 = vpop.f32.mrb[0].mxu0
        %v1092 = vpop.f32.mrb[0].mxu0
        %v1093 = vadd.f32 0.0, %v1092
        %v1094 = vpop.f32.mrb[0].mxu0
        %1095 = vmatprep.mubr.bf16.mxu0 0
        %1096 = vmatmul.mubr.bf16.gmra.mrb[0].mxu0 %v878
        %v1097 = vpop.f32.mrb[0].mxu0
        %v1098 = vadd.f32 0.0, %v1097
        %v1099 = vpop.f32.mrb[0].mxu0
        %v1100 = vpop.f32.mrb[0].mxu0
        %v1101 = vadd.f32 0.0, %v1100
        %v1102 = vpop.f32.mrb[0].mxu0
        %1103 = vdwg.mxu0
        %s1104 = scalar_lea.vmem %s720, 128 [#allocation2]
        %v1105 = vld [vmem:[%s1104] sm:$0xf]
        %v1106 = vld [vmem:[%s1104 + $0x4] sm:$0xf]
        %v1107 = vld [vmem:[%s1104 + $0x8] sm:$0xf]
        %v1108 = vld [vmem:[%s1104 + $0xc] sm:$0xf]
        %v1109 = vld [vmem:[%s1104 + $0x10] sm:$0xf]
        %v1110 = vld [vmem:[%s1104 + $0x14] sm:$0xf]
        %v1111 = vld [vmem:[%s1104 + $0x18] sm:$0xf]
        %v1112 = vld [vmem:[%s1104 + $0x1c] sm:$0xf]
        %v1113 = vld [vmem:[%s1104 + $0x20] sm:$0xf]
        %v1114 = vld [vmem:[%s1104 + $0x24] sm:$0xf]
        %v1115 = vld [vmem:[%s1104 + $0x28] sm:$0xf]
        %v1116 = vld [vmem:[%s1104 + $0x2c] sm:$0xf]
        %v1117 = vld [vmem:[%s1104 + $0x30] sm:$0xf]
        %v1118 = vld [vmem:[%s1104 + $0x34] sm:$0xf]
        %v1119 = vld [vmem:[%s1104 + $0x38] sm:$0xf]
        %v1120 = vld [vmem:[%s1104 + $0x3c] sm:$0xf]
        %v1121 = vld [vmem:[%s1104 + $0x40] sm:$0xf]
        %v1122 = vld [vmem:[%s1104 + $0x44] sm:$0xf]
        %v1123 = vld [vmem:[%s1104 + $0x48] sm:$0xf]
        %v1124 = vld [vmem:[%s1104 + $0x4c] sm:$0xf]
        %v1125 = vld [vmem:[%s1104 + $0x50] sm:$0xf]
        %v1126 = vld [vmem:[%s1104 + $0x54] sm:$0xf]
        %v1127 = vld [vmem:[%s1104 + $0x58] sm:$0xf]
        %v1128 = vld [vmem:[%s1104 + $0x5c] sm:$0xf]
        %v1129 = vld [vmem:[%s1104 + $0x60] sm:$0xf]
        %v1130 = vld [vmem:[%s1104 + $0x64] sm:$0xf]
        %v1131 = vld [vmem:[%s1104 + $0x68] sm:$0xf]
        %v1132 = vld [vmem:[%s1104 + $0x6c] sm:$0xf]
        %v1133 = vld [vmem:[%s1104 + $0x70] sm:$0xf]
        %v1134 = vld [vmem:[%s1104 + $0x74] sm:$0xf]
        %v1135 = vld [vmem:[%s1104 + $0x78] sm:$0xf]
        %v1136 = vld [vmem:[%s1104 + $0x7c] sm:$0xf]
        %v1169 = vunpack.c.l.b16 %v1105
        %v1170 = vunpack.c.l.b16 %v1106
        %v1171 = vunpack.c.l.b16 %v1107
        %v1172 = vunpack.c.l.b16 %v1108
        %v1173 = vunpack.c.l.b16 %v1109
        %v1174 = vunpack.c.l.b16 %v1110
        %v1175 = vunpack.c.l.b16 %v1111
        %v1176 = vunpack.c.l.b16 %v1112
        %v1177 = vunpack.c.l.b16 %v1113
        %v1178 = vunpack.c.l.b16 %v1114
        %v1179 = vunpack.c.l.b16 %v1115
        %v1180 = vunpack.c.l.b16 %v1116
        %v1181 = vunpack.c.l.b16 %v1117
        %v1182 = vunpack.c.l.b16 %v1118
        %v1183 = vunpack.c.l.b16 %v1119
        %v1184 = vunpack.c.l.b16 %v1120
        %v1185 = vunpack.c.l.b16 %v1121
        %v1186 = vunpack.c.l.b16 %v1122
        %v1187 = vunpack.c.l.b16 %v1123
        %v1188 = vunpack.c.l.b16 %v1124
        %v1189 = vunpack.c.l.b16 %v1125
        %v1190 = vunpack.c.l.b16 %v1126
        %v1191 = vunpack.c.l.b16 %v1127
        %v1192 = vunpack.c.l.b16 %v1128
        %v1193 = vunpack.c.l.b16 %v1129
        %v1194 = vunpack.c.l.b16 %v1130
        %v1195 = vunpack.c.l.b16 %v1131
        %v1196 = vunpack.c.l.b16 %v1132
        %v1197 = vunpack.c.l.b16 %v1133
        %v1198 = vunpack.c.l.b16 %v1134
        %v1199 = vunpack.c.l.b16 %v1135
        %v1200 = vunpack.c.l.b16 %v1136
        %v1201 = vpack.c.b16 %v1170, %v1169
        %v1202 = vpack.c.b16 %v1172, %v1171
        %v1203 = vpack.c.b16 %v1174, %v1173
        %v1204 = vpack.c.b16 %v1176, %v1175
        %v1205 = vpack.c.b16 %v1178, %v1177
        %v1206 = vpack.c.b16 %v1180, %v1179
        %v1207 = vpack.c.b16 %v1182, %v1181
        %v1208 = vpack.c.b16 %v1184, %v1183
        %v1209 = vpack.c.b16 %v1186, %v1185
        %v1210 = vpack.c.b16 %v1188, %v1187
        %v1211 = vpack.c.b16 %v1190, %v1189
        %v1212 = vpack.c.b16 %v1192, %v1191
        %v1213 = vpack.c.b16 %v1194, %v1193
        %v1214 = vpack.c.b16 %v1196, %v1195
        %v1215 = vpack.c.b16 %v1198, %v1197
        %v1216 = vpack.c.b16 %v1200, %v1199
        %1233 = vmatprep.subr.bf16.mxu0 0
        %1234 = vmatpush1.bf16.msra.mxu0 %v927
        %1235 = vmatprep.subr.bf16.mxu0 0
        %1236 = vmatpush1.bf16.msra.mxu0 %v928
        %1237 = vmatprep.subr.bf16.mxu0 0
        %1238 = vmatpush1.bf16.msra.mxu0 %v929
        %1239 = vmatprep.subr.bf16.mxu0 0
        %1240 = vmatpush1.bf16.msra.mxu0 %v930
        %1241 = vmatprep.subr.bf16.mxu0 0
        %1242 = vmatpush1.bf16.msra.mxu0 %v931
        %1243 = vmatprep.subr.bf16.mxu0 0
        %1244 = vmatpush1.bf16.msra.mxu0 %v932
        %1245 = vmatprep.subr.bf16.mxu0 0
        %1246 = vmatpush1.bf16.msra.mxu0 %v933
        %1247 = vmatprep.subr.bf16.mxu0 0
        %1248 = vmatpush1.bf16.msra.mxu0 %v934
        %1249 = vmatprep.subr.bf16.mxu0 0
        %1250 = vmatpush1.bf16.msra.mxu0 0
        %1251 = vmatprep.subr.bf16.mxu0 0
        %1252 = vmatpush1.bf16.msra.mxu0 0
        %1253 = vmatprep.subr.bf16.mxu0 0
        %1254 = vmatpush1.bf16.msra.mxu0 0
        %1255 = vmatprep.subr.bf16.mxu0 0
        %1256 = vmatpush1.bf16.msra.mxu0 0
        %1257 = vmatprep.subr.bf16.mxu0 0
        %1258 = vmatpush1.bf16.msra.mxu0 0
        %1259 = vmatprep.subr.bf16.mxu0 0
        %1260 = vmatpush1.bf16.msra.mxu0 0
        %1261 = vmatprep.subr.bf16.mxu0 0
        %1262 = vmatpush1.bf16.msra.mxu0 0
        %1263 = vmatprep.subr.bf16.mxu0 0
        %1264 = vmatpush1.bf16.msra.mxu0 0
        %1265 = vmatprep.mubr.bf16.mxu0 0
        %1266 = vmatmul.mubr.bf16.gmra.mrb[0].mxu0 %v1201
        %v1267 = vpop.f32.mrb[0].mxu0
        %v1268 = vadd.f32 0.0, %v1267
        %v1269 = vpop.f32.mrb[0].mxu0
        %v1270 = vpop.f32.mrb[0].mxu0
        %v1271 = vadd.f32 0.0, %v1270
        %v1272 = vpop.f32.mrb[0].mxu0
        %1273 = vmatprep.mubr.bf16.mxu0 0
        %1274 = vmatmul.mubr.bf16.gmra.mrb[0].mxu0 %v1202
        %v1275 = vpop.f32.mrb[0].mxu0
        %v1276 = vadd.f32 0.0, %v1275
        %v1277 = vpop.f32.mrb[0].mxu0
        %v1278 = vpop.f32.mrb[0].mxu0
        %v1279 = vadd.f32 0.0, %v1278
        %v1280 = vpop.f32.mrb[0].mxu0
        %1281 = vmatprep.mubr.bf16.mxu0 0
        %1282 = vmatmul.mubr.bf16.gmra.mrb[0].mxu0 %v1203
        %v1283 = vpop.f32.mrb[0].mxu0
        %v1284 = vadd.f32 0.0, %v1283
        %v1285 = vpop.f32.mrb[0].mxu0
        %v1286 = vpop.f32.mrb[0].mxu0
        %v1287 = vadd.f32 0.0, %v1286
        %v1288 = vpop.f32.mrb[0].mxu0
        %1289 = vmatprep.mubr.bf16.mxu0 0
        %1290 = vmatmul.mubr.bf16.gmra.mrb[0].mxu0 %v1204
        %v1291 = vpop.f32.mrb[0].mxu0
        %v1292 = vadd.f32 0.0, %v1291
        %v1293 = vpop.f32.mrb[0].mxu0
        %v1294 = vpop.f32.mrb[0].mxu0
        %v1295 = vadd.f32 0.0, %v1294
        %v1296 = vpop.f32.mrb[0].mxu0
        %1297 = vmatprep.mubr.bf16.mxu0 0
        %1298 = vmatmul.mubr.bf16.gmra.mrb[0].mxu0 %v1205
        %v1299 = vpop.f32.mrb[0].mxu0
        %v1300 = vadd.f32 0.0, %v1299
        %v1301 = vpop.f32.mrb[0].mxu0
        %v1302 = vpop.f32.mrb[0].mxu0
        %v1303 = vadd.f32 0.0, %v1302
        %v1304 = vpop.f32.mrb[0].mxu0
        %1305 = vmatprep.mubr.bf16.mxu0 0
        %1306 = vmatmul.mubr.bf16.gmra.mrb[0].mxu0 %v1206
        %v1307 = vpop.f32.mrb[0].mxu0
        %v1308 = vadd.f32 0.0, %v1307
        %v1309 = vpop.f32.mrb[0].mxu0
        %v1310 = vpop.f32.mrb[0].mxu0
        %v1311 = vadd.f32 0.0, %v1310
        %v1312 = vpop.f32.mrb[0].mxu0
        %1313 = vmatprep.mubr.bf16.mxu0 0
        %1314 = vmatmul.mubr.bf16.gmra.mrb[0].mxu0 %v1207
        %v1315 = vpop.f32.mrb[0].mxu0
        %v1316 = vadd.f32 0.0, %v1315
        %v1317 = vpop.f32.mrb[0].mxu0
        %v1318 = vpop.f32.mrb[0].mxu0
        %v1319 = vadd.f32 0.0, %v1318
        %v1320 = vpop.f32.mrb[0].mxu0
        %1321 = vmatprep.mubr.bf16.mxu0 0
        %1322 = vmatmul.mubr.bf16.gmra.mrb[0].mxu0 %v1208
        %v1323 = vpop.f32.mrb[0].mxu0
        %v1324 = vadd.f32 0.0, %v1323
        %v1325 = vpop.f32.mrb[0].mxu0
        %v1326 = vpop.f32.mrb[0].mxu0
        %v1327 = vadd.f32 0.0, %v1326
        %v1328 = vpop.f32.mrb[0].mxu0
        %1329 = vmatprep.mubr.bf16.mxu0 0
        %1330 = vmatmul.mubr.bf16.gmra.mrb[0].mxu0 %v1209
        %v1331 = vpop.f32.mrb[0].mxu0
        %v1332 = vadd.f32 0.0, %v1331
        %v1333 = vpop.f32.mrb[0].mxu0
        %v1334 = vpop.f32.mrb[0].mxu0
        %v1335 = vadd.f32 0.0, %v1334
        %v1336 = vpop.f32.mrb[0].mxu0
        %1337 = vmatprep.mubr.bf16.mxu0 0
        %1338 = vmatmul.mubr.bf16.gmra.mrb[0].mxu0 %v1210
        %v1339 = vpop.f32.mrb[0].mxu0
        %v1340 = vadd.f32 0.0, %v1339
        %v1341 = vpop.f32.mrb[0].mxu0
        %v1342 = vpop.f32.mrb[0].mxu0
        %v1343 = vadd.f32 0.0, %v1342
        %v1344 = vpop.f32.mrb[0].mxu0
        %1345 = vmatprep.mubr.bf16.mxu0 0
        %1346 = vmatmul.mubr.bf16.gmra.mrb[0].mxu0 %v1211
        %v1347 = vpop.f32.mrb[0].mxu0
        %v1348 = vadd.f32 0.0, %v1347
        %v1349 = vpop.f32.mrb[0].mxu0
        %v1350 = vpop.f32.mrb[0].mxu0
        %v1351 = vadd.f32 0.0, %v1350
        %v1352 = vpop.f32.mrb[0].mxu0
        %1353 = vmatprep.mubr.bf16.mxu0 0
        %1354 = vmatmul.mubr.bf16.gmra.mrb[0].mxu0 %v1212
        %v1355 = vpop.f32.mrb[0].mxu0
        %v1356 = vadd.f32 0.0, %v1355
        %v1357 = vpop.f32.mrb[0].mxu0
        %v1358 = vpop.f32.mrb[0].mxu0
        %v1359 = vadd.f32 0.0, %v1358
        %v1360 = vpop.f32.mrb[0].mxu0
        %1361 = vmatprep.mubr.bf16.mxu0 0
        %1362 = vmatmul.mubr.bf16.gmra.mrb[0].mxu0 %v1213
        %v1363 = vpop.f32.mrb[0].mxu0
        %v1364 = vadd.f32 0.0, %v1363
        %v1365 = vpop.f32.mrb[0].mxu0
        %v1366 = vpop.f32.mrb[0].mxu0
        %v1367 = vadd.f32 0.0, %v1366
        %v1368 = vpop.f32.mrb[0].mxu0
        %1369 = vmatprep.mubr.bf16.mxu0 0
        %1370 = vmatmul.mubr.bf16.gmra.mrb[0].mxu0 %v1214
        %v1371 = vpop.f32.mrb[0].mxu0
        %v1372 = vadd.f32 0.0, %v1371
        %v1373 = vpop.f32.mrb[0].mxu0
        %v1374 = vpop.f32.mrb[0].mxu0
        %v1375 = vadd.f32 0.0, %v1374
        %v1376 = vpop.f32.mrb[0].mxu0
        %1377 = vmatprep.mubr.bf16.mxu0 0
        %1378 = vmatmul.mubr.bf16.gmra.mrb[0].mxu0 %v1215
        %v1379 = vpop.f32.mrb[0].mxu0
        %v1380 = vadd.f32 0.0, %v1379
        %v1381 = vpop.f32.mrb[0].mxu0
        %v1382 = vpop.f32.mrb[0].mxu0
        %v1383 = vadd.f32 0.0, %v1382
        %v1384 = vpop.f32.mrb[0].mxu0
        %1385 = vmatprep.mubr.bf16.mxu0 0
        %1386 = vmatmul.mubr.bf16.gmra.mrb[0].mxu0 %v1216
        %v1387 = vpop.f32.mrb[0].mxu0
        %v1388 = vadd.f32 0.0, %v1387
        %v1389 = vpop.f32.mrb[0].mxu0
        %v1390 = vpop.f32.mrb[0].mxu0
        %v1391 = vadd.f32 0.0, %v1390
        %v1392 = vpop.f32.mrb[0].mxu0
        %1393 = vdwg.mxu0
        %v1394 = vmax.f32 %v978, %v1268
        %v1395 = vmax.f32 %v981, %v1271
        %v1396 = vmax.f32 %v986, %v1276
        %v1397 = vmax.f32 %v989, %v1279
        %v1398 = vmax.f32 %v994, %v1284
        %v1399 = vmax.f32 %v997, %v1287
        %v1400 = vmax.f32 %v1002, %v1292
        %v1401 = vmax.f32 %v1005, %v1295
        %v1402 = vmax.f32 %v1010, %v1300
        %v1403 = vmax.f32 %v1013, %v1303
        %v1404 = vmax.f32 %v1018, %v1308
        %v1405 = vmax.f32 %v1021, %v1311
        %v1406 = vmax.f32 %v1026, %v1316
        %v1407 = vmax.f32 %v1029, %v1319
        %v1408 = vmax.f32 %v1034, %v1324
        %v1409 = vmax.f32 %v1037, %v1327
        %v1410 = vmax.f32 %v1042, %v1332
        %v1411 = vmax.f32 %v1045, %v1335
        %v1412 = vmax.f32 %v1050, %v1340
        %v1413 = vmax.f32 %v1053, %v1343
        %v1414 = vmax.f32 %v1058, %v1348
        %v1415 = vmax.f32 %v1061, %v1351
        %v1416 = vmax.f32 %v1066, %v1356
        %v1417 = vmax.f32 %v1069, %v1359
        %v1418 = vmax.f32 %v1074, %v1364
        %v1419 = vmax.f32 %v1077, %v1367
        %v1420 = vmax.f32 %v1082, %v1372
        %v1421 = vmax.f32 %v1085, %v1375
        %v1422 = vmax.f32 %v1090, %v1380
        %v1423 = vmax.f32 %v1093, %v1383
        %v1424 = vmax.f32 %v1098, %v1388
        %v1425 = vmax.f32 %v1101, %v1391
        %s1426 = scalar_lea.vmem %s720, 256 [#allocation2]
        %v1427 = vld [vmem:[%s1426] sm:$0xf]
        %v1428 = vld [vmem:[%s1426 + $0x4] sm:$0xf]
        %v1429 = vld [vmem:[%s1426 + $0x8] sm:$0xf]
        %v1430 = vld [vmem:[%s1426 + $0xc] sm:$0xf]
        %v1431 = vld [vmem:[%s1426 + $0x10] sm:$0xf]
        %v1432 = vld [vmem:[%s1426 + $0x14] sm:$0xf]
        %v1433 = vld [vmem:[%s1426 + $0x18] sm:$0xf]
        %v1434 = vld [vmem:[%s1426 + $0x1c] sm:$0xf]
        %v1435 = vld [vmem:[%s1426 + $0x20] sm:$0xf]
        %v1436 = vld [vmem:[%s1426 + $0x24] sm:$0xf]
        %v1437 = vld [vmem:[%s1426 + $0x28] sm:$0xf]
        %v1438 = vld [vmem:[%s1426 + $0x2c] sm:$0xf]
        %v1439 = vld [vmem:[%s1426 + $0x30] sm:$0xf]
        %v1440 = vld [vmem:[%s1426 + $0x34] sm:$0xf]
        %v1441 = vld [vmem:[%s1426 + $0x38] sm:$0xf]
        %v1442 = vld [vmem:[%s1426 + $0x3c] sm:$0xf]
        %v1443 = vld [vmem:[%s1426 + $0x40] sm:$0xf]
        %v1444 = vld [vmem:[%s1426 + $0x44] sm:$0xf]
        %v1445 = vld [vmem:[%s1426 + $0x48] sm:$0xf]
        %v1446 = vld [vmem:[%s1426 + $0x4c] sm:$0xf]
        %v1447 = vld [vmem:[%s1426 + $0x50] sm:$0xf]
        %v1448 = vld [vmem:[%s1426 + $0x54] sm:$0xf]
        %v1449 = vld [vmem:[%s1426 + $0x58] sm:$0xf]
        %v1450 = vld [vmem:[%s1426 + $0x5c] sm:$0xf]
        %v1451 = vld [vmem:[%s1426 + $0x60] sm:$0xf]
        %v1452 = vld [vmem:[%s1426 + $0x64] sm:$0xf]
        %v1453 = vld [vmem:[%s1426 + $0x68] sm:$0xf]
        %v1454 = vld [vmem:[%s1426 + $0x6c] sm:$0xf]
        %v1455 = vld [vmem:[%s1426 + $0x70] sm:$0xf]
        %v1456 = vld [vmem:[%s1426 + $0x74] sm:$0xf]
        %v1457 = vld [vmem:[%s1426 + $0x78] sm:$0xf]
        %v1458 = vld [vmem:[%s1426 + $0x7c] sm:$0xf]
        %v1491 = vunpack.c.l.b16 %v1427
        %v1492 = vunpack.c.l.b16 %v1428
        %v1493 = vunpack.c.l.b16 %v1429
        %v1494 = vunpack.c.l.b16 %v1430
        %v1495 = vunpack.c.l.b16 %v1431
        %v1496 = vunpack.c.l.b16 %v1432
        %v1497 = vunpack.c.l.b16 %v1433
        %v1498 = vunpack.c.l.b16 %v1434
        %v1499 = vunpack.c.l.b16 %v1435
        %v1500 = vunpack.c.l.b16 %v1436
        %v1501 = vunpack.c.l.b16 %v1437
        %v1502 = vunpack.c.l.b16 %v1438
        %v1503 = vunpack.c.l.b16 %v1439
        %v1504 = vunpack.c.l.b16 %v1440
        %v1505 = vunpack.c.l.b16 %v1441
        %v1506 = vunpack.c.l.b16 %v1442
        %v1507 = vunpack.c.l.b16 %v1443
        %v1508 = vunpack.c.l.b16 %v1444
        %v1509 = vunpack.c.l.b16 %v1445
        %v1510 = vunpack.c.l.b16 %v1446
        %v1511 = vunpack.c.l.b16 %v1447
        %v1512 = vunpack.c.l.b16 %v1448
        %v1513 = vunpack.c.l.b16 %v1449
        %v1514 = vunpack.c.l.b16 %v1450
        %v1515 = vunpack.c.l.b16 %v1451
        %v1516 = vunpack.c.l.b16 %v1452
        %v1517 = vunpack.c.l.b16 %v1453
        %v1518 = vunpack.c.l.b16 %v1454
        %v1519 = vunpack.c.l.b16 %v1455
        %v1520 = vunpack.c.l.b16 %v1456
        %v1521 = vunpack.c.l.b16 %v1457
        %v1522 = vunpack.c.l.b16 %v1458
        %v1523 = vpack.c.b16 %v1492, %v1491
        %v1524 = vpack.c.b16 %v1494, %v1493
        %v1525 = vpack.c.b16 %v1496, %v1495
        %v1526 = vpack.c.b16 %v1498, %v1497
        %v1527 = vpack.c.b16 %v1500, %v1499
        %v1528 = vpack.c.b16 %v1502, %v1501
        %v1529 = vpack.c.b16 %v1504, %v1503
        %v1530 = vpack.c.b16 %v1506, %v1505
        %v1531 = vpack.c.b16 %v1508, %v1507
        %v1532 = vpack.c.b16 %v1510, %v1509
        %v1533 = vpack.c.b16 %v1512, %v1511
        %v1534 = vpack.c.b16 %v1514, %v1513
        %v1535 = vpack.c.b16 %v1516, %v1515
        %v1536 = vpack.c.b16 %v1518, %v1517
        %v1537 = vpack.c.b16 %v1520, %v1519
        %v1538 = vpack.c.b16 %v1522, %v1521
        %1555 = vmatprep.subr.bf16.mxu0 0
        %1556 = vmatpush1.bf16.msra.mxu0 %v927
        %1557 = vmatprep.subr.bf16.mxu0 0
        %1558 = vmatpush1.bf16.msra.mxu0 %v928
        %1559 = vmatprep.subr.bf16.mxu0 0
        %1560 = vmatpush1.bf16.msra.mxu0 %v929
        %1561 = vmatprep.subr.bf16.mxu0 0
        %1562 = vmatpush1.bf16.msra.mxu0 %v930
        %1563 = vmatprep.subr.bf16.mxu0 0
        %1564 = vmatpush1.bf16.msra.mxu0 %v931
        %1565 = vmatprep.subr.bf16.mxu0 0
        %1566 = vmatpush1.bf16.msra.mxu0 %v932
        %1567 = vmatprep.subr.bf16.mxu0 0
        %1568 = vmatpush1.bf16.msra.mxu0 %v933
        %1569 = vmatprep.subr.bf16.mxu0 0
        %1570 = vmatpush1.bf16.msra.mxu0 %v934
        %1571 = vmatprep.subr.bf16.mxu0 0
        %1572 = vmatpush1.bf16.msra.mxu0 0
        %1573 = vmatprep.subr.bf16.mxu0 0
        %1574 = vmatpush1.bf16.msra.mxu0 0
        %1575 = vmatprep.subr.bf16.mxu0 0
        %1576 = vmatpush1.bf16.msra.mxu0 0
        %1577 = vmatprep.subr.bf16.mxu0 0
        %1578 = vmatpush1.bf16.msra.mxu0 0
        %1579 = vmatprep.subr.bf16.mxu0 0
        %1580 = vmatpush1.bf16.msra.mxu0 0
        %1581 = vmatprep.subr.bf16.mxu0 0
        %1582 = vmatpush1.bf16.msra.mxu0 0
        %1583 = vmatprep.subr.bf16.mxu0 0
        %1584 = vmatpush1.bf16.msra.mxu0 0
        %1585 = vmatprep.subr.bf16.mxu0 0
        %1586 = vmatpush1.bf16.msra.mxu0 0
        %1587 = vmatprep.mubr.bf16.mxu0 0
        %1588 = vmatmul.mubr.bf16.gmra.mrb[0].mxu0 %v1523
        %v1589 = vpop.f32.mrb[0].mxu0
        %v1590 = vadd.f32 0.0, %v1589
        %v1591 = vpop.f32.mrb[0].mxu0
        %v1592 = vpop.f32.mrb[0].mxu0
        %v1593 = vadd.f32 0.0, %v1592
        %v1594 = vpop.f32.mrb[0].mxu0
        %1595 = vmatprep.mubr.bf16.mxu0 0
        %1596 = vmatmul.mubr.bf16.gmra.mrb[0].mxu0 %v1524
        %v1597 = vpop.f32.mrb[0].mxu0
        %v1598 = vadd.f32 0.0, %v1597
        %v1599 = vpop.f32.mrb[0].mxu0
        %v1600 = vpop.f32.mrb[0].mxu0
        %v1601 = vadd.f32 0.0, %v1600
        %v1602 = vpop.f32.mrb[0].mxu0
        %1603 = vmatprep.mubr.bf16.mxu0 0
        %1604 = vmatmul.mubr.bf16.gmra.mrb[0].mxu0 %v1525
        %v1605 = vpop.f32.mrb[0].mxu0
        %v1606 = vadd.f32 0.0, %v1605
        %v1607 = vpop.f32.mrb[0].mxu0
        %v1608 = vpop.f32.mrb[0].mxu0
        %v1609 = vadd.f32 0.0, %v1608
        %v1610 = vpop.f32.mrb[0].mxu0
        %1611 = vmatprep.mubr.bf16.mxu0 0
        %1612 = vmatmul.mubr.bf16.gmra.mrb[0].mxu0 %v1526
        %v1613 = vpop.f32.mrb[0].mxu0
        %v1614 = vadd.f32 0.0, %v1613
        %v1615 = vpop.f32.mrb[0].mxu0
        %v1616 = vpop.f32.mrb[0].mxu0
        %v1617 = vadd.f32 0.0, %v1616
        %v1618 = vpop.f32.mrb[0].mxu0
        %1619 = vmatprep.mubr.bf16.mxu0 0
        %1620 = vmatmul.mubr.bf16.gmra.mrb[0].mxu0 %v1527
        %v1621 = vpop.f32.mrb[0].mxu0
        %v1622 = vadd.f32 0.0, %v1621
        %v1623 = vpop.f32.mrb[0].mxu0
        %v1624 = vpop.f32.mrb[0].mxu0
        %v1625 = vadd.f32 0.0, %v1624
        %v1626 = vpop.f32.mrb[0].mxu0
        %1627 = vmatprep.mubr.bf16.mxu0 0
        %1628 = vmatmul.mubr.bf16.gmra.mrb[0].mxu0 %v1528
        %v1629 = vpop.f32.mrb[0].mxu0
        %v1630 = vadd.f32 0.0, %v1629
        %v1631 = vpop.f32.mrb[0].mxu0
        %v1632 = vpop.f32.mrb[0].mxu0
        %v1633 = vadd.f32 0.0, %v1632
        %v1634 = vpop.f32.mrb[0].mxu0
        %1635 = vmatprep.mubr.bf16.mxu0 0
        %1636 = vmatmul.mubr.bf16.gmra.mrb[0].mxu0 %v1529
        %v1637 = vpop.f32.mrb[0].mxu0
        %v1638 = vadd.f32 0.0, %v1637
        %v1639 = vpop.f32.mrb[0].mxu0
        %v1640 = vpop.f32.mrb[0].mxu0
        %v1641 = vadd.f32 0.0, %v1640
        %v1642 = vpop.f32.mrb[0].mxu0
        %1643 = vmatprep.mubr.bf16.mxu0 0
        %1644 = vmatmul.mubr.bf16.gmra.mrb[0].mxu0 %v1530
        %v1645 = vpop.f32.mrb[0].mxu0
        %v1646 = vadd.f32 0.0, %v1645
        %v1647 = vpop.f32.mrb[0].mxu0
        %v1648 = vpop.f32.mrb[0].mxu0
        %v1649 = vadd.f32 0.0, %v1648
        %v1650 = vpop.f32.mrb[0].mxu0
        %1651 = vmatprep.mubr.bf16.mxu0 0
        %1652 = vmatmul.mubr.bf16.gmra.mrb[0].mxu0 %v1531
        %v1653 = vpop.f32.mrb[0].mxu0
        %v1654 = vadd.f32 0.0, %v1653
        %v1655 = vpop.f32.mrb[0].mxu0
        %v1656 = vpop.f32.mrb[0].mxu0
        %v1657 = vadd.f32 0.0, %v1656
        %v1658 = vpop.f32.mrb[0].mxu0
        %1659 = vmatprep.mubr.bf16.mxu0 0
        %1660 = vmatmul.mubr.bf16.gmra.mrb[0].mxu0 %v1532
        %v1661 = vpop.f32.mrb[0].mxu0
        %v1662 = vadd.f32 0.0, %v1661
        %v1663 = vpop.f32.mrb[0].mxu0
        %v1664 = vpop.f32.mrb[0].mxu0
        %v1665 = vadd.f32 0.0, %v1664
        %v1666 = vpop.f32.mrb[0].mxu0
        %1667 = vmatprep.mubr.bf16.mxu0 0
        %1668 = vmatmul.mubr.bf16.gmra.mrb[0].mxu0 %v1533
        %v1669 = vpop.f32.mrb[0].mxu0
        %v1670 = vadd.f32 0.0, %v1669
        %v1671 = vpop.f32.mrb[0].mxu0
        %v1672 = vpop.f32.mrb[0].mxu0
        %v1673 = vadd.f32 0.0, %v1672
        %v1674 = vpop.f32.mrb[0].mxu0
        %1675 = vmatprep.mubr.bf16.mxu0 0
        %1676 = vmatmul.mubr.bf16.gmra.mrb[0].mxu0 %v1534
        %v1677 = vpop.f32.mrb[0].mxu0
        %v1678 = vadd.f32 0.0, %v1677
        %v1679 = vpop.f32.mrb[0].mxu0
        %v1680 = vpop.f32.mrb[0].mxu0
        %v1681 = vadd.f32 0.0, %v1680
        %v1682 = vpop.f32.mrb[0].mxu0
        %1683 = vmatprep.mubr.bf16.mxu0 0
        %1684 = vmatmul.mubr.bf16.gmra.mrb[0].mxu0 %v1535
        %v1685 = vpop.f32.mrb[0].mxu0
        %v1686 = vadd.f32 0.0, %v1685
        %v1687 = vpop.f32.mrb[0].mxu0
        %v1688 = vpop.f32.mrb[0].mxu0
        %v1689 = vadd.f32 0.0, %v1688
        %v1690 = vpop.f32.mrb[0].mxu0
        %1691 = vmatprep.mubr.bf16.mxu0 0
        %1692 = vmatmul.mubr.bf16.gmra.mrb[0].mxu0 %v1536
        %v1693 = vpop.f32.mrb[0].mxu0
        %v1694 = vadd.f32 0.0, %v1693
        %v1695 = vpop.f32.mrb[0].mxu0
        %v1696 = vpop.f32.mrb[0].mxu0
        %v1697 = vadd.f32 0.0, %v1696
        %v1698 = vpop.f32.mrb[0].mxu0
        %1699 = vmatprep.mubr.bf16.mxu0 0
        %1700 = vmatmul.mubr.bf16.gmra.mrb[0].mxu0 %v1537
        %v1701 = vpop.f32.mrb[0].mxu0
        %v1702 = vadd.f32 0.0, %v1701
        %v1703 = vpop.f32.mrb[0].mxu0
        %v1704 = vpop.f32.mrb[0].mxu0
        %v1705 = vadd.f32 0.0, %v1704
        %v1706 = vpop.f32.mrb[0].mxu0
        %1707 = vmatprep.mubr.bf16.mxu0 0
        %1708 = vmatmul.mubr.bf16.gmra.mrb[0].mxu0 %v1538
        %v1709 = vpop.f32.mrb[0].mxu0
        %v1710 = vadd.f32 0.0, %v1709
        %v1711 = vpop.f32.mrb[0].mxu0
        %v1712 = vpop.f32.mrb[0].mxu0
        %v1713 = vadd.f32 0.0, %v1712
        %v1714 = vpop.f32.mrb[0].mxu0
        %1715 = vdwg.mxu0
        %v1716 = vmax.f32 %v1394, %v1590
        %v1717 = vmax.f32 %v1395, %v1593
        %v1718 = vmax.f32 %v1396, %v1598
        %v1719 = vmax.f32 %v1397, %v1601
        %v1720 = vmax.f32 %v1398, %v1606
        %v1721 = vmax.f32 %v1399, %v1609
        %v1722 = vmax.f32 %v1400, %v1614
        %v1723 = vmax.f32 %v1401, %v1617
        %v1724 = vmax.f32 %v1402, %v1622
        %v1725 = vmax.f32 %v1403, %v1625
        %v1726 = vmax.f32 %v1404, %v1630
        %v1727 = vmax.f32 %v1405, %v1633
        %v1728 = vmax.f32 %v1406, %v1638
        %v1729 = vmax.f32 %v1407, %v1641
        %v1730 = vmax.f32 %v1408, %v1646
        %v1731 = vmax.f32 %v1409, %v1649
        %v1732 = vmax.f32 %v1410, %v1654
        %v1733 = vmax.f32 %v1411, %v1657
        %v1734 = vmax.f32 %v1412, %v1662
        %v1735 = vmax.f32 %v1413, %v1665
        %v1736 = vmax.f32 %v1414, %v1670
        %v1737 = vmax.f32 %v1415, %v1673
        %v1738 = vmax.f32 %v1416, %v1678
        %v1739 = vmax.f32 %v1417, %v1681
        %v1740 = vmax.f32 %v1418, %v1686
        %v1741 = vmax.f32 %v1419, %v1689
        %v1742 = vmax.f32 %v1420, %v1694
        %v1743 = vmax.f32 %v1421, %v1697
        %v1744 = vmax.f32 %v1422, %v1702
        %v1745 = vmax.f32 %v1423, %v1705
        %v1746 = vmax.f32 %v1424, %v1710
        %v1747 = vmax.f32 %v1425, %v1713
        %s1748 = scalar_lea.vmem %s720, 384 [#allocation2]
        %v1749 = vld [vmem:[%s1748] sm:$0xf]
        %v1750 = vld [vmem:[%s1748 + $0x4] sm:$0xf]
        %v1751 = vld [vmem:[%s1748 + $0x8] sm:$0xf]
        %v1752 = vld [vmem:[%s1748 + $0xc] sm:$0xf]
        %v1753 = vld [vmem:[%s1748 + $0x10] sm:$0xf]
        %v1754 = vld [vmem:[%s1748 + $0x14] sm:$0xf]
        %v1755 = vld [vmem:[%s1748 + $0x18] sm:$0xf]
        %v1756 = vld [vmem:[%s1748 + $0x1c] sm:$0xf]
        %v1757 = vld [vmem:[%s1748 + $0x20] sm:$0xf]
        %v1758 = vld [vmem:[%s1748 + $0x24] sm:$0xf]
        %v1759 = vld [vmem:[%s1748 + $0x28] sm:$0xf]
        %v1760 = vld [vmem:[%s1748 + $0x2c] sm:$0xf]
        %v1761 = vld [vmem:[%s1748 + $0x30] sm:$0xf]
        %v1762 = vld [vmem:[%s1748 + $0x34] sm:$0xf]
        %v1763 = vld [vmem:[%s1748 + $0x38] sm:$0xf]
        %v1764 = vld [vmem:[%s1748 + $0x3c] sm:$0xf]
        %v1765 = vld [vmem:[%s1748 + $0x40] sm:$0xf]
        %v1766 = vld [vmem:[%s1748 + $0x44] sm:$0xf]
        %v1767 = vld [vmem:[%s1748 + $0x48] sm:$0xf]
        %v1768 = vld [vmem:[%s1748 + $0x4c] sm:$0xf]
        %v1769 = vld [vmem:[%s1748 + $0x50] sm:$0xf]
        %v1770 = vld [vmem:[%s1748 + $0x54] sm:$0xf]
        %v1771 = vld [vmem:[%s1748 + $0x58] sm:$0xf]
        %v1772 = vld [vmem:[%s1748 + $0x5c] sm:$0xf]
        %v1773 = vld [vmem:[%s1748 + $0x60] sm:$0xf]
        %v1774 = vld [vmem:[%s1748 + $0x64] sm:$0xf]
        %v1775 = vld [vmem:[%s1748 + $0x68] sm:$0xf]
        %v1776 = vld [vmem:[%s1748 + $0x6c] sm:$0xf]
        %v1777 = vld [vmem:[%s1748 + $0x70] sm:$0xf]
        %v1778 = vld [vmem:[%s1748 + $0x74] sm:$0xf]
        %v1779 = vld [vmem:[%s1748 + $0x78] sm:$0xf]
        %v1780 = vld [vmem:[%s1748 + $0x7c] sm:$0xf]
        %v1813 = vunpack.c.l.b16 %v1749
        %v1814 = vunpack.c.l.b16 %v1750
        %v1815 = vunpack.c.l.b16 %v1751
        %v1816 = vunpack.c.l.b16 %v1752
        %v1817 = vunpack.c.l.b16 %v1753
        %v1818 = vunpack.c.l.b16 %v1754
        %v1819 = vunpack.c.l.b16 %v1755
        %v1820 = vunpack.c.l.b16 %v1756
        %v1821 = vunpack.c.l.b16 %v1757
        %v1822 = vunpack.c.l.b16 %v1758
        %v1823 = vunpack.c.l.b16 %v1759
        %v1824 = vunpack.c.l.b16 %v1760
        %v1825 = vunpack.c.l.b16 %v1761
        %v1826 = vunpack.c.l.b16 %v1762
        %v1827 = vunpack.c.l.b16 %v1763
        %v1828 = vunpack.c.l.b16 %v1764
        %v1829 = vunpack.c.l.b16 %v1765
        %v1830 = vunpack.c.l.b16 %v1766
        %v1831 = vunpack.c.l.b16 %v1767
        %v1832 = vunpack.c.l.b16 %v1768
        %v1833 = vunpack.c.l.b16 %v1769
        %v1834 = vunpack.c.l.b16 %v1770
        %v1835 = vunpack.c.l.b16 %v1771
        %v1836 = vunpack.c.l.b16 %v1772
        %v1837 = vunpack.c.l.b16 %v1773
        %v1838 = vunpack.c.l.b16 %v1774
        %v1839 = vunpack.c.l.b16 %v1775
        %v1840 = vunpack.c.l.b16 %v1776
        %v1841 = vunpack.c.l.b16 %v1777
        %v1842 = vunpack.c.l.b16 %v1778
        %v1843 = vunpack.c.l.b16 %v1779
        %v1844 = vunpack.c.l.b16 %v1780
        %v1845 = vpack.c.b16 %v1814, %v1813
        %v1846 = vpack.c.b16 %v1816, %v1815
        %v1847 = vpack.c.b16 %v1818, %v1817
        %v1848 = vpack.c.b16 %v1820, %v1819
        %v1849 = vpack.c.b16 %v1822, %v1821
        %v1850 = vpack.c.b16 %v1824, %v1823
        %v1851 = vpack.c.b16 %v1826, %v1825
        %v1852 = vpack.c.b16 %v1828, %v1827
        %v1853 = vpack.c.b16 %v1830, %v1829
        %v1854 = vpack.c.b16 %v1832, %v1831
        %v1855 = vpack.c.b16 %v1834, %v1833
        %v1856 = vpack.c.b16 %v1836, %v1835
        %v1857 = vpack.c.b16 %v1838, %v1837
        %v1858 = vpack.c.b16 %v1840, %v1839
        %v1859 = vpack.c.b16 %v1842, %v1841
        %v1860 = vpack.c.b16 %v1844, %v1843
        %1877 = vmatprep.subr.bf16.mxu0 0
        %1878 = vmatpush1.bf16.msra.mxu0 %v927
        %1879 = vmatprep.subr.bf16.mxu0 0
        %1880 = vmatpush1.bf16.msra.mxu0 %v928
        %1881 = vmatprep.subr.bf16.mxu0 0
        %1882 = vmatpush1.bf16.msra.mxu0 %v929
        %1883 = vmatprep.subr.bf16.mxu0 0
        %1884 = vmatpush1.bf16.msra.mxu0 %v930
        %1885 = vmatprep.subr.bf16.mxu0 0
        %1886 = vmatpush1.bf16.msra.mxu0 %v931
        %1887 = vmatprep.subr.bf16.mxu0 0
        %1888 = vmatpush1.bf16.msra.mxu0 %v932
        %1889 = vmatprep.subr.bf16.mxu0 0
        %1890 = vmatpush1.bf16.msra.mxu0 %v933
        %1891 = vmatprep.subr.bf16.mxu0 0
        %1892 = vmatpush1.bf16.msra.mxu0 %v934
        %1893 = vmatprep.subr.bf16.mxu0 0
        %1894 = vmatpush1.bf16.msra.mxu0 0
        %1895 = vmatprep.subr.bf16.mxu0 0
        %1896 = vmatpush1.bf16.msra.mxu0 0
        %1897 = vmatprep.subr.bf16.mxu0 0
        %1898 = vmatpush1.bf16.msra.mxu0 0
        %1899 = vmatprep.subr.bf16.mxu0 0
        %1900 = vmatpush1.bf16.msra.mxu0 0
        %1901 = vmatprep.subr.bf16.mxu0 0
        %1902 = vmatpush1.bf16.msra.mxu0 0
        %1903 = vmatprep.subr.bf16.mxu0 0
        %1904 = vmatpush1.bf16.msra.mxu0 0
        %1905 = vmatprep.subr.bf16.mxu0 0
        %1906 = vmatpush1.bf16.msra.mxu0 0
        %1907 = vmatprep.subr.bf16.mxu0 0
        %1908 = vmatpush1.bf16.msra.mxu0 0
        %1909 = vmatprep.mubr.bf16.mxu0 0
        %1910 = vmatmul.mubr.bf16.gmra.mrb[0].mxu0 %v1845
        %v1911 = vpop.f32.mrb[0].mxu0
        %v1912 = vadd.f32 0.0, %v1911
        %v1913 = vpop.f32.mrb[0].mxu0
        %v1914 = vpop.f32.mrb[0].mxu0
        %v1915 = vadd.f32 0.0, %v1914
        %v1916 = vpop.f32.mrb[0].mxu0
        %1917 = vmatprep.mubr.bf16.mxu0 0
        %1918 = vmatmul.mubr.bf16.gmra.mrb[0].mxu0 %v1846
        %v1919 = vpop.f32.mrb[0].mxu0
        %v1920 = vadd.f32 0.0, %v1919
        %v1921 = vpop.f32.mrb[0].mxu0
        %v1922 = vpop.f32.mrb[0].mxu0
        %v1923 = vadd.f32 0.0, %v1922
        %v1924 = vpop.f32.mrb[0].mxu0
        %1925 = vmatprep.mubr.bf16.mxu0 0
        %1926 = vmatmul.mubr.bf16.gmra.mrb[0].mxu0 %v1847
        %v1927 = vpop.f32.mrb[0].mxu0
        %v1928 = vadd.f32 0.0, %v1927
        %v1929 = vpop.f32.mrb[0].mxu0
        %v1930 = vpop.f32.mrb[0].mxu0
        %v1931 = vadd.f32 0.0, %v1930
        %v1932 = vpop.f32.mrb[0].mxu0
        %1933 = vmatprep.mubr.bf16.mxu0 0
        %1934 = vmatmul.mubr.bf16.gmra.mrb[0].mxu0 %v1848
        %v1935 = vpop.f32.mrb[0].mxu0
        %v1936 = vadd.f32 0.0, %v1935
        %v1937 = vpop.f32.mrb[0].mxu0
        %v1938 = vpop.f32.mrb[0].mxu0
        %v1939 = vadd.f32 0.0, %v1938
        %v1940 = vpop.f32.mrb[0].mxu0
        %1941 = vmatprep.mubr.bf16.mxu0 0
        %1942 = vmatmul.mubr.bf16.gmra.mrb[0].mxu0 %v1849
        %v1943 = vpop.f32.mrb[0].mxu0
        %v1944 = vadd.f32 0.0, %v1943
        %v1945 = vpop.f32.mrb[0].mxu0
        %v1946 = vpop.f32.mrb[0].mxu0
        %v1947 = vadd.f32 0.0, %v1946
        %v1948 = vpop.f32.mrb[0].mxu0
        %1949 = vmatprep.mubr.bf16.mxu0 0
        %1950 = vmatmul.mubr.bf16.gmra.mrb[0].mxu0 %v1850
        %v1951 = vpop.f32.mrb[0].mxu0
        %v1952 = vadd.f32 0.0, %v1951
        %v1953 = vpop.f32.mrb[0].mxu0
        %v1954 = vpop.f32.mrb[0].mxu0
        %v1955 = vadd.f32 0.0, %v1954
        %v1956 = vpop.f32.mrb[0].mxu0
        %1957 = vmatprep.mubr.bf16.mxu0 0
        %1958 = vmatmul.mubr.bf16.gmra.mrb[0].mxu0 %v1851
        %v1959 = vpop.f32.mrb[0].mxu0
        %v1960 = vadd.f32 0.0, %v1959
        %v1961 = vpop.f32.mrb[0].mxu0
        %v1962 = vpop.f32.mrb[0].mxu0
        %v1963 = vadd.f32 0.0, %v1962
        %v1964 = vpop.f32.mrb[0].mxu0
        %1965 = vmatprep.mubr.bf16.mxu0 0
        %1966 = vmatmul.mubr.bf16.gmra.mrb[0].mxu0 %v1852
        %v1967 = vpop.f32.mrb[0].mxu0
        %v1968 = vadd.f32 0.0, %v1967
        %v1969 = vpop.f32.mrb[0].mxu0
        %v1970 = vpop.f32.mrb[0].mxu0
        %v1971 = vadd.f32 0.0, %v1970
        %v1972 = vpop.f32.mrb[0].mxu0
        %1973 = vmatprep.mubr.bf16.mxu0 0
        %1974 = vmatmul.mubr.bf16.gmra.mrb[0].mxu0 %v1853
        %v1975 = vpop.f32.mrb[0].mxu0
        %v1976 = vadd.f32 0.0, %v1975
        %v1977 = vpop.f32.mrb[0].mxu0
        %v1978 = vpop.f32.mrb[0].mxu0
        %v1979 = vadd.f32 0.0, %v1978
        %v1980 = vpop.f32.mrb[0].mxu0
        %1981 = vmatprep.mubr.bf16.mxu0 0
        %1982 = vmatmul.mubr.bf16.gmra.mrb[0].mxu0 %v1854
        %v1983 = vpop.f32.mrb[0].mxu0
        %v1984 = vadd.f32 0.0, %v1983
        %v1985 = vpop.f32.mrb[0].mxu0
        %v1986 = vpop.f32.mrb[0].mxu0
        %v1987 = vadd.f32 0.0, %v1986
        %v1988 = vpop.f32.mrb[0].mxu0
        %1989 = vmatprep.mubr.bf16.mxu0 0
        %1990 = vmatmul.mubr.bf16.gmra.mrb[0].mxu0 %v1855
        %v1991 = vpop.f32.mrb[0].mxu0
        %v1992 = vadd.f32 0.0, %v1991
        %v1993 = vpop.f32.mrb[0].mxu0
        %v1994 = vpop.f32.mrb[0].mxu0
        %v1995 = vadd.f32 0.0, %v1994
        %v1996 = vpop.f32.mrb[0].mxu0
        %1997 = vmatprep.mubr.bf16.mxu0 0
        %1998 = vmatmul.mubr.bf16.gmra.mrb[0].mxu0 %v1856
        %v1999 = vpop.f32.mrb[0].mxu0
        %v2000 = vadd.f32 0.0, %v1999
        %v2001 = vpop.f32.mrb[0].mxu0
        %v2002 = vpop.f32.mrb[0].mxu0
        %v2003 = vadd.f32 0.0, %v2002
        %v2004 = vpop.f32.mrb[0].mxu0
        %2005 = vmatprep.mubr.bf16.mxu0 0
        %2006 = vmatmul.mubr.bf16.gmra.mrb[0].mxu0 %v1857
        %v2007 = vpop.f32.mrb[0].mxu0
        %v2008 = vadd.f32 0.0, %v2007
        %v2009 = vpop.f32.mrb[0].mxu0
        %v2010 = vpop.f32.mrb[0].mxu0
        %v2011 = vadd.f32 0.0, %v2010
        %v2012 = vpop.f32.mrb[0].mxu0
        %2013 = vmatprep.mubr.bf16.mxu0 0
        %2014 = vmatmul.mubr.bf16.gmra.mrb[0].mxu0 %v1858
        %v2015 = vpop.f32.mrb[0].mxu0
        %v2016 = vadd.f32 0.0, %v2015
        %v2017 = vpop.f32.mrb[0].mxu0
        %v2018 = vpop.f32.mrb[0].mxu0
        %v2019 = vadd.f32 0.0, %v2018
        %v2020 = vpop.f32.mrb[0].mxu0
        %2021 = vmatprep.mubr.bf16.mxu0 0
        %2022 = vmatmul.mubr.bf16.gmra.mrb[0].mxu0 %v1859
        %v2023 = vpop.f32.mrb[0].mxu0
        %v2024 = vadd.f32 0.0, %v2023
        %v2025 = vpop.f32.mrb[0].mxu0
        %v2026 = vpop.f32.mrb[0].mxu0
        %v2027 = vadd.f32 0.0, %v2026
        %v2028 = vpop.f32.mrb[0].mxu0
        %2029 = vmatprep.mubr.bf16.mxu0 0
        %2030 = vmatmul.mubr.bf16.gmra.mrb[0].mxu0 %v1860
        %v2031 = vpop.f32.mrb[0].mxu0
        %v2032 = vadd.f32 0.0, %v2031
        %v2033 = vpop.f32.mrb[0].mxu0
        %v2034 = vpop.f32.mrb[0].mxu0
        %v2035 = vadd.f32 0.0, %v2034
        %v2036 = vpop.f32.mrb[0].mxu0
        %2037 = vdwg.mxu0
        %v2038 = vmax.f32 %v1716, %v1912
        %v2039 = vmax.f32 %v1717, %v1915
        %v2040 = vmax.f32 %v1718, %v1920
        %v2041 = vmax.f32 %v1719, %v1923
        %v2042 = vmax.f32 %v1720, %v1928
        %v2043 = vmax.f32 %v1721, %v1931
        %v2044 = vmax.f32 %v1722, %v1936
        %v2045 = vmax.f32 %v1723, %v1939
        %v2046 = vmax.f32 %v1724, %v1944
        %v2047 = vmax.f32 %v1725, %v1947
        %v2048 = vmax.f32 %v1726, %v1952
        %v2049 = vmax.f32 %v1727, %v1955
        %v2050 = vmax.f32 %v1728, %v1960
        %v2051 = vmax.f32 %v1729, %v1963
        %v2052 = vmax.f32 %v1730, %v1968
        %v2053 = vmax.f32 %v1731, %v1971
        %v2054 = vmax.f32 %v1732, %v1976
        %v2055 = vmax.f32 %v1733, %v1979
        %v2056 = vmax.f32 %v1734, %v1984
        %v2057 = vmax.f32 %v1735, %v1987
        %v2058 = vmax.f32 %v1736, %v1992
        %v2059 = vmax.f32 %v1737, %v1995
        %v2060 = vmax.f32 %v1738, %v2000
        %v2061 = vmax.f32 %v1739, %v2003
        %v2062 = vmax.f32 %v1740, %v2008
        %v2063 = vmax.f32 %v1741, %v2011
        %v2064 = vmax.f32 %v1742, %v2016
        %v2065 = vmax.f32 %v1743, %v2019
        %v2066 = vmax.f32 %v1744, %v2024
        %v2067 = vmax.f32 %v1745, %v2027
        %v2068 = vmax.f32 %v1746, %v2032
        %v2069 = vmax.f32 %v1747, %v2035
        %v2070 = vld [vmem:[%s2] sm:$0x1]
        %v2072 = vlaneseq
        %v2073 = vshrl.u32 %v2072, 7
        %v2074 = vsub.s32 0, %v2073
        %v2075 = vrot.slane %v2070, %v2074
        %v2077 = vmul.f32 %v2038, %v2075
        %v2078 = vmul.f32 %v2039, %v2075
        %v2079 = vmul.f32 %v2040, %v2075
        %v2080 = vmul.f32 %v2041, %v2075
        %v2081 = vmul.f32 %v2042, %v2075
        %v2082 = vmul.f32 %v2043, %v2075
        %v2083 = vmul.f32 %v2044, %v2075
        %v2084 = vmul.f32 %v2045, %v2075
        %v2085 = vmul.f32 %v2046, %v2075
        %v2086 = vmul.f32 %v2047, %v2075
        %v2087 = vmul.f32 %v2048, %v2075
        %v2088 = vmul.f32 %v2049, %v2075
        %v2089 = vmul.f32 %v2050, %v2075
        %v2090 = vmul.f32 %v2051, %v2075
        %v2091 = vmul.f32 %v2052, %v2075
        %v2092 = vmul.f32 %v2053, %v2075
        %v2093 = vmul.f32 %v2054, %v2075
        %v2094 = vmul.f32 %v2055, %v2075
        %v2095 = vmul.f32 %v2056, %v2075
        %v2096 = vmul.f32 %v2057, %v2075
        %v2097 = vmul.f32 %v2058, %v2075
        %v2098 = vmul.f32 %v2059, %v2075
        %v2099 = vmul.f32 %v2060, %v2075
        %v2100 = vmul.f32 %v2061, %v2075
        %v2101 = vmul.f32 %v2062, %v2075
        %v2102 = vmul.f32 %v2063, %v2075
        %v2103 = vmul.f32 %v2064, %v2075
        %v2104 = vmul.f32 %v2065, %v2075
        %v2105 = vmul.f32 %v2066, %v2075
        %v2106 = vmul.f32 %v2067, %v2075
        %v2107 = vmul.f32 %v2068, %v2075
        %v2108 = vmul.f32 %v2069, %v2075
        %v2109 = vld [vmem:[%s3] sm:$0x1]
        %v2111 = vlaneseq
        %v2112 = vshrl.u32 %v2111, 7
        %v2113 = vsub.s32 0, %v2112
        %v2114 = vrot.slane %v2109, %v2113
        %v2116 = vadd.f32 %v2077, %v2114
        %v2117 = vadd.f32 %v2078, %v2114
        %v2118 = vadd.f32 %v2079, %v2114
        %v2119 = vadd.f32 %v2080, %v2114
        %v2120 = vadd.f32 %v2081, %v2114
        %v2121 = vadd.f32 %v2082, %v2114
        %v2122 = vadd.f32 %v2083, %v2114
        %v2123 = vadd.f32 %v2084, %v2114
        %v2124 = vadd.f32 %v2085, %v2114
        %v2125 = vadd.f32 %v2086, %v2114
        %v2126 = vadd.f32 %v2087, %v2114
        %v2127 = vadd.f32 %v2088, %v2114
        %v2128 = vadd.f32 %v2089, %v2114
        %v2129 = vadd.f32 %v2090, %v2114
        %v2130 = vadd.f32 %v2091, %v2114
        %v2131 = vadd.f32 %v2092, %v2114
        %v2132 = vadd.f32 %v2093, %v2114
        %v2133 = vadd.f32 %v2094, %v2114
        %v2134 = vadd.f32 %v2095, %v2114
        %v2135 = vadd.f32 %v2096, %v2114
        %v2136 = vadd.f32 %v2097, %v2114
        %v2137 = vadd.f32 %v2098, %v2114
        %v2138 = vadd.f32 %v2099, %v2114
        %v2139 = vadd.f32 %v2100, %v2114
        %v2140 = vadd.f32 %v2101, %v2114
        %v2141 = vadd.f32 %v2102, %v2114
        %v2142 = vadd.f32 %v2103, %v2114
        %v2143 = vadd.f32 %v2104, %v2114
        %v2144 = vadd.f32 %v2105, %v2114
        %v2145 = vadd.f32 %v2106, %v2114
        %v2146 = vadd.f32 %v2107, %v2114
        %v2147 = vadd.f32 %v2108, %v2114
        %v2148 = vmax.f32 %v2116, 0.0
        %v2149 = vmax.f32 %v2117, 0.0
        %v2150 = vmax.f32 %v2118, 0.0
        %v2151 = vmax.f32 %v2119, 0.0
        %v2152 = vmax.f32 %v2120, 0.0
        %v2153 = vmax.f32 %v2121, 0.0
        %v2154 = vmax.f32 %v2122, 0.0
        %v2155 = vmax.f32 %v2123, 0.0
        %v2156 = vmax.f32 %v2124, 0.0
        %v2157 = vmax.f32 %v2125, 0.0
        %v2158 = vmax.f32 %v2126, 0.0
        %v2159 = vmax.f32 %v2127, 0.0
        %v2160 = vmax.f32 %v2128, 0.0
        %v2161 = vmax.f32 %v2129, 0.0
        %v2162 = vmax.f32 %v2130, 0.0
        %v2163 = vmax.f32 %v2131, 0.0
        %v2164 = vmax.f32 %v2132, 0.0
        %v2165 = vmax.f32 %v2133, 0.0
        %v2166 = vmax.f32 %v2134, 0.0
        %v2167 = vmax.f32 %v2135, 0.0
        %v2168 = vmax.f32 %v2136, 0.0
        %v2169 = vmax.f32 %v2137, 0.0
        %v2170 = vmax.f32 %v2138, 0.0
        %v2171 = vmax.f32 %v2139, 0.0
        %v2172 = vmax.f32 %v2140, 0.0
        %v2173 = vmax.f32 %v2141, 0.0
        %v2174 = vmax.f32 %v2142, 0.0
        %v2175 = vmax.f32 %v2143, 0.0
        %v2176 = vmax.f32 %v2144, 0.0
        %v2177 = vmax.f32 %v2145, 0.0
        %v2178 = vmax.f32 %v2146, 0.0
        %v2179 = vmax.f32 %v2147, 0.0
        %v2180 = vpack.c.bf16 %v2149, %v2148
        %v2181 = vpack.c.bf16 %v2151, %v2150
        %v2182 = vpack.c.bf16 %v2153, %v2152
        %v2183 = vpack.c.bf16 %v2155, %v2154
        %v2184 = vpack.c.bf16 %v2157, %v2156
        %v2185 = vpack.c.bf16 %v2159, %v2158
        %v2186 = vpack.c.bf16 %v2161, %v2160
        %v2187 = vpack.c.bf16 %v2163, %v2162
        %v2188 = vpack.c.bf16 %v2165, %v2164
        %v2189 = vpack.c.bf16 %v2167, %v2166
        %v2190 = vpack.c.bf16 %v2169, %v2168
        %v2191 = vpack.c.bf16 %v2171, %v2170
        %v2192 = vpack.c.bf16 %v2173, %v2172
        %v2193 = vpack.c.bf16 %v2175, %v2174
        %v2194 = vpack.c.bf16 %v2177, %v2176
        %v2195 = vpack.c.bf16 %v2179, %v2178
        %v2212 = vunpack.c.l.b16 %v2180
        %v2213 = vunpack.c.h.b16 %v2180
        %v2214 = vunpack.c.l.b16 %v2181
        %v2215 = vunpack.c.h.b16 %v2181
        %v2216 = vunpack.c.l.b16 %v2182
        %v2217 = vunpack.c.h.b16 %v2182
        %v2218 = vunpack.c.l.b16 %v2183
        %v2219 = vunpack.c.h.b16 %v2183
        %v2220 = vunpack.c.l.b16 %v2184
        %v2221 = vunpack.c.h.b16 %v2184
        %v2222 = vunpack.c.l.b16 %v2185
        %v2223 = vunpack.c.h.b16 %v2185
        %v2224 = vunpack.c.l.b16 %v2186
        %v2225 = vunpack.c.h.b16 %v2186
        %v2226 = vunpack.c.l.b16 %v2187
        %v2227 = vunpack.c.h.b16 %v2187
        %v2228 = vunpack.c.l.b16 %v2188
        %v2229 = vunpack.c.h.b16 %v2188
        %v2230 = vunpack.c.l.b16 %v2189
        %v2231 = vunpack.c.h.b16 %v2189
        %v2232 = vunpack.c.l.b16 %v2190
        %v2233 = vunpack.c.h.b16 %v2190
        %v2234 = vunpack.c.l.b16 %v2191
        %v2235 = vunpack.c.h.b16 %v2191
        %v2236 = vunpack.c.l.b16 %v2192
        %v2237 = vunpack.c.h.b16 %v2192
        %v2238 = vunpack.c.l.b16 %v2193
        %v2239 = vunpack.c.h.b16 %v2193
        %v2240 = vunpack.c.l.b16 %v2194
        %v2241 = vunpack.c.h.b16 %v2194
        %v2242 = vunpack.c.l.b16 %v2195
        %v2243 = vunpack.c.h.b16 %v2195
        %v2244 = vpack.c.b16 %v2212, %v2212
        %v2245 = vpack.c.b16 %v2213, %v2213
        %v2246 = vpack.c.b16 %v2214, %v2214
        %v2247 = vpack.c.b16 %v2215, %v2215
        %v2248 = vpack.c.b16 %v2216, %v2216
        %v2249 = vpack.c.b16 %v2217, %v2217
        %v2250 = vpack.c.b16 %v2218, %v2218
        %v2251 = vpack.c.b16 %v2219, %v2219
        %v2252 = vpack.c.b16 %v2220, %v2220
        %v2253 = vpack.c.b16 %v2221, %v2221
        %v2254 = vpack.c.b16 %v2222, %v2222
        %v2255 = vpack.c.b16 %v2223, %v2223
        %v2256 = vpack.c.b16 %v2224, %v2224
        %v2257 = vpack.c.b16 %v2225, %v2225
        %v2258 = vpack.c.b16 %v2226, %v2226
        %v2259 = vpack.c.b16 %v2227, %v2227
        %v2260 = vpack.c.b16 %v2228, %v2228
        %v2261 = vpack.c.b16 %v2229, %v2229
        %v2262 = vpack.c.b16 %v2230, %v2230
        %v2263 = vpack.c.b16 %v2231, %v2231
        %v2264 = vpack.c.b16 %v2232, %v2232
        %v2265 = vpack.c.b16 %v2233, %v2233
        %v2266 = vpack.c.b16 %v2234, %v2234
        %v2267 = vpack.c.b16 %v2235, %v2235
        %v2268 = vpack.c.b16 %v2236, %v2236
        %v2269 = vpack.c.b16 %v2237, %v2237
        %v2270 = vpack.c.b16 %v2238, %v2238
        %v2271 = vpack.c.b16 %v2239, %v2239
        %v2272 = vpack.c.b16 %v2240, %v2240
        %v2273 = vpack.c.b16 %v2241, %v2241
        %v2274 = vpack.c.b16 %v2242, %v2242
        %v2275 = vpack.c.b16 %v2243, %v2243
        %2308 = vst [vmem:[%s748] sm:$0xf] %v2244
        %2309 = vst [vmem:[%s748 + $0x4] sm:$0xf] %v2245
        %2310 = vst [vmem:[%s748 + $0x8] sm:$0xf] %v2246
        %2311 = vst [vmem:[%s748 + $0xc] sm:$0xf] %v2247
        %2312 = vst [vmem:[%s748 + $0x10] sm:$0xf] %v2248
        %2313 = vst [vmem:[%s748 + $0x14] sm:$0xf] %v2249
        %2314 = vst [vmem:[%s748 + $0x18] sm:$0xf] %v2250
        %2315 = vst [vmem:[%s748 + $0x1c] sm:$0xf] %v2251
        %2316 = vst [vmem:[%s748 + $0x20] sm:$0xf] %v2252
        %2317 = vst [vmem:[%s748 + $0x24] sm:$0xf] %v2253
        %2318 = vst [vmem:[%s748 + $0x28] sm:$0xf] %v2254
        %2319 = vst [vmem:[%s748 + $0x2c] sm:$0xf] %v2255
        %2320 = vst [vmem:[%s748 + $0x30] sm:$0xf] %v2256
        %2321 = vst [vmem:[%s748 + $0x34] sm:$0xf] %v2257
        %2322 = vst [vmem:[%s748 + $0x38] sm:$0xf] %v2258
        %2323 = vst [vmem:[%s748 + $0x3c] sm:$0xf] %v2259
        %2324 = vst [vmem:[%s748 + $0x40] sm:$0xf] %v2260
        %2325 = vst [vmem:[%s748 + $0x44] sm:$0xf] %v2261
        %2326 = vst [vmem:[%s748 + $0x48] sm:$0xf] %v2262
        %2327 = vst [vmem:[%s748 + $0x4c] sm:$0xf] %v2263
        %2328 = vst [vmem:[%s748 + $0x50] sm:$0xf] %v2264
        %2329 = vst [vmem:[%s748 + $0x54] sm:$0xf] %v2265
        %2330 = vst [vmem:[%s748 + $0x58] sm:$0xf] %v2266
        %2331 = vst [vmem:[%s748 + $0x5c] sm:$0xf] %v2267
        %2332 = vst [vmem:[%s748 + $0x60] sm:$0xf] %v2268
        %2333 = vst [vmem:[%s748 + $0x64] sm:$0xf] %v2269
        %2334 = vst [vmem:[%s748 + $0x68] sm:$0xf] %v2270
        %2335 = vst [vmem:[%s748 + $0x6c] sm:$0xf] %v2271
        %2336 = vst [vmem:[%s748 + $0x70] sm:$0xf] %v2272
        %2337 = vst [vmem:[%s748 + $0x74] sm:$0xf] %v2273
        %2338 = vst [vmem:[%s748 + $0x78] sm:$0xf] %v2274
        %2339 = vst [vmem:[%s748 + $0x7c] sm:$0xf] %v2275
        %s2340 = smul.u32 32, %s15
        %p2341 = scmp.lt.s32.totalorder %s2340, 63
        %s2342 = scalar_select %p2341, %s2340, 63
        %s2343 = smul.addr %s2342, 4
        %s2344 = scalar_lea.vmem %s4, %s2343
        // Predicated region
        $region78: #{cnn_forward.4} parent=72 // pred_check
          %p2345 = pneg %p122
        $region79: #{cnn_forward.4} parent=72 // pred_check_branch
          %2347 = sbr.rel (%p2345) target = $region81
        $region80: #{cnn_forward.4} parent=72 // pred_region
          %s2348 = smul.u32 32, %s15
        $region81: #{cnn_forward.4} parent=72 // pred_fallthru
          _
      $region73: #{cnn_forward.4} parent=5 // pred_fallthru
        _
      %p2349 = scmp.le.s32.totalorder 2, %s10
      // Predicated region
      $region82: #{cnn_forward.4} parent=5 // pred_check
        %p2350 = pneg %p2349
      $region83: #{cnn_forward.4} parent=5 // pred_check_branch
        %2352 = sbr.rel (%p2350) target = $region85
      $region84: #{cnn_forward.4} parent=5 // pred_region
        %s2353 = ssub.s32 %s10, 2
        // Predicated region
        $region86: #{cnn_forward.4} parent=84 // pred_check
          %p2354 = pneg %p128
        $region87: #{cnn_forward.4} parent=84 // pred_check_branch
          %2356 = sbr.rel (%p2354) target = $region89
        $region88: #{cnn_forward.4} parent=84 // pred_region
          %s2357 = smul.u32 32, %s16
          %p2358 = scmp.lt.s32.totalorder %s2357, 63
          %s2359 = scalar_select %p2358, %s2357, 63
          %s2360 = smul.addr %s2359, 4
          %s2361 = scalar_lea.vmem %s4, %s2360
        $region89: #{cnn_forward.4} parent=84 // pred_fallthru
          _
      $region85: #{cnn_forward.4} parent=5 // pred_fallthru
        _
    $region6: #{cnn_forward.4} parent=1 // loop_footer
      %s14 = sadd.s32 1, %s10
    $region7: #{cnn_forward.4} parent=1 // loop_footer_branch
      %9 = sbr.rel target = $region3
    $region8: #{cnn_forward.4} parent=1 // loop_exit
      _

// kernel: cnn_forward.6
$region0: #{cnn_forward.6}
  #allocation0 [shape = 'u32[]', space=smem, size = 0x4, offset = 0x4, fixed_abs, tag = 'smem constant byte address 0x4 - core index']
  #allocation1 [shape = 'u32[144,128]{1,0:T(1,128)}', space=vmem, size = 0x12000, scoped, tag = 'internal scratch']
  %s0 = inlined_call_operand.vmem [shape: bf16[4,32,1152], index: 0, kind: input, shape index: {}]
  %s1 = inlined_call_operand.vmem [shape: bf16[1152,128], index: 1, kind: input, shape index: {}]
  %s2 = inlined_call_operand.vmem [shape: f32[1,128], index: 2, kind: input, shape index: {}]
  %s3 = inlined_call_operand.vmem [shape: f32[1,128], index: 3, kind: input, shape index: {}]
  %s4 = inlined_call_operand.vmem [shape: bf16[32,128], index: 4, kind: output, shape index: {}]
  %s5 = sld [smem:[#allocation0]]
  $region26: #{cnn_forward.6} parent=0
    _
  %s7 = ssub.s32 1, %s5
  %s8 = scalar_select 0, %s7, %s5
  // Predicated region
  $region2: #{cnn_forward.6} parent=0 // pred_check
    _
  $region3: #{cnn_forward.6} parent=0 // pred_check_branch
    %10 = sbr.rel (0) target = $region5
  $region4: #{cnn_forward.6} parent=0 // pred_region
    _
  $region5: #{cnn_forward.6} parent=0 // pred_fallthru
    _
  // Predicated region
  $region6: #{cnn_forward.6} parent=0 // pred_check
    _
  $region7: #{cnn_forward.6} parent=0 // pred_check_branch
    %12 = sbr.rel (0) target = $region9
  $region8: #{cnn_forward.6} parent=0 // pred_region
    _
  $region9: #{cnn_forward.6} parent=0 // pred_fallthru
    _
  // Predicated region
  $region10: #{cnn_forward.6} parent=0 // pred_check
    _
  $region11: #{cnn_forward.6} parent=0 // pred_check_branch
    %14 = sbr.rel (0) target = $region13
  $region12: #{cnn_forward.6} parent=0 // pred_region
    _
  $region13: #{cnn_forward.6} parent=0 // pred_fallthru
    _
  // Predicated region
  $region14: #{cnn_forward.6} parent=0 // pred_check
    _
  $region15: #{cnn_forward.6} parent=0 // pred_check_branch
    %16 = sbr.rel (0) target = $region17
  $region16: #{cnn_forward.6} parent=0 // pred_region
    _
  $region17: #{cnn_forward.6} parent=0 // pred_fallthru
    _
  %v18 = vld [vmem:[%s1] sm:$0xf]
  %v19 = vld [vmem:[%s1 + $0x4] sm:$0xf]
  %v20 = vld [vmem:[%s1 + $0x8] sm:$0xf]
  %v21 = vld [vmem:[%s1 + $0xc] sm:$0xf]
  %v22 = vld [vmem:[%s1 + $0x10] sm:$0xf]
  %v23 = vld [vmem:[%s1 + $0x14] sm:$0xf]
  %v24 = vld [vmem:[%s1 + $0x18] sm:$0xf]
  %v25 = vld [vmem:[%s1 + $0x1c] sm:$0xf]
  %v26 = vld [vmem:[%s1 + $0x20] sm:$0xf]
  %v27 = vld [vmem:[%s1 + $0x24] sm:$0xf]
  %v28 = vld [vmem:[%s1 + $0x28] sm:$0xf]
  %v29 = vld [vmem:[%s1 + $0x2c] sm:$0xf]
  %v30 = vld [vmem:[%s1 + $0x30] sm:$0xf]
  %v31 = vld [vmem:[%s1 + $0x34] sm:$0xf]
  %v32 = vld [vmem:[%s1 + $0x38] sm:$0xf]
  %v33 = vld [vmem:[%s1 + $0x3c] sm:$0xf]
  %v34 = vld [vmem:[%s1 + $0x40] sm:$0xf]
  %v35 = vld [vmem:[%s1 + $0x44] sm:$0xf]
  %v36 = vld [vmem:[%s1 + $0x48] sm:$0xf]
  %v37 = vld [vmem:[%s1 + $0x4c] sm:$0xf]
  %v38 = vld [vmem:[%s1 + $0x50] sm:$0xf]
  %v39 = vld [vmem:[%s1 + $0x54] sm:$0xf]
  %v40 = vld [vmem:[%s1 + $0x58] sm:$0xf]
  %v41 = vld [vmem:[%s1 + $0x5c] sm:$0xf]
  %v42 = vld [vmem:[%s1 + $0x60] sm:$0xf]
  %v43 = vld [vmem:[%s1 + $0x64] sm:$0xf]
  %v44 = vld [vmem:[%s1 + $0x68] sm:$0xf]
  %v45 = vld [vmem:[%s1 + $0x6c] sm:$0xf]
  %v46 = vld [vmem:[%s1 + $0x70] sm:$0xf]
  %v47 = vld [vmem:[%s1 + $0x74] sm:$0xf]
  %v48 = vld [vmem:[%s1 + $0x78] sm:$0xf]
  %v49 = vld [vmem:[%s1 + $0x7c] sm:$0xf]
  %v50 = vld [vmem:[%s1 + $0x80] sm:$0xf]
  %v51 = vld [vmem:[%s1 + $0x84] sm:$0xf]
  %v52 = vld [vmem:[%s1 + $0x88] sm:$0xf]
  %v53 = vld [vmem:[%s1 + $0x8c] sm:$0xf]
  %v54 = vld [vmem:[%s1 + $0x90] sm:$0xf]
  %v55 = vld [vmem:[%s1 + $0x94] sm:$0xf]
  %v56 = vld [vmem:[%s1 + $0x98] sm:$0xf]
  %v57 = vld [vmem:[%s1 + $0x9c] sm:$0xf]
  %v58 = vld [vmem:[%s1 + $0xa0] sm:$0xf]
  %v59 = vld [vmem:[%s1 + $0xa4] sm:$0xf]
  %v60 = vld [vmem:[%s1 + $0xa8] sm:$0xf]
  %v61 = vld [vmem:[%s1 + $0xac] sm:$0xf]
  %v62 = vld [vmem:[%s1 + $0xb0] sm:$0xf]
  %v63 = vld [vmem:[%s1 + $0xb4] sm:$0xf]
  %v64 = vld [vmem:[%s1 + $0xb8] sm:$0xf]
  %v65 = vld [vmem:[%s1 + $0xbc] sm:$0xf]
  %v66 = vld [vmem:[%s1 + $0xc0] sm:$0xf]
  %v67 = vld [vmem:[%s1 + $0xc4] sm:$0xf]
  %v68 = vld [vmem:[%s1 + $0xc8] sm:$0xf]
  %v69 = vld [vmem:[%s1 + $0xcc] sm:$0xf]
  %v70 = vld [vmem:[%s1 + $0xd0] sm:$0xf]
  %v71 = vld [vmem:[%s1 + $0xd4] sm:$0xf]
  %v72 = vld [vmem:[%s1 + $0xd8] sm:$0xf]
  %v73 = vld [vmem:[%s1 + $0xdc] sm:$0xf]
  %v74 = vld [vmem:[%s1 + $0xe0] sm:$0xf]
  %v75 = vld [vmem:[%s1 + $0xe4] sm:$0xf]
  %v76 = vld [vmem:[%s1 + $0xe8] sm:$0xf]
  %v77 = vld [vmem:[%s1 + $0xec] sm:$0xf]
  %v78 = vld [vmem:[%s1 + $0xf0] sm:$0xf]
  %v79 = vld [vmem:[%s1 + $0xf4] sm:$0xf]
  %v80 = vld [vmem:[%s1 + $0xf8] sm:$0xf]
  %v81 = vld [vmem:[%s1 + $0xfc] sm:$0xf]
  %v82 = vld [vmem:[%s1 + $0x100] sm:$0xf]
  %v83 = vld [vmem:[%s1 + $0x104] sm:$0xf]
  %v84 = vld [vmem:[%s1 + $0x108] sm:$0xf]
  %v85 = vld [vmem:[%s1 + $0x10c] sm:$0xf]
  %v86 = vld [vmem:[%s1 + $0x110] sm:$0xf]
  %v87 = vld [vmem:[%s1 + $0x114] sm:$0xf]
  %v88 = vld [vmem:[%s1 + $0x118] sm:$0xf]
  %v89 = vld [vmem:[%s1 + $0x11c] sm:$0xf]
  %v90 = vld [vmem:[%s1 + $0x120] sm:$0xf]
  %v91 = vld [vmem:[%s1 + $0x124] sm:$0xf]
  %v92 = vld [vmem:[%s1 + $0x128] sm:$0xf]
  %v93 = vld [vmem:[%s1 + $0x12c] sm:$0xf]
  %v94 = vld [vmem:[%s1 + $0x130] sm:$0xf]
  %v95 = vld [vmem:[%s1 + $0x134] sm:$0xf]
  %v96 = vld [vmem:[%s1 + $0x138] sm:$0xf]
  %v97 = vld [vmem:[%s1 + $0x13c] sm:$0xf]
  %v98 = vld [vmem:[%s1 + $0x140] sm:$0xf]
  %v99 = vld [vmem:[%s1 + $0x144] sm:$0xf]
  %v100 = vld [vmem:[%s1 + $0x148] sm:$0xf]
  %v101 = vld [vmem:[%s1 + $0x14c] sm:$0xf]
  %v102 = vld [vmem:[%s1 + $0x150] sm:$0xf]
  %v103 = vld [vmem:[%s1 + $0x154] sm:$0xf]
  %v104 = vld [vmem:[%s1 + $0x158] sm:$0xf]
  %v105 = vld [vmem:[%s1 + $0x15c] sm:$0xf]
  %v106 = vld [vmem:[%s1 + $0x160] sm:$0xf]
  %v107 = vld [vmem:[%s1 + $0x164] sm:$0xf]
  %v108 = vld [vmem:[%s1 + $0x168] sm:$0xf]
  %v109 = vld [vmem:[%s1 + $0x16c] sm:$0xf]
  %v110 = vld [vmem:[%s1 + $0x170] sm:$0xf]
  %v111 = vld [vmem:[%s1 + $0x174] sm:$0xf]
  %v112 = vld [vmem:[%s1 + $0x178] sm:$0xf]
  %v113 = vld [vmem:[%s1 + $0x17c] sm:$0xf]
  %v114 = vld [vmem:[%s1 + $0x180] sm:$0xf]
  %v115 = vld [vmem:[%s1 + $0x184] sm:$0xf]
  %v116 = vld [vmem:[%s1 + $0x188] sm:$0xf]
  %v117 = vld [vmem:[%s1 + $0x18c] sm:$0xf]
  %v118 = vld [vmem:[%s1 + $0x190] sm:$0xf]
  %v119 = vld [vmem:[%s1 + $0x194] sm:$0xf]
  %v120 = vld [vmem:[%s1 + $0x198] sm:$0xf]
  %v121 = vld [vmem:[%s1 + $0x19c] sm:$0xf]
  %v122 = vld [vmem:[%s1 + $0x1a0] sm:$0xf]
  %v123 = vld [vmem:[%s1 + $0x1a4] sm:$0xf]
  %v124 = vld [vmem:[%s1 + $0x1a8] sm:$0xf]
  %v125 = vld [vmem:[%s1 + $0x1ac] sm:$0xf]
  %v126 = vld [vmem:[%s1 + $0x1b0] sm:$0xf]
  %v127 = vld [vmem:[%s1 + $0x1b4] sm:$0xf]
  %v128 = vld [vmem:[%s1 + $0x1b8] sm:$0xf]
  %v129 = vld [vmem:[%s1 + $0x1bc] sm:$0xf]
  %v130 = vld [vmem:[%s1 + $0x1c0] sm:$0xf]
  %v131 = vld [vmem:[%s1 + $0x1c4] sm:$0xf]
  %v132 = vld [vmem:[%s1 + $0x1c8] sm:$0xf]
  %v133 = vld [vmem:[%s1 + $0x1cc] sm:$0xf]
  %v134 = vld [vmem:[%s1 + $0x1d0] sm:$0xf]
  %v135 = vld [vmem:[%s1 + $0x1d4] sm:$0xf]
  %v136 = vld [vmem:[%s1 + $0x1d8] sm:$0xf]
  %v137 = vld [vmem:[%s1 + $0x1dc] sm:$0xf]
  %v138 = vld [vmem:[%s1 + $0x1e0] sm:$0xf]
  %v139 = vld [vmem:[%s1 + $0x1e4] sm:$0xf]
  %v140 = vld [vmem:[%s1 + $0x1e8] sm:$0xf]
  %v141 = vld [vmem:[%s1 + $0x1ec] sm:$0xf]
  %v142 = vld [vmem:[%s1 + $0x1f0] sm:$0xf]
  %v143 = vld [vmem:[%s1 + $0x1f4] sm:$0xf]
  %v144 = vld [vmem:[%s1 + $0x1f8] sm:$0xf]
  %v145 = vld [vmem:[%s1 + $0x1fc] sm:$0xf]
  %v146 = vld [vmem:[%s1 + $0x200] sm:$0xf]
  %v147 = vld [vmem:[%s1 + $0x204] sm:$0xf]
  %v148 = vld [vmem:[%s1 + $0x208] sm:$0xf]
  %v149 = vld [vmem:[%s1 + $0x20c] sm:$0xf]
  %v150 = vld [vmem:[%s1 + $0x210] sm:$0xf]
  %v151 = vld [vmem:[%s1 + $0x214] sm:$0xf]
  %v152 = vld [vmem:[%s1 + $0x218] sm:$0xf]
  %v153 = vld [vmem:[%s1 + $0x21c] sm:$0xf]
  %v154 = vld [vmem:[%s1 + $0x220] sm:$0xf]
  %v155 = vld [vmem:[%s1 + $0x224] sm:$0xf]
  %v156 = vld [vmem:[%s1 + $0x228] sm:$0xf]
  %v157 = vld [vmem:[%s1 + $0x22c] sm:$0xf]
  %v158 = vld [vmem:[%s1 + $0x230] sm:$0xf]
  %v159 = vld [vmem:[%s1 + $0x234] sm:$0xf]
  %v160 = vld [vmem:[%s1 + $0x238] sm:$0xf]
  %v161 = vld [vmem:[%s1 + $0x23c] sm:$0xf]
  %v162 = vld [vmem:[%s0] sm:$0xff]
  %v163 = vld [vmem:[%s0 + $0x8] sm:$0xff]
  %v164 = vld [vmem:[%s0 + $0x10] sm:$0xff]
  %v165 = vld [vmem:[%s0 + $0x18] sm:$0xff]
  %v166 = vld [vmem:[%s0 + $0x20] sm:$0xf]
  %v167 = vld [vmem:[%s0 + $0x24] sm:$0xff]
  %v168 = vld [vmem:[%s0 + $0x2c] sm:$0xff]
  %v169 = vld [vmem:[%s0 + $0x34] sm:$0xff]
  %v170 = vld [vmem:[%s0 + $0x3c] sm:$0xff]
  %v171 = vld [vmem:[%s0 + $0x44] sm:$0xf]
  %v172 = vld [vmem:[%s0 + $0x48] sm:$0xff]
  %v173 = vld [vmem:[%s0 + $0x50] sm:$0xff]
  %v174 = vld [vmem:[%s0 + $0x58] sm:$0xff]
  %v175 = vld [vmem:[%s0 + $0x60] sm:$0xff]
  %v176 = vld [vmem:[%s0 + $0x68] sm:$0xf]
  %v177 = vld [vmem:[%s0 + $0x6c] sm:$0xff]
  %v178 = vld [vmem:[%s0 + $0x74] sm:$0xff]
  %v179 = vld [vmem:[%s0 + $0x7c] sm:$0xff]
  %v180 = vld [vmem:[%s0 + $0x84] sm:$0xff]
  %v181 = vld [vmem:[%s0 + $0x8c] sm:$0xf]
  %v202 = vunpack.c.l.b16 %v162
  %v203 = vunpack.c.h.b16 %v162
  %v204 = vunpack.c.l.b16 %v163
  %v205 = vunpack.c.h.b16 %v163
  %v206 = vunpack.c.l.b16 %v164
  %v207 = vunpack.c.h.b16 %v164
  %v208 = vunpack.c.l.b16 %v165
  %v209 = vunpack.c.h.b16 %v165
  %v210 = vunpack.c.l.b16 %v166
  %v211 = vunpack.c.l.b16 %v167
  %v212 = vunpack.c.h.b16 %v167
  %v213 = vunpack.c.l.b16 %v168
  %v214 = vunpack.c.h.b16 %v168
  %v215 = vunpack.c.l.b16 %v169
  %v216 = vunpack.c.h.b16 %v169
  %v217 = vunpack.c.l.b16 %v170
  %v218 = vunpack.c.h.b16 %v170
  %v219 = vunpack.c.l.b16 %v171
  %v220 = vunpack.c.l.b16 %v172
  %v221 = vunpack.c.h.b16 %v172
  %v222 = vunpack.c.l.b16 %v173
  %v223 = vunpack.c.h.b16 %v173
  %v224 = vunpack.c.l.b16 %v174
  %v225 = vunpack.c.h.b16 %v174
  %v226 = vunpack.c.l.b16 %v175
  %v227 = vunpack.c.h.b16 %v175
  %v228 = vunpack.c.l.b16 %v176
  %v229 = vunpack.c.l.b16 %v177
  %v230 = vunpack.c.h.b16 %v177
  %v231 = vunpack.c.l.b16 %v178
  %v232 = vunpack.c.h.b16 %v178
  %v233 = vunpack.c.l.b16 %v179
  %v234 = vunpack.c.h.b16 %v179
  %v235 = vunpack.c.l.b16 %v180
  %v236 = vunpack.c.h.b16 %v180
  %v237 = vunpack.c.l.b16 %v181
  %v238 = vpack.c.b16 %v211, %v202
  %v239 = vpack.c.b16 %v212, %v203
  %v240 = vpack.c.b16 %v213, %v204
  %v241 = vpack.c.b16 %v214, %v205
  %v242 = vpack.c.b16 %v215, %v206
  %v243 = vpack.c.b16 %v216, %v207
  %v244 = vpack.c.b16 %v217, %v208
  %v245 = vpack.c.b16 %v218, %v209
  %v246 = vpack.c.b16 %v219, %v210
  %v247 = vpack.c.b16 %v229, %v220
  %v248 = vpack.c.b16 %v230, %v221
  %v249 = vpack.c.b16 %v231, %v222
  %v250 = vpack.c.b16 %v232, %v223
  %v251 = vpack.c.b16 %v233, %v224
  %v252 = vpack.c.b16 %v234, %v225
  %v253 = vpack.c.b16 %v235, %v226
  %v254 = vpack.c.b16 %v236, %v227
  %v255 = vpack.c.b16 %v237, %v228
  %v418 = vunpack.c.l.b16 %v18
  %v419 = vunpack.c.l.b16 %v19
  %v420 = vunpack.c.l.b16 %v20
  %v421 = vunpack.c.l.b16 %v21
  %v422 = vunpack.c.l.b16 %v22
  %v423 = vunpack.c.l.b16 %v23
  %v424 = vunpack.c.l.b16 %v24
  %v425 = vunpack.c.l.b16 %v25
  %v426 = vunpack.c.l.b16 %v26
  %v427 = vunpack.c.l.b16 %v27
  %v428 = vunpack.c.l.b16 %v28
  %v429 = vunpack.c.l.b16 %v29
  %v430 = vunpack.c.l.b16 %v30
  %v431 = vunpack.c.l.b16 %v31
  %v432 = vunpack.c.l.b16 %v32
  %v433 = vunpack.c.l.b16 %v33
  %v434 = vunpack.c.l.b16 %v34
  %v435 = vunpack.c.l.b16 %v35
  %v436 = vunpack.c.l.b16 %v36
  %v437 = vunpack.c.l.b16 %v37
  %v438 = vunpack.c.l.b16 %v38
  %v439 = vunpack.c.l.b16 %v39
  %v440 = vunpack.c.l.b16 %v40
  %v441 = vunpack.c.l.b16 %v41
  %v442 = vunpack.c.l.b16 %v42
  %v443 = vunpack.c.l.b16 %v43
  %v444 = vunpack.c.l.b16 %v44
  %v445 = vunpack.c.l.b16 %v45
  %v446 = vunpack.c.l.b16 %v46
  %v447 = vunpack.c.l.b16 %v47
  %v448 = vunpack.c.l.b16 %v48
  %v449 = vunpack.c.l.b16 %v49
  %v450 = vunpack.c.l.b16 %v50
  %v451 = vunpack.c.l.b16 %v51
  %v452 = vunpack.c.l.b16 %v52
  %v453 = vunpack.c.l.b16 %v53
  %v454 = vunpack.c.l.b16 %v54
  %v455 = vunpack.c.l.b16 %v55
  %v456 = vunpack.c.l.b16 %v56
  %v457 = vunpack.c.l.b16 %v57
  %v458 = vunpack.c.l.b16 %v58
  %v459 = vunpack.c.l.b16 %v59
  %v460 = vunpack.c.l.b16 %v60
  %v461 = vunpack.c.l.b16 %v61
  %v462 = vunpack.c.l.b16 %v62
  %v463 = vunpack.c.l.b16 %v63
  %v464 = vunpack.c.l.b16 %v64
  %v465 = vunpack.c.l.b16 %v65
  %v466 = vunpack.c.l.b16 %v66
  %v467 = vunpack.c.l.b16 %v67
  %v468 = vunpack.c.l.b16 %v68
  %v469 = vunpack.c.l.b16 %v69
  %v470 = vunpack.c.l.b16 %v70
  %v471 = vunpack.c.l.b16 %v71
  %v472 = vunpack.c.l.b16 %v72
  %v473 = vunpack.c.l.b16 %v73
  %v474 = vunpack.c.l.b16 %v74
  %v475 = vunpack.c.l.b16 %v75
  %v476 = vunpack.c.l.b16 %v76
  %v477 = vunpack.c.l.b16 %v77
  %v478 = vunpack.c.l.b16 %v78
  %v479 = vunpack.c.l.b16 %v79
  %v480 = vunpack.c.l.b16 %v80
  %v481 = vunpack.c.l.b16 %v81
  %v482 = vunpack.c.l.b16 %v82
  %v483 = vunpack.c.l.b16 %v83
  %v484 = vunpack.c.l.b16 %v84
  %v485 = vunpack.c.l.b16 %v85
  %v486 = vunpack.c.l.b16 %v86
  %v487 = vunpack.c.l.b16 %v87
  %v488 = vunpack.c.l.b16 %v88
  %v489 = vunpack.c.l.b16 %v89
  %v490 = vunpack.c.l.b16 %v90
  %v491 = vunpack.c.l.b16 %v91
  %v492 = vunpack.c.l.b16 %v92
  %v493 = vunpack.c.l.b16 %v93
  %v494 = vunpack.c.l.b16 %v94
  %v495 = vunpack.c.l.b16 %v95
  %v496 = vunpack.c.l.b16 %v96
  %v497 = vunpack.c.l.b16 %v97
  %v498 = vunpack.c.l.b16 %v98
  %v499 = vunpack.c.l.b16 %v99
  %v500 = vunpack.c.l.b16 %v100
  %v501 = vunpack.c.l.b16 %v101
  %v502 = vunpack.c.l.b16 %v102
  %v503 = vunpack.c.l.b16 %v103
  %v504 = vunpack.c.l.b16 %v104
  %v505 = vunpack.c.l.b16 %v105
  %v506 = vunpack.c.l.b16 %v106
  %v507 = vunpack.c.l.b16 %v107
  %v508 = vunpack.c.l.b16 %v108
  %v509 = vunpack.c.l.b16 %v109
  %v510 = vunpack.c.l.b16 %v110
  %v511 = vunpack.c.l.b16 %v111
  %v512 = vunpack.c.l.b16 %v112
  %v513 = vunpack.c.l.b16 %v113
  %v514 = vunpack.c.l.b16 %v114
  %v515 = vunpack.c.l.b16 %v115
  %v516 = vunpack.c.l.b16 %v116
  %v517 = vunpack.c.l.b16 %v117
  %v518 = vunpack.c.l.b16 %v118
  %v519 = vunpack.c.l.b16 %v119
  %v520 = vunpack.c.l.b16 %v120
  %v521 = vunpack.c.l.b16 %v121
  %v522 = vunpack.c.l.b16 %v122
  %v523 = vunpack.c.l.b16 %v123
  %v524 = vunpack.c.l.b16 %v124
  %v525 = vunpack.c.l.b16 %v125
  %v526 = vunpack.c.l.b16 %v126
  %v527 = vunpack.c.l.b16 %v127
  %v528 = vunpack.c.l.b16 %v128
  %v529 = vunpack.c.l.b16 %v129
  %v530 = vunpack.c.l.b16 %v130
  %v531 = vunpack.c.l.b16 %v131
  %v532 = vunpack.c.l.b16 %v132
  %v533 = vunpack.c.l.b16 %v133
  %v534 = vunpack.c.l.b16 %v134
  %v535 = vunpack.c.l.b16 %v135
  %v536 = vunpack.c.l.b16 %v136
  %v537 = vunpack.c.l.b16 %v137
  %v538 = vunpack.c.l.b16 %v138
  %v539 = vunpack.c.l.b16 %v139
  %v540 = vunpack.c.l.b16 %v140
  %v541 = vunpack.c.l.b16 %v141
  %v542 = vunpack.c.l.b16 %v142
  %v543 = vunpack.c.l.b16 %v143
  %v544 = vunpack.c.l.b16 %v144
  %v545 = vunpack.c.l.b16 %v145
  %v546 = vunpack.c.l.b16 %v146
  %v547 = vunpack.c.l.b16 %v147
  %v548 = vunpack.c.l.b16 %v148
  %v549 = vunpack.c.l.b16 %v149
  %v550 = vunpack.c.l.b16 %v150
  %v551 = vunpack.c.l.b16 %v151
  %v552 = vunpack.c.l.b16 %v152
  %v553 = vunpack.c.l.b16 %v153
  %v554 = vunpack.c.l.b16 %v154
  %v555 = vunpack.c.l.b16 %v155
  %v556 = vunpack.c.l.b16 %v156
  %v557 = vunpack.c.l.b16 %v157
  %v558 = vunpack.c.l.b16 %v158
  %v559 = vunpack.c.l.b16 %v159
  %v560 = vunpack.c.l.b16 %v160
  %v561 = vunpack.c.l.b16 %v161
  %v562 = vpack.c.b16 %v419, %v418
  %v563 = vpack.c.b16 %v421, %v420
  %v564 = vpack.c.b16 %v423, %v422
  %v565 = vpack.c.b16 %v425, %v424
  %v566 = vpack.c.b16 %v427, %v426
  %v567 = vpack.c.b16 %v429, %v428
  %v568 = vpack.c.b16 %v431, %v430
  %v569 = vpack.c.b16 %v433, %v432
  %v570 = vpack.c.b16 %v435, %v434
  %v571 = vpack.c.b16 %v437, %v436
  %v572 = vpack.c.b16 %v439, %v438
  %v573 = vpack.c.b16 %v441, %v440
  %v574 = vpack.c.b16 %v443, %v442
  %v575 = vpack.c.b16 %v445, %v444
  %v576 = vpack.c.b16 %v447, %v446
  %v577 = vpack.c.b16 %v449, %v448
  %v578 = vpack.c.b16 %v451, %v450
  %v579 = vpack.c.b16 %v453, %v452
  %v580 = vpack.c.b16 %v455, %v454
  %v581 = vpack.c.b16 %v457, %v456
  %v582 = vpack.c.b16 %v459, %v458
  %v583 = vpack.c.b16 %v461, %v460
  %v584 = vpack.c.b16 %v463, %v462
  %v585 = vpack.c.b16 %v465, %v464
  %v586 = vpack.c.b16 %v467, %v466
  %v587 = vpack.c.b16 %v469, %v468
  %v588 = vpack.c.b16 %v471, %v470
  %v589 = vpack.c.b16 %v473, %v472
  %v590 = vpack.c.b16 %v475, %v474
  %v591 = vpack.c.b16 %v477, %v476
  %v592 = vpack.c.b16 %v479, %v478
  %v593 = vpack.c.b16 %v481, %v480
  %v594 = vpack.c.b16 %v483, %v482
  %v595 = vpack.c.b16 %v485, %v484
  %v596 = vpack.c.b16 %v487, %v486
  %v597 = vpack.c.b16 %v489, %v488
  %v598 = vpack.c.b16 %v491, %v490
  %v599 = vpack.c.b16 %v493, %v492
  %v600 = vpack.c.b16 %v495, %v494
  %v601 = vpack.c.b16 %v497, %v496
  %v602 = vpack.c.b16 %v499, %v498
  %v603 = vpack.c.b16 %v501, %v500
  %v604 = vpack.c.b16 %v503, %v502
  %v605 = vpack.c.b16 %v505, %v504
  %v606 = vpack.c.b16 %v507, %v506
  %v607 = vpack.c.b16 %v509, %v508
  %v608 = vpack.c.b16 %v511, %v510
  %v609 = vpack.c.b16 %v513, %v512
  %v610 = vpack.c.b16 %v515, %v514
  %v611 = vpack.c.b16 %v517, %v516
  %v612 = vpack.c.b16 %v519, %v518
  %v613 = vpack.c.b16 %v521, %v520
  %v614 = vpack.c.b16 %v523, %v522
  %v615 = vpack.c.b16 %v525, %v524
  %v616 = vpack.c.b16 %v527, %v526
  %v617 = vpack.c.b16 %v529, %v528
  %v618 = vpack.c.b16 %v531, %v530
  %v619 = vpack.c.b16 %v533, %v532
  %v620 = vpack.c.b16 %v535, %v534
  %v621 = vpack.c.b16 %v537, %v536
  %v622 = vpack.c.b16 %v539, %v538
  %v623 = vpack.c.b16 %v541, %v540
  %v624 = vpack.c.b16 %v543, %v542
  %v625 = vpack.c.b16 %v545, %v544
  %v626 = vpack.c.b16 %v547, %v546
  %v627 = vpack.c.b16 %v549, %v548
  %v628 = vpack.c.b16 %v551, %v550
  %v629 = vpack.c.b16 %v553, %v552
  %v630 = vpack.c.b16 %v555, %v554
  %v631 = vpack.c.b16 %v557, %v556
  %v632 = vpack.c.b16 %v559, %v558
  %v633 = vpack.c.b16 %v561, %v560
  %706 = vmatprep.subr.bf16.mxu0 0
  %707 = vmatpush1.bf16.msra.mxu0 %v562
  %708 = vmatprep.subr.bf16.mxu0 0
  %709 = vmatpush1.bf16.msra.mxu0 %v563
  %710 = vmatprep.subr.bf16.mxu0 0
  %711 = vmatpush1.bf16.msra.mxu0 %v564
  %712 = vmatprep.subr.bf16.mxu0 0
  %713 = vmatpush1.bf16.msra.mxu0 %v565
  %714 = vmatprep.subr.bf16.mxu0 0
  %715 = vmatpush1.bf16.msra.mxu0 %v566
  %716 = vmatprep.subr.bf16.mxu0 0
  %717 = vmatpush1.bf16.msra.mxu0 %v567
  %718 = vmatprep.subr.bf16.mxu0 0
  %719 = vmatpush1.bf16.msra.mxu0 %v568
  %720 = vmatprep.subr.bf16.mxu0 0
  %721 = vmatpush1.bf16.msra.mxu0 %v569
  %722 = vmatprep.subr.bf16.mxu0 0
  %723 = vmatpush1.bf16.msra.mxu0 %v570
  %724 = vmatprep.subr.bf16.mxu0 0
  %725 = vmatpush1.bf16.msra.mxu0 %v571
  %726 = vmatprep.subr.bf16.mxu0 0
  %727 = vmatpush1.bf16.msra.mxu0 %v572
  %728 = vmatprep.subr.bf16.mxu0 0
  %729 = vmatpush1.bf16.msra.mxu0 %v573
  %730 = vmatprep.subr.bf16.mxu0 0
  %731 = vmatpush1.bf16.msra.mxu0 %v574
  %732 = vmatprep.subr.bf16.mxu0 0
  %733 = vmatpush1.bf16.msra.mxu0 %v575
  %734 = vmatprep.subr.bf16.mxu0 0
  %735 = vmatpush1.bf16.msra.mxu0 %v576
  %736 = vmatprep.subr.bf16.mxu0 0
  %737 = vmatpush1.bf16.msra.mxu0 %v577
  %738 = vmatprep.mubr.bf16.mxu0 %v239
  %739 = vmatmul.mubr.bf16.gmra.mrb[0].mxu0 %v238
  %v740 = vpop.f32.mrb[0].mxu0
  %v741 = vadd.f32 0.0, %v740
  %v742 = vpop.f32.mrb[0].mxu0
  %v743 = vpop.f32.mrb[0].mxu0
  %v744 = vadd.f32 0.0, %v743
  %v745 = vpop.f32.mrb[0].mxu0
  %746 = vmatprep.mubr.bf16.mxu0 %v248
  %747 = vmatmul.mubr.bf16.gmra.mrb[0].mxu0 %v247
  %v748 = vpop.f32.mrb[0].mxu0
  %v749 = vadd.f32 0.0, %v748
  %v750 = vpop.f32.mrb[0].mxu0
  %v751 = vpop.f32.mrb[0].mxu0
  %v752 = vadd.f32 0.0, %v751
  %v753 = vpop.f32.mrb[0].mxu0
  %754 = vdwg.mxu0
  %755 = vmatprep.subr.bf16.mxu0 0
  %756 = vmatpush1.bf16.msra.mxu0 %v578
  %757 = vmatprep.subr.bf16.mxu0 0
  %758 = vmatpush1.bf16.msra.mxu0 %v579
  %759 = vmatprep.subr.bf16.mxu0 0
  %760 = vmatpush1.bf16.msra.mxu0 %v580
  %761 = vmatprep.subr.bf16.mxu0 0
  %762 = vmatpush1.bf16.msra.mxu0 %v581
  %763 = vmatprep.subr.bf16.mxu0 0
  %764 = vmatpush1.bf16.msra.mxu0 %v582
  %765 = vmatprep.subr.bf16.mxu0 0
  %766 = vmatpush1.bf16.msra.mxu0 %v583
  %767 = vmatprep.subr.bf16.mxu0 0
  %768 = vmatpush1.bf16.msra.mxu0 %v584
  %769 = vmatprep.subr.bf16.mxu0 0
  %770 = vmatpush1.bf16.msra.mxu0 %v585
  %771 = vmatprep.subr.bf16.mxu0 0
  %772 = vmatpush1.bf16.msra.mxu0 %v586
  %773 = vmatprep.subr.bf16.mxu0 0
  %774 = vmatpush1.bf16.msra.mxu0 %v587
  %775 = vmatprep.subr.bf16.mxu0 0
  %776 = vmatpush1.bf16.msra.mxu0 %v588
  %777 = vmatprep.subr.bf16.mxu0 0
  %778 = vmatpush1.bf16.msra.mxu0 %v589
  %779 = vmatprep.subr.bf16.mxu0 0
  %780 = vmatpush1.bf16.msra.mxu0 %v590
  %781 = vmatprep.subr.bf16.mxu0 0
  %782 = vmatpush1.bf16.msra.mxu0 %v591
  %783 = vmatprep.subr.bf16.mxu0 0
  %784 = vmatpush1.bf16.msra.mxu0 %v592
  %785 = vmatprep.subr.bf16.mxu0 0
  %786 = vmatpush1.bf16.msra.mxu0 %v593
  %787 = vmatprep.mubr.bf16.mxu0 %v241
  %788 = vmatmul.mubr.bf16.gmra.mrb[0].mxu0 %v240
  %v789 = vpop.f32.mrb[0].mxu0
  %v790 = vadd.f32 %v741, %v789
  %v791 = vpop.f32.mrb[0].mxu0
  %v792 = vpop.f32.mrb[0].mxu0
  %v793 = vadd.f32 %v744, %v792
  %v794 = vpop.f32.mrb[0].mxu0
  %795 = vmatprep.mubr.bf16.mxu0 %v250
  %796 = vmatmul.mubr.bf16.gmra.mrb[0].mxu0 %v249
  %v797 = vpop.f32.mrb[0].mxu0
  %v798 = vadd.f32 %v749, %v797
  %v799 = vpop.f32.mrb[0].mxu0
  %v800 = vpop.f32.mrb[0].mxu0
  %v801 = vadd.f32 %v752, %v800
  %v802 = vpop.f32.mrb[0].mxu0
  %803 = vdwg.mxu0
  %804 = vmatprep.subr.bf16.mxu0 0
  %805 = vmatpush1.bf16.msra.mxu0 %v594
  %806 = vmatprep.subr.bf16.mxu0 0
  %807 = vmatpush1.bf16.msra.mxu0 %v595
  %808 = vmatprep.subr.bf16.mxu0 0
  %809 = vmatpush1.bf16.msra.mxu0 %v596
  %810 = vmatprep.subr.bf16.mxu0 0
  %811 = vmatpush1.bf16.msra.mxu0 %v597
  %812 = vmatprep.subr.bf16.mxu0 0
  %813 = vmatpush1.bf16.msra.mxu0 %v598
  %814 = vmatprep.subr.bf16.mxu0 0
  %815 = vmatpush1.bf16.msra.mxu0 %v599
  %816 = vmatprep.subr.bf16.mxu0 0
  %817 = vmatpush1.bf16.msra.mxu0 %v600
  %818 = vmatprep.subr.bf16.mxu0 0
  %819 = vmatpush1.bf16.msra.mxu0 %v601
  %820 = vmatprep.subr.bf16.mxu0 0
  %821 = vmatpush1.bf16.msra.mxu0 %v602
  %822 = vmatprep.subr.bf16.mxu0 0
  %823 = vmatpush1.bf16.msra.mxu0 %v603
  %824 = vmatprep.subr.bf16.mxu0 0
  %825 = vmatpush1.bf16.msra.mxu0 %v604
  %826 = vmatprep.subr.bf16.mxu0 0
  %827 = vmatpush1.bf16.msra.mxu0 %v605
  %828 = vmatprep.subr.bf16.mxu0 0
  %829 = vmatpush1.bf16.msra.mxu0 %v606
  %830 = vmatprep.subr.bf16.mxu0 0
  %831 = vmatpush1.bf16.msra.mxu0 %v607
  %832 = vmatprep.subr.bf16.mxu0 0
  %833 = vmatpush1.bf16.msra.mxu0 %v608
  %834 = vmatprep.subr.bf16.mxu0 0
  %835 = vmatpush1.bf16.msra.mxu0 %v609
  %836 = vmatprep.mubr.bf16.mxu0 %v243
  %837 = vmatmul.mubr.bf16.gmra.mrb[0].mxu0 %v242
  %v838 = vpop.f32.mrb[0].mxu0
  %v839 = vadd.f32 %v790, %v838
  %v840 = vpop.f32.mrb[0].mxu0
  %v841 = vpop.f32.mrb[0].mxu0
  %v842 = vadd.f32 %v793, %v841
  %v843 = vpop.f32.mrb[0].mxu0
  %844 = vmatprep.mubr.bf16.mxu0 %v252
  %845 = vmatmul.mubr.bf16.gmra.mrb[0].mxu0 %v251
  %v846 = vpop.f32.mrb[0].mxu0
  %v847 = vadd.f32 %v798, %v846
  %v848 = vpop.f32.mrb[0].mxu0
  %v849 = vpop.f32.mrb[0].mxu0
  %v850 = vadd.f32 %v801, %v849
  %v851 = vpop.f32.mrb[0].mxu0
  %852 = vdwg.mxu0
  %853 = vmatprep.subr.bf16.mxu0 0
  %854 = vmatpush1.bf16.msra.mxu0 %v610
  %855 = vmatprep.subr.bf16.mxu0 0
  %856 = vmatpush1.bf16.msra.mxu0 %v611
  %857 = vmatprep.subr.bf16.mxu0 0
  %858 = vmatpush1.bf16.msra.mxu0 %v612
  %859 = vmatprep.subr.bf16.mxu0 0
  %860 = vmatpush1.bf16.msra.mxu0 %v613
  %861 = vmatprep.subr.bf16.mxu0 0
  %862 = vmatpush1.bf16.msra.mxu0 %v614
  %863 = vmatprep.subr.bf16.mxu0 0
  %864 = vmatpush1.bf16.msra.mxu0 %v615
  %865 = vmatprep.subr.bf16.mxu0 0
  %866 = vmatpush1.bf16.msra.mxu0 %v616
  %867 = vmatprep.subr.bf16.mxu0 0
  %868 = vmatpush1.bf16.msra.mxu0 %v617
  %869 = vmatprep.subr.bf16.mxu0 0
  %870 = vmatpush1.bf16.msra.mxu0 %v618
  %871 = vmatprep.subr.bf16.mxu0 0
  %872 = vmatpush1.bf16.msra.mxu0 %v619
  %873 = vmatprep.subr.bf16.mxu0 0
  %874 = vmatpush1.bf16.msra.mxu0 %v620
  %875 = vmatprep.subr.bf16.mxu0 0
  %876 = vmatpush1.bf16.msra.mxu0 %v621
  %877 = vmatprep.subr.bf16.mxu0 0
  %878 = vmatpush1.bf16.msra.mxu0 %v622
  %879 = vmatprep.subr.bf16.mxu0 0
  %880 = vmatpush1.bf16.msra.mxu0 %v623
  %881 = vmatprep.subr.bf16.mxu0 0
  %882 = vmatpush1.bf16.msra.mxu0 %v624
  %883 = vmatprep.subr.bf16.mxu0 0
  %884 = vmatpush1.bf16.msra.mxu0 %v625
  %885 = vmatprep.mubr.bf16.mxu0 %v245
  %886 = vmatmul.mubr.bf16.gmra.mrb[0].mxu0 %v244
  %v887 = vpop.f32.mrb[0].mxu0
  %v888 = vadd.f32 %v839, %v887
  %v889 = vpop.f32.mrb[0].mxu0
  %v890 = vpop.f32.mrb[0].mxu0
  %v891 = vadd.f32 %v842, %v890
  %v892 = vpop.f32.mrb[0].mxu0
  %893 = vmatprep.mubr.bf16.mxu0 %v254
  %894 = vmatmul.mubr.bf16.gmra.mrb[0].mxu0 %v253
  %v895 = vpop.f32.mrb[0].mxu0
  %v896 = vadd.f32 %v847, %v895
  %v897 = vpop.f32.mrb[0].mxu0
  %v898 = vpop.f32.mrb[0].mxu0
  %v899 = vadd.f32 %v850, %v898
  %v900 = vpop.f32.mrb[0].mxu0
  %901 = vdwg.mxu0
  %902 = vmatprep.subr.bf16.mxu0 0
  %903 = vmatpush1.bf16.msra.mxu0 %v626
  %904 = vmatprep.subr.bf16.mxu0 0
  %905 = vmatpush1.bf16.msra.mxu0 %v627
  %906 = vmatprep.subr.bf16.mxu0 0
  %907 = vmatpush1.bf16.msra.mxu0 %v628
  %908 = vmatprep.subr.bf16.mxu0 0
  %909 = vmatpush1.bf16.msra.mxu0 %v629
  %910 = vmatprep.subr.bf16.mxu0 0
  %911 = vmatpush1.bf16.msra.mxu0 %v630
  %912 = vmatprep.subr.bf16.mxu0 0
  %913 = vmatpush1.bf16.msra.mxu0 %v631
  %914 = vmatprep.subr.bf16.mxu0 0
  %915 = vmatpush1.bf16.msra.mxu0 %v632
  %916 = vmatprep.subr.bf16.mxu0 0
  %917 = vmatpush1.bf16.msra.mxu0 %v633
  %918 = vmatprep.subr.bf16.mxu0 0
  %919 = vmatpush1.bf16.msra.mxu0 0
  %920 = vmatprep.subr.bf16.mxu0 0
  %921 = vmatpush1.bf16.msra.mxu0 0
  %922 = vmatprep.subr.bf16.mxu0 0
  %923 = vmatpush1.bf16.msra.mxu0 0
  %924 = vmatprep.subr.bf16.mxu0 0
  %925 = vmatpush1.bf16.msra.mxu0 0
  %926 = vmatprep.subr.bf16.mxu0 0
  %927 = vmatpush1.bf16.msra.mxu0 0
  %928 = vmatprep.subr.bf16.mxu0 0
  %929 = vmatpush1.bf16.msra.mxu0 0
  %930 = vmatprep.subr.bf16.mxu0 0
  %931 = vmatpush1.bf16.msra.mxu0 0
  %932 = vmatprep.subr.bf16.mxu0 0
  %933 = vmatpush1.bf16.msra.mxu0 0
  %934 = vmatprep.mubr.bf16.mxu0 0
  %935 = vmatmul.mubr.bf16.gmra.mrb[0].mxu0 %v246
  %v936 = vpop.f32.mrb[0].mxu0
  %v937 = vadd.f32 %v888, %v936
  %v938 = vpop.f32.mrb[0].mxu0
  %v939 = vpop.f32.mrb[0].mxu0
  %v940 = vadd.f32 %v891, %v939
  %v941 = vpop.f32.mrb[0].mxu0
  %942 = vmatprep.mubr.bf16.mxu0 0
  %943 = vmatmul.mubr.bf16.gmra.mrb[0].mxu0 %v255
  %v944 = vpop.f32.mrb[0].mxu0
  %v945 = vadd.f32 %v896, %v944
  %v946 = vpop.f32.mrb[0].mxu0
  %v947 = vpop.f32.mrb[0].mxu0
  %v948 = vadd.f32 %v899, %v947
  %v949 = vpop.f32.mrb[0].mxu0
  %950 = vdwg.mxu0
  %s951 = scalar_lea.vmem %s0, 144
  %v952 = vld [vmem:[%s951] sm:$0xff]
  %v953 = vld [vmem:[%s951 + $0x8] sm:$0xff]
  %v954 = vld [vmem:[%s951 + $0x10] sm:$0xff]
  %v955 = vld [vmem:[%s951 + $0x18] sm:$0xff]
  %v956 = vld [vmem:[%s951 + $0x20] sm:$0xf]
  %v957 = vld [vmem:[%s951 + $0x24] sm:$0xff]
  %v958 = vld [vmem:[%s951 + $0x2c] sm:$0xff]
  %v959 = vld [vmem:[%s951 + $0x34] sm:$0xff]
  %v960 = vld [vmem:[%s951 + $0x3c] sm:$0xff]
  %v961 = vld [vmem:[%s951 + $0x44] sm:$0xf]
  %v962 = vld [vmem:[%s951 + $0x48] sm:$0xff]
  %v963 = vld [vmem:[%s951 + $0x50] sm:$0xff]
  %v964 = vld [vmem:[%s951 + $0x58] sm:$0xff]
  %v965 = vld [vmem:[%s951 + $0x60] sm:$0xff]
  %v966 = vld [vmem:[%s951 + $0x68] sm:$0xf]
  %v967 = vld [vmem:[%s951 + $0x6c] sm:$0xff]
  %v968 = vld [vmem:[%s951 + $0x74] sm:$0xff]
  %v969 = vld [vmem:[%s951 + $0x7c] sm:$0xff]
  %v970 = vld [vmem:[%s951 + $0x84] sm:$0xff]
  %v971 = vld [vmem:[%s951 + $0x8c] sm:$0xf]
  %v992 = vunpack.c.l.b16 %v952
  %v993 = vunpack.c.h.b16 %v952
  %v994 = vunpack.c.l.b16 %v953
  %v995 = vunpack.c.h.b16 %v953
  %v996 = vunpack.c.l.b16 %v954
  %v997 = vunpack.c.h.b16 %v954
  %v998 = vunpack.c.l.b16 %v955
  %v999 = vunpack.c.h.b16 %v955
  %v1000 = vunpack.c.l.b16 %v956
  %v1001 = vunpack.c.l.b16 %v957
  %v1002 = vunpack.c.h.b16 %v957
  %v1003 = vunpack.c.l.b16 %v958
  %v1004 = vunpack.c.h.b16 %v958
  %v1005 = vunpack.c.l.b16 %v959
  %v1006 = vunpack.c.h.b16 %v959
  %v1007 = vunpack.c.l.b16 %v960
  %v1008 = vunpack.c.h.b16 %v960
  %v1009 = vunpack.c.l.b16 %v961
  %v1010 = vunpack.c.l.b16 %v962
  %v1011 = vunpack.c.h.b16 %v962
  %v1012 = vunpack.c.l.b16 %v963
  %v1013 = vunpack.c.h.b16 %v963
  %v1014 = vunpack.c.l.b16 %v964
  %v1015 = vunpack.c.h.b16 %v964
  %v1016 = vunpack.c.l.b16 %v965
  %v1017 = vunpack.c.h.b16 %v965
  %v1018 = vunpack.c.l.b16 %v966
  %v1019 = vunpack.c.l.b16 %v967
  %v1020 = vunpack.c.h.b16 %v967
  %v1021 = vunpack.c.l.b16 %v968
  %v1022 = vunpack.c.h.b16 %v968
  %v1023 = vunpack.c.l.b16 %v969
  %v1024 = vunpack.c.h.b16 %v969
  %v1025 = vunpack.c.l.b16 %v970
  %v1026 = vunpack.c.h.b16 %v970
  %v1027 = vunpack.c.l.b16 %v971
  %v1028 = vpack.c.b16 %v1001, %v992
  %v1029 = vpack.c.b16 %v1002, %v993
  %v1030 = vpack.c.b16 %v1003, %v994
  %v1031 = vpack.c.b16 %v1004, %v995
  %v1032 = vpack.c.b16 %v1005, %v996
  %v1033 = vpack.c.b16 %v1006, %v997
  %v1034 = vpack.c.b16 %v1007, %v998
  %v1035 = vpack.c.b16 %v1008, %v999
  %v1036 = vpack.c.b16 %v1009, %v1000
  %v1037 = vpack.c.b16 %v1019, %v1010
  %v1038 = vpack.c.b16 %v1020, %v1011
  %v1039 = vpack.c.b16 %v1021, %v1012
  %v1040 = vpack.c.b16 %v1022, %v1013
  %v1041 = vpack.c.b16 %v1023, %v1014
  %v1042 = vpack.c.b16 %v1024, %v1015
  %v1043 = vpack.c.b16 %v1025, %v1016
  %v1044 = vpack.c.b16 %v1026, %v1017
  %v1045 = vpack.c.b16 %v1027, %v1018
  %1064 = vmatprep.subr.bf16.mxu0 0
  %1065 = vmatpush1.bf16.msra.mxu0 %v562
  %1066 = vmatprep.subr.bf16.mxu0 0
  %1067 = vmatpush1.bf16.msra.mxu0 %v563
  %1068 = vmatprep.subr.bf16.mxu0 0
  %1069 = vmatpush1.bf16.msra.mxu0 %v564
  %1070 = vmatprep.subr.bf16.mxu0 0
  %1071 = vmatpush1.bf16.msra.mxu0 %v565
  %1072 = vmatprep.subr.bf16.mxu0 0
  %1073 = vmatpush1.bf16.msra.mxu0 %v566
  %1074 = vmatprep.subr.bf16.mxu0 0
  %1075 = vmatpush1.bf16.msra.mxu0 %v567
  %1076 = vmatprep.subr.bf16.mxu0 0
  %1077 = vmatpush1.bf16.msra.mxu0 %v568
  %1078 = vmatprep.subr.bf16.mxu0 0
  %1079 = vmatpush1.bf16.msra.mxu0 %v569
  %1080 = vmatprep.subr.bf16.mxu0 0
  %1081 = vmatpush1.bf16.msra.mxu0 %v570
  %1082 = vmatprep.subr.bf16.mxu0 0
  %1083 = vmatpush1.bf16.msra.mxu0 %v571
  %1084 = vmatprep.subr.bf16.mxu0 0
  %1085 = vmatpush1.bf16.msra.mxu0 %v572
  %1086 = vmatprep.subr.bf16.mxu0 0
  %1087 = vmatpush1.bf16.msra.mxu0 %v573
  %1088 = vmatprep.subr.bf16.mxu0 0
  %1089 = vmatpush1.bf16.msra.mxu0 %v574
  %1090 = vmatprep.subr.bf16.mxu0 0
  %1091 = vmatpush1.bf16.msra.mxu0 %v575
  %1092 = vmatprep.subr.bf16.mxu0 0
  %1093 = vmatpush1.bf16.msra.mxu0 %v576
  %1094 = vmatprep.subr.bf16.mxu0 0
  %1095 = vmatpush1.bf16.msra.mxu0 %v577
  %1096 = vmatprep.mubr.bf16.mxu0 %v1029
  %1097 = vmatmul.mubr.bf16.gmra.mrb[0].mxu0 %v1028
  %v1098 = vpop.f32.mrb[0].mxu0
  %v1099 = vadd.f32 0.0, %v1098
  %v1100 = vpop.f32.mrb[0].mxu0
  %v1101 = vpop.f32.mrb[0].mxu0
  %v1102 = vadd.f32 0.0, %v1101
  %v1103 = vpop.f32.mrb[0].mxu0
  %1104 = vmatprep.mubr.bf16.mxu0 %v1038
  %1105 = vmatmul.mubr.bf16.gmra.mrb[0].mxu0 %v1037
  %v1106 = vpop.f32.mrb[0].mxu0
  %v1107 = vadd.f32 0.0, %v1106
  %v1108 = vpop.f32.mrb[0].mxu0
  %v1109 = vpop.f32.mrb[0].mxu0
  %v1110 = vadd.f32 0.0, %v1109
  %v1111 = vpop.f32.mrb[0].mxu0
  %1112 = vdwg.mxu0
  %1113 = vmatprep.subr.bf16.mxu0 0
  %1114 = vmatpush1.bf16.msra.mxu0 %v578
  %1115 = vmatprep.subr.bf16.mxu0 0
  %1116 = vmatpush1.bf16.msra.mxu0 %v579
  %1117 = vmatprep.subr.bf16.mxu0 0
  %1118 = vmatpush1.bf16.msra.mxu0 %v580
  %1119 = vmatprep.subr.bf16.mxu0 0
  %1120 = vmatpush1.bf16.msra.mxu0 %v581
  %1121 = vmatprep.subr.bf16.mxu0 0
  %1122 = vmatpush1.bf16.msra.mxu0 %v582
  %1123 = vmatprep.subr.bf16.mxu0 0
  %1124 = vmatpush1.bf16.msra.mxu0 %v583
  %1125 = vmatprep.subr.bf16.mxu0 0
  %1126 = vmatpush1.bf16.msra.mxu0 %v584
  %1127 = vmatprep.subr.bf16.mxu0 0
  %1128 = vmatpush1.bf16.msra.mxu0 %v585
  %1129 = vmatprep.subr.bf16.mxu0 0
  %1130 = vmatpush1.bf16.msra.mxu0 %v586
  %1131 = vmatprep.subr.bf16.mxu0 0
  %1132 = vmatpush1.bf16.msra.mxu0 %v587
  %1133 = vmatprep.subr.bf16.mxu0 0
  %1134 = vmatpush1.bf16.msra.mxu0 %v588
  %1135 = vmatprep.subr.bf16.mxu0 0
  %1136 = vmatpush1.bf16.msra.mxu0 %v589
  %1137 = vmatprep.subr.bf16.mxu0 0
  %1138 = vmatpush1.bf16.msra.mxu0 %v590
  %1139 = vmatprep.subr.bf16.mxu0 0
  %1140 = vmatpush1.bf16.msra.mxu0 %v591
  %1141 = vmatprep.subr.bf16.mxu0 0
  %1142 = vmatpush1.bf16.msra.mxu0 %v592
  %1143 = vmatprep.subr.bf16.mxu0 0
  %1144 = vmatpush1.bf16.msra.mxu0 %v593
  %1145 = vmatprep.mubr.bf16.mxu0 %v1031
  %1146 = vmatmul.mubr.bf16.gmra.mrb[0].mxu0 %v1030
  %v1147 = vpop.f32.mrb[0].mxu0
  %v1148 = vadd.f32 %v1099, %v1147
  %v1149 = vpop.f32.mrb[0].mxu0
  %v1150 = vpop.f32.mrb[0].mxu0
  %v1151 = vadd.f32 %v1102, %v1150
  %v1152 = vpop.f32.mrb[0].mxu0
  %1153 = vmatprep.mubr.bf16.mxu0 %v1040
  %1154 = vmatmul.mubr.bf16.gmra.mrb[0].mxu0 %v1039
  %v1155 = vpop.f32.mrb[0].mxu0
  %v1156 = vadd.f32 %v1107, %v1155
  %v1157 = vpop.f32.mrb[0].mxu0
  %v1158 = vpop.f32.mrb[0].mxu0
  %v1159 = vadd.f32 %v1110, %v1158
  %v1160 = vpop.f32.mrb[0].mxu0
  %1161 = vdwg.mxu0
  %1162 = vmatprep.subr.bf16.mxu0 0
  %1163 = vmatpush1.bf16.msra.mxu0 %v594
  %1164 = vmatprep.subr.bf16.mxu0 0
  %1165 = vmatpush1.bf16.msra.mxu0 %v595
  %1166 = vmatprep.subr.bf16.mxu0 0
  %1167 = vmatpush1.bf16.msra.mxu0 %v596
  %1168 = vmatprep.subr.bf16.mxu0 0
  %1169 = vmatpush1.bf16.msra.mxu0 %v597
  %1170 = vmatprep.subr.bf16.mxu0 0
  %1171 = vmatpush1.bf16.msra.mxu0 %v598
  %1172 = vmatprep.subr.bf16.mxu0 0
  %1173 = vmatpush1.bf16.msra.mxu0 %v599
  %1174 = vmatprep.subr.bf16.mxu0 0
  %1175 = vmatpush1.bf16.msra.mxu0 %v600
  %1176 = vmatprep.subr.bf16.mxu0 0
  %1177 = vmatpush1.bf16.msra.mxu0 %v601
  %1178 = vmatprep.subr.bf16.mxu0 0
  %1179 = vmatpush1.bf16.msra.mxu0 %v602
  %1180 = vmatprep.subr.bf16.mxu0 0
  %1181 = vmatpush1.bf16.msra.mxu0 %v603
  %1182 = vmatprep.subr.bf16.mxu0 0
  %1183 = vmatpush1.bf16.msra.mxu0 %v604
  %1184 = vmatprep.subr.bf16.mxu0 0
  %1185 = vmatpush1.bf16.msra.mxu0 %v605
  %1186 = vmatprep.subr.bf16.mxu0 0
  %1187 = vmatpush1.bf16.msra.mxu0 %v606
  %1188 = vmatprep.subr.bf16.mxu0 0
  %1189 = vmatpush1.bf16.msra.mxu0 %v607
  %1190 = vmatprep.subr.bf16.mxu0 0
  %1191 = vmatpush1.bf16.msra.mxu0 %v608
  %1192 = vmatprep.subr.bf16.mxu0 0
  %1193 = vmatpush1.bf16.msra.mxu0 %v609
  %1194 = vmatprep.mubr.bf16.mxu0 %v1033
  %1195 = vmatmul.mubr.bf16.gmra.mrb[0].mxu0 %v1032
  %v1196 = vpop.f32.mrb[0].mxu0
  %v1197 = vadd.f32 %v1148, %v1196
  %v1198 = vpop.f32.mrb[0].mxu0
  %v1199 = vpop.f32.mrb[0].mxu0
  %v1200 = vadd.f32 %v1151, %v1199
  %v1201 = vpop.f32.mrb[0].mxu0
  %1202 = vmatprep.mubr.bf16.mxu0 %v1042
  %1203 = vmatmul.mubr.bf16.gmra.mrb[0].mxu0 %v1041
  %v1204 = vpop.f32.mrb[0].mxu0
  %v1205 = vadd.f32 %v1156, %v1204
  %v1206 = vpop.f32.mrb[0].mxu0
  %v1207 = vpop.f32.mrb[0].mxu0
  %v1208 = vadd.f32 %v1159, %v1207
  %v1209 = vpop.f32.mrb[0].mxu0
  %1210 = vdwg.mxu0
  %1211 = vmatprep.subr.bf16.mxu0 0
  %1212 = vmatpush1.bf16.msra.mxu0 %v610
  %1213 = vmatprep.subr.bf16.mxu0 0
  %1214 = vmatpush1.bf16.msra.mxu0 %v611
  %1215 = vmatprep.subr.bf16.mxu0 0
  %1216 = vmatpush1.bf16.msra.mxu0 %v612
  %1217 = vmatprep.subr.bf16.mxu0 0
  %1218 = vmatpush1.bf16.msra.mxu0 %v613
  %1219 = vmatprep.subr.bf16.mxu0 0
  %1220 = vmatpush1.bf16.msra.mxu0 %v614
  %1221 = vmatprep.subr.bf16.mxu0 0
  %1222 = vmatpush1.bf16.msra.mxu0 %v615
  %1223 = vmatprep.subr.bf16.mxu0 0
  %1224 = vmatpush1.bf16.msra.mxu0 %v616
  %1225 = vmatprep.subr.bf16.mxu0 0
  %1226 = vmatpush1.bf16.msra.mxu0 %v617
  %1227 = vmatprep.subr.bf16.mxu0 0
  %1228 = vmatpush1.bf16.msra.mxu0 %v618
  %1229 = vmatprep.subr.bf16.mxu0 0
  %1230 = vmatpush1.bf16.msra.mxu0 %v619
  %1231 = vmatprep.subr.bf16.mxu0 0
  %1232 = vmatpush1.bf16.msra.mxu0 %v620
  %1233 = vmatprep.subr.bf16.mxu0 0
  %1234 = vmatpush1.bf16.msra.mxu0 %v621
  %1235 = vmatprep.subr.bf16.mxu0 0
  %1236 = vmatpush1.bf16.msra.mxu0 %v622
  %1237 = vmatprep.subr.bf16.mxu0 0
  %1238 = vmatpush1.bf16.msra.mxu0 %v623
  %1239 = vmatprep.subr.bf16.mxu0 0
  %1240 = vmatpush1.bf16.msra.mxu0 %v624
  %1241 = vmatprep.subr.bf16.mxu0 0
  %1242 = vmatpush1.bf16.msra.mxu0 %v625
  %1243 = vmatprep.mubr.bf16.mxu0 %v1035
  %1244 = vmatmul.mubr.bf16.gmra.mrb[0].mxu0 %v1034
  %v1245 = vpop.f32.mrb[0].mxu0
  %v1246 = vadd.f32 %v1197, %v1245
  %v1247 = vpop.f32.mrb[0].mxu0
  %v1248 = vpop.f32.mrb[0].mxu0
  %v1249 = vadd.f32 %v1200, %v1248
  %v1250 = vpop.f32.mrb[0].mxu0
  %1251 = vmatprep.mubr.bf16.mxu0 %v1044
  %1252 = vmatmul.mubr.bf16.gmra.mrb[0].mxu0 %v1043
  %v1253 = vpop.f32.mrb[0].mxu0
  %v1254 = vadd.f32 %v1205, %v1253
  %v1255 = vpop.f32.mrb[0].mxu0
  %v1256 = vpop.f32.mrb[0].mxu0
  %v1257 = vadd.f32 %v1208, %v1256
  %v1258 = vpop.f32.mrb[0].mxu0
  %1259 = vdwg.mxu0
  %1260 = vmatprep.subr.bf16.mxu0 0
  %1261 = vmatpush1.bf16.msra.mxu0 %v626
  %1262 = vmatprep.subr.bf16.mxu0 0
  %1263 = vmatpush1.bf16.msra.mxu0 %v627
  %1264 = vmatprep.subr.bf16.mxu0 0
  %1265 = vmatpush1.bf16.msra.mxu0 %v628
  %1266 = vmatprep.subr.bf16.mxu0 0
  %1267 = vmatpush1.bf16.msra.mxu0 %v629
  %1268 = vmatprep.subr.bf16.mxu0 0
  %1269 = vmatpush1.bf16.msra.mxu0 %v630
  %1270 = vmatprep.subr.bf16.mxu0 0
  %1271 = vmatpush1.bf16.msra.mxu0 %v631
  %1272 = vmatprep.subr.bf16.mxu0 0
  %1273 = vmatpush1.bf16.msra.mxu0 %v632
  %1274 = vmatprep.subr.bf16.mxu0 0
  %1275 = vmatpush1.bf16.msra.mxu0 %v633
  %1276 = vmatprep.subr.bf16.mxu0 0
  %1277 = vmatpush1.bf16.msra.mxu0 0
  %1278 = vmatprep.subr.bf16.mxu0 0
  %1279 = vmatpush1.bf16.msra.mxu0 0
  %1280 = vmatprep.subr.bf16.mxu0 0
  %1281 = vmatpush1.bf16.msra.mxu0 0
  %1282 = vmatprep.subr.bf16.mxu0 0
  %1283 = vmatpush1.bf16.msra.mxu0 0
  %1284 = vmatprep.subr.bf16.mxu0 0
  %1285 = vmatpush1.bf16.msra.mxu0 0
  %1286 = vmatprep.subr.bf16.mxu0 0
  %1287 = vmatpush1.bf16.msra.mxu0 0
  %1288 = vmatprep.subr.bf16.mxu0 0
  %1289 = vmatpush1.bf16.msra.mxu0 0
  %1290 = vmatprep.subr.bf16.mxu0 0
  %1291 = vmatpush1.bf16.msra.mxu0 0
  %1292 = vmatprep.mubr.bf16.mxu0 0
  %1293 = vmatmul.mubr.bf16.gmra.mrb[0].mxu0 %v1036
  %v1294 = vpop.f32.mrb[0].mxu0
  %v1295 = vadd.f32 %v1246, %v1294
  %v1296 = vpop.f32.mrb[0].mxu0
  %v1297 = vpop.f32.mrb[0].mxu0
  %v1298 = vadd.f32 %v1249, %v1297
  %v1299 = vpop.f32.mrb[0].mxu0
  %1300 = vmatprep.mubr.bf16.mxu0 0
  %1301 = vmatmul.mubr.bf16.gmra.mrb[0].mxu0 %v1045
  %v1302 = vpop.f32.mrb[0].mxu0
  %v1303 = vadd.f32 %v1254, %v1302
  %v1304 = vpop.f32.mrb[0].mxu0
  %v1305 = vpop.f32.mrb[0].mxu0
  %v1306 = vadd.f32 %v1257, %v1305
  %v1307 = vpop.f32.mrb[0].mxu0
  %1308 = vdwg.mxu0
  %v1309 = vmax.f32 %v937, %v1295
  %v1310 = vmax.f32 %v940, %v1298
  %v1311 = vmax.f32 %v945, %v1303
  %v1312 = vmax.f32 %v948, %v1306
  %s1313 = scalar_lea.vmem %s0, 288
  %v1314 = vld [vmem:[%s1313] sm:$0xff]
  %v1315 = vld [vmem:[%s1313 + $0x8] sm:$0xff]
  %v1316 = vld [vmem:[%s1313 + $0x10] sm:$0xff]
  %v1317 = vld [vmem:[%s1313 + $0x18] sm:$0xff]
  %v1318 = vld [vmem:[%s1313 + $0x20] sm:$0xf]
  %v1319 = vld [vmem:[%s1313 + $0x24] sm:$0xff]
  %v1320 = vld [vmem:[%s1313 + $0x2c] sm:$0xff]
  %v1321 = vld [vmem:[%s1313 + $0x34] sm:$0xff]
  %v1322 = vld [vmem:[%s1313 + $0x3c] sm:$0xff]
  %v1323 = vld [vmem:[%s1313 + $0x44] sm:$0xf]
  %v1324 = vld [vmem:[%s1313 + $0x48] sm:$0xff]
  %v1325 = vld [vmem:[%s1313 + $0x50] sm:$0xff]
  %v1326 = vld [vmem:[%s1313 + $0x58] sm:$0xff]
  %v1327 = vld [vmem:[%s1313 + $0x60] sm:$0xff]
  %v1328 = vld [vmem:[%s1313 + $0x68] sm:$0xf]
  %v1329 = vld [vmem:[%s1313 + $0x6c] sm:$0xff]
  %v1330 = vld [vmem:[%s1313 + $0x74] sm:$0xff]
  %v1331 = vld [vmem:[%s1313 + $0x7c] sm:$0xff]
  %v1332 = vld [vmem:[%s1313 + $0x84] sm:$0xff]
  %v1333 = vld [vmem:[%s1313 + $0x8c] sm:$0xf]
  %v1354 = vunpack.c.l.b16 %v1314
  %v1355 = vunpack.c.h.b16 %v1314
  %v1356 = vunpack.c.l.b16 %v1315
  %v1357 = vunpack.c.h.b16 %v1315
  %v1358 = vunpack.c.l.b16 %v1316
  %v1359 = vunpack.c.h.b16 %v1316
  %v1360 = vunpack.c.l.b16 %v1317
  %v1361 = vunpack.c.h.b16 %v1317
  %v1362 = vunpack.c.l.b16 %v1318
  %v1363 = vunpack.c.l.b16 %v1319
  %v1364 = vunpack.c.h.b16 %v1319
  %v1365 = vunpack.c.l.b16 %v1320
  %v1366 = vunpack.c.h.b16 %v1320
  %v1367 = vunpack.c.l.b16 %v1321
  %v1368 = vunpack.c.h.b16 %v1321
  %v1369 = vunpack.c.l.b16 %v1322
  %v1370 = vunpack.c.h.b16 %v1322
  %v1371 = vunpack.c.l.b16 %v1323
  %v1372 = vunpack.c.l.b16 %v1324
  %v1373 = vunpack.c.h.b16 %v1324
  %v1374 = vunpack.c.l.b16 %v1325
  %v1375 = vunpack.c.h.b16 %v1325
  %v1376 = vunpack.c.l.b16 %v1326
  %v1377 = vunpack.c.h.b16 %v1326
  %v1378 = vunpack.c.l.b16 %v1327
  %v1379 = vunpack.c.h.b16 %v1327
  %v1380 = vunpack.c.l.b16 %v1328
  %v1381 = vunpack.c.l.b16 %v1329
  %v1382 = vunpack.c.h.b16 %v1329
  %v1383 = vunpack.c.l.b16 %v1330
  %v1384 = vunpack.c.h.b16 %v1330
  %v1385 = vunpack.c.l.b16 %v1331
  %v1386 = vunpack.c.h.b16 %v1331
  %v1387 = vunpack.c.l.b16 %v1332
  %v1388 = vunpack.c.h.b16 %v1332
  %v1389 = vunpack.c.l.b16 %v1333
  %v1390 = vpack.c.b16 %v1363, %v1354
  %v1391 = vpack.c.b16 %v1364, %v1355
  %v1392 = vpack.c.b16 %v1365, %v1356
  %v1393 = vpack.c.b16 %v1366, %v1357
  %v1394 = vpack.c.b16 %v1367, %v1358
  %v1395 = vpack.c.b16 %v1368, %v1359
  %v1396 = vpack.c.b16 %v1369, %v1360
  %v1397 = vpack.c.b16 %v1370, %v1361
  %v1398 = vpack.c.b16 %v1371, %v1362
  %v1399 = vpack.c.b16 %v1381, %v1372
  %v1400 = vpack.c.b16 %v1382, %v1373
  %v1401 = vpack.c.b16 %v1383, %v1374
  %v1402 = vpack.c.b16 %v1384, %v1375
  %v1403 = vpack.c.b16 %v1385, %v1376
  %v1404 = vpack.c.b16 %v1386, %v1377
  %v1405 = vpack.c.b16 %v1387, %v1378
  %v1406 = vpack.c.b16 %v1388, %v1379
  %v1407 = vpack.c.b16 %v1389, %v1380
  %1426 = vmatprep.subr.bf16.mxu0 0
  %1427 = vmatpush1.bf16.msra.mxu0 %v562
  %1428 = vmatprep.subr.bf16.mxu0 0
  %1429 = vmatpush1.bf16.msra.mxu0 %v563
  %1430 = vmatprep.subr.bf16.mxu0 0
  %1431 = vmatpush1.bf16.msra.mxu0 %v564
  %1432 = vmatprep.subr.bf16.mxu0 0
  %1433 = vmatpush1.bf16.msra.mxu0 %v565
  %1434 = vmatprep.subr.bf16.mxu0 0
  %1435 = vmatpush1.bf16.msra.mxu0 %v566
  %1436 = vmatprep.subr.bf16.mxu0 0
  %1437 = vmatpush1.bf16.msra.mxu0 %v567
  %1438 = vmatprep.subr.bf16.mxu0 0
  %1439 = vmatpush1.bf16.msra.mxu0 %v568
  %1440 = vmatprep.subr.bf16.mxu0 0
  %1441 = vmatpush1.bf16.msra.mxu0 %v569
  %1442 = vmatprep.subr.bf16.mxu0 0
  %1443 = vmatpush1.bf16.msra.mxu0 %v570
  %1444 = vmatprep.subr.bf16.mxu0 0
  %1445 = vmatpush1.bf16.msra.mxu0 %v571
  %1446 = vmatprep.subr.bf16.mxu0 0
  %1447 = vmatpush1.bf16.msra.mxu0 %v572
  %1448 = vmatprep.subr.bf16.mxu0 0
  %1449 = vmatpush1.bf16.msra.mxu0 %v573
  %1450 = vmatprep.subr.bf16.mxu0 0
  %1451 = vmatpush1.bf16.msra.mxu0 %v574
  %1452 = vmatprep.subr.bf16.mxu0 0
  %1453 = vmatpush1.bf16.msra.mxu0 %v575
  %1454 = vmatprep.subr.bf16.mxu0 0
  %1455 = vmatpush1.bf16.msra.mxu0 %v576
  %1456 = vmatprep.subr.bf16.mxu0 0
  %1457 = vmatpush1.bf16.msra.mxu0 %v577
  %1458 = vmatprep.mubr.bf16.mxu0 %v1391
  %1459 = vmatmul.mubr.bf16.gmra.mrb[0].mxu0 %v1390
  %v1460 = vpop.f32.mrb[0].mxu0
  %v1461 = vadd.f32 0.0, %v1460
  %v1462 = vpop.f32.mrb[0].mxu0
  %v1463 = vpop.f32.mrb[0].mxu0
  %v1464 = vadd.f32 0.0, %v1463
  %v1465 = vpop.f32.mrb[0].mxu0
  %1466 = vmatprep.mubr.bf16.mxu0 %v1400
  %1467 = vmatmul.mubr.bf16.gmra.mrb[0].mxu0 %v1399
  %v1468 = vpop.f32.mrb[0].mxu0
  %v1469 = vadd.f32 0.0, %v1468
  %v1470 = vpop.f32.mrb[0].mxu0
  %v1471 = vpop.f32.mrb[0].mxu0
  %v1472 = vadd.f32 0.0, %v1471
  %v1473 = vpop.f32.mrb[0].mxu0
  %1474 = vdwg.mxu0
  %1475 = vmatprep.subr.bf16.mxu0 0
  %1476 = vmatpush1.bf16.msra.mxu0 %v578
  %1477 = vmatprep.subr.bf16.mxu0 0
  %1478 = vmatpush1.bf16.msra.mxu0 %v579
  %1479 = vmatprep.subr.bf16.mxu0 0
  %1480 = vmatpush1.bf16.msra.mxu0 %v580
  %1481 = vmatprep.subr.bf16.mxu0 0
  %1482 = vmatpush1.bf16.msra.mxu0 %v581
  %1483 = vmatprep.subr.bf16.mxu0 0
  %1484 = vmatpush1.bf16.msra.mxu0 %v582
  %1485 = vmatprep.subr.bf16.mxu0 0
  %1486 = vmatpush1.bf16.msra.mxu0 %v583
  %1487 = vmatprep.subr.bf16.mxu0 0
  %1488 = vmatpush1.bf16.msra.mxu0 %v584
  %1489 = vmatprep.subr.bf16.mxu0 0
  %1490 = vmatpush1.bf16.msra.mxu0 %v585
  %1491 = vmatprep.subr.bf16.mxu0 0
  %1492 = vmatpush1.bf16.msra.mxu0 %v586
  %1493 = vmatprep.subr.bf16.mxu0 0
  %1494 = vmatpush1.bf16.msra.mxu0 %v587
  %1495 = vmatprep.subr.bf16.mxu0 0
  %1496 = vmatpush1.bf16.msra.mxu0 %v588
  %1497 = vmatprep.subr.bf16.mxu0 0
  %1498 = vmatpush1.bf16.msra.mxu0 %v589
  %1499 = vmatprep.subr.bf16.mxu0 0
  %1500 = vmatpush1.bf16.msra.mxu0 %v590
  %1501 = vmatprep.subr.bf16.mxu0 0
  %1502 = vmatpush1.bf16.msra.mxu0 %v591
  %1503 = vmatprep.subr.bf16.mxu0 0
  %1504 = vmatpush1.bf16.msra.mxu0 %v592
  %1505 = vmatprep.subr.bf16.mxu0 0
  %1506 = vmatpush1.bf16.msra.mxu0 %v593
  %1507 = vmatprep.mubr.bf16.mxu0 %v1393
  %1508 = vmatmul.mubr.bf16.gmra.mrb[0].mxu0 %v1392
  %v1509 = vpop.f32.mrb[0].mxu0
  %v1510 = vadd.f32 %v1461, %v1509
  %v1511 = vpop.f32.mrb[0].mxu0
  %v1512 = vpop.f32.mrb[0].mxu0
  %v1513 = vadd.f32 %v1464, %v1512
  %v1514 = vpop.f32.mrb[0].mxu0
  %1515 = vmatprep.mubr.bf16.mxu0 %v1402
  %1516 = vmatmul.mubr.bf16.gmra.mrb[0].mxu0 %v1401
  %v1517 = vpop.f32.mrb[0].mxu0
  %v1518 = vadd.f32 %v1469, %v1517
  %v1519 = vpop.f32.mrb[0].mxu0
  %v1520 = vpop.f32.mrb[0].mxu0
  %v1521 = vadd.f32 %v1472, %v1520
  %v1522 = vpop.f32.mrb[0].mxu0
  %1523 = vdwg.mxu0
  %1524 = vmatprep.subr.bf16.mxu0 0
  %1525 = vmatpush1.bf16.msra.mxu0 %v594
  %1526 = vmatprep.subr.bf16.mxu0 0
  %1527 = vmatpush1.bf16.msra.mxu0 %v595
  %1528 = vmatprep.subr.bf16.mxu0 0
  %1529 = vmatpush1.bf16.msra.mxu0 %v596
  %1530 = vmatprep.subr.bf16.mxu0 0
  %1531 = vmatpush1.bf16.msra.mxu0 %v597
  %1532 = vmatprep.subr.bf16.mxu0 0
  %1533 = vmatpush1.bf16.msra.mxu0 %v598
  %1534 = vmatprep.subr.bf16.mxu0 0
  %1535 = vmatpush1.bf16.msra.mxu0 %v599
  %1536 = vmatprep.subr.bf16.mxu0 0
  %1537 = vmatpush1.bf16.msra.mxu0 %v600
  %1538 = vmatprep.subr.bf16.mxu0 0
  %1539 = vmatpush1.bf16.msra.mxu0 %v601
  %1540 = vmatprep.subr.bf16.mxu0 0
  %1541 = vmatpush1.bf16.msra.mxu0 %v602
  %1542 = vmatprep.subr.bf16.mxu0 0
  %1543 = vmatpush1.bf16.msra.mxu0 %v603
  %1544 = vmatprep.subr.bf16.mxu0 0
  %1545 = vmatpush1.bf16.msra.mxu0 %v604
  %1546 = vmatprep.subr.bf16.mxu0 0
  %1547 = vmatpush1.bf16.msra.mxu0 %v605
  %1548 = vmatprep.subr.bf16.mxu0 0
  %1549 = vmatpush1.bf16.msra.mxu0 %v606
  %1550 = vmatprep.subr.bf16.mxu0 0
  %1551 = vmatpush1.bf16.msra.mxu0 %v607
  %1552 = vmatprep.subr.bf16.mxu0 0
  %1553 = vmatpush1.bf16.msra.mxu0 %v608
  %1554 = vmatprep.subr.bf16.mxu0 0
  %1555 = vmatpush1.bf16.msra.mxu0 %v609
  %1556 = vmatprep.mubr.bf16.mxu0 %v1395
  %1557 = vmatmul.mubr.bf16.gmra.mrb[0].mxu0 %v1394
  %v1558 = vpop.f32.mrb[0].mxu0
  %v1559 = vadd.f32 %v1510, %v1558
  %v1560 = vpop.f32.mrb[0].mxu0
  %v1561 = vpop.f32.mrb[0].mxu0
  %v1562 = vadd.f32 %v1513, %v1561
  %v1563 = vpop.f32.mrb[0].mxu0
  %1564 = vmatprep.mubr.bf16.mxu0 %v1404
  %1565 = vmatmul.mubr.bf16.gmra.mrb[0].mxu0 %v1403
  %v1566 = vpop.f32.mrb[0].mxu0
  %v1567 = vadd.f32 %v1518, %v1566
  %v1568 = vpop.f32.mrb[0].mxu0
  %v1569 = vpop.f32.mrb[0].mxu0
  %v1570 = vadd.f32 %v1521, %v1569
  %v1571 = vpop.f32.mrb[0].mxu0
  %1572 = vdwg.mxu0
  %1573 = vmatprep.subr.bf16.mxu0 0
  %1574 = vmatpush1.bf16.msra.mxu0 %v610
  %1575 = vmatprep.subr.bf16.mxu0 0
  %1576 = vmatpush1.bf16.msra.mxu0 %v611
  %1577 = vmatprep.subr.bf16.mxu0 0
  %1578 = vmatpush1.bf16.msra.mxu0 %v612
  %1579 = vmatprep.subr.bf16.mxu0 0
  %1580 = vmatpush1.bf16.msra.mxu0 %v613
  %1581 = vmatprep.subr.bf16.mxu0 0
  %1582 = vmatpush1.bf16.msra.mxu0 %v614
  %1583 = vmatprep.subr.bf16.mxu0 0
  %1584 = vmatpush1.bf16.msra.mxu0 %v615
  %1585 = vmatprep.subr.bf16.mxu0 0
  %1586 = vmatpush1.bf16.msra.mxu0 %v616
  %1587 = vmatprep.subr.bf16.mxu0 0
  %1588 = vmatpush1.bf16.msra.mxu0 %v617
  %1589 = vmatprep.subr.bf16.mxu0 0
  %1590 = vmatpush1.bf16.msra.mxu0 %v618
  %1591 = vmatprep.subr.bf16.mxu0 0
  %1592 = vmatpush1.bf16.msra.mxu0 %v619
  %1593 = vmatprep.subr.bf16.mxu0 0
  %1594 = vmatpush1.bf16.msra.mxu0 %v620
  %1595 = vmatprep.subr.bf16.mxu0 0
  %1596 = vmatpush1.bf16.msra.mxu0 %v621
  %1597 = vmatprep.subr.bf16.mxu0 0
  %1598 = vmatpush1.bf16.msra.mxu0 %v622
  %1599 = vmatprep.subr.bf16.mxu0 0
  %1600 = vmatpush1.bf16.msra.mxu0 %v623
  %1601 = vmatprep.subr.bf16.mxu0 0
  %1602 = vmatpush1.bf16.msra.mxu0 %v624
  %1603 = vmatprep.subr.bf16.mxu0 0
  %1604 = vmatpush1.bf16.msra.mxu0 %v625
  %1605 = vmatprep.mubr.bf16.mxu0 %v1397
  %1606 = vmatmul.mubr.bf16.gmra.mrb[0].mxu0 %v1396
  %v1607 = vpop.f32.mrb[0].mxu0
  %v1608 = vadd.f32 %v1559, %v1607
  %v1609 = vpop.f32.mrb[0].mxu0
  %v1610 = vpop.f32.mrb[0].mxu0
  %v1611 = vadd.f32 %v1562, %v1610
  %v1612 = vpop.f32.mrb[0].mxu0
  %1613 = vmatprep.mubr.bf16.mxu0 %v1406
  %1614 = vmatmul.mubr.bf16.gmra.mrb[0].mxu0 %v1405
  %v1615 = vpop.f32.mrb[0].mxu0
  %v1616 = vadd.f32 %v1567, %v1615
  %v1617 = vpop.f32.mrb[0].mxu0
  %v1618 = vpop.f32.mrb[0].mxu0
  %v1619 = vadd.f32 %v1570, %v1618
  %v1620 = vpop.f32.mrb[0].mxu0
  %1621 = vdwg.mxu0
  %1622 = vmatprep.subr.bf16.mxu0 0
  %1623 = vmatpush1.bf16.msra.mxu0 %v626
  %1624 = vmatprep.subr.bf16.mxu0 0
  %1625 = vmatpush1.bf16.msra.mxu0 %v627
  %1626 = vmatprep.subr.bf16.mxu0 0
  %1627 = vmatpush1.bf16.msra.mxu0 %v628
  %1628 = vmatprep.subr.bf16.mxu0 0
  %1629 = vmatpush1.bf16.msra.mxu0 %v629
  %1630 = vmatprep.subr.bf16.mxu0 0
  %1631 = vmatpush1.bf16.msra.mxu0 %v630
  %1632 = vmatprep.subr.bf16.mxu0 0
  %1633 = vmatpush1.bf16.msra.mxu0 %v631
  %1634 = vmatprep.subr.bf16.mxu0 0
  %1635 = vmatpush1.bf16.msra.mxu0 %v632
  %1636 = vmatprep.subr.bf16.mxu0 0
  %1637 = vmatpush1.bf16.msra.mxu0 %v633
  %1638 = vmatprep.subr.bf16.mxu0 0
  %1639 = vmatpush1.bf16.msra.mxu0 0
  %1640 = vmatprep.subr.bf16.mxu0 0
  %1641 = vmatpush1.bf16.msra.mxu0 0
  %1642 = vmatprep.subr.bf16.mxu0 0
  %1643 = vmatpush1.bf16.msra.mxu0 0
  %1644 = vmatprep.subr.bf16.mxu0 0
  %1645 = vmatpush1.bf16.msra.mxu0 0
  %1646 = vmatprep.subr.bf16.mxu0 0
  %1647 = vmatpush1.bf16.msra.mxu0 0
  %1648 = vmatprep.subr.bf16.mxu0 0
  %1649 = vmatpush1.bf16.msra.mxu0 0
  %1650 = vmatprep.subr.bf16.mxu0 0
  %1651 = vmatpush1.bf16.msra.mxu0 0
  %1652 = vmatprep.subr.bf16.mxu0 0
  %1653 = vmatpush1.bf16.msra.mxu0 0
  %1654 = vmatprep.mubr.bf16.mxu0 0
  %1655 = vmatmul.mubr.bf16.gmra.mrb[0].mxu0 %v1398
  %v1656 = vpop.f32.mrb[0].mxu0
  %v1657 = vadd.f32 %v1608, %v1656
  %v1658 = vpop.f32.mrb[0].mxu0
  %v1659 = vpop.f32.mrb[0].mxu0
  %v1660 = vadd.f32 %v1611, %v1659
  %v1661 = vpop.f32.mrb[0].mxu0
  %1662 = vmatprep.mubr.bf16.mxu0 0
  %1663 = vmatmul.mubr.bf16.gmra.mrb[0].mxu0 %v1407
  %v1664 = vpop.f32.mrb[0].mxu0
  %v1665 = vadd.f32 %v1616, %v1664
  %v1666 = vpop.f32.mrb[0].mxu0
  %v1667 = vpop.f32.mrb[0].mxu0
  %v1668 = vadd.f32 %v1619, %v1667
  %v1669 = vpop.f32.mrb[0].mxu0
  %1670 = vdwg.mxu0
  %v1671 = vmax.f32 %v1309, %v1657
  %v1672 = vmax.f32 %v1310, %v1660
  %v1673 = vmax.f32 %v1311, %v1665
  %v1674 = vmax.f32 %v1312, %v1668
  %s1675 = scalar_lea.vmem %s0, 432
  %v1676 = vld [vmem:[%s1675] sm:$0xff]
  %v1677 = vld [vmem:[%s1675 + $0x8] sm:$0xff]
  %v1678 = vld [vmem:[%s1675 + $0x10] sm:$0xff]
  %v1679 = vld [vmem:[%s1675 + $0x18] sm:$0xff]
  %v1680 = vld [vmem:[%s1675 + $0x20] sm:$0xf]
  %v1681 = vld [vmem:[%s1675 + $0x24] sm:$0xff]
  %v1682 = vld [vmem:[%s1675 + $0x2c] sm:$0xff]
  %v1683 = vld [vmem:[%s1675 + $0x34] sm:$0xff]
  %v1684 = vld [vmem:[%s1675 + $0x3c] sm:$0xff]
  %v1685 = vld [vmem:[%s1675 + $0x44] sm:$0xf]
  %v1686 = vld [vmem:[%s1675 + $0x48] sm:$0xff]
  %v1687 = vld [vmem:[%s1675 + $0x50] sm:$0xff]
  %v1688 = vld [vmem:[%s1675 + $0x58] sm:$0xff]
  %v1689 = vld [vmem:[%s1675 + $0x60] sm:$0xff]
  %v1690 = vld [vmem:[%s1675 + $0x68] sm:$0xf]
  %v1691 = vld [vmem:[%s1675 + $0x6c] sm:$0xff]
  %v1692 = vld [vmem:[%s1675 + $0x74] sm:$0xff]
  %v1693 = vld [vmem:[%s1675 + $0x7c] sm:$0xff]
  %v1694 = vld [vmem:[%s1675 + $0x84] sm:$0xff]
  %v1695 = vld [vmem:[%s1675 + $0x8c] sm:$0xf]
  %v1716 = vunpack.c.l.b16 %v1676
  %v1717 = vunpack.c.h.b16 %v1676
  %v1718 = vunpack.c.l.b16 %v1677
  %v1719 = vunpack.c.h.b16 %v1677
  %v1720 = vunpack.c.l.b16 %v1678
  %v1721 = vunpack.c.h.b16 %v1678
  %v1722 = vunpack.c.l.b16 %v1679
  %v1723 = vunpack.c.h.b16 %v1679
  %v1724 = vunpack.c.l.b16 %v1680
  %v1725 = vunpack.c.l.b16 %v1681
  %v1726 = vunpack.c.h.b16 %v1681
  %v1727 = vunpack.c.l.b16 %v1682
  %v1728 = vunpack.c.h.b16 %v1682
  %v1729 = vunpack.c.l.b16 %v1683
  %v1730 = vunpack.c.h.b16 %v1683
  %v1731 = vunpack.c.l.b16 %v1684
  %v1732 = vunpack.c.h.b16 %v1684
  %v1733 = vunpack.c.l.b16 %v1685
  %v1734 = vunpack.c.l.b16 %v1686
  %v1735 = vunpack.c.h.b16 %v1686
  %v1736 = vunpack.c.l.b16 %v1687
  %v1737 = vunpack.c.h.b16 %v1687
  %v1738 = vunpack.c.l.b16 %v1688
  %v1739 = vunpack.c.h.b16 %v1688
  %v1740 = vunpack.c.l.b16 %v1689
  %v1741 = vunpack.c.h.b16 %v1689
  %v1742 = vunpack.c.l.b16 %v1690
  %v1743 = vunpack.c.l.b16 %v1691
  %v1744 = vunpack.c.h.b16 %v1691
  %v1745 = vunpack.c.l.b16 %v1692
  %v1746 = vunpack.c.h.b16 %v1692
  %v1747 = vunpack.c.l.b16 %v1693
  %v1748 = vunpack.c.h.b16 %v1693
  %v1749 = vunpack.c.l.b16 %v1694
  %v1750 = vunpack.c.h.b16 %v1694
  %v1751 = vunpack.c.l.b16 %v1695
  %v1752 = vpack.c.b16 %v1725, %v1716
  %v1753 = vpack.c.b16 %v1726, %v1717
  %v1754 = vpack.c.b16 %v1727, %v1718
  %v1755 = vpack.c.b16 %v1728, %v1719
  %v1756 = vpack.c.b16 %v1729, %v1720
  %v1757 = vpack.c.b16 %v1730, %v1721
  %v1758 = vpack.c.b16 %v1731, %v1722
  %v1759 = vpack.c.b16 %v1732, %v1723
  %v1760 = vpack.c.b16 %v1733, %v1724
  %v1761 = vpack.c.b16 %v1743, %v1734
  %v1762 = vpack.c.b16 %v1744, %v1735
  %v1763 = vpack.c.b16 %v1745, %v1736
  %v1764 = vpack.c.b16 %v1746, %v1737
  %v1765 = vpack.c.b16 %v1747, %v1738
  %v1766 = vpack.c.b16 %v1748, %v1739
  %v1767 = vpack.c.b16 %v1749, %v1740
  %v1768 = vpack.c.b16 %v1750, %v1741
  %v1769 = vpack.c.b16 %v1751, %v1742
  %1788 = vmatprep.subr.bf16.mxu0 0
  %1789 = vmatpush1.bf16.msra.mxu0 %v562
  %1790 = vmatprep.subr.bf16.mxu0 0
  %1791 = vmatpush1.bf16.msra.mxu0 %v563
  %1792 = vmatprep.subr.bf16.mxu0 0
  %1793 = vmatpush1.bf16.msra.mxu0 %v564
  %1794 = vmatprep.subr.bf16.mxu0 0
  %1795 = vmatpush1.bf16.msra.mxu0 %v565
  %1796 = vmatprep.subr.bf16.mxu0 0
  %1797 = vmatpush1.bf16.msra.mxu0 %v566
  %1798 = vmatprep.subr.bf16.mxu0 0
  %1799 = vmatpush1.bf16.msra.mxu0 %v567
  %1800 = vmatprep.subr.bf16.mxu0 0
  %1801 = vmatpush1.bf16.msra.mxu0 %v568
  %1802 = vmatprep.subr.bf16.mxu0 0
  %1803 = vmatpush1.bf16.msra.mxu0 %v569
  %1804 = vmatprep.subr.bf16.mxu0 0
  %1805 = vmatpush1.bf16.msra.mxu0 %v570
  %1806 = vmatprep.subr.bf16.mxu0 0
  %1807 = vmatpush1.bf16.msra.mxu0 %v571
  %1808 = vmatprep.subr.bf16.mxu0 0
  %1809 = vmatpush1.bf16.msra.mxu0 %v572
  %1810 = vmatprep.subr.bf16.mxu0 0
  %1811 = vmatpush1.bf16.msra.mxu0 %v573
  %1812 = vmatprep.subr.bf16.mxu0 0
  %1813 = vmatpush1.bf16.msra.mxu0 %v574
  %1814 = vmatprep.subr.bf16.mxu0 0
  %1815 = vmatpush1.bf16.msra.mxu0 %v575
  %1816 = vmatprep.subr.bf16.mxu0 0
  %1817 = vmatpush1.bf16.msra.mxu0 %v576
  %1818 = vmatprep.subr.bf16.mxu0 0
  %1819 = vmatpush1.bf16.msra.mxu0 %v577
  %1820 = vmatprep.mubr.bf16.mxu0 %v1753
  %1821 = vmatmul.mubr.bf16.gmra.mrb[0].mxu0 %v1752
  %v1822 = vpop.f32.mrb[0].mxu0
  %v1823 = vadd.f32 0.0, %v1822
  %v1824 = vpop.f32.mrb[0].mxu0
  %v1825 = vpop.f32.mrb[0].mxu0
  %v1826 = vadd.f32 0.0, %v1825
  %v1827 = vpop.f32.mrb[0].mxu0
  %1828 = vmatprep.mubr.bf16.mxu0 %v1762
  %1829 = vmatmul.mubr.bf16.gmra.mrb[0].mxu0 %v1761
  %v1830 = vpop.f32.mrb[0].mxu0
  %v1831 = vadd.f32 0.0, %v1830
  %v1832 = vpop.f32.mrb[0].mxu0
  %v1833 = vpop.f32.mrb[0].mxu0
  %v1834 = vadd.f32 0.0, %v1833
  %v1835 = vpop.f32.mrb[0].mxu0
  %1836 = vdwg.mxu0
  %1837 = vmatprep.subr.bf16.mxu0 0
  %1838 = vmatpush1.bf16.msra.mxu0 %v578
  %1839 = vmatprep.subr.bf16.mxu0 0
  %1840 = vmatpush1.bf16.msra.mxu0 %v579
  %1841 = vmatprep.subr.bf16.mxu0 0
  %1842 = vmatpush1.bf16.msra.mxu0 %v580
  %1843 = vmatprep.subr.bf16.mxu0 0
  %1844 = vmatpush1.bf16.msra.mxu0 %v581
  %1845 = vmatprep.subr.bf16.mxu0 0
  %1846 = vmatpush1.bf16.msra.mxu0 %v582
  %1847 = vmatprep.subr.bf16.mxu0 0
  %1848 = vmatpush1.bf16.msra.mxu0 %v583
  %1849 = vmatprep.subr.bf16.mxu0 0
  %1850 = vmatpush1.bf16.msra.mxu0 %v584
  %1851 = vmatprep.subr.bf16.mxu0 0
  %1852 = vmatpush1.bf16.msra.mxu0 %v585
  %1853 = vmatprep.subr.bf16.mxu0 0
  %1854 = vmatpush1.bf16.msra.mxu0 %v586
  %1855 = vmatprep.subr.bf16.mxu0 0
  %1856 = vmatpush1.bf16.msra.mxu0 %v587
  %1857 = vmatprep.subr.bf16.mxu0 0
  %1858 = vmatpush1.bf16.msra.mxu0 %v588
  %1859 = vmatprep.subr.bf16.mxu0 0
  %1860 = vmatpush1.bf16.msra.mxu0 %v589
  %1861 = vmatprep.subr.bf16.mxu0 0
  %1862 = vmatpush1.bf16.msra.mxu0 %v590
  %1863 = vmatprep.subr.bf16.mxu0 0
  %1864 = vmatpush1.bf16.msra.mxu0 %v591
  %1865 = vmatprep.subr.bf16.mxu0 0
  %1866 = vmatpush1.bf16.msra.mxu0 %v592
  %1867 = vmatprep.subr.bf16.mxu0 0
  %1868 = vmatpush1.bf16.msra.mxu0 %v593
  %1869 = vmatprep.mubr.bf16.mxu0 %v1755
  %1870 = vmatmul.mubr.bf16.gmra.mrb[0].mxu0 %v1754
  %v1871 = vpop.f32.mrb[0].mxu0
  %v1872 = vadd.f32 %v1823, %v1871
  %v1873 = vpop.f32.mrb[0].mxu0
  %v1874 = vpop.f32.mrb[0].mxu0
  %v1875 = vadd.f32 %v1826, %v1874
  %v1876 = vpop.f32.mrb[0].mxu0
  %1877 = vmatprep.mubr.bf16.mxu0 %v1764
  %1878 = vmatmul.mubr.bf16.gmra.mrb[0].mxu0 %v1763
  %v1879 = vpop.f32.mrb[0].mxu0
  %v1880 = vadd.f32 %v1831, %v1879
  %v1881 = vpop.f32.mrb[0].mxu0
  %v1882 = vpop.f32.mrb[0].mxu0
  %v1883 = vadd.f32 %v1834, %v1882
  %v1884 = vpop.f32.mrb[0].mxu0
  %1885 = vdwg.mxu0
  %1886 = vmatprep.subr.bf16.mxu0 0
  %1887 = vmatpush1.bf16.msra.mxu0 %v594
  %1888 = vmatprep.subr.bf16.mxu0 0
  %1889 = vmatpush1.bf16.msra.mxu0 %v595
  %1890 = vmatprep.subr.bf16.mxu0 0
  %1891 = vmatpush1.bf16.msra.mxu0 %v596
  %1892 = vmatprep.subr.bf16.mxu0 0
  %1893 = vmatpush1.bf16.msra.mxu0 %v597
  %1894 = vmatprep.subr.bf16.mxu0 0
  %1895 = vmatpush1.bf16.msra.mxu0 %v598
  %1896 = vmatprep.subr.bf16.mxu0 0
  %1897 = vmatpush1.bf16.msra.mxu0 %v599
  %1898 = vmatprep.subr.bf16.mxu0 0
  %1899 = vmatpush1.bf16.msra.mxu0 %v600
  %1900 = vmatprep.subr.bf16.mxu0 0
  %1901 = vmatpush1.bf16.msra.mxu0 %v601
  %1902 = vmatprep.subr.bf16.mxu0 0
  %1903 = vmatpush1.bf16.msra.mxu0 %v602
  %1904 = vmatprep.subr.bf16.mxu0 0
  %1905 = vmatpush1.bf16.msra.mxu0 %v603
  %1906 = vmatprep.subr.bf16.mxu0 0
  %1907 = vmatpush1.bf16.msra.mxu0 %v604
  %1908 = vmatprep.subr.bf16.mxu0 0
  %1909 = vmatpush1.bf16.msra.mxu0 %v605
  %1910 = vmatprep.subr.bf16.mxu0 0
  %1911 = vmatpush1.bf16.msra.mxu0 %v606
  %1912 = vmatprep.subr.bf16.mxu0 0
  %1913 = vmatpush1.bf16.msra.mxu0 %v607
  %1914 = vmatprep.subr.bf16.mxu0 0
  %1915 = vmatpush1.bf16.msra.mxu0 %v608
  %1916 = vmatprep.subr.bf16.mxu0 0
  %1917 = vmatpush1.bf16.msra.mxu0 %v609
  %1918 = vmatprep.mubr.bf16.mxu0 %v1757
  %1919 = vmatmul.mubr.bf16.gmra.mrb[0].mxu0 %v1756
  %v1920 = vpop.f32.mrb[0].mxu0
  %v1921 = vadd.f32 %v1872, %v1920
  %v1922 = vpop.f32.mrb[0].mxu0
  %v1923 = vpop.f32.mrb[0].mxu0
  %v1924 = vadd.f32 %v1875, %v1923
  %v1925 = vpop.f32.mrb[0].mxu0
  %1926 = vmatprep.mubr.bf16.mxu0 %v1766
  %1927 = vmatmul.mubr.bf16.gmra.mrb[0].mxu0 %v1765
  %v1928 = vpop.f32.mrb[0].mxu0
  %v1929 = vadd.f32 %v1880, %v1928
  %v1930 = vpop.f32.mrb[0].mxu0
  %v1931 = vpop.f32.mrb[0].mxu0
  %v1932 = vadd.f32 %v1883, %v1931
  %v1933 = vpop.f32.mrb[0].mxu0
  %1934 = vdwg.mxu0
  %1935 = vmatprep.subr.bf16.mxu0 0
  %1936 = vmatpush1.bf16.msra.mxu0 %v610
  %1937 = vmatprep.subr.bf16.mxu0 0
  %1938 = vmatpush1.bf16.msra.mxu0 %v611
  %1939 = vmatprep.subr.bf16.mxu0 0
  %1940 = vmatpush1.bf16.msra.mxu0 %v612
  %1941 = vmatprep.subr.bf16.mxu0 0
  %1942 = vmatpush1.bf16.msra.mxu0 %v613
  %1943 = vmatprep.subr.bf16.mxu0 0
  %1944 = vmatpush1.bf16.msra.mxu0 %v614
  %1945 = vmatprep.subr.bf16.mxu0 0
  %1946 = vmatpush1.bf16.msra.mxu0 %v615
  %1947 = vmatprep.subr.bf16.mxu0 0
  %1948 = vmatpush1.bf16.msra.mxu0 %v616
  %1949 = vmatprep.subr.bf16.mxu0 0
  %1950 = vmatpush1.bf16.msra.mxu0 %v617
  %1951 = vmatprep.subr.bf16.mxu0 0
  %1952 = vmatpush1.bf16.msra.mxu0 %v618
  %1953 = vmatprep.subr.bf16.mxu0 0
  %1954 = vmatpush1.bf16.msra.mxu0 %v619
  %1955 = vmatprep.subr.bf16.mxu0 0
  %1956 = vmatpush1.bf16.msra.mxu0 %v620
  %1957 = vmatprep.subr.bf16.mxu0 0
  %1958 = vmatpush1.bf16.msra.mxu0 %v621
  %1959 = vmatprep.subr.bf16.mxu0 0
  %1960 = vmatpush1.bf16.msra.mxu0 %v622
  %1961 = vmatprep.subr.bf16.mxu0 0
  %1962 = vmatpush1.bf16.msra.mxu0 %v623
  %1963 = vmatprep.subr.bf16.mxu0 0
  %1964 = vmatpush1.bf16.msra.mxu0 %v624
  %1965 = vmatprep.subr.bf16.mxu0 0
  %1966 = vmatpush1.bf16.msra.mxu0 %v625
  %1967 = vmatprep.mubr.bf16.mxu0 %v1759
  %1968 = vmatmul.mubr.bf16.gmra.mrb[0].mxu0 %v1758
  %v1969 = vpop.f32.mrb[0].mxu0
  %v1970 = vadd.f32 %v1921, %v1969
  %v1971 = vpop.f32.mrb[0].mxu0
  %v1972 = vpop.f32.mrb[0].mxu0
  %v1973 = vadd.f32 %v1924, %v1972
  %v1974 = vpop.f32.mrb[0].mxu0
  %1975 = vmatprep.mubr.bf16.mxu0 %v1768
  %1976 = vmatmul.mubr.bf16.gmra.mrb[0].mxu0 %v1767
  %v1977 = vpop.f32.mrb[0].mxu0
  %v1978 = vadd.f32 %v1929, %v1977
  %v1979 = vpop.f32.mrb[0].mxu0
  %v1980 = vpop.f32.mrb[0].mxu0
  %v1981 = vadd.f32 %v1932, %v1980
  %v1982 = vpop.f32.mrb[0].mxu0
  %1983 = vdwg.mxu0
  %1984 = vmatprep.subr.bf16.mxu0 0
  %1985 = vmatpush1.bf16.msra.mxu0 %v626
  %1986 = vmatprep.subr.bf16.mxu0 0
  %1987 = vmatpush1.bf16.msra.mxu0 %v627
  %1988 = vmatprep.subr.bf16.mxu0 0
  %1989 = vmatpush1.bf16.msra.mxu0 %v628
  %1990 = vmatprep.subr.bf16.mxu0 0
  %1991 = vmatpush1.bf16.msra.mxu0 %v629
  %1992 = vmatprep.subr.bf16.mxu0 0
  %1993 = vmatpush1.bf16.msra.mxu0 %v630
  %1994 = vmatprep.subr.bf16.mxu0 0
  %1995 = vmatpush1.bf16.msra.mxu0 %v631
  %1996 = vmatprep.subr.bf16.mxu0 0
  %1997 = vmatpush1.bf16.msra.mxu0 %v632
  %1998 = vmatprep.subr.bf16.mxu0 0
  %1999 = vmatpush1.bf16.msra.mxu0 %v633
  %2000 = vmatprep.subr.bf16.mxu0 0
  %2001 = vmatpush1.bf16.msra.mxu0 0
  %2002 = vmatprep.subr.bf16.mxu0 0
  %2003 = vmatpush1.bf16.msra.mxu0 0
  %2004 = vmatprep.subr.bf16.mxu0 0
  %2005 = vmatpush1.bf16.msra.mxu0 0
  %2006 = vmatprep.subr.bf16.mxu0 0
  %2007 = vmatpush1.bf16.msra.mxu0 0
  %2008 = vmatprep.subr.bf16.mxu0 0
  %2009 = vmatpush1.bf16.msra.mxu0 0
  %2010 = vmatprep.subr.bf16.mxu0 0
  %2011 = vmatpush1.bf16.msra.mxu0 0
  %2012 = vmatprep.subr.bf16.mxu0 0
  %2013 = vmatpush1.bf16.msra.mxu0 0
  %2014 = vmatprep.subr.bf16.mxu0 0
  %2015 = vmatpush1.bf16.msra.mxu0 0
  %2016 = vmatprep.mubr.bf16.mxu0 0
  %2017 = vmatmul.mubr.bf16.gmra.mrb[0].mxu0 %v1760
  %v2018 = vpop.f32.mrb[0].mxu0
  %v2019 = vadd.f32 %v1970, %v2018
  %v2020 = vpop.f32.mrb[0].mxu0
  %v2021 = vpop.f32.mrb[0].mxu0
  %v2022 = vadd.f32 %v1973, %v2021
  %v2023 = vpop.f32.mrb[0].mxu0
  %2024 = vmatprep.mubr.bf16.mxu0 0
  %2025 = vmatmul.mubr.bf16.gmra.mrb[0].mxu0 %v1769
  %v2026 = vpop.f32.mrb[0].mxu0
  %v2027 = vadd.f32 %v1978, %v2026
  %v2028 = vpop.f32.mrb[0].mxu0
  %v2029 = vpop.f32.mrb[0].mxu0
  %v2030 = vadd.f32 %v1981, %v2029
  %v2031 = vpop.f32.mrb[0].mxu0
  %2032 = vdwg.mxu0
  %v2033 = vmax.f32 %v1671, %v2019
  %v2034 = vmax.f32 %v1672, %v2022
  %v2035 = vmax.f32 %v1673, %v2027
  %v2036 = vmax.f32 %v1674, %v2030
  %v2037 = vld [vmem:[%s2] sm:$0x1]
  %v2039 = vlaneseq
  %v2040 = vshrl.u32 %v2039, 7
  %v2041 = vsub.s32 0, %v2040
  %v2042 = vrot.slane %v2037, %v2041
  %v2044 = vmul.f32 %v2033, %v2042
  %v2045 = vmul.f32 %v2034, %v2042
  %v2046 = vmul.f32 %v2035, %v2042
  %v2047 = vmul.f32 %v2036, %v2042
  %v2048 = vld [vmem:[%s3] sm:$0x1]
  %v2050 = vlaneseq
  %v2051 = vshrl.u32 %v2050, 7
  %v2052 = vsub.s32 0, %v2051
  %v2053 = vrot.slane %v2048, %v2052
  %v2055 = vadd.f32 %v2044, %v2053
  %v2056 = vadd.f32 %v2045, %v2053
  %v2057 = vadd.f32 %v2046, %v2053
  %v2058 = vadd.f32 %v2047, %v2053
  %v2059 = vmax.f32 %v2055, 0.0
  %v2060 = vmax.f32 %v2056, 0.0
  %v2061 = vmax.f32 %v2057, 0.0
  %v2062 = vmax.f32 %v2058, 0.0
  %v2063 = vpack.c.bf16 %v2060, %v2059
  %v2064 = vpack.c.bf16 %v2062, %v2061
  %v2067 = vunpack.c.l.b16 %v2063
  %v2068 = vunpack.c.h.b16 %v2063
  %v2069 = vunpack.c.l.b16 %v2064
  %v2070 = vunpack.c.h.b16 %v2064
  %v2071 = vpack.c.b16 %v2067, %v2067
  %v2072 = vpack.c.b16 %v2068, %v2068
  %v2073 = vpack.c.b16 %v2069, %v2069
  %v2074 = vpack.c.b16 %v2070, %v2070
  %2079 = vst [vmem:[%s4] sm:$0xf] %v2071
  %2080 = vst [vmem:[%s4 + $0x4] sm:$0xf] %v2072
  %2081 = vst [vmem:[%s4 + $0x8] sm:$0xf] %v2073
  %2082 = vst [vmem:[%s4 + $0xc] sm:$0xf] %v2074
  // Predicated region
  $region18: #{cnn_forward.6} parent=0 // pred_check
    _
  $region19: #{cnn_forward.6} parent=0 // pred_check_branch
    %2084 = sbr.rel (0) target = $region21
  $region20: #{cnn_forward.6} parent=0 // pred_region
    _
  $region21: #{cnn_forward.6} parent=0 // pred_fallthru
    _
  // Predicated region
  $region22: #{cnn_forward.6} parent=0 // pred_check
    _
  $region23: #{cnn_forward.6} parent=0 // pred_check_branch
    %2086 = sbr.rel (0) target = $region25
  $region24: #{cnn_forward.6} parent=0 // pred_region
    _
  $region25: #{cnn_forward.6} parent=0 // pred_fallthru
    _

// kernel: cnn_forward.5
$region0: #{cnn_forward.5}
  #allocation0 [shape = 'u32[]', space=smem, size = 0x4, offset = 0x4, fixed_abs, tag = 'smem constant byte address 0x4 - core index']
  #allocation1 [shape = 'u32[144,128]{1,0:T(1,128)}', space=vmem, size = 0x12000, scoped, tag = 'internal scratch']
  %s0 = inlined_call_operand.vmem [shape: bf16[4,128,1152], index: 0, kind: input, shape index: {}]
  %s1 = inlined_call_operand.vmem [shape: bf16[1152,128], index: 1, kind: input, shape index: {}]
  %s2 = inlined_call_operand.vmem [shape: f32[1,128], index: 2, kind: input, shape index: {}]
  %s3 = inlined_call_operand.vmem [shape: f32[1,128], index: 3, kind: input, shape index: {}]
  %s4 = inlined_call_operand.vmem [shape: bf16[128,128], index: 4, kind: output, shape index: {}]
  %s5 = sld [smem:[#allocation0]]
  $region26: #{cnn_forward.5} parent=0
    _
  %s7 = ssub.s32 1, %s5
  %s8 = scalar_select 0, %s7, %s5
  // Predicated region
  $region2: #{cnn_forward.5} parent=0 // pred_check
    _
  $region3: #{cnn_forward.5} parent=0 // pred_check_branch
    %10 = sbr.rel (0) target = $region5
  $region4: #{cnn_forward.5} parent=0 // pred_region
    _
  $region5: #{cnn_forward.5} parent=0 // pred_fallthru
    _
  // Predicated region
  $region6: #{cnn_forward.5} parent=0 // pred_check
    _
  $region7: #{cnn_forward.5} parent=0 // pred_check_branch
    %12 = sbr.rel (0) target = $region9
  $region8: #{cnn_forward.5} parent=0 // pred_region
    _
  $region9: #{cnn_forward.5} parent=0 // pred_fallthru
    _
  // Predicated region
  $region10: #{cnn_forward.5} parent=0 // pred_check
    _
  $region11: #{cnn_forward.5} parent=0 // pred_check_branch
    %14 = sbr.rel (0) target = $region13
  $region12: #{cnn_forward.5} parent=0 // pred_region
    _
  $region13: #{cnn_forward.5} parent=0 // pred_fallthru
    _
  // Predicated region
  $region14: #{cnn_forward.5} parent=0 // pred_check
    _
  $region15: #{cnn_forward.5} parent=0 // pred_check_branch
    %16 = sbr.rel (0) target = $region17
  $region16: #{cnn_forward.5} parent=0 // pred_region
    _
  $region17: #{cnn_forward.5} parent=0 // pred_fallthru
    _
  %v18 = vld [vmem:[%s1] sm:$0xf]
  %v19 = vld [vmem:[%s1 + $0x4] sm:$0xf]
  %v20 = vld [vmem:[%s1 + $0x8] sm:$0xf]
  %v21 = vld [vmem:[%s1 + $0xc] sm:$0xf]
  %v22 = vld [vmem:[%s1 + $0x10] sm:$0xf]
  %v23 = vld [vmem:[%s1 + $0x14] sm:$0xf]
  %v24 = vld [vmem:[%s1 + $0x18] sm:$0xf]
  %v25 = vld [vmem:[%s1 + $0x1c] sm:$0xf]
  %v26 = vld [vmem:[%s1 + $0x20] sm:$0xf]
  %v27 = vld [vmem:[%s1 + $0x24] sm:$0xf]
  %v28 = vld [vmem:[%s1 + $0x28] sm:$0xf]
  %v29 = vld [vmem:[%s1 + $0x2c] sm:$0xf]
  %v30 = vld [vmem:[%s1 + $0x30] sm:$0xf]
  %v31 = vld [vmem:[%s1 + $0x34] sm:$0xf]
  %v32 = vld [vmem:[%s1 + $0x38] sm:$0xf]
  %v33 = vld [vmem:[%s1 + $0x3c] sm:$0xf]
  %v34 = vld [vmem:[%s1 + $0x40] sm:$0xf]
  %v35 = vld [vmem:[%s1 + $0x44] sm:$0xf]
  %v36 = vld [vmem:[%s1 + $0x48] sm:$0xf]
  %v37 = vld [vmem:[%s1 + $0x4c] sm:$0xf]
  %v38 = vld [vmem:[%s1 + $0x50] sm:$0xf]
  %v39 = vld [vmem:[%s1 + $0x54] sm:$0xf]
  %v40 = vld [vmem:[%s1 + $0x58] sm:$0xf]
  %v41 = vld [vmem:[%s1 + $0x5c] sm:$0xf]
  %v42 = vld [vmem:[%s1 + $0x60] sm:$0xf]
  %v43 = vld [vmem:[%s1 + $0x64] sm:$0xf]
  %v44 = vld [vmem:[%s1 + $0x68] sm:$0xf]
  %v45 = vld [vmem:[%s1 + $0x6c] sm:$0xf]
  %v46 = vld [vmem:[%s1 + $0x70] sm:$0xf]
  %v47 = vld [vmem:[%s1 + $0x74] sm:$0xf]
  %v48 = vld [vmem:[%s1 + $0x78] sm:$0xf]
  %v49 = vld [vmem:[%s1 + $0x7c] sm:$0xf]
  %v50 = vld [vmem:[%s1 + $0x80] sm:$0xf]
  %v51 = vld [vmem:[%s1 + $0x84] sm:$0xf]
  %v52 = vld [vmem:[%s1 + $0x88] sm:$0xf]
  %v53 = vld [vmem:[%s1 + $0x8c] sm:$0xf]
  %v54 = vld [vmem:[%s1 + $0x90] sm:$0xf]
  %v55 = vld [vmem:[%s1 + $0x94] sm:$0xf]
  %v56 = vld [vmem:[%s1 + $0x98] sm:$0xf]
  %v57 = vld [vmem:[%s1 + $0x9c] sm:$0xf]
  %v58 = vld [vmem:[%s1 + $0xa0] sm:$0xf]
  %v59 = vld [vmem:[%s1 + $0xa4] sm:$0xf]
  %v60 = vld [vmem:[%s1 + $0xa8] sm:$0xf]
  %v61 = vld [vmem:[%s1 + $0xac] sm:$0xf]
  %v62 = vld [vmem:[%s1 + $0xb0] sm:$0xf]
  %v63 = vld [vmem:[%s1 + $0xb4] sm:$0xf]
  %v64 = vld [vmem:[%s1 + $0xb8] sm:$0xf]
  %v65 = vld [vmem:[%s1 + $0xbc] sm:$0xf]
  %v66 = vld [vmem:[%s1 + $0xc0] sm:$0xf]
  %v67 = vld [vmem:[%s1 + $0xc4] sm:$0xf]
  %v68 = vld [vmem:[%s1 + $0xc8] sm:$0xf]
  %v69 = vld [vmem:[%s1 + $0xcc] sm:$0xf]
  %v70 = vld [vmem:[%s1 + $0xd0] sm:$0xf]
  %v71 = vld [vmem:[%s1 + $0xd4] sm:$0xf]
  %v72 = vld [vmem:[%s1 + $0xd8] sm:$0xf]
  %v73 = vld [vmem:[%s1 + $0xdc] sm:$0xf]
  %v74 = vld [vmem:[%s1 + $0xe0] sm:$0xf]
  %v75 = vld [vmem:[%s1 + $0xe4] sm:$0xf]
  %v76 = vld [vmem:[%s1 + $0xe8] sm:$0xf]
  %v77 = vld [vmem:[%s1 + $0xec] sm:$0xf]
  %v78 = vld [vmem:[%s1 + $0xf0] sm:$0xf]
  %v79 = vld [vmem:[%s1 + $0xf4] sm:$0xf]
  %v80 = vld [vmem:[%s1 + $0xf8] sm:$0xf]
  %v81 = vld [vmem:[%s1 + $0xfc] sm:$0xf]
  %v82 = vld [vmem:[%s1 + $0x100] sm:$0xf]
  %v83 = vld [vmem:[%s1 + $0x104] sm:$0xf]
  %v84 = vld [vmem:[%s1 + $0x108] sm:$0xf]
  %v85 = vld [vmem:[%s1 + $0x10c] sm:$0xf]
  %v86 = vld [vmem:[%s1 + $0x110] sm:$0xf]
  %v87 = vld [vmem:[%s1 + $0x114] sm:$0xf]
  %v88 = vld [vmem:[%s1 + $0x118] sm:$0xf]
  %v89 = vld [vmem:[%s1 + $0x11c] sm:$0xf]
  %v90 = vld [vmem:[%s1 + $0x120] sm:$0xf]
  %v91 = vld [vmem:[%s1 + $0x124] sm:$0xf]
  %v92 = vld [vmem:[%s1 + $0x128] sm:$0xf]
  %v93 = vld [vmem:[%s1 + $0x12c] sm:$0xf]
  %v94 = vld [vmem:[%s1 + $0x130] sm:$0xf]
  %v95 = vld [vmem:[%s1 + $0x134] sm:$0xf]
  %v96 = vld [vmem:[%s1 + $0x138] sm:$0xf]
  %v97 = vld [vmem:[%s1 + $0x13c] sm:$0xf]
  %v98 = vld [vmem:[%s1 + $0x140] sm:$0xf]
  %v99 = vld [vmem:[%s1 + $0x144] sm:$0xf]
  %v100 = vld [vmem:[%s1 + $0x148] sm:$0xf]
  %v101 = vld [vmem:[%s1 + $0x14c] sm:$0xf]
  %v102 = vld [vmem:[%s1 + $0x150] sm:$0xf]
  %v103 = vld [vmem:[%s1 + $0x154] sm:$0xf]
  %v104 = vld [vmem:[%s1 + $0x158] sm:$0xf]
  %v105 = vld [vmem:[%s1 + $0x15c] sm:$0xf]
  %v106 = vld [vmem:[%s1 + $0x160] sm:$0xf]
  %v107 = vld [vmem:[%s1 + $0x164] sm:$0xf]
  %v108 = vld [vmem:[%s1 + $0x168] sm:$0xf]
  %v109 = vld [vmem:[%s1 + $0x16c] sm:$0xf]
  %v110 = vld [vmem:[%s1 + $0x170] sm:$0xf]
  %v111 = vld [vmem:[%s1 + $0x174] sm:$0xf]
  %v112 = vld [vmem:[%s1 + $0x178] sm:$0xf]
  %v113 = vld [vmem:[%s1 + $0x17c] sm:$0xf]
  %v114 = vld [vmem:[%s1 + $0x180] sm:$0xf]
  %v115 = vld [vmem:[%s1 + $0x184] sm:$0xf]
  %v116 = vld [vmem:[%s1 + $0x188] sm:$0xf]
  %v117 = vld [vmem:[%s1 + $0x18c] sm:$0xf]
  %v118 = vld [vmem:[%s1 + $0x190] sm:$0xf]
  %v119 = vld [vmem:[%s1 + $0x194] sm:$0xf]
  %v120 = vld [vmem:[%s1 + $0x198] sm:$0xf]
  %v121 = vld [vmem:[%s1 + $0x19c] sm:$0xf]
  %v122 = vld [vmem:[%s1 + $0x1a0] sm:$0xf]
  %v123 = vld [vmem:[%s1 + $0x1a4] sm:$0xf]
  %v124 = vld [vmem:[%s1 + $0x1a8] sm:$0xf]
  %v125 = vld [vmem:[%s1 + $0x1ac] sm:$0xf]
  %v126 = vld [vmem:[%s1 + $0x1b0] sm:$0xf]
  %v127 = vld [vmem:[%s1 + $0x1b4] sm:$0xf]
  %v128 = vld [vmem:[%s1 + $0x1b8] sm:$0xf]
  %v129 = vld [vmem:[%s1 + $0x1bc] sm:$0xf]
  %v130 = vld [vmem:[%s1 + $0x1c0] sm:$0xf]
  %v131 = vld [vmem:[%s1 + $0x1c4] sm:$0xf]
  %v132 = vld [vmem:[%s1 + $0x1c8] sm:$0xf]
  %v133 = vld [vmem:[%s1 + $0x1cc] sm:$0xf]
  %v134 = vld [vmem:[%s1 + $0x1d0] sm:$0xf]
  %v135 = vld [vmem:[%s1 + $0x1d4] sm:$0xf]
  %v136 = vld [vmem:[%s1 + $0x1d8] sm:$0xf]
  %v137 = vld [vmem:[%s1 + $0x1dc] sm:$0xf]
  %v138 = vld [vmem:[%s1 + $0x1e0] sm:$0xf]
  %v139 = vld [vmem:[%s1 + $0x1e4] sm:$0xf]
  %v140 = vld [vmem:[%s1 + $0x1e8] sm:$0xf]
  %v141 = vld [vmem:[%s1 + $0x1ec] sm:$0xf]
  %v142 = vld [vmem:[%s1 + $0x1f0] sm:$0xf]
  %v143 = vld [vmem:[%s1 + $0x1f4] sm:$0xf]
  %v144 = vld [vmem:[%s1 + $0x1f8] sm:$0xf]
  %v145 = vld [vmem:[%s1 + $0x1fc] sm:$0xf]
  %v146 = vld [vmem:[%s1 + $0x200] sm:$0xf]
  %v147 = vld [vmem:[%s1 + $0x204] sm:$0xf]
  %v148 = vld [vmem:[%s1 + $0x208] sm:$0xf]
  %v149 = vld [vmem:[%s1 + $0x20c] sm:$0xf]
  %v150 = vld [vmem:[%s1 + $0x210] sm:$0xf]
  %v151 = vld [vmem:[%s1 + $0x214] sm:$0xf]
  %v152 = vld [vmem:[%s1 + $0x218] sm:$0xf]
  %v153 = vld [vmem:[%s1 + $0x21c] sm:$0xf]
  %v154 = vld [vmem:[%s1 + $0x220] sm:$0xf]
  %v155 = vld [vmem:[%s1 + $0x224] sm:$0xf]
  %v156 = vld [vmem:[%s1 + $0x228] sm:$0xf]
  %v157 = vld [vmem:[%s1 + $0x22c] sm:$0xf]
  %v158 = vld [vmem:[%s1 + $0x230] sm:$0xf]
  %v159 = vld [vmem:[%s1 + $0x234] sm:$0xf]
  %v160 = vld [vmem:[%s1 + $0x238] sm:$0xf]
  %v161 = vld [vmem:[%s1 + $0x23c] sm:$0xf]
  %v162 = vld [vmem:[%s0] sm:$0xff]
  %v163 = vld [vmem:[%s0 + $0x8] sm:$0xff]
  %v164 = vld [vmem:[%s0 + $0x10] sm:$0xff]
  %v165 = vld [vmem:[%s0 + $0x18] sm:$0xff]
  %v166 = vld [vmem:[%s0 + $0x20] sm:$0xf]
  %v167 = vld [vmem:[%s0 + $0x24] sm:$0xff]
  %v168 = vld [vmem:[%s0 + $0x2c] sm:$0xff]
  %v169 = vld [vmem:[%s0 + $0x34] sm:$0xff]
  %v170 = vld [vmem:[%s0 + $0x3c] sm:$0xff]
  %v171 = vld [vmem:[%s0 + $0x44] sm:$0xf]
  %v172 = vld [vmem:[%s0 + $0x48] sm:$0xff]
  %v173 = vld [vmem:[%s0 + $0x50] sm:$0xff]
  %v174 = vld [vmem:[%s0 + $0x58] sm:$0xff]
  %v175 = vld [vmem:[%s0 + $0x60] sm:$0xff]
  %v176 = vld [vmem:[%s0 + $0x68] sm:$0xf]
  %v177 = vld [vmem:[%s0 + $0x6c] sm:$0xff]
  %v178 = vld [vmem:[%s0 + $0x74] sm:$0xff]
  %v179 = vld [vmem:[%s0 + $0x7c] sm:$0xff]
  %v180 = vld [vmem:[%s0 + $0x84] sm:$0xff]
  %v181 = vld [vmem:[%s0 + $0x8c] sm:$0xf]
  %v182 = vld [vmem:[%s0 + $0x90] sm:$0xff]
  %v183 = vld [vmem:[%s0 + $0x98] sm:$0xff]
  %v184 = vld [vmem:[%s0 + $0xa0] sm:$0xff]
  %v185 = vld [vmem:[%s0 + $0xa8] sm:$0xff]
  %v186 = vld [vmem:[%s0 + $0xb0] sm:$0xf]
  %v187 = vld [vmem:[%s0 + $0xb4] sm:$0xff]
  %v188 = vld [vmem:[%s0 + $0xbc] sm:$0xff]
  %v189 = vld [vmem:[%s0 + $0xc4] sm:$0xff]
  %v190 = vld [vmem:[%s0 + $0xcc] sm:$0xff]
  %v191 = vld [vmem:[%s0 + $0xd4] sm:$0xf]
  %v192 = vld [vmem:[%s0 + $0xd8] sm:$0xff]
  %v193 = vld [vmem:[%s0 + $0xe0] sm:$0xff]
  %v194 = vld [vmem:[%s0 + $0xe8] sm:$0xff]
  %v195 = vld [vmem:[%s0 + $0xf0] sm:$0xff]
  %v196 = vld [vmem:[%s0 + $0xf8] sm:$0xf]
  %v197 = vld [vmem:[%s0 + $0xfc] sm:$0xff]
  %v198 = vld [vmem:[%s0 + $0x104] sm:$0xff]
  %v199 = vld [vmem:[%s0 + $0x10c] sm:$0xff]
  %v200 = vld [vmem:[%s0 + $0x114] sm:$0xff]
  %v201 = vld [vmem:[%s0 + $0x11c] sm:$0xf]
  %v202 = vld [vmem:[%s0 + $0x120] sm:$0xff]
  %v203 = vld [vmem:[%s0 + $0x128] sm:$0xff]
  %v204 = vld [vmem:[%s0 + $0x130] sm:$0xff]
  %v205 = vld [vmem:[%s0 + $0x138] sm:$0xff]
  %v206 = vld [vmem:[%s0 + $0x140] sm:$0xf]
  %v207 = vld [vmem:[%s0 + $0x144] sm:$0xff]
  %v208 = vld [vmem:[%s0 + $0x14c] sm:$0xff]
  %v209 = vld [vmem:[%s0 + $0x154] sm:$0xff]
  %v210 = vld [vmem:[%s0 + $0x15c] sm:$0xff]
  %v211 = vld [vmem:[%s0 + $0x164] sm:$0xf]
  %v212 = vld [vmem:[%s0 + $0x168] sm:$0xff]
  %v213 = vld [vmem:[%s0 + $0x170] sm:$0xff]
  %v214 = vld [vmem:[%s0 + $0x178] sm:$0xff]
  %v215 = vld [vmem:[%s0 + $0x180] sm:$0xff]
  %v216 = vld [vmem:[%s0 + $0x188] sm:$0xf]
  %v217 = vld [vmem:[%s0 + $0x18c] sm:$0xff]
  %v218 = vld [vmem:[%s0 + $0x194] sm:$0xff]
  %v219 = vld [vmem:[%s0 + $0x19c] sm:$0xff]
  %v220 = vld [vmem:[%s0 + $0x1a4] sm:$0xff]
  %v221 = vld [vmem:[%s0 + $0x1ac] sm:$0xf]
  %v222 = vld [vmem:[%s0 + $0x1b0] sm:$0xff]
  %v223 = vld [vmem:[%s0 + $0x1b8] sm:$0xff]
  %v224 = vld [vmem:[%s0 + $0x1c0] sm:$0xff]
  %v225 = vld [vmem:[%s0 + $0x1c8] sm:$0xff]
  %v226 = vld [vmem:[%s0 + $0x1d0] sm:$0xf]
  %v227 = vld [vmem:[%s0 + $0x1d4] sm:$0xff]
  %v228 = vld [vmem:[%s0 + $0x1dc] sm:$0xff]
  %v229 = vld [vmem:[%s0 + $0x1e4] sm:$0xff]
  %v230 = vld [vmem:[%s0 + $0x1ec] sm:$0xff]
  %v231 = vld [vmem:[%s0 + $0x1f4] sm:$0xf]
  %v232 = vld [vmem:[%s0 + $0x1f8] sm:$0xff]
  %v233 = vld [vmem:[%s0 + $0x200] sm:$0xff]
  %v234 = vld [vmem:[%s0 + $0x208] sm:$0xff]
  %v235 = vld [vmem:[%s0 + $0x210] sm:$0xff]
  %v236 = vld [vmem:[%s0 + $0x218] sm:$0xf]
  %v237 = vld [vmem:[%s0 + $0x21c] sm:$0xff]
  %v238 = vld [vmem:[%s0 + $0x224] sm:$0xff]
  %v239 = vld [vmem:[%s0 + $0x22c] sm:$0xff]
  %v240 = vld [vmem:[%s0 + $0x234] sm:$0xff]
  %v241 = vld [vmem:[%s0 + $0x23c] sm:$0xf]
  %v322 = vunpack.c.l.b16 %v162
  %v323 = vunpack.c.h.b16 %v162
  %v324 = vunpack.c.l.b16 %v163
  %v325 = vunpack.c.h.b16 %v163
  %v326 = vunpack.c.l.b16 %v164
  %v327 = vunpack.c.h.b16 %v164
  %v328 = vunpack.c.l.b16 %v165
  %v329 = vunpack.c.h.b16 %v165
  %v330 = vunpack.c.l.b16 %v166
  %v331 = vunpack.c.l.b16 %v167
  %v332 = vunpack.c.h.b16 %v167
  %v333 = vunpack.c.l.b16 %v168
  %v334 = vunpack.c.h.b16 %v168
  %v335 = vunpack.c.l.b16 %v169
  %v336 = vunpack.c.h.b16 %v169
  %v337 = vunpack.c.l.b16 %v170
  %v338 = vunpack.c.h.b16 %v170
  %v339 = vunpack.c.l.b16 %v171
  %v340 = vunpack.c.l.b16 %v172
  %v341 = vunpack.c.h.b16 %v172
  %v342 = vunpack.c.l.b16 %v173
  %v343 = vunpack.c.h.b16 %v173
  %v344 = vunpack.c.l.b16 %v174
  %v345 = vunpack.c.h.b16 %v174
  %v346 = vunpack.c.l.b16 %v175
  %v347 = vunpack.c.h.b16 %v175
  %v348 = vunpack.c.l.b16 %v176
  %v349 = vunpack.c.l.b16 %v177
  %v350 = vunpack.c.h.b16 %v177
  %v351 = vunpack.c.l.b16 %v178
  %v352 = vunpack.c.h.b16 %v178
  %v353 = vunpack.c.l.b16 %v179
  %v354 = vunpack.c.h.b16 %v179
  %v355 = vunpack.c.l.b16 %v180
  %v356 = vunpack.c.h.b16 %v180
  %v357 = vunpack.c.l.b16 %v181
  %v358 = vunpack.c.l.b16 %v182
  %v359 = vunpack.c.h.b16 %v182
  %v360 = vunpack.c.l.b16 %v183
  %v361 = vunpack.c.h.b16 %v183
  %v362 = vunpack.c.l.b16 %v184
  %v363 = vunpack.c.h.b16 %v184
  %v364 = vunpack.c.l.b16 %v185
  %v365 = vunpack.c.h.b16 %v185
  %v366 = vunpack.c.l.b16 %v186
  %v367 = vunpack.c.l.b16 %v187
  %v368 = vunpack.c.h.b16 %v187
  %v369 = vunpack.c.l.b16 %v188
  %v370 = vunpack.c.h.b16 %v188
  %v371 = vunpack.c.l.b16 %v189
  %v372 = vunpack.c.h.b16 %v189
  %v373 = vunpack.c.l.b16 %v190
  %v374 = vunpack.c.h.b16 %v190
  %v375 = vunpack.c.l.b16 %v191
  %v376 = vunpack.c.l.b16 %v192
  %v377 = vunpack.c.h.b16 %v192
  %v378 = vunpack.c.l.b16 %v193
  %v379 = vunpack.c.h.b16 %v193
  %v380 = vunpack.c.l.b16 %v194
  %v381 = vunpack.c.h.b16 %v194
  %v382 = vunpack.c.l.b16 %v195
  %v383 = vunpack.c.h.b16 %v195
  %v384 = vunpack.c.l.b16 %v196
  %v385 = vunpack.c.l.b16 %v197
  %v386 = vunpack.c.h.b16 %v197
  %v387 = vunpack.c.l.b16 %v198
  %v388 = vunpack.c.h.b16 %v198
  %v389 = vunpack.c.l.b16 %v199
  %v390 = vunpack.c.h.b16 %v199
  %v391 = vunpack.c.l.b16 %v200
  %v392 = vunpack.c.h.b16 %v200
  %v393 = vunpack.c.l.b16 %v201
  %v394 = vunpack.c.l.b16 %v202
  %v395 = vunpack.c.h.b16 %v202
  %v396 = vunpack.c.l.b16 %v203
  %v397 = vunpack.c.h.b16 %v203
  %v398 = vunpack.c.l.b16 %v204
  %v399 = vunpack.c.h.b16 %v204
  %v400 = vunpack.c.l.b16 %v205
  %v401 = vunpack.c.h.b16 %v205
  %v402 = vunpack.c.l.b16 %v206
  %v403 = vunpack.c.l.b16 %v207
  %v404 = vunpack.c.h.b16 %v207
  %v405 = vunpack.c.l.b16 %v208
  %v406 = vunpack.c.h.b16 %v208
  %v407 = vunpack.c.l.b16 %v209
  %v408 = vunpack.c.h.b16 %v209
  %v409 = vunpack.c.l.b16 %v210
  %v410 = vunpack.c.h.b16 %v210
  %v411 = vunpack.c.l.b16 %v211
  %v412 = vunpack.c.l.b16 %v212
  %v413 = vunpack.c.h.b16 %v212
  %v414 = vunpack.c.l.b16 %v213
  %v415 = vunpack.c.h.b16 %v213
  %v416 = vunpack.c.l.b16 %v214
  %v417 = vunpack.c.h.b16 %v214
  %v418 = vunpack.c.l.b16 %v215
  %v419 = vunpack.c.h.b16 %v215
  %v420 = vunpack.c.l.b16 %v216
  %v421 = vunpack.c.l.b16 %v217
  %v422 = vunpack.c.h.b16 %v217
  %v423 = vunpack.c.l.b16 %v218
  %v424 = vunpack.c.h.b16 %v218
  %v425 = vunpack.c.l.b16 %v219
  %v426 = vunpack.c.h.b16 %v219
  %v427 = vunpack.c.l.b16 %v220
  %v428 = vunpack.c.h.b16 %v220
  %v429 = vunpack.c.l.b16 %v221
  %v430 = vunpack.c.l.b16 %v222
  %v431 = vunpack.c.h.b16 %v222
  %v432 = vunpack.c.l.b16 %v223
  %v433 = vunpack.c.h.b16 %v223
  %v434 = vunpack.c.l.b16 %v224
  %v435 = vunpack.c.h.b16 %v224
  %v436 = vunpack.c.l.b16 %v225
  %v437 = vunpack.c.h.b16 %v225
  %v438 = vunpack.c.l.b16 %v226
  %v439 = vunpack.c.l.b16 %v227
  %v440 = vunpack.c.h.b16 %v227
  %v441 = vunpack.c.l.b16 %v228
  %v442 = vunpack.c.h.b16 %v228
  %v443 = vunpack.c.l.b16 %v229
  %v444 = vunpack.c.h.b16 %v229
  %v445 = vunpack.c.l.b16 %v230
  %v446 = vunpack.c.h.b16 %v230
  %v447 = vunpack.c.l.b16 %v231
  %v448 = vunpack.c.l.b16 %v232
  %v449 = vunpack.c.h.b16 %v232
  %v450 = vunpack.c.l.b16 %v233
  %v451 = vunpack.c.h.b16 %v233
  %v452 = vunpack.c.l.b16 %v234
  %v453 = vunpack.c.h.b16 %v234
  %v454 = vunpack.c.l.b16 %v235
  %v455 = vunpack.c.h.b16 %v235
  %v456 = vunpack.c.l.b16 %v236
  %v457 = vunpack.c.l.b16 %v237
  %v458 = vunpack.c.h.b16 %v237
  %v459 = vunpack.c.l.b16 %v238
  %v460 = vunpack.c.h.b16 %v238
  %v461 = vunpack.c.l.b16 %v239
  %v462 = vunpack.c.h.b16 %v239
  %v463 = vunpack.c.l.b16 %v240
  %v464 = vunpack.c.h.b16 %v240
  %v465 = vunpack.c.l.b16 %v241
  %v466 = vpack.c.b16 %v331, %v322
  %v467 = vpack.c.b16 %v332, %v323
  %v468 = vpack.c.b16 %v333, %v324
  %v469 = vpack.c.b16 %v334, %v325
  %v470 = vpack.c.b16 %v335, %v326
  %v471 = vpack.c.b16 %v336, %v327
  %v472 = vpack.c.b16 %v337, %v328
  %v473 = vpack.c.b16 %v338, %v329
  %v474 = vpack.c.b16 %v339, %v330
  %v475 = vpack.c.b16 %v349, %v340
  %v476 = vpack.c.b16 %v350, %v341
  %v477 = vpack.c.b16 %v351, %v342
  %v478 = vpack.c.b16 %v352, %v343
  %v479 = vpack.c.b16 %v353, %v344
  %v480 = vpack.c.b16 %v354, %v345
  %v481 = vpack.c.b16 %v355, %v346
  %v482 = vpack.c.b16 %v356, %v347
  %v483 = vpack.c.b16 %v357, %v348
  %v484 = vpack.c.b16 %v367, %v358
  %v485 = vpack.c.b16 %v368, %v359
  %v486 = vpack.c.b16 %v369, %v360
  %v487 = vpack.c.b16 %v370, %v361
  %v488 = vpack.c.b16 %v371, %v362
  %v489 = vpack.c.b16 %v372, %v363
  %v490 = vpack.c.b16 %v373, %v364
  %v491 = vpack.c.b16 %v374, %v365
  %v492 = vpack.c.b16 %v375, %v366
  %v493 = vpack.c.b16 %v385, %v376
  %v494 = vpack.c.b16 %v386, %v377
  %v495 = vpack.c.b16 %v387, %v378
  %v496 = vpack.c.b16 %v388, %v379
  %v497 = vpack.c.b16 %v389, %v380
  %v498 = vpack.c.b16 %v390, %v381
  %v499 = vpack.c.b16 %v391, %v382
  %v500 = vpack.c.b16 %v392, %v383
  %v501 = vpack.c.b16 %v393, %v384
  %v502 = vpack.c.b16 %v403, %v394
  %v503 = vpack.c.b16 %v404, %v395
  %v504 = vpack.c.b16 %v405, %v396
  %v505 = vpack.c.b16 %v406, %v397
  %v506 = vpack.c.b16 %v407, %v398
  %v507 = vpack.c.b16 %v408, %v399
  %v508 = vpack.c.b16 %v409, %v400
  %v509 = vpack.c.b16 %v410, %v401
  %v510 = vpack.c.b16 %v411, %v402
  %v511 = vpack.c.b16 %v421, %v412
  %v512 = vpack.c.b16 %v422, %v413
  %v513 = vpack.c.b16 %v423, %v414
  %v514 = vpack.c.b16 %v424, %v415
  %v515 = vpack.c.b16 %v425, %v416
  %v516 = vpack.c.b16 %v426, %v417
  %v517 = vpack.c.b16 %v427, %v418
  %v518 = vpack.c.b16 %v428, %v419
  %v519 = vpack.c.b16 %v429, %v420
  %v520 = vpack.c.b16 %v439, %v430
  %v521 = vpack.c.b16 %v440, %v431
  %v522 = vpack.c.b16 %v441, %v432
  %v523 = vpack.c.b16 %v442, %v433
  %v524 = vpack.c.b16 %v443, %v434
  %v525 = vpack.c.b16 %v444, %v435
  %v526 = vpack.c.b16 %v445, %v436
  %v527 = vpack.c.b16 %v446, %v437
  %v528 = vpack.c.b16 %v447, %v438
  %v529 = vpack.c.b16 %v457, %v448
  %v530 = vpack.c.b16 %v458, %v449
  %v531 = vpack.c.b16 %v459, %v450
  %v532 = vpack.c.b16 %v460, %v451
  %v533 = vpack.c.b16 %v461, %v452
  %v534 = vpack.c.b16 %v462, %v453
  %v535 = vpack.c.b16 %v463, %v454
  %v536 = vpack.c.b16 %v464, %v455
  %v537 = vpack.c.b16 %v465, %v456
  %v754 = vunpack.c.l.b16 %v18
  %v755 = vunpack.c.l.b16 %v19
  %v756 = vunpack.c.l.b16 %v20
  %v757 = vunpack.c.l.b16 %v21
  %v758 = vunpack.c.l.b16 %v22
  %v759 = vunpack.c.l.b16 %v23
  %v760 = vunpack.c.l.b16 %v24
  %v761 = vunpack.c.l.b16 %v25
  %v762 = vunpack.c.l.b16 %v26
  %v763 = vunpack.c.l.b16 %v27
  %v764 = vunpack.c.l.b16 %v28
  %v765 = vunpack.c.l.b16 %v29
  %v766 = vunpack.c.l.b16 %v30
  %v767 = vunpack.c.l.b16 %v31
  %v768 = vunpack.c.l.b16 %v32
  %v769 = vunpack.c.l.b16 %v33
  %v770 = vunpack.c.l.b16 %v34
  %v771 = vunpack.c.l.b16 %v35
  %v772 = vunpack.c.l.b16 %v36
  %v773 = vunpack.c.l.b16 %v37
  %v774 = vunpack.c.l.b16 %v38
  %v775 = vunpack.c.l.b16 %v39
  %v776 = vunpack.c.l.b16 %v40
  %v777 = vunpack.c.l.b16 %v41
  %v778 = vunpack.c.l.b16 %v42
  %v779 = vunpack.c.l.b16 %v43
  %v780 = vunpack.c.l.b16 %v44
  %v781 = vunpack.c.l.b16 %v45
  %v782 = vunpack.c.l.b16 %v46
  %v783 = vunpack.c.l.b16 %v47
  %v784 = vunpack.c.l.b16 %v48
  %v785 = vunpack.c.l.b16 %v49
  %v786 = vunpack.c.l.b16 %v50
  %v787 = vunpack.c.l.b16 %v51
  %v788 = vunpack.c.l.b16 %v52
  %v789 = vunpack.c.l.b16 %v53
  %v790 = vunpack.c.l.b16 %v54
  %v791 = vunpack.c.l.b16 %v55
  %v792 = vunpack.c.l.b16 %v56
  %v793 = vunpack.c.l.b16 %v57
  %v794 = vunpack.c.l.b16 %v58
  %v795 = vunpack.c.l.b16 %v59
  %v796 = vunpack.c.l.b16 %v60
  %v797 = vunpack.c.l.b16 %v61
  %v798 = vunpack.c.l.b16 %v62
  %v799 = vunpack.c.l.b16 %v63
  %v800 = vunpack.c.l.b16 %v64
  %v801 = vunpack.c.l.b16 %v65
  %v802 = vunpack.c.l.b16 %v66
  %v803 = vunpack.c.l.b16 %v67
  %v804 = vunpack.c.l.b16 %v68
  %v805 = vunpack.c.l.b16 %v69
  %v806 = vunpack.c.l.b16 %v70
  %v807 = vunpack.c.l.b16 %v71
  %v808 = vunpack.c.l.b16 %v72
  %v809 = vunpack.c.l.b16 %v73
  %v810 = vunpack.c.l.b16 %v74
  %v811 = vunpack.c.l.b16 %v75
  %v812 = vunpack.c.l.b16 %v76
  %v813 = vunpack.c.l.b16 %v77
  %v814 = vunpack.c.l.b16 %v78
  %v815 = vunpack.c.l.b16 %v79
  %v816 = vunpack.c.l.b16 %v80
  %v817 = vunpack.c.l.b16 %v81
  %v818 = vunpack.c.l.b16 %v82
  %v819 = vunpack.c.l.b16 %v83
  %v820 = vunpack.c.l.b16 %v84
  %v821 = vunpack.c.l.b16 %v85
  %v822 = vunpack.c.l.b16 %v86
  %v823 = vunpack.c.l.b16 %v87
  %v824 = vunpack.c.l.b16 %v88
  %v825 = vunpack.c.l.b16 %v89
  %v826 = vunpack.c.l.b16 %v90
  %v827 = vunpack.c.l.b16 %v91
  %v828 = vunpack.c.l.b16 %v92
  %v829 = vunpack.c.l.b16 %v93
  %v830 = vunpack.c.l.b16 %v94
  %v831 = vunpack.c.l.b16 %v95
  %v832 = vunpack.c.l.b16 %v96
  %v833 = vunpack.c.l.b16 %v97
  %v834 = vunpack.c.l.b16 %v98
  %v835 = vunpack.c.l.b16 %v99
  %v836 = vunpack.c.l.b16 %v100
  %v837 = vunpack.c.l.b16 %v101
  %v838 = vunpack.c.l.b16 %v102
  %v839 = vunpack.c.l.b16 %v103
  %v840 = vunpack.c.l.b16 %v104
  %v841 = vunpack.c.l.b16 %v105
  %v842 = vunpack.c.l.b16 %v106
  %v843 = vunpack.c.l.b16 %v107
  %v844 = vunpack.c.l.b16 %v108
  %v845 = vunpack.c.l.b16 %v109
  %v846 = vunpack.c.l.b16 %v110
  %v847 = vunpack.c.l.b16 %v111
  %v848 = vunpack.c.l.b16 %v112
  %v849 = vunpack.c.l.b16 %v113
  %v850 = vunpack.c.l.b16 %v114
  %v851 = vunpack.c.l.b16 %v115
  %v852 = vunpack.c.l.b16 %v116
  %v853 = vunpack.c.l.b16 %v117
  %v854 = vunpack.c.l.b16 %v118
  %v855 = vunpack.c.l.b16 %v119
  %v856 = vunpack.c.l.b16 %v120
  %v857 = vunpack.c.l.b16 %v121
  %v858 = vunpack.c.l.b16 %v122
  %v859 = vunpack.c.l.b16 %v123
  %v860 = vunpack.c.l.b16 %v124
  %v861 = vunpack.c.l.b16 %v125
  %v862 = vunpack.c.l.b16 %v126
  %v863 = vunpack.c.l.b16 %v127
  %v864 = vunpack.c.l.b16 %v128
  %v865 = vunpack.c.l.b16 %v129
  %v866 = vunpack.c.l.b16 %v130
  %v867 = vunpack.c.l.b16 %v131
  %v868 = vunpack.c.l.b16 %v132
  %v869 = vunpack.c.l.b16 %v133
  %v870 = vunpack.c.l.b16 %v134
  %v871 = vunpack.c.l.b16 %v135
  %v872 = vunpack.c.l.b16 %v136
  %v873 = vunpack.c.l.b16 %v137
  %v874 = vunpack.c.l.b16 %v138
  %v875 = vunpack.c.l.b16 %v139
  %v876 = vunpack.c.l.b16 %v140
  %v877 = vunpack.c.l.b16 %v141
  %v878 = vunpack.c.l.b16 %v142
  %v879 = vunpack.c.l.b16 %v143
  %v880 = vunpack.c.l.b16 %v144
  %v881 = vunpack.c.l.b16 %v145
  %v882 = vunpack.c.l.b16 %v146
  %v883 = vunpack.c.l.b16 %v147
  %v884 = vunpack.c.l.b16 %v148
  %v885 = vunpack.c.l.b16 %v149
  %v886 = vunpack.c.l.b16 %v150
  %v887 = vunpack.c.l.b16 %v151
  %v888 = vunpack.c.l.b16 %v152
  %v889 = vunpack.c.l.b16 %v153
  %v890 = vunpack.c.l.b16 %v154
  %v891 = vunpack.c.l.b16 %v155
  %v892 = vunpack.c.l.b16 %v156
  %v893 = vunpack.c.l.b16 %v157
  %v894 = vunpack.c.l.b16 %v158
  %v895 = vunpack.c.l.b16 %v159
  %v896 = vunpack.c.l.b16 %v160
  %v897 = vunpack.c.l.b16 %v161
  %v898 = vpack.c.b16 %v755, %v754
  %v899 = vpack.c.b16 %v757, %v756
  %v900 = vpack.c.b16 %v759, %v758
  %v901 = vpack.c.b16 %v761, %v760
  %v902 = vpack.c.b16 %v763, %v762
  %v903 = vpack.c.b16 %v765, %v764
  %v904 = vpack.c.b16 %v767, %v766
  %v905 = vpack.c.b16 %v769, %v768
  %v906 = vpack.c.b16 %v771, %v770
  %v907 = vpack.c.b16 %v773, %v772
  %v908 = vpack.c.b16 %v775, %v774
  %v909 = vpack.c.b16 %v777, %v776
  %v910 = vpack.c.b16 %v779, %v778
  %v911 = vpack.c.b16 %v781, %v780
  %v912 = vpack.c.b16 %v783, %v782
  %v913 = vpack.c.b16 %v785, %v784
  %v914 = vpack.c.b16 %v787, %v786
  %v915 = vpack.c.b16 %v789, %v788
  %v916 = vpack.c.b16 %v791, %v790
  %v917 = vpack.c.b16 %v793, %v792
  %v918 = vpack.c.b16 %v795, %v794
  %v919 = vpack.c.b16 %v797, %v796
  %v920 = vpack.c.b16 %v799, %v798
  %v921 = vpack.c.b16 %v801, %v800
  %v922 = vpack.c.b16 %v803, %v802
  %v923 = vpack.c.b16 %v805, %v804
  %v924 = vpack.c.b16 %v807, %v806
  %v925 = vpack.c.b16 %v809, %v808
  %v926 = vpack.c.b16 %v811, %v810
  %v927 = vpack.c.b16 %v813, %v812
  %v928 = vpack.c.b16 %v815, %v814
  %v929 = vpack.c.b16 %v817, %v816
  %v930 = vpack.c.b16 %v819, %v818
  %v931 = vpack.c.b16 %v821, %v820
  %v932 = vpack.c.b16 %v823, %v822
  %v933 = vpack.c.b16 %v825, %v824
  %v934 = vpack.c.b16 %v827, %v826
  %v935 = vpack.c.b16 %v829, %v828
  %v936 = vpack.c.b16 %v831, %v830
  %v937 = vpack.c.b16 %v833, %v832
  %v938 = vpack.c.b16 %v835, %v834
  %v939 = vpack.c.b16 %v837, %v836
  %v940 = vpack.c.b16 %v839, %v838
  %v941 = vpack.c.b16 %v841, %v840
  %v942 = vpack.c.b16 %v843, %v842
  %v943 = vpack.c.b16 %v845, %v844
  %v944 = vpack.c.b16 %v847, %v846
  %v945 = vpack.c.b16 %v849, %v848
  %v946 = vpack.c.b16 %v851, %v850
  %v947 = vpack.c.b16 %v853, %v852
  %v948 = vpack.c.b16 %v855, %v854
  %v949 = vpack.c.b16 %v857, %v856
  %v950 = vpack.c.b16 %v859, %v858
  %v951 = vpack.c.b16 %v861, %v860
  %v952 = vpack.c.b16 %v863, %v862
  %v953 = vpack.c.b16 %v865, %v864
  %v954 = vpack.c.b16 %v867, %v866
  %v955 = vpack.c.b16 %v869, %v868
  %v956 = vpack.c.b16 %v871, %v870
  %v957 = vpack.c.b16 %v873, %v872
  %v958 = vpack.c.b16 %v875, %v874
  %v959 = vpack.c.b16 %v877, %v876
  %v960 = vpack.c.b16 %v879, %v878
  %v961 = vpack.c.b16 %v881, %v880
  %v962 = vpack.c.b16 %v883, %v882
  %v963 = vpack.c.b16 %v885, %v884
  %v964 = vpack.c.b16 %v887, %v886
  %v965 = vpack.c.b16 %v889, %v888
  %v966 = vpack.c.b16 %v891, %v890
  %v967 = vpack.c.b16 %v893, %v892
  %v968 = vpack.c.b16 %v895, %v894
  %v969 = vpack.c.b16 %v897, %v896
  %1042 = vmatprep.subr.bf16.mxu0 0
  %1043 = vmatpush1.bf16.msra.mxu0 %v898
  %1044 = vmatprep.subr.bf16.mxu0 0
  %1045 = vmatpush1.bf16.msra.mxu0 %v899
  %1046 = vmatprep.subr.bf16.mxu0 0
  %1047 = vmatpush1.bf16.msra.mxu0 %v900
  %1048 = vmatprep.subr.bf16.mxu0 0
  %1049 = vmatpush1.bf16.msra.mxu0 %v901
  %1050 = vmatprep.subr.bf16.mxu0 0
  %1051 = vmatpush1.bf16.msra.mxu0 %v902
  %1052 = vmatprep.subr.bf16.mxu0 0
  %1053 = vmatpush1.bf16.msra.mxu0 %v903
  %1054 = vmatprep.subr.bf16.mxu0 0
  %1055 = vmatpush1.bf16.msra.mxu0 %v904
  %1056 = vmatprep.subr.bf16.mxu0 0
  %1057 = vmatpush1.bf16.msra.mxu0 %v905
  %1058 = vmatprep.subr.bf16.mxu0 0
  %1059 = vmatpush1.bf16.msra.mxu0 %v906
  %1060 = vmatprep.subr.bf16.mxu0 0
  %1061 = vmatpush1.bf16.msra.mxu0 %v907
  %1062 = vmatprep.subr.bf16.mxu0 0
  %1063 = vmatpush1.bf16.msra.mxu0 %v908
  %1064 = vmatprep.subr.bf16.mxu0 0
  %1065 = vmatpush1.bf16.msra.mxu0 %v909
  %1066 = vmatprep.subr.bf16.mxu0 0
  %1067 = vmatpush1.bf16.msra.mxu0 %v910
  %1068 = vmatprep.subr.bf16.mxu0 0
  %1069 = vmatpush1.bf16.msra.mxu0 %v911
  %1070 = vmatprep.subr.bf16.mxu0 0
  %1071 = vmatpush1.bf16.msra.mxu0 %v912
  %1072 = vmatprep.subr.bf16.mxu0 0
  %1073 = vmatpush1.bf16.msra.mxu0 %v913
  %1074 = vmatprep.mubr.bf16.mxu0 %v467
  %1075 = vmatmul.mubr.bf16.gmra.mrb[0].mxu0 %v466
  %v1076 = vpop.f32.mrb[0].mxu0
  %v1077 = vadd.f32 0.0, %v1076
  %v1078 = vpop.f32.mrb[0].mxu0
  %v1079 = vpop.f32.mrb[0].mxu0
  %v1080 = vadd.f32 0.0, %v1079
  %v1081 = vpop.f32.mrb[0].mxu0
  %1082 = vmatprep.mubr.bf16.mxu0 %v476
  %1083 = vmatmul.mubr.bf16.gmra.mrb[0].mxu0 %v475
  %v1084 = vpop.f32.mrb[0].mxu0
  %v1085 = vadd.f32 0.0, %v1084
  %v1086 = vpop.f32.mrb[0].mxu0
  %v1087 = vpop.f32.mrb[0].mxu0
  %v1088 = vadd.f32 0.0, %v1087
  %v1089 = vpop.f32.mrb[0].mxu0
  %1090 = vmatprep.mubr.bf16.mxu0 %v485
  %1091 = vmatmul.mubr.bf16.gmra.mrb[0].mxu0 %v484
  %v1092 = vpop.f32.mrb[0].mxu0
  %v1093 = vadd.f32 0.0, %v1092
  %v1094 = vpop.f32.mrb[0].mxu0
  %v1095 = vpop.f32.mrb[0].mxu0
  %v1096 = vadd.f32 0.0, %v1095
  %v1097 = vpop.f32.mrb[0].mxu0
  %1098 = vmatprep.mubr.bf16.mxu0 %v494
  %1099 = vmatmul.mubr.bf16.gmra.mrb[0].mxu0 %v493
  %v1100 = vpop.f32.mrb[0].mxu0
  %v1101 = vadd.f32 0.0, %v1100
  %v1102 = vpop.f32.mrb[0].mxu0
  %v1103 = vpop.f32.mrb[0].mxu0
  %v1104 = vadd.f32 0.0, %v1103
  %v1105 = vpop.f32.mrb[0].mxu0
  %1106 = vmatprep.mubr.bf16.mxu0 %v503
  %1107 = vmatmul.mubr.bf16.gmra.mrb[0].mxu0 %v502
  %v1108 = vpop.f32.mrb[0].mxu0
  %v1109 = vadd.f32 0.0, %v1108
  %v1110 = vpop.f32.mrb[0].mxu0
  %v1111 = vpop.f32.mrb[0].mxu0
  %v1112 = vadd.f32 0.0, %v1111
  %v1113 = vpop.f32.mrb[0].mxu0
  %1114 = vmatprep.mubr.bf16.mxu0 %v512
  %1115 = vmatmul.mubr.bf16.gmra.mrb[0].mxu0 %v511
  %v1116 = vpop.f32.mrb[0].mxu0
  %v1117 = vadd.f32 0.0, %v1116
  %v1118 = vpop.f32.mrb[0].mxu0
  %v1119 = vpop.f32.mrb[0].mxu0
  %v1120 = vadd.f32 0.0, %v1119
  %v1121 = vpop.f32.mrb[0].mxu0
  %1122 = vmatprep.mubr.bf16.mxu0 %v521
  %1123 = vmatmul.mubr.bf16.gmra.mrb[0].mxu0 %v520
  %v1124 = vpop.f32.mrb[0].mxu0
  %v1125 = vadd.f32 0.0, %v1124
  %v1126 = vpop.f32.mrb[0].mxu0
  %v1127 = vpop.f32.mrb[0].mxu0
  %v1128 = vadd.f32 0.0, %v1127
  %v1129 = vpop.f32.mrb[0].mxu0
  %1130 = vmatprep.mubr.bf16.mxu0 %v530
  %1131 = vmatmul.mubr.bf16.gmra.mrb[0].mxu0 %v529
  %v1132 = vpop.f32.mrb[0].mxu0
  %v1133 = vadd.f32 0.0, %v1132
  %v1134 = vpop.f32.mrb[0].mxu0
  %v1135 = vpop.f32.mrb[0].mxu0
  %v1136 = vadd.f32 0.0, %v1135
  %v1137 = vpop.f32.mrb[0].mxu0
  %1138 = vdwg.mxu0
  %1139 = vmatprep.subr.bf16.mxu0 0
  %1140 = vmatpush1.bf16.msra.mxu0 %v914
  %1141 = vmatprep.subr.bf16.mxu0 0
  %1142 = vmatpush1.bf16.msra.mxu0 %v915
  %1143 = vmatprep.subr.bf16.mxu0 0
  %1144 = vmatpush1.bf16.msra.mxu0 %v916
  %1145 = vmatprep.subr.bf16.mxu0 0
  %1146 = vmatpush1.bf16.msra.mxu0 %v917
  %1147 = vmatprep.subr.bf16.mxu0 0
  %1148 = vmatpush1.bf16.msra.mxu0 %v918
  %1149 = vmatprep.subr.bf16.mxu0 0
  %1150 = vmatpush1.bf16.msra.mxu0 %v919
  %1151 = vmatprep.subr.bf16.mxu0 0
  %1152 = vmatpush1.bf16.msra.mxu0 %v920
  %1153 = vmatprep.subr.bf16.mxu0 0
  %1154 = vmatpush1.bf16.msra.mxu0 %v921
  %1155 = vmatprep.subr.bf16.mxu0 0
  %1156 = vmatpush1.bf16.msra.mxu0 %v922
  %1157 = vmatprep.subr.bf16.mxu0 0
  %1158 = vmatpush1.bf16.msra.mxu0 %v923
  %1159 = vmatprep.subr.bf16.mxu0 0
  %1160 = vmatpush1.bf16.msra.mxu0 %v924
  %1161 = vmatprep.subr.bf16.mxu0 0
  %1162 = vmatpush1.bf16.msra.mxu0 %v925
  %1163 = vmatprep.subr.bf16.mxu0 0
  %1164 = vmatpush1.bf16.msra.mxu0 %v926
  %1165 = vmatprep.subr.bf16.mxu0 0
  %1166 = vmatpush1.bf16.msra.mxu0 %v927
  %1167 = vmatprep.subr.bf16.mxu0 0
  %1168 = vmatpush1.bf16.msra.mxu0 %v928
  %1169 = vmatprep.subr.bf16.mxu0 0
  %1170 = vmatpush1.bf16.msra.mxu0 %v929
  %1171 = vmatprep.mubr.bf16.mxu0 %v469
  %1172 = vmatmul.mubr.bf16.gmra.mrb[0].mxu0 %v468
  %v1173 = vpop.f32.mrb[0].mxu0
  %v1174 = vadd.f32 %v1077, %v1173
  %v1175 = vpop.f32.mrb[0].mxu0
  %v1176 = vpop.f32.mrb[0].mxu0
  %v1177 = vadd.f32 %v1080, %v1176
  %v1178 = vpop.f32.mrb[0].mxu0
  %1179 = vmatprep.mubr.bf16.mxu0 %v478
  %1180 = vmatmul.mubr.bf16.gmra.mrb[0].mxu0 %v477
  %v1181 = vpop.f32.mrb[0].mxu0
  %v1182 = vadd.f32 %v1085, %v1181
  %v1183 = vpop.f32.mrb[0].mxu0
  %v1184 = vpop.f32.mrb[0].mxu0
  %v1185 = vadd.f32 %v1088, %v1184
  %v1186 = vpop.f32.mrb[0].mxu0
  %1187 = vmatprep.mubr.bf16.mxu0 %v487
  %1188 = vmatmul.mubr.bf16.gmra.mrb[0].mxu0 %v486
  %v1189 = vpop.f32.mrb[0].mxu0
  %v1190 = vadd.f32 %v1093, %v1189
  %v1191 = vpop.f32.mrb[0].mxu0
  %v1192 = vpop.f32.mrb[0].mxu0
  %v1193 = vadd.f32 %v1096, %v1192
  %v1194 = vpop.f32.mrb[0].mxu0
  %1195 = vmatprep.mubr.bf16.mxu0 %v496
  %1196 = vmatmul.mubr.bf16.gmra.mrb[0].mxu0 %v495
  %v1197 = vpop.f32.mrb[0].mxu0
  %v1198 = vadd.f32 %v1101, %v1197
  %v1199 = vpop.f32.mrb[0].mxu0
  %v1200 = vpop.f32.mrb[0].mxu0
  %v1201 = vadd.f32 %v1104, %v1200
  %v1202 = vpop.f32.mrb[0].mxu0
  %1203 = vmatprep.mubr.bf16.mxu0 %v505
  %1204 = vmatmul.mubr.bf16.gmra.mrb[0].mxu0 %v504
  %v1205 = vpop.f32.mrb[0].mxu0
  %v1206 = vadd.f32 %v1109, %v1205
  %v1207 = vpop.f32.mrb[0].mxu0
  %v1208 = vpop.f32.mrb[0].mxu0
  %v1209 = vadd.f32 %v1112, %v1208
  %v1210 = vpop.f32.mrb[0].mxu0
  %1211 = vmatprep.mubr.bf16.mxu0 %v514
  %1212 = vmatmul.mubr.bf16.gmra.mrb[0].mxu0 %v513
  %v1213 = vpop.f32.mrb[0].mxu0
  %v1214 = vadd.f32 %v1117, %v1213
  %v1215 = vpop.f32.mrb[0].mxu0
  %v1216 = vpop.f32.mrb[0].mxu0
  %v1217 = vadd.f32 %v1120, %v1216
  %v1218 = vpop.f32.mrb[0].mxu0
  %1219 = vmatprep.mubr.bf16.mxu0 %v523
  %1220 = vmatmul.mubr.bf16.gmra.mrb[0].mxu0 %v522
  %v1221 = vpop.f32.mrb[0].mxu0
  %v1222 = vadd.f32 %v1125, %v1221
  %v1223 = vpop.f32.mrb[0].mxu0
  %v1224 = vpop.f32.mrb[0].mxu0
  %v1225 = vadd.f32 %v1128, %v1224
  %v1226 = vpop.f32.mrb[0].mxu0
  %1227 = vmatprep.mubr.bf16.mxu0 %v532
  %1228 = vmatmul.mubr.bf16.gmra.mrb[0].mxu0 %v531
  %v1229 = vpop.f32.mrb[0].mxu0
  %v1230 = vadd.f32 %v1133, %v1229
  %v1231 = vpop.f32.mrb[0].mxu0
  %v1232 = vpop.f32.mrb[0].mxu0
  %v1233 = vadd.f32 %v1136, %v1232
  %v1234 = vpop.f32.mrb[0].mxu0
  %1235 = vdwg.mxu0
  %1236 = vmatprep.subr.bf16.mxu0 0
  %1237 = vmatpush1.bf16.msra.mxu0 %v930
  %1238 = vmatprep.subr.bf16.mxu0 0
  %1239 = vmatpush1.bf16.msra.mxu0 %v931
  %1240 = vmatprep.subr.bf16.mxu0 0
  %1241 = vmatpush1.bf16.msra.mxu0 %v932
  %1242 = vmatprep.subr.bf16.mxu0 0
  %1243 = vmatpush1.bf16.msra.mxu0 %v933
  %1244 = vmatprep.subr.bf16.mxu0 0
  %1245 = vmatpush1.bf16.msra.mxu0 %v934
  %1246 = vmatprep.subr.bf16.mxu0 0
  %1247 = vmatpush1.bf16.msra.mxu0 %v935
  %1248 = vmatprep.subr.bf16.mxu0 0
  %1249 = vmatpush1.bf16.msra.mxu0 %v936
  %1250 = vmatprep.subr.bf16.mxu0 0
  %1251 = vmatpush1.bf16.msra.mxu0 %v937
  %1252 = vmatprep.subr.bf16.mxu0 0
  %1253 = vmatpush1.bf16.msra.mxu0 %v938
  %1254 = vmatprep.subr.bf16.mxu0 0
  %1255 = vmatpush1.bf16.msra.mxu0 %v939
  %1256 = vmatprep.subr.bf16.mxu0 0
  %1257 = vmatpush1.bf16.msra.mxu0 %v940
  %1258 = vmatprep.subr.bf16.mxu0 0
  %1259 = vmatpush1.bf16.msra.mxu0 %v941
  %1260 = vmatprep.subr.bf16.mxu0 0
  %1261 = vmatpush1.bf16.msra.mxu0 %v942
  %1262 = vmatprep.subr.bf16.mxu0 0
  %1263 = vmatpush1.bf16.msra.mxu0 %v943
  %1264 = vmatprep.subr.bf16.mxu0 0
  %1265 = vmatpush1.bf16.msra.mxu0 %v944
  %1266 = vmatprep.subr.bf16.mxu0 0
  %1267 = vmatpush1.bf16.msra.mxu0 %v945
  %1268 = vmatprep.mubr.bf16.mxu0 %v471
  %1269 = vmatmul.mubr.bf16.gmra.mrb[0].mxu0 %v470
  %v1270 = vpop.f32.mrb[0].mxu0
  %v1271 = vadd.f32 %v1174, %v1270
  %v1272 = vpop.f32.mrb[0].mxu0
  %v1273 = vpop.f32.mrb[0].mxu0
  %v1274 = vadd.f32 %v1177, %v1273
  %v1275 = vpop.f32.mrb[0].mxu0
  %1276 = vmatprep.mubr.bf16.mxu0 %v480
  %1277 = vmatmul.mubr.bf16.gmra.mrb[0].mxu0 %v479
  %v1278 = vpop.f32.mrb[0].mxu0
  %v1279 = vadd.f32 %v1182, %v1278
  %v1280 = vpop.f32.mrb[0].mxu0
  %v1281 = vpop.f32.mrb[0].mxu0
  %v1282 = vadd.f32 %v1185, %v1281
  %v1283 = vpop.f32.mrb[0].mxu0
  %1284 = vmatprep.mubr.bf16.mxu0 %v489
  %1285 = vmatmul.mubr.bf16.gmra.mrb[0].mxu0 %v488
  %v1286 = vpop.f32.mrb[0].mxu0
  %v1287 = vadd.f32 %v1190, %v1286
  %v1288 = vpop.f32.mrb[0].mxu0
  %v1289 = vpop.f32.mrb[0].mxu0
  %v1290 = vadd.f32 %v1193, %v1289
  %v1291 = vpop.f32.mrb[0].mxu0
  %1292 = vmatprep.mubr.bf16.mxu0 %v498
  %1293 = vmatmul.mubr.bf16.gmra.mrb[0].mxu0 %v497
  %v1294 = vpop.f32.mrb[0].mxu0
  %v1295 = vadd.f32 %v1198, %v1294
  %v1296 = vpop.f32.mrb[0].mxu0
  %v1297 = vpop.f32.mrb[0].mxu0
  %v1298 = vadd.f32 %v1201, %v1297
  %v1299 = vpop.f32.mrb[0].mxu0
  %1300 = vmatprep.mubr.bf16.mxu0 %v507
  %1301 = vmatmul.mubr.bf16.gmra.mrb[0].mxu0 %v506
  %v1302 = vpop.f32.mrb[0].mxu0
  %v1303 = vadd.f32 %v1206, %v1302
  %v1304 = vpop.f32.mrb[0].mxu0
  %v1305 = vpop.f32.mrb[0].mxu0
  %v1306 = vadd.f32 %v1209, %v1305
  %v1307 = vpop.f32.mrb[0].mxu0
  %1308 = vmatprep.mubr.bf16.mxu0 %v516
  %1309 = vmatmul.mubr.bf16.gmra.mrb[0].mxu0 %v515
  %v1310 = vpop.f32.mrb[0].mxu0
  %v1311 = vadd.f32 %v1214, %v1310
  %v1312 = vpop.f32.mrb[0].mxu0
  %v1313 = vpop.f32.mrb[0].mxu0
  %v1314 = vadd.f32 %v1217, %v1313
  %v1315 = vpop.f32.mrb[0].mxu0
  %1316 = vmatprep.mubr.bf16.mxu0 %v525
  %1317 = vmatmul.mubr.bf16.gmra.mrb[0].mxu0 %v524
  %v1318 = vpop.f32.mrb[0].mxu0
  %v1319 = vadd.f32 %v1222, %v1318
  %v1320 = vpop.f32.mrb[0].mxu0
  %v1321 = vpop.f32.mrb[0].mxu0
  %v1322 = vadd.f32 %v1225, %v1321
  %v1323 = vpop.f32.mrb[0].mxu0
  %1324 = vmatprep.mubr.bf16.mxu0 %v534
  %1325 = vmatmul.mubr.bf16.gmra.mrb[0].mxu0 %v533
  %v1326 = vpop.f32.mrb[0].mxu0
  %v1327 = vadd.f32 %v1230, %v1326
  %v1328 = vpop.f32.mrb[0].mxu0
  %v1329 = vpop.f32.mrb[0].mxu0
  %v1330 = vadd.f32 %v1233, %v1329
  %v1331 = vpop.f32.mrb[0].mxu0
  %1332 = vdwg.mxu0
  %1333 = vmatprep.subr.bf16.mxu0 0
  %1334 = vmatpush1.bf16.msra.mxu0 %v946
  %1335 = vmatprep.subr.bf16.mxu0 0
  %1336 = vmatpush1.bf16.msra.mxu0 %v947
  %1337 = vmatprep.subr.bf16.mxu0 0
  %1338 = vmatpush1.bf16.msra.mxu0 %v948
  %1339 = vmatprep.subr.bf16.mxu0 0
  %1340 = vmatpush1.bf16.msra.mxu0 %v949
  %1341 = vmatprep.subr.bf16.mxu0 0
  %1342 = vmatpush1.bf16.msra.mxu0 %v950
  %1343 = vmatprep.subr.bf16.mxu0 0
  %1344 = vmatpush1.bf16.msra.mxu0 %v951
  %1345 = vmatprep.subr.bf16.mxu0 0
  %1346 = vmatpush1.bf16.msra.mxu0 %v952
  %1347 = vmatprep.subr.bf16.mxu0 0
  %1348 = vmatpush1.bf16.msra.mxu0 %v953
  %1349 = vmatprep.subr.bf16.mxu0 0
  %1350 = vmatpush1.bf16.msra.mxu0 %v954
  %1351 = vmatprep.subr.bf16.mxu0 0
  %1352 = vmatpush1.bf16.msra.mxu0 %v955
  %1353 = vmatprep.subr.bf16.mxu0 0
  %1354 = vmatpush1.bf16.msra.mxu0 %v956
  %1355 = vmatprep.subr.bf16.mxu0 0
  %1356 = vmatpush1.bf16.msra.mxu0 %v957
  %1357 = vmatprep.subr.bf16.mxu0 0
  %1358 = vmatpush1.bf16.msra.mxu0 %v958
  %1359 = vmatprep.subr.bf16.mxu0 0
  %1360 = vmatpush1.bf16.msra.mxu0 %v959
  %1361 = vmatprep.subr.bf16.mxu0 0
  %1362 = vmatpush1.bf16.msra.mxu0 %v960
  %1363 = vmatprep.subr.bf16.mxu0 0
  %1364 = vmatpush1.bf16.msra.mxu0 %v961
  %1365 = vmatprep.mubr.bf16.mxu0 %v473
  %1366 = vmatmul.mubr.bf16.gmra.mrb[0].mxu0 %v472
  %v1367 = vpop.f32.mrb[0].mxu0
  %v1368 = vadd.f32 %v1271, %v1367
  %v1369 = vpop.f32.mrb[0].mxu0
  %v1370 = vpop.f32.mrb[0].mxu0
  %v1371 = vadd.f32 %v1274, %v1370
  %v1372 = vpop.f32.mrb[0].mxu0
  %1373 = vmatprep.mubr.bf16.mxu0 %v482
  %1374 = vmatmul.mubr.bf16.gmra.mrb[0].mxu0 %v481
  %v1375 = vpop.f32.mrb[0].mxu0
  %v1376 = vadd.f32 %v1279, %v1375
  %v1377 = vpop.f32.mrb[0].mxu0
  %v1378 = vpop.f32.mrb[0].mxu0
  %v1379 = vadd.f32 %v1282, %v1378
  %v1380 = vpop.f32.mrb[0].mxu0
  %1381 = vmatprep.mubr.bf16.mxu0 %v491
  %1382 = vmatmul.mubr.bf16.gmra.mrb[0].mxu0 %v490
  %v1383 = vpop.f32.mrb[0].mxu0
  %v1384 = vadd.f32 %v1287, %v1383
  %v1385 = vpop.f32.mrb[0].mxu0
  %v1386 = vpop.f32.mrb[0].mxu0
  %v1387 = vadd.f32 %v1290, %v1386
  %v1388 = vpop.f32.mrb[0].mxu0
  %1389 = vmatprep.mubr.bf16.mxu0 %v500
  %1390 = vmatmul.mubr.bf16.gmra.mrb[0].mxu0 %v499
  %v1391 = vpop.f32.mrb[0].mxu0
  %v1392 = vadd.f32 %v1295, %v1391
  %v1393 = vpop.f32.mrb[0].mxu0
  %v1394 = vpop.f32.mrb[0].mxu0
  %v1395 = vadd.f32 %v1298, %v1394
  %v1396 = vpop.f32.mrb[0].mxu0
  %1397 = vmatprep.mubr.bf16.mxu0 %v509
  %1398 = vmatmul.mubr.bf16.gmra.mrb[0].mxu0 %v508
  %v1399 = vpop.f32.mrb[0].mxu0
  %v1400 = vadd.f32 %v1303, %v1399
  %v1401 = vpop.f32.mrb[0].mxu0
  %v1402 = vpop.f32.mrb[0].mxu0
  %v1403 = vadd.f32 %v1306, %v1402
  %v1404 = vpop.f32.mrb[0].mxu0
  %1405 = vmatprep.mubr.bf16.mxu0 %v518
  %1406 = vmatmul.mubr.bf16.gmra.mrb[0].mxu0 %v517
  %v1407 = vpop.f32.mrb[0].mxu0
  %v1408 = vadd.f32 %v1311, %v1407
  %v1409 = vpop.f32.mrb[0].mxu0
  %v1410 = vpop.f32.mrb[0].mxu0
  %v1411 = vadd.f32 %v1314, %v1410
  %v1412 = vpop.f32.mrb[0].mxu0
  %1413 = vmatprep.mubr.bf16.mxu0 %v527
  %1414 = vmatmul.mubr.bf16.gmra.mrb[0].mxu0 %v526
  %v1415 = vpop.f32.mrb[0].mxu0
  %v1416 = vadd.f32 %v1319, %v1415
  %v1417 = vpop.f32.mrb[0].mxu0
  %v1418 = vpop.f32.mrb[0].mxu0
  %v1419 = vadd.f32 %v1322, %v1418
  %v1420 = vpop.f32.mrb[0].mxu0
  %1421 = vmatprep.mubr.bf16.mxu0 %v536
  %1422 = vmatmul.mubr.bf16.gmra.mrb[0].mxu0 %v535
  %v1423 = vpop.f32.mrb[0].mxu0
  %v1424 = vadd.f32 %v1327, %v1423
  %v1425 = vpop.f32.mrb[0].mxu0
  %v1426 = vpop.f32.mrb[0].mxu0
  %v1427 = vadd.f32 %v1330, %v1426
  %v1428 = vpop.f32.mrb[0].mxu0
  %1429 = vdwg.mxu0
  %1430 = vmatprep.subr.bf16.mxu0 0
  %1431 = vmatpush1.bf16.msra.mxu0 %v962
  %1432 = vmatprep.subr.bf16.mxu0 0
  %1433 = vmatpush1.bf16.msra.mxu0 %v963
  %1434 = vmatprep.subr.bf16.mxu0 0
  %1435 = vmatpush1.bf16.msra.mxu0 %v964
  %1436 = vmatprep.subr.bf16.mxu0 0
  %1437 = vmatpush1.bf16.msra.mxu0 %v965
  %1438 = vmatprep.subr.bf16.mxu0 0
  %1439 = vmatpush1.bf16.msra.mxu0 %v966
  %1440 = vmatprep.subr.bf16.mxu0 0
  %1441 = vmatpush1.bf16.msra.mxu0 %v967
  %1442 = vmatprep.subr.bf16.mxu0 0
  %1443 = vmatpush1.bf16.msra.mxu0 %v968
  %1444 = vmatprep.subr.bf16.mxu0 0
  %1445 = vmatpush1.bf16.msra.mxu0 %v969
  %1446 = vmatprep.subr.bf16.mxu0 0
  %1447 = vmatpush1.bf16.msra.mxu0 0
  %1448 = vmatprep.subr.bf16.mxu0 0
  %1449 = vmatpush1.bf16.msra.mxu0 0
  %1450 = vmatprep.subr.bf16.mxu0 0
  %1451 = vmatpush1.bf16.msra.mxu0 0
  %1452 = vmatprep.subr.bf16.mxu0 0
  %1453 = vmatpush1.bf16.msra.mxu0 0
  %1454 = vmatprep.subr.bf16.mxu0 0
  %1455 = vmatpush1.bf16.msra.mxu0 0
  %1456 = vmatprep.subr.bf16.mxu0 0
  %1457 = vmatpush1.bf16.msra.mxu0 0
  %1458 = vmatprep.subr.bf16.mxu0 0
  %1459 = vmatpush1.bf16.msra.mxu0 0
  %1460 = vmatprep.subr.bf16.mxu0 0
  %1461 = vmatpush1.bf16.msra.mxu0 0
  %1462 = vmatprep.mubr.bf16.mxu0 0
  %1463 = vmatmul.mubr.bf16.gmra.mrb[0].mxu0 %v474
  %v1464 = vpop.f32.mrb[0].mxu0
  %v1465 = vadd.f32 %v1368, %v1464
  %v1466 = vpop.f32.mrb[0].mxu0
  %v1467 = vpop.f32.mrb[0].mxu0
  %v1468 = vadd.f32 %v1371, %v1467
  %v1469 = vpop.f32.mrb[0].mxu0
  %1470 = vmatprep.mubr.bf16.mxu0 0
  %1471 = vmatmul.mubr.bf16.gmra.mrb[0].mxu0 %v483
  %v1472 = vpop.f32.mrb[0].mxu0
  %v1473 = vadd.f32 %v1376, %v1472
  %v1474 = vpop.f32.mrb[0].mxu0
  %v1475 = vpop.f32.mrb[0].mxu0
  %v1476 = vadd.f32 %v1379, %v1475
  %v1477 = vpop.f32.mrb[0].mxu0
  %1478 = vmatprep.mubr.bf16.mxu0 0
  %1479 = vmatmul.mubr.bf16.gmra.mrb[0].mxu0 %v492
  %v1480 = vpop.f32.mrb[0].mxu0
  %v1481 = vadd.f32 %v1384, %v1480
  %v1482 = vpop.f32.mrb[0].mxu0
  %v1483 = vpop.f32.mrb[0].mxu0
  %v1484 = vadd.f32 %v1387, %v1483
  %v1485 = vpop.f32.mrb[0].mxu0
  %1486 = vmatprep.mubr.bf16.mxu0 0
  %1487 = vmatmul.mubr.bf16.gmra.mrb[0].mxu0 %v501
  %v1488 = vpop.f32.mrb[0].mxu0
  %v1489 = vadd.f32 %v1392, %v1488
  %v1490 = vpop.f32.mrb[0].mxu0
  %v1491 = vpop.f32.mrb[0].mxu0
  %v1492 = vadd.f32 %v1395, %v1491
  %v1493 = vpop.f32.mrb[0].mxu0
  %1494 = vmatprep.mubr.bf16.mxu0 0
  %1495 = vmatmul.mubr.bf16.gmra.mrb[0].mxu0 %v510
  %v1496 = vpop.f32.mrb[0].mxu0
  %v1497 = vadd.f32 %v1400, %v1496
  %v1498 = vpop.f32.mrb[0].mxu0
  %v1499 = vpop.f32.mrb[0].mxu0
  %v1500 = vadd.f32 %v1403, %v1499
  %v1501 = vpop.f32.mrb[0].mxu0
  %1502 = vmatprep.mubr.bf16.mxu0 0
  %1503 = vmatmul.mubr.bf16.gmra.mrb[0].mxu0 %v519
  %v1504 = vpop.f32.mrb[0].mxu0
  %v1505 = vadd.f32 %v1408, %v1504
  %v1506 = vpop.f32.mrb[0].mxu0
  %v1507 = vpop.f32.mrb[0].mxu0
  %v1508 = vadd.f32 %v1411, %v1507
  %v1509 = vpop.f32.mrb[0].mxu0
  %1510 = vmatprep.mubr.bf16.mxu0 0
  %1511 = vmatmul.mubr.bf16.gmra.mrb[0].mxu0 %v528
  %v1512 = vpop.f32.mrb[0].mxu0
  %v1513 = vadd.f32 %v1416, %v1512
  %v1514 = vpop.f32.mrb[0].mxu0
  %v1515 = vpop.f32.mrb[0].mxu0
  %v1516 = vadd.f32 %v1419, %v1515
  %v1517 = vpop.f32.mrb[0].mxu0
  %1518 = vmatprep.mubr.bf16.mxu0 0
  %1519 = vmatmul.mubr.bf16.gmra.mrb[0].mxu0 %v537
  %v1520 = vpop.f32.mrb[0].mxu0
  %v1521 = vadd.f32 %v1424, %v1520
  %v1522 = vpop.f32.mrb[0].mxu0
  %v1523 = vpop.f32.mrb[0].mxu0
  %v1524 = vadd.f32 %v1427, %v1523
  %v1525 = vpop.f32.mrb[0].mxu0
  %1526 = vdwg.mxu0
  %s1527 = scalar_lea.vmem %s0, 576
  %v1528 = vld [vmem:[%s1527] sm:$0xff]
  %v1529 = vld [vmem:[%s1527 + $0x8] sm:$0xff]
  %v1530 = vld [vmem:[%s1527 + $0x10] sm:$0xff]
  %v1531 = vld [vmem:[%s1527 + $0x18] sm:$0xff]
  %v1532 = vld [vmem:[%s1527 + $0x20] sm:$0xf]
  %v1533 = vld [vmem:[%s1527 + $0x24] sm:$0xff]
  %v1534 = vld [vmem:[%s1527 + $0x2c] sm:$0xff]
  %v1535 = vld [vmem:[%s1527 + $0x34] sm:$0xff]
  %v1536 = vld [vmem:[%s1527 + $0x3c] sm:$0xff]
  %v1537 = vld [vmem:[%s1527 + $0x44] sm:$0xf]
  %v1538 = vld [vmem:[%s1527 + $0x48] sm:$0xff]
  %v1539 = vld [vmem:[%s1527 + $0x50] sm:$0xff]
  %v1540 = vld [vmem:[%s1527 + $0x58] sm:$0xff]
  %v1541 = vld [vmem:[%s1527 + $0x60] sm:$0xff]
  %v1542 = vld [vmem:[%s1527 + $0x68] sm:$0xf]
  %v1543 = vld [vmem:[%s1527 + $0x6c] sm:$0xff]
  %v1544 = vld [vmem:[%s1527 + $0x74] sm:$0xff]
  %v1545 = vld [vmem:[%s1527 + $0x7c] sm:$0xff]
  %v1546 = vld [vmem:[%s1527 + $0x84] sm:$0xff]
  %v1547 = vld [vmem:[%s1527 + $0x8c] sm:$0xf]
  %v1548 = vld [vmem:[%s1527 + $0x90] sm:$0xff]
  %v1549 = vld [vmem:[%s1527 + $0x98] sm:$0xff]
  %v1550 = vld [vmem:[%s1527 + $0xa0] sm:$0xff]
  %v1551 = vld [vmem:[%s1527 + $0xa8] sm:$0xff]
  %v1552 = vld [vmem:[%s1527 + $0xb0] sm:$0xf]
  %v1553 = vld [vmem:[%s1527 + $0xb4] sm:$0xff]
  %v1554 = vld [vmem:[%s1527 + $0xbc] sm:$0xff]
  %v1555 = vld [vmem:[%s1527 + $0xc4] sm:$0xff]
  %v1556 = vld [vmem:[%s1527 + $0xcc] sm:$0xff]
  %v1557 = vld [vmem:[%s1527 + $0xd4] sm:$0xf]
  %v1558 = vld [vmem:[%s1527 + $0xd8] sm:$0xff]
  %v1559 = vld [vmem:[%s1527 + $0xe0] sm:$0xff]
  %v1560 = vld [vmem:[%s1527 + $0xe8] sm:$0xff]
  %v1561 = vld [vmem:[%s1527 + $0xf0] sm:$0xff]
  %v1562 = vld [vmem:[%s1527 + $0xf8] sm:$0xf]
  %v1563 = vld [vmem:[%s1527 + $0xfc] sm:$0xff]
  %v1564 = vld [vmem:[%s1527 + $0x104] sm:$0xff]
  %v1565 = vld [vmem:[%s1527 + $0x10c] sm:$0xff]
  %v1566 = vld [vmem:[%s1527 + $0x114] sm:$0xff]
  %v1567 = vld [vmem:[%s1527 + $0x11c] sm:$0xf]
  %v1568 = vld [vmem:[%s1527 + $0x120] sm:$0xff]
  %v1569 = vld [vmem:[%s1527 + $0x128] sm:$0xff]
  %v1570 = vld [vmem:[%s1527 + $0x130] sm:$0xff]
  %v1571 = vld [vmem:[%s1527 + $0x138] sm:$0xff]
  %v1572 = vld [vmem:[%s1527 + $0x140] sm:$0xf]
  %v1573 = vld [vmem:[%s1527 + $0x144] sm:$0xff]
  %v1574 = vld [vmem:[%s1527 + $0x14c] sm:$0xff]
  %v1575 = vld [vmem:[%s1527 + $0x154] sm:$0xff]
  %v1576 = vld [vmem:[%s1527 + $0x15c] sm:$0xff]
  %v1577 = vld [vmem:[%s1527 + $0x164] sm:$0xf]
  %v1578 = vld [vmem:[%s1527 + $0x168] sm:$0xff]
  %v1579 = vld [vmem:[%s1527 + $0x170] sm:$0xff]
  %v1580 = vld [vmem:[%s1527 + $0x178] sm:$0xff]
  %v1581 = vld [vmem:[%s1527 + $0x180] sm:$0xff]
  %v1582 = vld [vmem:[%s1527 + $0x188] sm:$0xf]
  %v1583 = vld [vmem:[%s1527 + $0x18c] sm:$0xff]
  %v1584 = vld [vmem:[%s1527 + $0x194] sm:$0xff]
  %v1585 = vld [vmem:[%s1527 + $0x19c] sm:$0xff]
  %v1586 = vld [vmem:[%s1527 + $0x1a4] sm:$0xff]
  %v1587 = vld [vmem:[%s1527 + $0x1ac] sm:$0xf]
  %v1588 = vld [vmem:[%s1527 + $0x1b0] sm:$0xff]
  %v1589 = vld [vmem:[%s1527 + $0x1b8] sm:$0xff]
  %v1590 = vld [vmem:[%s1527 + $0x1c0] sm:$0xff]
  %v1591 = vld [vmem:[%s1527 + $0x1c8] sm:$0xff]
  %v1592 = vld [vmem:[%s1527 + $0x1d0] sm:$0xf]
  %v1593 = vld [vmem:[%s1527 + $0x1d4] sm:$0xff]
  %v1594 = vld [vmem:[%s1527 + $0x1dc] sm:$0xff]
  %v1595 = vld [vmem:[%s1527 + $0x1e4] sm:$0xff]
  %v1596 = vld [vmem:[%s1527 + $0x1ec] sm:$0xff]
  %v1597 = vld [vmem:[%s1527 + $0x1f4] sm:$0xf]
  %v1598 = vld [vmem:[%s1527 + $0x1f8] sm:$0xff]
  %v1599 = vld [vmem:[%s1527 + $0x200] sm:$0xff]
  %v1600 = vld [vmem:[%s1527 + $0x208] sm:$0xff]
  %v1601 = vld [vmem:[%s1527 + $0x210] sm:$0xff]
  %v1602 = vld [vmem:[%s1527 + $0x218] sm:$0xf]
  %v1603 = vld [vmem:[%s1527 + $0x21c] sm:$0xff]
  %v1604 = vld [vmem:[%s1527 + $0x224] sm:$0xff]
  %v1605 = vld [vmem:[%s1527 + $0x22c] sm:$0xff]
  %v1606 = vld [vmem:[%s1527 + $0x234] sm:$0xff]
  %v1607 = vld [vmem:[%s1527 + $0x23c] sm:$0xf]
  %v1688 = vunpack.c.l.b16 %v1528
  %v1689 = vunpack.c.h.b16 %v1528
  %v1690 = vunpack.c.l.b16 %v1529
  %v1691 = vunpack.c.h.b16 %v1529
  %v1692 = vunpack.c.l.b16 %v1530
  %v1693 = vunpack.c.h.b16 %v1530
  %v1694 = vunpack.c.l.b16 %v1531
  %v1695 = vunpack.c.h.b16 %v1531
  %v1696 = vunpack.c.l.b16 %v1532
  %v1697 = vunpack.c.l.b16 %v1533
  %v1698 = vunpack.c.h.b16 %v1533
  %v1699 = vunpack.c.l.b16 %v1534
  %v1700 = vunpack.c.h.b16 %v1534
  %v1701 = vunpack.c.l.b16 %v1535
  %v1702 = vunpack.c.h.b16 %v1535
  %v1703 = vunpack.c.l.b16 %v1536
  %v1704 = vunpack.c.h.b16 %v1536
  %v1705 = vunpack.c.l.b16 %v1537
  %v1706 = vunpack.c.l.b16 %v1538
  %v1707 = vunpack.c.h.b16 %v1538
  %v1708 = vunpack.c.l.b16 %v1539
  %v1709 = vunpack.c.h.b16 %v1539
  %v1710 = vunpack.c.l.b16 %v1540
  %v1711 = vunpack.c.h.b16 %v1540
  %v1712 = vunpack.c.l.b16 %v1541
  %v1713 = vunpack.c.h.b16 %v1541
  %v1714 = vunpack.c.l.b16 %v1542
  %v1715 = vunpack.c.l.b16 %v1543
  %v1716 = vunpack.c.h.b16 %v1543
  %v1717 = vunpack.c.l.b16 %v1544
  %v1718 = vunpack.c.h.b16 %v1544
  %v1719 = vunpack.c.l.b16 %v1545
  %v1720 = vunpack.c.h.b16 %v1545
  %v1721 = vunpack.c.l.b16 %v1546
  %v1722 = vunpack.c.h.b16 %v1546
  %v1723 = vunpack.c.l.b16 %v1547
  %v1724 = vunpack.c.l.b16 %v1548
  %v1725 = vunpack.c.h.b16 %v1548
  %v1726 = vunpack.c.l.b16 %v1549
  %v1727 = vunpack.c.h.b16 %v1549
  %v1728 = vunpack.c.l.b16 %v1550
  %v1729 = vunpack.c.h.b16 %v1550
  %v1730 = vunpack.c.l.b16 %v1551
  %v1731 = vunpack.c.h.b16 %v1551
  %v1732 = vunpack.c.l.b16 %v1552
  %v1733 = vunpack.c.l.b16 %v1553
  %v1734 = vunpack.c.h.b16 %v1553
  %v1735 = vunpack.c.l.b16 %v1554
  %v1736 = vunpack.c.h.b16 %v1554
  %v1737 = vunpack.c.l.b16 %v1555
  %v1738 = vunpack.c.h.b16 %v1555
  %v1739 = vunpack.c.l.b16 %v1556
  %v1740 = vunpack.c.h.b16 %v1556
  %v1741 = vunpack.c.l.b16 %v1557
  %v1742 = vunpack.c.l.b16 %v1558
  %v1743 = vunpack.c.h.b16 %v1558
  %v1744 = vunpack.c.l.b16 %v1559
  %v1745 = vunpack.c.h.b16 %v1559
  %v1746 = vunpack.c.l.b16 %v1560
  %v1747 = vunpack.c.h.b16 %v1560
  %v1748 = vunpack.c.l.b16 %v1561
  %v1749 = vunpack.c.h.b16 %v1561
  %v1750 = vunpack.c.l.b16 %v1562
  %v1751 = vunpack.c.l.b16 %v1563
  %v1752 = vunpack.c.h.b16 %v1563
  %v1753 = vunpack.c.l.b16 %v1564
  %v1754 = vunpack.c.h.b16 %v1564
  %v1755 = vunpack.c.l.b16 %v1565
  %v1756 = vunpack.c.h.b16 %v1565
  %v1757 = vunpack.c.l.b16 %v1566
  %v1758 = vunpack.c.h.b16 %v1566
  %v1759 = vunpack.c.l.b16 %v1567
  %v1760 = vunpack.c.l.b16 %v1568
  %v1761 = vunpack.c.h.b16 %v1568
  %v1762 = vunpack.c.l.b16 %v1569
  %v1763 = vunpack.c.h.b16 %v1569
  %v1764 = vunpack.c.l.b16 %v1570
  %v1765 = vunpack.c.h.b16 %v1570
  %v1766 = vunpack.c.l.b16 %v1571
  %v1767 = vunpack.c.h.b16 %v1571
  %v1768 = vunpack.c.l.b16 %v1572
  %v1769 = vunpack.c.l.b16 %v1573
  %v1770 = vunpack.c.h.b16 %v1573
  %v1771 = vunpack.c.l.b16 %v1574
  %v1772 = vunpack.c.h.b16 %v1574
  %v1773 = vunpack.c.l.b16 %v1575
  %v1774 = vunpack.c.h.b16 %v1575
  %v1775 = vunpack.c.l.b16 %v1576
  %v1776 = vunpack.c.h.b16 %v1576
  %v1777 = vunpack.c.l.b16 %v1577
  %v1778 = vunpack.c.l.b16 %v1578
  %v1779 = vunpack.c.h.b16 %v1578
  %v1780 = vunpack.c.l.b16 %v1579
  %v1781 = vunpack.c.h.b16 %v1579
  %v1782 = vunpack.c.l.b16 %v1580
  %v1783 = vunpack.c.h.b16 %v1580
  %v1784 = vunpack.c.l.b16 %v1581
  %v1785 = vunpack.c.h.b16 %v1581
  %v1786 = vunpack.c.l.b16 %v1582
  %v1787 = vunpack.c.l.b16 %v1583
  %v1788 = vunpack.c.h.b16 %v1583
  %v1789 = vunpack.c.l.b16 %v1584
  %v1790 = vunpack.c.h.b16 %v1584
  %v1791 = vunpack.c.l.b16 %v1585
  %v1792 = vunpack.c.h.b16 %v1585
  %v1793 = vunpack.c.l.b16 %v1586
  %v1794 = vunpack.c.h.b16 %v1586
  %v1795 = vunpack.c.l.b16 %v1587
  %v1796 = vunpack.c.l.b16 %v1588
  %v1797 = vunpack.c.h.b16 %v1588
  %v1798 = vunpack.c.l.b16 %v1589
  %v1799 = vunpack.c.h.b16 %v1589
  %v1800 = vunpack.c.l.b16 %v1590
  %v1801 = vunpack.c.h.b16 %v1590
  %v1802 = vunpack.c.l.b16 %v1591
  %v1803 = vunpack.c.h.b16 %v1591
  %v1804 = vunpack.c.l.b16 %v1592
  %v1805 = vunpack.c.l.b16 %v1593
  %v1806 = vunpack.c.h.b16 %v1593
  %v1807 = vunpack.c.l.b16 %v1594
  %v1808 = vunpack.c.h.b16 %v1594
  %v1809 = vunpack.c.l.b16 %v1595
  %v1810 = vunpack.c.h.b16 %v1595
  %v1811 = vunpack.c.l.b16 %v1596
  %v1812 = vunpack.c.h.b16 %v1596
  %v1813 = vunpack.c.l.b16 %v1597
  %v1814 = vunpack.c.l.b16 %v1598
  %v1815 = vunpack.c.h.b16 %v1598
  %v1816 = vunpack.c.l.b16 %v1599
  %v1817 = vunpack.c.h.b16 %v1599
  %v1818 = vunpack.c.l.b16 %v1600
  %v1819 = vunpack.c.h.b16 %v1600
  %v1820 = vunpack.c.l.b16 %v1601
  %v1821 = vunpack.c.h.b16 %v1601
  %v1822 = vunpack.c.l.b16 %v1602
  %v1823 = vunpack.c.l.b16 %v1603
  %v1824 = vunpack.c.h.b16 %v1603
  %v1825 = vunpack.c.l.b16 %v1604
  %v1826 = vunpack.c.h.b16 %v1604
  %v1827 = vunpack.c.l.b16 %v1605
  %v1828 = vunpack.c.h.b16 %v1605
  %v1829 = vunpack.c.l.b16 %v1606
  %v1830 = vunpack.c.h.b16 %v1606
  %v1831 = vunpack.c.l.b16 %v1607
  %v1832 = vpack.c.b16 %v1697, %v1688
  %v1833 = vpack.c.b16 %v1698, %v1689
  %v1834 = vpack.c.b16 %v1699, %v1690
  %v1835 = vpack.c.b16 %v1700, %v1691
  %v1836 = vpack.c.b16 %v1701, %v1692
  %v1837 = vpack.c.b16 %v1702, %v1693
  %v1838 = vpack.c.b16 %v1703, %v1694
  %v1839 = vpack.c.b16 %v1704, %v1695
  %v1840 = vpack.c.b16 %v1705, %v1696
  %v1841 = vpack.c.b16 %v1715, %v1706
  %v1842 = vpack.c.b16 %v1716, %v1707
  %v1843 = vpack.c.b16 %v1717, %v1708
  %v1844 = vpack.c.b16 %v1718, %v1709
  %v1845 = vpack.c.b16 %v1719, %v1710
  %v1846 = vpack.c.b16 %v1720, %v1711
  %v1847 = vpack.c.b16 %v1721, %v1712
  %v1848 = vpack.c.b16 %v1722, %v1713
  %v1849 = vpack.c.b16 %v1723, %v1714
  %v1850 = vpack.c.b16 %v1733, %v1724
  %v1851 = vpack.c.b16 %v1734, %v1725
  %v1852 = vpack.c.b16 %v1735, %v1726
  %v1853 = vpack.c.b16 %v1736, %v1727
  %v1854 = vpack.c.b16 %v1737, %v1728
  %v1855 = vpack.c.b16 %v1738, %v1729
  %v1856 = vpack.c.b16 %v1739, %v1730
  %v1857 = vpack.c.b16 %v1740, %v1731
  %v1858 = vpack.c.b16 %v1741, %v1732
  %v1859 = vpack.c.b16 %v1751, %v1742
  %v1860 = vpack.c.b16 %v1752, %v1743
  %v1861 = vpack.c.b16 %v1753, %v1744
  %v1862 = vpack.c.b16 %v1754, %v1745
  %v1863 = vpack.c.b16 %v1755, %v1746
  %v1864 = vpack.c.b16 %v1756, %v1747
  %v1865 = vpack.c.b16 %v1757, %v1748
  %v1866 = vpack.c.b16 %v1758, %v1749
  %v1867 = vpack.c.b16 %v1759, %v1750
  %v1868 = vpack.c.b16 %v1769, %v1760
  %v1869 = vpack.c.b16 %v1770, %v1761
  %v1870 = vpack.c.b16 %v1771, %v1762
  %v1871 = vpack.c.b16 %v1772, %v1763
  %v1872 = vpack.c.b16 %v1773, %v1764
  %v1873 = vpack.c.b16 %v1774, %v1765
  %v1874 = vpack.c.b16 %v1775, %v1766
  %v1875 = vpack.c.b16 %v1776, %v1767
  %v1876 = vpack.c.b16 %v1777, %v1768
  %v1877 = vpack.c.b16 %v1787, %v1778
  %v1878 = vpack.c.b16 %v1788, %v1779
  %v1879 = vpack.c.b16 %v1789, %v1780
  %v1880 = vpack.c.b16 %v1790, %v1781
  %v1881 = vpack.c.b16 %v1791, %v1782
  %v1882 = vpack.c.b16 %v1792, %v1783
  %v1883 = vpack.c.b16 %v1793, %v1784
  %v1884 = vpack.c.b16 %v1794, %v1785
  %v1885 = vpack.c.b16 %v1795, %v1786
  %v1886 = vpack.c.b16 %v1805, %v1796
  %v1887 = vpack.c.b16 %v1806, %v1797
  %v1888 = vpack.c.b16 %v1807, %v1798
  %v1889 = vpack.c.b16 %v1808, %v1799
  %v1890 = vpack.c.b16 %v1809, %v1800
  %v1891 = vpack.c.b16 %v1810, %v1801
  %v1892 = vpack.c.b16 %v1811, %v1802
  %v1893 = vpack.c.b16 %v1812, %v1803
  %v1894 = vpack.c.b16 %v1813, %v1804
  %v1895 = vpack.c.b16 %v1823, %v1814
  %v1896 = vpack.c.b16 %v1824, %v1815
  %v1897 = vpack.c.b16 %v1825, %v1816
  %v1898 = vpack.c.b16 %v1826, %v1817
  %v1899 = vpack.c.b16 %v1827, %v1818
  %v1900 = vpack.c.b16 %v1828, %v1819
  %v1901 = vpack.c.b16 %v1829, %v1820
  %v1902 = vpack.c.b16 %v1830, %v1821
  %v1903 = vpack.c.b16 %v1831, %v1822
  %1976 = vmatprep.subr.bf16.mxu0 0
  %1977 = vmatpush1.bf16.msra.mxu0 %v898
  %1978 = vmatprep.subr.bf16.mxu0 0
  %1979 = vmatpush1.bf16.msra.mxu0 %v899
  %1980 = vmatprep.subr.bf16.mxu0 0
  %1981 = vmatpush1.bf16.msra.mxu0 %v900
  %1982 = vmatprep.subr.bf16.mxu0 0
  %1983 = vmatpush1.bf16.msra.mxu0 %v901
  %1984 = vmatprep.subr.bf16.mxu0 0
  %1985 = vmatpush1.bf16.msra.mxu0 %v902
  %1986 = vmatprep.subr.bf16.mxu0 0
  %1987 = vmatpush1.bf16.msra.mxu0 %v903
  %1988 = vmatprep.subr.bf16.mxu0 0
  %1989 = vmatpush1.bf16.msra.mxu0 %v904
  %1990 = vmatprep.subr.bf16.mxu0 0
  %1991 = vmatpush1.bf16.msra.mxu0 %v905
  %1992 = vmatprep.subr.bf16.mxu0 0
  %1993 = vmatpush1.bf16.msra.mxu0 %v906
  %1994 = vmatprep.subr.bf16.mxu0 0
  %1995 = vmatpush1.bf16.msra.mxu0 %v907
  %1996 = vmatprep.subr.bf16.mxu0 0
  %1997 = vmatpush1.bf16.msra.mxu0 %v908
  %1998 = vmatprep.subr.bf16.mxu0 0
  %1999 = vmatpush1.bf16.msra.mxu0 %v909
  %2000 = vmatprep.subr.bf16.mxu0 0
  %2001 = vmatpush1.bf16.msra.mxu0 %v910
  %2002 = vmatprep.subr.bf16.mxu0 0
  %2003 = vmatpush1.bf16.msra.mxu0 %v911
  %2004 = vmatprep.subr.bf16.mxu0 0
  %2005 = vmatpush1.bf16.msra.mxu0 %v912
  %2006 = vmatprep.subr.bf16.mxu0 0
  %2007 = vmatpush1.bf16.msra.mxu0 %v913
  %2008 = vmatprep.mubr.bf16.mxu0 %v1833
  %2009 = vmatmul.mubr.bf16.gmra.mrb[0].mxu0 %v1832
  %v2010 = vpop.f32.mrb[0].mxu0
  %v2011 = vadd.f32 0.0, %v2010
  %v2012 = vpop.f32.mrb[0].mxu0
  %v2013 = vpop.f32.mrb[0].mxu0
  %v2014 = vadd.f32 0.0, %v2013
  %v2015 = vpop.f32.mrb[0].mxu0
  %2016 = vmatprep.mubr.bf16.mxu0 %v1842
  %2017 = vmatmul.mubr.bf16.gmra.mrb[0].mxu0 %v1841
  %v2018 = vpop.f32.mrb[0].mxu0
  %v2019 = vadd.f32 0.0, %v2018
  %v2020 = vpop.f32.mrb[0].mxu0
  %v2021 = vpop.f32.mrb[0].mxu0
  %v2022 = vadd.f32 0.0, %v2021
  %v2023 = vpop.f32.mrb[0].mxu0
  %2024 = vmatprep.mubr.bf16.mxu0 %v1851
  %2025 = vmatmul.mubr.bf16.gmra.mrb[0].mxu0 %v1850
  %v2026 = vpop.f32.mrb[0].mxu0
  %v2027 = vadd.f32 0.0, %v2026
  %v2028 = vpop.f32.mrb[0].mxu0
  %v2029 = vpop.f32.mrb[0].mxu0
  %v2030 = vadd.f32 0.0, %v2029
  %v2031 = vpop.f32.mrb[0].mxu0
  %2032 = vmatprep.mubr.bf16.mxu0 %v1860
  %2033 = vmatmul.mubr.bf16.gmra.mrb[0].mxu0 %v1859
  %v2034 = vpop.f32.mrb[0].mxu0
  %v2035 = vadd.f32 0.0, %v2034
  %v2036 = vpop.f32.mrb[0].mxu0
  %v2037 = vpop.f32.mrb[0].mxu0
  %v2038 = vadd.f32 0.0, %v2037
  %v2039 = vpop.f32.mrb[0].mxu0
  %2040 = vmatprep.mubr.bf16.mxu0 %v1869
  %2041 = vmatmul.mubr.bf16.gmra.mrb[0].mxu0 %v1868
  %v2042 = vpop.f32.mrb[0].mxu0
  %v2043 = vadd.f32 0.0, %v2042
  %v2044 = vpop.f32.mrb[0].mxu0
  %v2045 = vpop.f32.mrb[0].mxu0
  %v2046 = vadd.f32 0.0, %v2045
  %v2047 = vpop.f32.mrb[0].mxu0
  %2048 = vmatprep.mubr.bf16.mxu0 %v1878
  %2049 = vmatmul.mubr.bf16.gmra.mrb[0].mxu0 %v1877
  %v2050 = vpop.f32.mrb[0].mxu0
  %v2051 = vadd.f32 0.0, %v2050
  %v2052 = vpop.f32.mrb[0].mxu0
  %v2053 = vpop.f32.mrb[0].mxu0
  %v2054 = vadd.f32 0.0, %v2053
  %v2055 = vpop.f32.mrb[0].mxu0
  %2056 = vmatprep.mubr.bf16.mxu0 %v1887
  %2057 = vmatmul.mubr.bf16.gmra.mrb[0].mxu0 %v1886
  %v2058 = vpop.f32.mrb[0].mxu0
  %v2059 = vadd.f32 0.0, %v2058
  %v2060 = vpop.f32.mrb[0].mxu0
  %v2061 = vpop.f32.mrb[0].mxu0
  %v2062 = vadd.f32 0.0, %v2061
  %v2063 = vpop.f32.mrb[0].mxu0
  %2064 = vmatprep.mubr.bf16.mxu0 %v1896
  %2065 = vmatmul.mubr.bf16.gmra.mrb[0].mxu0 %v1895
  %v2066 = vpop.f32.mrb[0].mxu0
  %v2067 = vadd.f32 0.0, %v2066
  %v2068 = vpop.f32.mrb[0].mxu0
  %v2069 = vpop.f32.mrb[0].mxu0
  %v2070 = vadd.f32 0.0, %v2069
  %v2071 = vpop.f32.mrb[0].mxu0
  %2072 = vdwg.mxu0
  %2073 = vmatprep.subr.bf16.mxu0 0
  %2074 = vmatpush1.bf16.msra.mxu0 %v914
  %2075 = vmatprep.subr.bf16.mxu0 0
  %2076 = vmatpush1.bf16.msra.mxu0 %v915
  %2077 = vmatprep.subr.bf16.mxu0 0
  %2078 = vmatpush1.bf16.msra.mxu0 %v916
  %2079 = vmatprep.subr.bf16.mxu0 0
  %2080 = vmatpush1.bf16.msra.mxu0 %v917
  %2081 = vmatprep.subr.bf16.mxu0 0
  %2082 = vmatpush1.bf16.msra.mxu0 %v918
  %2083 = vmatprep.subr.bf16.mxu0 0
  %2084 = vmatpush1.bf16.msra.mxu0 %v919
  %2085 = vmatprep.subr.bf16.mxu0 0
  %2086 = vmatpush1.bf16.msra.mxu0 %v920
  %2087 = vmatprep.subr.bf16.mxu0 0
  %2088 = vmatpush1.bf16.msra.mxu0 %v921
  %2089 = vmatprep.subr.bf16.mxu0 0
  %2090 = vmatpush1.bf16.msra.mxu0 %v922
  %2091 = vmatprep.subr.bf16.mxu0 0
  %2092 = vmatpush1.bf16.msra.mxu0 %v923
  %2093 = vmatprep.subr.bf16.mxu0 0
  %2094 = vmatpush1.bf16.msra.mxu0 %v924
  %2095 = vmatprep.subr.bf16.mxu0 0
  %2096 = vmatpush1.bf16.msra.mxu0 %v925
  %2097 = vmatprep.subr.bf16.mxu0 0
  %2098 = vmatpush1.bf16.msra.mxu0 %v926
  %2099 = vmatprep.subr.bf16.mxu0 0
  %2100 = vmatpush1.bf16.msra.mxu0 %v927
  %2101 = vmatprep.subr.bf16.mxu0 0
  %2102 = vmatpush1.bf16.msra.mxu0 %v928
  %2103 = vmatprep.subr.bf16.mxu0 0
  %2104 = vmatpush1.bf16.msra.mxu0 %v929
  %2105 = vmatprep.mubr.bf16.mxu0 %v1835
  %2106 = vmatmul.mubr.bf16.gmra.mrb[0].mxu0 %v1834
  %v2107 = vpop.f32.mrb[0].mxu0
  %v2108 = vadd.f32 %v2011, %v2107
  %v2109 = vpop.f32.mrb[0].mxu0
  %v2110 = vpop.f32.mrb[0].mxu0
  %v2111 = vadd.f32 %v2014, %v2110
  %v2112 = vpop.f32.mrb[0].mxu0
  %2113 = vmatprep.mubr.bf16.mxu0 %v1844
  %2114 = vmatmul.mubr.bf16.gmra.mrb[0].mxu0 %v1843
  %v2115 = vpop.f32.mrb[0].mxu0
  %v2116 = vadd.f32 %v2019, %v2115
  %v2117 = vpop.f32.mrb[0].mxu0
  %v2118 = vpop.f32.mrb[0].mxu0
  %v2119 = vadd.f32 %v2022, %v2118
  %v2120 = vpop.f32.mrb[0].mxu0
  %2121 = vmatprep.mubr.bf16.mxu0 %v1853
  %2122 = vmatmul.mubr.bf16.gmra.mrb[0].mxu0 %v1852
  %v2123 = vpop.f32.mrb[0].mxu0
  %v2124 = vadd.f32 %v2027, %v2123
  %v2125 = vpop.f32.mrb[0].mxu0
  %v2126 = vpop.f32.mrb[0].mxu0
  %v2127 = vadd.f32 %v2030, %v2126
  %v2128 = vpop.f32.mrb[0].mxu0
  %2129 = vmatprep.mubr.bf16.mxu0 %v1862
  %2130 = vmatmul.mubr.bf16.gmra.mrb[0].mxu0 %v1861
  %v2131 = vpop.f32.mrb[0].mxu0
  %v2132 = vadd.f32 %v2035, %v2131
  %v2133 = vpop.f32.mrb[0].mxu0
  %v2134 = vpop.f32.mrb[0].mxu0
  %v2135 = vadd.f32 %v2038, %v2134
  %v2136 = vpop.f32.mrb[0].mxu0
  %2137 = vmatprep.mubr.bf16.mxu0 %v1871
  %2138 = vmatmul.mubr.bf16.gmra.mrb[0].mxu0 %v1870
  %v2139 = vpop.f32.mrb[0].mxu0
  %v2140 = vadd.f32 %v2043, %v2139
  %v2141 = vpop.f32.mrb[0].mxu0
  %v2142 = vpop.f32.mrb[0].mxu0
  %v2143 = vadd.f32 %v2046, %v2142
  %v2144 = vpop.f32.mrb[0].mxu0
  %2145 = vmatprep.mubr.bf16.mxu0 %v1880
  %2146 = vmatmul.mubr.bf16.gmra.mrb[0].mxu0 %v1879
  %v2147 = vpop.f32.mrb[0].mxu0
  %v2148 = vadd.f32 %v2051, %v2147
  %v2149 = vpop.f32.mrb[0].mxu0
  %v2150 = vpop.f32.mrb[0].mxu0
  %v2151 = vadd.f32 %v2054, %v2150
  %v2152 = vpop.f32.mrb[0].mxu0
  %2153 = vmatprep.mubr.bf16.mxu0 %v1889
  %2154 = vmatmul.mubr.bf16.gmra.mrb[0].mxu0 %v1888
  %v2155 = vpop.f32.mrb[0].mxu0
  %v2156 = vadd.f32 %v2059, %v2155
  %v2157 = vpop.f32.mrb[0].mxu0
  %v2158 = vpop.f32.mrb[0].mxu0
  %v2159 = vadd.f32 %v2062, %v2158
  %v2160 = vpop.f32.mrb[0].mxu0
  %2161 = vmatprep.mubr.bf16.mxu0 %v1898
  %2162 = vmatmul.mubr.bf16.gmra.mrb[0].mxu0 %v1897
  %v2163 = vpop.f32.mrb[0].mxu0
  %v2164 = vadd.f32 %v2067, %v2163
  %v2165 = vpop.f32.mrb[0].mxu0
  %v2166 = vpop.f32.mrb[0].mxu0
  %v2167 = vadd.f32 %v2070, %v2166
  %v2168 = vpop.f32.mrb[0].mxu0
  %2169 = vdwg.mxu0
  %2170 = vmatprep.subr.bf16.mxu0 0
  %2171 = vmatpush1.bf16.msra.mxu0 %v930
  %2172 = vmatprep.subr.bf16.mxu0 0
  %2173 = vmatpush1.bf16.msra.mxu0 %v931
  %2174 = vmatprep.subr.bf16.mxu0 0
  %2175 = vmatpush1.bf16.msra.mxu0 %v932
  %2176 = vmatprep.subr.bf16.mxu0 0
  %2177 = vmatpush1.bf16.msra.mxu0 %v933
  %2178 = vmatprep.subr.bf16.mxu0 0
  %2179 = vmatpush1.bf16.msra.mxu0 %v934
  %2180 = vmatprep.subr.bf16.mxu0 0
  %2181 = vmatpush1.bf16.msra.mxu0 %v935
  %2182 = vmatprep.subr.bf16.mxu0 0
  %2183 = vmatpush1.bf16.msra.mxu0 %v936
  %2184 = vmatprep.subr.bf16.mxu0 0
  %2185 = vmatpush1.bf16.msra.mxu0 %v937
  %2186 = vmatprep.subr.bf16.mxu0 0
  %2187 = vmatpush1.bf16.msra.mxu0 %v938
  %2188 = vmatprep.subr.bf16.mxu0 0
  %2189 = vmatpush1.bf16.msra.mxu0 %v939
  %2190 = vmatprep.subr.bf16.mxu0 0
  %2191 = vmatpush1.bf16.msra.mxu0 %v940
  %2192 = vmatprep.subr.bf16.mxu0 0
  %2193 = vmatpush1.bf16.msra.mxu0 %v941
  %2194 = vmatprep.subr.bf16.mxu0 0
  %2195 = vmatpush1.bf16.msra.mxu0 %v942
  %2196 = vmatprep.subr.bf16.mxu0 0
  %2197 = vmatpush1.bf16.msra.mxu0 %v943
  %2198 = vmatprep.subr.bf16.mxu0 0
  %2199 = vmatpush1.bf16.msra.mxu0 %v944
  %2200 = vmatprep.subr.bf16.mxu0 0
  %2201 = vmatpush1.bf16.msra.mxu0 %v945
  %2202 = vmatprep.mubr.bf16.mxu0 %v1837
  %2203 = vmatmul.mubr.bf16.gmra.mrb[0].mxu0 %v1836
  %v2204 = vpop.f32.mrb[0].mxu0
  %v2205 = vadd.f32 %v2108, %v2204
  %v2206 = vpop.f32.mrb[0].mxu0
  %v2207 = vpop.f32.mrb[0].mxu0
  %v2208 = vadd.f32 %v2111, %v2207
  %v2209 = vpop.f32.mrb[0].mxu0
  %2210 = vmatprep.mubr.bf16.mxu0 %v1846
  %2211 = vmatmul.mubr.bf16.gmra.mrb[0].mxu0 %v1845
  %v2212 = vpop.f32.mrb[0].mxu0
  %v2213 = vadd.f32 %v2116, %v2212
  %v2214 = vpop.f32.mrb[0].mxu0
  %v2215 = vpop.f32.mrb[0].mxu0
  %v2216 = vadd.f32 %v2119, %v2215
  %v2217 = vpop.f32.mrb[0].mxu0
  %2218 = vmatprep.mubr.bf16.mxu0 %v1855
  %2219 = vmatmul.mubr.bf16.gmra.mrb[0].mxu0 %v1854
  %v2220 = vpop.f32.mrb[0].mxu0
  %v2221 = vadd.f32 %v2124, %v2220
  %v2222 = vpop.f32.mrb[0].mxu0
  %v2223 = vpop.f32.mrb[0].mxu0
  %v2224 = vadd.f32 %v2127, %v2223
  %v2225 = vpop.f32.mrb[0].mxu0
  %2226 = vmatprep.mubr.bf16.mxu0 %v1864
  %2227 = vmatmul.mubr.bf16.gmra.mrb[0].mxu0 %v1863
  %v2228 = vpop.f32.mrb[0].mxu0
  %v2229 = vadd.f32 %v2132, %v2228
  %v2230 = vpop.f32.mrb[0].mxu0
  %v2231 = vpop.f32.mrb[0].mxu0
  %v2232 = vadd.f32 %v2135, %v2231
  %v2233 = vpop.f32.mrb[0].mxu0
  %2234 = vmatprep.mubr.bf16.mxu0 %v1873
  %2235 = vmatmul.mubr.bf16.gmra.mrb[0].mxu0 %v1872
  %v2236 = vpop.f32.mrb[0].mxu0
  %v2237 = vadd.f32 %v2140, %v2236
  %v2238 = vpop.f32.mrb[0].mxu0
  %v2239 = vpop.f32.mrb[0].mxu0
  %v2240 = vadd.f32 %v2143, %v2239
  %v2241 = vpop.f32.mrb[0].mxu0
  %2242 = vmatprep.mubr.bf16.mxu0 %v1882
  %2243 = vmatmul.mubr.bf16.gmra.mrb[0].mxu0 %v1881
  %v2244 = vpop.f32.mrb[0].mxu0
  %v2245 = vadd.f32 %v2148, %v2244
  %v2246 = vpop.f32.mrb[0].mxu0
  %v2247 = vpop.f32.mrb[0].mxu0
  %v2248 = vadd.f32 %v2151, %v2247
  %v2249 = vpop.f32.mrb[0].mxu0
  %2250 = vmatprep.mubr.bf16.mxu0 %v1891
  %2251 = vmatmul.mubr.bf16.gmra.mrb[0].mxu0 %v1890
  %v2252 = vpop.f32.mrb[0].mxu0
  %v2253 = vadd.f32 %v2156, %v2252
  %v2254 = vpop.f32.mrb[0].mxu0
  %v2255 = vpop.f32.mrb[0].mxu0
  %v2256 = vadd.f32 %v2159, %v2255
  %v2257 = vpop.f32.mrb[0].mxu0
  %2258 = vmatprep.mubr.bf16.mxu0 %v1900
  %2259 = vmatmul.mubr.bf16.gmra.mrb[0].mxu0 %v1899
  %v2260 = vpop.f32.mrb[0].mxu0
  %v2261 = vadd.f32 %v2164, %v2260
  %v2262 = vpop.f32.mrb[0].mxu0
  %v2263 = vpop.f32.mrb[0].mxu0
  %v2264 = vadd.f32 %v2167, %v2263
  %v2265 = vpop.f32.mrb[0].mxu0
  %2266 = vdwg.mxu0
  %2267 = vmatprep.subr.bf16.mxu0 0
  %2268 = vmatpush1.bf16.msra.mxu0 %v946
  %2269 = vmatprep.subr.bf16.mxu0 0
  %2270 = vmatpush1.bf16.msra.mxu0 %v947
  %2271 = vmatprep.subr.bf16.mxu0 0
  %2272 = vmatpush1.bf16.msra.mxu0 %v948
  %2273 = vmatprep.subr.bf16.mxu0 0
  %2274 = vmatpush1.bf16.msra.mxu0 %v949
  %2275 = vmatprep.subr.bf16.mxu0 0
  %2276 = vmatpush1.bf16.msra.mxu0 %v950
  %2277 = vmatprep.subr.bf16.mxu0 0
  %2278 = vmatpush1.bf16.msra.mxu0 %v951
  %2279 = vmatprep.subr.bf16.mxu0 0
  %2280 = vmatpush1.bf16.msra.mxu0 %v952
  %2281 = vmatprep.subr.bf16.mxu0 0
  %2282 = vmatpush1.bf16.msra.mxu0 %v953
  %2283 = vmatprep.subr.bf16.mxu0 0
  %2284 = vmatpush1.bf16.msra.mxu0 %v954
  %2285 = vmatprep.subr.bf16.mxu0 0
  %2286 = vmatpush1.bf16.msra.mxu0 %v955
  %2287 = vmatprep.subr.bf16.mxu0 0
  %2288 = vmatpush1.bf16.msra.mxu0 %v956
  %2289 = vmatprep.subr.bf16.mxu0 0
  %2290 = vmatpush1.bf16.msra.mxu0 %v957
  %2291 = vmatprep.subr.bf16.mxu0 0
  %2292 = vmatpush1.bf16.msra.mxu0 %v958
  %2293 = vmatprep.subr.bf16.mxu0 0
  %2294 = vmatpush1.bf16.msra.mxu0 %v959
  %2295 = vmatprep.subr.bf16.mxu0 0
  %2296 = vmatpush1.bf16.msra.mxu0 %v960
  %2297 = vmatprep.subr.bf16.mxu0 0
  %2298 = vmatpush1.bf16.msra.mxu0 %v961
  %2299 = vmatprep.mubr.bf16.mxu0 %v1839
  %2300 = vmatmul.mubr.bf16.gmra.mrb[0].mxu0 %v1838
  %v2301 = vpop.f32.mrb[0].mxu0
  %v2302 = vadd.f32 %v2205, %v2301
  %v2303 = vpop.f32.mrb[0].mxu0
  %v2304 = vpop.f32.mrb[0].mxu0
  %v2305 = vadd.f32 %v2208, %v2304
  %v2306 = vpop.f32.mrb[0].mxu0
  %2307 = vmatprep.mubr.bf16.mxu0 %v1848
  %2308 = vmatmul.mubr.bf16.gmra.mrb[0].mxu0 %v1847
  %v2309 = vpop.f32.mrb[0].mxu0
  %v2310 = vadd.f32 %v2213, %v2309
  %v2311 = vpop.f32.mrb[0].mxu0
  %v2312 = vpop.f32.mrb[0].mxu0
  %v2313 = vadd.f32 %v2216, %v2312
  %v2314 = vpop.f32.mrb[0].mxu0
  %2315 = vmatprep.mubr.bf16.mxu0 %v1857
  %2316 = vmatmul.mubr.bf16.gmra.mrb[0].mxu0 %v1856
  %v2317 = vpop.f32.mrb[0].mxu0
  %v2318 = vadd.f32 %v2221, %v2317
  %v2319 = vpop.f32.mrb[0].mxu0
  %v2320 = vpop.f32.mrb[0].mxu0
  %v2321 = vadd.f32 %v2224, %v2320
  %v2322 = vpop.f32.mrb[0].mxu0
  %2323 = vmatprep.mubr.bf16.mxu0 %v1866
  %2324 = vmatmul.mubr.bf16.gmra.mrb[0].mxu0 %v1865
  %v2325 = vpop.f32.mrb[0].mxu0
  %v2326 = vadd.f32 %v2229, %v2325
  %v2327 = vpop.f32.mrb[0].mxu0
  %v2328 = vpop.f32.mrb[0].mxu0
  %v2329 = vadd.f32 %v2232, %v2328
  %v2330 = vpop.f32.mrb[0].mxu0
  %2331 = vmatprep.mubr.bf16.mxu0 %v1875
  %2332 = vmatmul.mubr.bf16.gmra.mrb[0].mxu0 %v1874
  %v2333 = vpop.f32.mrb[0].mxu0
  %v2334 = vadd.f32 %v2237, %v2333
  %v2335 = vpop.f32.mrb[0].mxu0
  %v2336 = vpop.f32.mrb[0].mxu0
  %v2337 = vadd.f32 %v2240, %v2336
  %v2338 = vpop.f32.mrb[0].mxu0
  %2339 = vmatprep.mubr.bf16.mxu0 %v1884
  %2340 = vmatmul.mubr.bf16.gmra.mrb[0].mxu0 %v1883
  %v2341 = vpop.f32.mrb[0].mxu0
  %v2342 = vadd.f32 %v2245, %v2341
  %v2343 = vpop.f32.mrb[0].mxu0
  %v2344 = vpop.f32.mrb[0].mxu0
  %v2345 = vadd.f32 %v2248, %v2344
  %v2346 = vpop.f32.mrb[0].mxu0
  %2347 = vmatprep.mubr.bf16.mxu0 %v1893
  %2348 = vmatmul.mubr.bf16.gmra.mrb[0].mxu0 %v1892
  %v2349 = vpop.f32.mrb[0].mxu0
  %v2350 = vadd.f32 %v2253, %v2349
  %v2351 = vpop.f32.mrb[0].mxu0
  %v2352 = vpop.f32.mrb[0].mxu0
  %v2353 = vadd.f32 %v2256, %v2352
  %v2354 = vpop.f32.mrb[0].mxu0
  %2355 = vmatprep.mubr.bf16.mxu0 %v1902
  %2356 = vmatmul.mubr.bf16.gmra.mrb[0].mxu0 %v1901
  %v2357 = vpop.f32.mrb[0].mxu0
  %v2358 = vadd.f32 %v2261, %v2357
  %v2359 = vpop.f32.mrb[0].mxu0
  %v2360 = vpop.f32.mrb[0].mxu0
  %v2361 = vadd.f32 %v2264, %v2360
  %v2362 = vpop.f32.mrb[0].mxu0
  %2363 = vdwg.mxu0
  %2364 = vmatprep.subr.bf16.mxu0 0
  %2365 = vmatpush1.bf16.msra.mxu0 %v962
  %2366 = vmatprep.subr.bf16.mxu0 0
  %2367 = vmatpush1.bf16.msra.mxu0 %v963
  %2368 = vmatprep.subr.bf16.mxu0 0
  %2369 = vmatpush1.bf16.msra.mxu0 %v964
  %2370 = vmatprep.subr.bf16.mxu0 0
  %2371 = vmatpush1.bf16.msra.mxu0 %v965
  %2372 = vmatprep.subr.bf16.mxu0 0
  %2373 = vmatpush1.bf16.msra.mxu0 %v966
  %2374 = vmatprep.subr.bf16.mxu0 0
  %2375 = vmatpush1.bf16.msra.mxu0 %v967
  %2376 = vmatprep.subr.bf16.mxu0 0
  %2377 = vmatpush1.bf16.msra.mxu0 %v968
  %2378 = vmatprep.subr.bf16.mxu0 0
  %2379 = vmatpush1.bf16.msra.mxu0 %v969
  %2380 = vmatprep.subr.bf16.mxu0 0
  %2381 = vmatpush1.bf16.msra.mxu0 0
  %2382 = vmatprep.subr.bf16.mxu0 0
  %2383 = vmatpush1.bf16.msra.mxu0 0
  %2384 = vmatprep.subr.bf16.mxu0 0
  %2385 = vmatpush1.bf16.msra.mxu0 0
  %2386 = vmatprep.subr.bf16.mxu0 0
  %2387 = vmatpush1.bf16.msra.mxu0 0
  %2388 = vmatprep.subr.bf16.mxu0 0
  %2389 = vmatpush1.bf16.msra.mxu0 0
  %2390 = vmatprep.subr.bf16.mxu0 0
  %2391 = vmatpush1.bf16.msra.mxu0 0
  %2392 = vmatprep.subr.bf16.mxu0 0
  %2393 = vmatpush1.bf16.msra.mxu0 0
  %2394 = vmatprep.subr.bf16.mxu0 0
  %2395 = vmatpush1.bf16.msra.mxu0 0
  %2396 = vmatprep.mubr.bf16.mxu0 0
  %2397 = vmatmul.mubr.bf16.gmra.mrb[0].mxu0 %v1840
  %v2398 = vpop.f32.mrb[0].mxu0
  %v2399 = vadd.f32 %v2302, %v2398
  %v2400 = vpop.f32.mrb[0].mxu0
  %v2401 = vpop.f32.mrb[0].mxu0
  %v2402 = vadd.f32 %v2305, %v2401
  %v2403 = vpop.f32.mrb[0].mxu0
  %2404 = vmatprep.mubr.bf16.mxu0 0
  %2405 = vmatmul.mubr.bf16.gmra.mrb[0].mxu0 %v1849
  %v2406 = vpop.f32.mrb[0].mxu0
  %v2407 = vadd.f32 %v2310, %v2406
  %v2408 = vpop.f32.mrb[0].mxu0
  %v2409 = vpop.f32.mrb[0].mxu0
  %v2410 = vadd.f32 %v2313, %v2409
  %v2411 = vpop.f32.mrb[0].mxu0
  %2412 = vmatprep.mubr.bf16.mxu0 0
  %2413 = vmatmul.mubr.bf16.gmra.mrb[0].mxu0 %v1858
  %v2414 = vpop.f32.mrb[0].mxu0
  %v2415 = vadd.f32 %v2318, %v2414
  %v2416 = vpop.f32.mrb[0].mxu0
  %v2417 = vpop.f32.mrb[0].mxu0
  %v2418 = vadd.f32 %v2321, %v2417
  %v2419 = vpop.f32.mrb[0].mxu0
  %2420 = vmatprep.mubr.bf16.mxu0 0
  %2421 = vmatmul.mubr.bf16.gmra.mrb[0].mxu0 %v1867
  %v2422 = vpop.f32.mrb[0].mxu0
  %v2423 = vadd.f32 %v2326, %v2422
  %v2424 = vpop.f32.mrb[0].mxu0
  %v2425 = vpop.f32.mrb[0].mxu0
  %v2426 = vadd.f32 %v2329, %v2425
  %v2427 = vpop.f32.mrb[0].mxu0
  %2428 = vmatprep.mubr.bf16.mxu0 0
  %2429 = vmatmul.mubr.bf16.gmra.mrb[0].mxu0 %v1876
  %v2430 = vpop.f32.mrb[0].mxu0
  %v2431 = vadd.f32 %v2334, %v2430
  %v2432 = vpop.f32.mrb[0].mxu0
  %v2433 = vpop.f32.mrb[0].mxu0
  %v2434 = vadd.f32 %v2337, %v2433
  %v2435 = vpop.f32.mrb[0].mxu0
  %2436 = vmatprep.mubr.bf16.mxu0 0
  %2437 = vmatmul.mubr.bf16.gmra.mrb[0].mxu0 %v1885
  %v2438 = vpop.f32.mrb[0].mxu0
  %v2439 = vadd.f32 %v2342, %v2438
  %v2440 = vpop.f32.mrb[0].mxu0
  %v2441 = vpop.f32.mrb[0].mxu0
  %v2442 = vadd.f32 %v2345, %v2441
  %v2443 = vpop.f32.mrb[0].mxu0
  %2444 = vmatprep.mubr.bf16.mxu0 0
  %2445 = vmatmul.mubr.bf16.gmra.mrb[0].mxu0 %v1894
  %v2446 = vpop.f32.mrb[0].mxu0
  %v2447 = vadd.f32 %v2350, %v2446
  %v2448 = vpop.f32.mrb[0].mxu0
  %v2449 = vpop.f32.mrb[0].mxu0
  %v2450 = vadd.f32 %v2353, %v2449
  %v2451 = vpop.f32.mrb[0].mxu0
  %2452 = vmatprep.mubr.bf16.mxu0 0
  %2453 = vmatmul.mubr.bf16.gmra.mrb[0].mxu0 %v1903
  %v2454 = vpop.f32.mrb[0].mxu0
  %v2455 = vadd.f32 %v2358, %v2454
  %v2456 = vpop.f32.mrb[0].mxu0
  %v2457 = vpop.f32.mrb[0].mxu0
  %v2458 = vadd.f32 %v2361, %v2457
  %v2459 = vpop.f32.mrb[0].mxu0
  %2460 = vdwg.mxu0
  %v2461 = vmax.f32 %v1465, %v2399
  %v2462 = vmax.f32 %v1468, %v2402
  %v2463 = vmax.f32 %v1473, %v2407
  %v2464 = vmax.f32 %v1476, %v2410
  %v2465 = vmax.f32 %v1481, %v2415
  %v2466 = vmax.f32 %v1484, %v2418
  %v2467 = vmax.f32 %v1489, %v2423
  %v2468 = vmax.f32 %v1492, %v2426
  %v2469 = vmax.f32 %v1497, %v2431
  %v2470 = vmax.f32 %v1500, %v2434
  %v2471 = vmax.f32 %v1505, %v2439
  %v2472 = vmax.f32 %v1508, %v2442
  %v2473 = vmax.f32 %v1513, %v2447
  %v2474 = vmax.f32 %v1516, %v2450
  %v2475 = vmax.f32 %v1521, %v2455
  %v2476 = vmax.f32 %v1524, %v2458
  %s2477 = scalar_lea.vmem %s0, 1152
  %v2478 = vld [vmem:[%s2477] sm:$0xff]
  %v2479 = vld [vmem:[%s2477 + $0x8] sm:$0xff]
  %v2480 = vld [vmem:[%s2477 + $0x10] sm:$0xff]
  %v2481 = vld [vmem:[%s2477 + $0x18] sm:$0xff]
  %v2482 = vld [vmem:[%s2477 + $0x20] sm:$0xf]
  %v2483 = vld [vmem:[%s2477 + $0x24] sm:$0xff]
  %v2484 = vld [vmem:[%s2477 + $0x2c] sm:$0xff]
  %v2485 = vld [vmem:[%s2477 + $0x34] sm:$0xff]
  %v2486 = vld [vmem:[%s2477 + $0x3c] sm:$0xff]
  %v2487 = vld [vmem:[%s2477 + $0x44] sm:$0xf]
  %v2488 = vld [vmem:[%s2477 + $0x48] sm:$0xff]
  %v2489 = vld [vmem:[%s2477 + $0x50] sm:$0xff]
  %v2490 = vld [vmem:[%s2477 + $0x58] sm:$0xff]
  %v2491 = vld [vmem:[%s2477 + $0x60] sm:$0xff]
  %v2492 = vld [vmem:[%s2477 + $0x68] sm:$0xf]
  %v2493 = vld [vmem:[%s2477 + $0x6c] sm:$0xff]
  %v2494 = vld [vmem:[%s2477 + $0x74] sm:$0xff]
  %v2495 = vld [vmem:[%s2477 + $0x7c] sm:$0xff]
  %v2496 = vld [vmem:[%s2477 + $0x84] sm:$0xff]
  %v2497 = vld [vmem:[%s2477 + $0x8c] sm:$0xf]
  %v2498 = vld [vmem:[%s2477 + $0x90] sm:$0xff]
  %v2499 = vld [vmem:[%s2477 + $0x98] sm:$0xff]
  %v2500 = vld [vmem:[%s2477 + $0xa0] sm:$0xff]
  %v2501 = vld [vmem:[%s2477 + $0xa8] sm:$0xff]
  %v2502 = vld [vmem:[%s2477 + $0xb0] sm:$0xf]
  %v2503 = vld [vmem:[%s2477 + $0xb4] sm:$0xff]
  %v2504 = vld [vmem:[%s2477 + $0xbc] sm:$0xff]
  %v2505 = vld [vmem:[%s2477 + $0xc4] sm:$0xff]
  %v2506 = vld [vmem:[%s2477 + $0xcc] sm:$0xff]
  %v2507 = vld [vmem:[%s2477 + $0xd4] sm:$0xf]
  %v2508 = vld [vmem:[%s2477 + $0xd8] sm:$0xff]
  %v2509 = vld [vmem:[%s2477 + $0xe0] sm:$0xff]
  %v2510 = vld [vmem:[%s2477 + $0xe8] sm:$0xff]
  %v2511 = vld [vmem:[%s2477 + $0xf0] sm:$0xff]
  %v2512 = vld [vmem:[%s2477 + $0xf8] sm:$0xf]
  %v2513 = vld [vmem:[%s2477 + $0xfc] sm:$0xff]
  %v2514 = vld [vmem:[%s2477 + $0x104] sm:$0xff]
  %v2515 = vld [vmem:[%s2477 + $0x10c] sm:$0xff]
  %v2516 = vld [vmem:[%s2477 + $0x114] sm:$0xff]
  %v2517 = vld [vmem:[%s2477 + $0x11c] sm:$0xf]
  %v2518 = vld [vmem:[%s2477 + $0x120] sm:$0xff]
  %v2519 = vld [vmem:[%s2477 + $0x128] sm:$0xff]
  %v2520 = vld [vmem:[%s2477 + $0x130] sm:$0xff]
  %v2521 = vld [vmem:[%s2477 + $0x138] sm:$0xff]
  %v2522 = vld [vmem:[%s2477 + $0x140] sm:$0xf]
  %v2523 = vld [vmem:[%s2477 + $0x144] sm:$0xff]
  %v2524 = vld [vmem:[%s2477 + $0x14c] sm:$0xff]
  %v2525 = vld [vmem:[%s2477 + $0x154] sm:$0xff]
  %v2526 = vld [vmem:[%s2477 + $0x15c] sm:$0xff]
  %v2527 = vld [vmem:[%s2477 + $0x164] sm:$0xf]
  %v2528 = vld [vmem:[%s2477 + $0x168] sm:$0xff]
  %v2529 = vld [vmem:[%s2477 + $0x170] sm:$0xff]
  %v2530 = vld [vmem:[%s2477 + $0x178] sm:$0xff]
  %v2531 = vld [vmem:[%s2477 + $0x180] sm:$0xff]
  %v2532 = vld [vmem:[%s2477 + $0x188] sm:$0xf]
  %v2533 = vld [vmem:[%s2477 + $0x18c] sm:$0xff]
  %v2534 = vld [vmem:[%s2477 + $0x194] sm:$0xff]
  %v2535 = vld [vmem:[%s2477 + $0x19c] sm:$0xff]
  %v2536 = vld [vmem:[%s2477 + $0x1a4] sm:$0xff]
  %v2537 = vld [vmem:[%s2477 + $0x1ac] sm:$0xf]
  %v2538 = vld [vmem:[%s2477 + $0x1b0] sm:$0xff]
  %v2539 = vld [vmem:[%s2477 + $0x1b8] sm:$0xff]
  %v2540 = vld [vmem:[%s2477 + $0x1c0] sm:$0xff]
  %v2541 = vld [vmem:[%s2477 + $0x1c8] sm:$0xff]
  %v2542 = vld [vmem:[%s2477 + $0x1d0] sm:$0xf]
  %v2543 = vld [vmem:[%s2477 + $0x1d4] sm:$0xff]
  %v2544 = vld [vmem:[%s2477 + $0x1dc] sm:$0xff]
  %v2545 = vld [vmem:[%s2477 + $0x1e4] sm:$0xff]
  %v2546 = vld [vmem:[%s2477 + $0x1ec] sm:$0xff]
  %v2547 = vld [vmem:[%s2477 + $0x1f4] sm:$0xf]
  %v2548 = vld [vmem:[%s2477 + $0x1f8] sm:$0xff]
  %v2549 = vld [vmem:[%s2477 + $0x200] sm:$0xff]
  %v2550 = vld [vmem:[%s2477 + $0x208] sm:$0xff]
  %v2551 = vld [vmem:[%s2477 + $0x210] sm:$0xff]
  %v2552 = vld [vmem:[%s2477 + $0x218] sm:$0xf]
  %v2553 = vld [vmem:[%s2477 + $0x21c] sm:$0xff]
  %v2554 = vld [vmem:[%s2477 + $0x224] sm:$0xff]
  %v2555 = vld [vmem:[%s2477 + $0x22c] sm:$0xff]
  %v2556 = vld [vmem:[%s2477 + $0x234] sm:$0xff]
  %v2557 = vld [vmem:[%s2477 + $0x23c] sm:$0xf]
  %v2638 = vunpack.c.l.b16 %v2478
  %v2639 = vunpack.c.h.b16 %v2478
  %v2640 = vunpack.c.l.b16 %v2479
  %v2641 = vunpack.c.h.b16 %v2479
  %v2642 = vunpack.c.l.b16 %v2480
  %v2643 = vunpack.c.h.b16 %v2480
  %v2644 = vunpack.c.l.b16 %v2481
  %v2645 = vunpack.c.h.b16 %v2481
  %v2646 = vunpack.c.l.b16 %v2482
  %v2647 = vunpack.c.l.b16 %v2483
  %v2648 = vunpack.c.h.b16 %v2483
  %v2649 = vunpack.c.l.b16 %v2484
  %v2650 = vunpack.c.h.b16 %v2484
  %v2651 = vunpack.c.l.b16 %v2485
  %v2652 = vunpack.c.h.b16 %v2485
  %v2653 = vunpack.c.l.b16 %v2486
  %v2654 = vunpack.c.h.b16 %v2486
  %v2655 = vunpack.c.l.b16 %v2487
  %v2656 = vunpack.c.l.b16 %v2488
  %v2657 = vunpack.c.h.b16 %v2488
  %v2658 = vunpack.c.l.b16 %v2489
  %v2659 = vunpack.c.h.b16 %v2489
  %v2660 = vunpack.c.l.b16 %v2490
  %v2661 = vunpack.c.h.b16 %v2490
  %v2662 = vunpack.c.l.b16 %v2491
  %v2663 = vunpack.c.h.b16 %v2491
  %v2664 = vunpack.c.l.b16 %v2492
  %v2665 = vunpack.c.l.b16 %v2493
  %v2666 = vunpack.c.h.b16 %v2493
  %v2667 = vunpack.c.l.b16 %v2494
  %v2668 = vunpack.c.h.b16 %v2494
  %v2669 = vunpack.c.l.b16 %v2495
  %v2670 = vunpack.c.h.b16 %v2495
  %v2671 = vunpack.c.l.b16 %v2496
  %v2672 = vunpack.c.h.b16 %v2496
  %v2673 = vunpack.c.l.b16 %v2497
  %v2674 = vunpack.c.l.b16 %v2498
  %v2675 = vunpack.c.h.b16 %v2498
  %v2676 = vunpack.c.l.b16 %v2499
  %v2677 = vunpack.c.h.b16 %v2499
  %v2678 = vunpack.c.l.b16 %v2500
  %v2679 = vunpack.c.h.b16 %v2500
  %v2680 = vunpack.c.l.b16 %v2501
  %v2681 = vunpack.c.h.b16 %v2501
  %v2682 = vunpack.c.l.b16 %v2502
  %v2683 = vunpack.c.l.b16 %v2503
  %v2684 = vunpack.c.h.b16 %v2503
  %v2685 = vunpack.c.l.b16 %v2504
  %v2686 = vunpack.c.h.b16 %v2504
  %v2687 = vunpack.c.l.b16 %v2505
  %v2688 = vunpack.c.h.b16 %v2505
  %v2689 = vunpack.c.l.b16 %v2506
  %v2690 = vunpack.c.h.b16 %v2506
  %v2691 = vunpack.c.l.b16 %v2507
  %v2692 = vunpack.c.l.b16 %v2508
  %v2693 = vunpack.c.h.b16 %v2508
  %v2694 = vunpack.c.l.b16 %v2509
  %v2695 = vunpack.c.h.b16 %v2509
  %v2696 = vunpack.c.l.b16 %v2510
  %v2697 = vunpack.c.h.b16 %v2510
  %v2698 = vunpack.c.l.b16 %v2511
  %v2699 = vunpack.c.h.b16 %v2511
  %v2700 = vunpack.c.l.b16 %v2512
  %v2701 = vunpack.c.l.b16 %v2513
  %v2702 = vunpack.c.h.b16 %v2513
  %v2703 = vunpack.c.l.b16 %v2514
  %v2704 = vunpack.c.h.b16 %v2514
  %v2705 = vunpack.c.l.b16 %v2515
  %v2706 = vunpack.c.h.b16 %v2515
  %v2707 = vunpack.c.l.b16 %v2516
  %v2708 = vunpack.c.h.b16 %v2516
  %v2709 = vunpack.c.l.b16 %v2517
  %v2710 = vunpack.c.l.b16 %v2518
  %v2711 = vunpack.c.h.b16 %v2518
  %v2712 = vunpack.c.l.b16 %v2519
  %v2713 = vunpack.c.h.b16 %v2519
  %v2714 = vunpack.c.l.b16 %v2520
  %v2715 = vunpack.c.h.b16 %v2520
  %v2716 = vunpack.c.l.b16 %v2521
  %v2717 = vunpack.c.h.b16 %v2521
  %v2718 = vunpack.c.l.b16 %v2522
  %v2719 = vunpack.c.l.b16 %v2523
  %v2720 = vunpack.c.h.b16 %v2523
  %v2721 = vunpack.c.l.b16 %v2524
  %v2722 = vunpack.c.h.b16 %v2524
  %v2723 = vunpack.c.l.b16 %v2525
  %v2724 = vunpack.c.h.b16 %v2525
  %v2725 = vunpack.c.l.b16 %v2526
  %v2726 = vunpack.c.h.b16 %v2526
  %v2727 = vunpack.c.l.b16 %v2527
  %v2728 = vunpack.c.l.b16 %v2528
  %v2729 = vunpack.c.h.b16 %v2528
  %v2730 = vunpack.c.l.b16 %v2529
  %v2731 = vunpack.c.h.b16 %v2529
  %v2732 = vunpack.c.l.b16 %v2530
  %v2733 = vunpack.c.h.b16 %v2530
  %v2734 = vunpack.c.l.b16 %v2531
  %v2735 = vunpack.c.h.b16 %v2531
  %v2736 = vunpack.c.l.b16 %v2532
  %v2737 = vunpack.c.l.b16 %v2533
  %v2738 = vunpack.c.h.b16 %v2533
  %v2739 = vunpack.c.l.b16 %v2534
  %v2740 = vunpack.c.h.b16 %v2534
  %v2741 = vunpack.c.l.b16 %v2535
  %v2742 = vunpack.c.h.b16 %v2535
  %v2743 = vunpack.c.l.b16 %v2536
  %v2744 = vunpack.c.h.b16 %v2536
  %v2745 = vunpack.c.l.b16 %v2537
  %v2746 = vunpack.c.l.b16 %v2538
  %v2747 = vunpack.c.h.b16 %v2538
  %v2748 = vunpack.c.l.b16 %v2539
  %v2749 = vunpack.c.h.b16 %v2539
  %v2750 = vunpack.c.l.b16 %v2540
  %v2751 = vunpack.c.h.b16 %v2540
  %v2752 = vunpack.c.l.b16 %v2541
  %v2753 = vunpack.c.h.b16 %v2541
  %v2754 = vunpack.c.l.b16 %v2542
  %v2755 = vunpack.c.l.b16 %v2543
  %v2756 = vunpack.c.h.b16 %v2543
  %v2757 = vunpack.c.l.b16 %v2544
  %v2758 = vunpack.c.h.b16 %v2544
  %v2759 = vunpack.c.l.b16 %v2545
  %v2760 = vunpack.c.h.b16 %v2545
  %v2761 = vunpack.c.l.b16 %v2546
  %v2762 = vunpack.c.h.b16 %v2546
  %v2763 = vunpack.c.l.b16 %v2547
  %v2764 = vunpack.c.l.b16 %v2548
  %v2765 = vunpack.c.h.b16 %v2548
  %v2766 = vunpack.c.l.b16 %v2549
  %v2767 = vunpack.c.h.b16 %v2549
  %v2768 = vunpack.c.l.b16 %v2550
  %v2769 = vunpack.c.h.b16 %v2550
  %v2770 = vunpack.c.l.b16 %v2551
  %v2771 = vunpack.c.h.b16 %v2551
  %v2772 = vunpack.c.l.b16 %v2552
  %v2773 = vunpack.c.l.b16 %v2553
  %v2774 = vunpack.c.h.b16 %v2553
  %v2775 = vunpack.c.l.b16 %v2554
  %v2776 = vunpack.c.h.b16 %v2554
  %v2777 = vunpack.c.l.b16 %v2555
  %v2778 = vunpack.c.h.b16 %v2555
  %v2779 = vunpack.c.l.b16 %v2556
  %v2780 = vunpack.c.h.b16 %v2556
  %v2781 = vunpack.c.l.b16 %v2557
  %v2782 = vpack.c.b16 %v2647, %v2638
  %v2783 = vpack.c.b16 %v2648, %v2639
  %v2784 = vpack.c.b16 %v2649, %v2640
  %v2785 = vpack.c.b16 %v2650, %v2641
  %v2786 = vpack.c.b16 %v2651, %v2642
  %v2787 = vpack.c.b16 %v2652, %v2643
  %v2788 = vpack.c.b16 %v2653, %v2644
  %v2789 = vpack.c.b16 %v2654, %v2645
  %v2790 = vpack.c.b16 %v2655, %v2646
  %v2791 = vpack.c.b16 %v2665, %v2656
  %v2792 = vpack.c.b16 %v2666, %v2657
  %v2793 = vpack.c.b16 %v2667, %v2658
  %v2794 = vpack.c.b16 %v2668, %v2659
  %v2795 = vpack.c.b16 %v2669, %v2660
  %v2796 = vpack.c.b16 %v2670, %v2661
  %v2797 = vpack.c.b16 %v2671, %v2662
  %v2798 = vpack.c.b16 %v2672, %v2663
  %v2799 = vpack.c.b16 %v2673, %v2664
  %v2800 = vpack.c.b16 %v2683, %v2674
  %v2801 = vpack.c.b16 %v2684, %v2675
  %v2802 = vpack.c.b16 %v2685, %v2676
  %v2803 = vpack.c.b16 %v2686, %v2677
  %v2804 = vpack.c.b16 %v2687, %v2678
  %v2805 = vpack.c.b16 %v2688, %v2679
  %v2806 = vpack.c.b16 %v2689, %v2680
  %v2807 = vpack.c.b16 %v2690, %v2681
  %v2808 = vpack.c.b16 %v2691, %v2682
  %v2809 = vpack.c.b16 %v2701, %v2692
  %v2810 = vpack.c.b16 %v2702, %v2693
  %v2811 = vpack.c.b16 %v2703, %v2694
  %v2812 = vpack.c.b16 %v2704, %v2695
  %v2813 = vpack.c.b16 %v2705, %v2696
  %v2814 = vpack.c.b16 %v2706, %v2697
  %v2815 = vpack.c.b16 %v2707, %v2698
  %v2816 = vpack.c.b16 %v2708, %v2699
  %v2817 = vpack.c.b16 %v2709, %v2700
  %v2818 = vpack.c.b16 %v2719, %v2710
  %v2819 = vpack.c.b16 %v2720, %v2711
  %v2820 = vpack.c.b16 %v2721, %v2712
  %v2821 = vpack.c.b16 %v2722, %v2713
  %v2822 = vpack.c.b16 %v2723, %v2714
  %v2823 = vpack.c.b16 %v2724, %v2715
  %v2824 = vpack.c.b16 %v2725, %v2716
  %v2825 = vpack.c.b16 %v2726, %v2717
  %v2826 = vpack.c.b16 %v2727, %v2718
  %v2827 = vpack.c.b16 %v2737, %v2728
  %v2828 = vpack.c.b16 %v2738, %v2729
  %v2829 = vpack.c.b16 %v2739, %v2730
  %v2830 = vpack.c.b16 %v2740, %v2731
  %v2831 = vpack.c.b16 %v2741, %v2732
  %v2832 = vpack.c.b16 %v2742, %v2733
  %v2833 = vpack.c.b16 %v2743, %v2734
  %v2834 = vpack.c.b16 %v2744, %v2735
  %v2835 = vpack.c.b16 %v2745, %v2736
  %v2836 = vpack.c.b16 %v2755, %v2746
  %v2837 = vpack.c.b16 %v2756, %v2747
  %v2838 = vpack.c.b16 %v2757, %v2748
  %v2839 = vpack.c.b16 %v2758, %v2749
  %v2840 = vpack.c.b16 %v2759, %v2750
  %v2841 = vpack.c.b16 %v2760, %v2751
  %v2842 = vpack.c.b16 %v2761, %v2752
  %v2843 = vpack.c.b16 %v2762, %v2753
  %v2844 = vpack.c.b16 %v2763, %v2754
  %v2845 = vpack.c.b16 %v2773, %v2764
  %v2846 = vpack.c.b16 %v2774, %v2765
  %v2847 = vpack.c.b16 %v2775, %v2766
  %v2848 = vpack.c.b16 %v2776, %v2767
  %v2849 = vpack.c.b16 %v2777, %v2768
  %v2850 = vpack.c.b16 %v2778, %v2769
  %v2851 = vpack.c.b16 %v2779, %v2770
  %v2852 = vpack.c.b16 %v2780, %v2771
  %v2853 = vpack.c.b16 %v2781, %v2772
  %2926 = vmatprep.subr.bf16.mxu0 0
  %2927 = vmatpush1.bf16.msra.mxu0 %v898
  %2928 = vmatprep.subr.bf16.mxu0 0
  %2929 = vmatpush1.bf16.msra.mxu0 %v899
  %2930 = vmatprep.subr.bf16.mxu0 0
  %2931 = vmatpush1.bf16.msra.mxu0 %v900
  %2932 = vmatprep.subr.bf16.mxu0 0
  %2933 = vmatpush1.bf16.msra.mxu0 %v901
  %2934 = vmatprep.subr.bf16.mxu0 0
  %2935 = vmatpush1.bf16.msra.mxu0 %v902
  %2936 = vmatprep.subr.bf16.mxu0 0
  %2937 = vmatpush1.bf16.msra.mxu0 %v903
  %2938 = vmatprep.subr.bf16.mxu0 0
  %2939 = vmatpush1.bf16.msra.mxu0 %v904
  %2940 = vmatprep.subr.bf16.mxu0 0
  %2941 = vmatpush1.bf16.msra.mxu0 %v905
  %2942 = vmatprep.subr.bf16.mxu0 0
  %2943 = vmatpush1.bf16.msra.mxu0 %v906
  %2944 = vmatprep.subr.bf16.mxu0 0
  %2945 = vmatpush1.bf16.msra.mxu0 %v907
  %2946 = vmatprep.subr.bf16.mxu0 0
  %2947 = vmatpush1.bf16.msra.mxu0 %v908
  %2948 = vmatprep.subr.bf16.mxu0 0
  %2949 = vmatpush1.bf16.msra.mxu0 %v909
  %2950 = vmatprep.subr.bf16.mxu0 0
  %2951 = vmatpush1.bf16.msra.mxu0 %v910
  %2952 = vmatprep.subr.bf16.mxu0 0
  %2953 = vmatpush1.bf16.msra.mxu0 %v911
  %2954 = vmatprep.subr.bf16.mxu0 0
  %2955 = vmatpush1.bf16.msra.mxu0 %v912
  %2956 = vmatprep.subr.bf16.mxu0 0
  %2957 = vmatpush1.bf16.msra.mxu0 %v913
  %2958 = vmatprep.mubr.bf16.mxu0 %v2783
  %2959 = vmatmul.mubr.bf16.gmra.mrb[0].mxu0 %v2782
  %v2960 = vpop.f32.mrb[0].mxu0
  %v2961 = vadd.f32 0.0, %v2960
  %v2962 = vpop.f32.mrb[0].mxu0
  %v2963 = vpop.f32.mrb[0].mxu0
  %v2964 = vadd.f32 0.0, %v2963
  %v2965 = vpop.f32.mrb[0].mxu0
  %2966 = vmatprep.mubr.bf16.mxu0 %v2792
  %2967 = vmatmul.mubr.bf16.gmra.mrb[0].mxu0 %v2791
  %v2968 = vpop.f32.mrb[0].mxu0
  %v2969 = vadd.f32 0.0, %v2968
  %v2970 = vpop.f32.mrb[0].mxu0
  %v2971 = vpop.f32.mrb[0].mxu0
  %v2972 = vadd.f32 0.0, %v2971
  %v2973 = vpop.f32.mrb[0].mxu0
  %2974 = vmatprep.mubr.bf16.mxu0 %v2801
  %2975 = vmatmul.mubr.bf16.gmra.mrb[0].mxu0 %v2800
  %v2976 = vpop.f32.mrb[0].mxu0
  %v2977 = vadd.f32 0.0, %v2976
  %v2978 = vpop.f32.mrb[0].mxu0
  %v2979 = vpop.f32.mrb[0].mxu0
  %v2980 = vadd.f32 0.0, %v2979
  %v2981 = vpop.f32.mrb[0].mxu0
  %2982 = vmatprep.mubr.bf16.mxu0 %v2810
  %2983 = vmatmul.mubr.bf16.gmra.mrb[0].mxu0 %v2809
  %v2984 = vpop.f32.mrb[0].mxu0
  %v2985 = vadd.f32 0.0, %v2984
  %v2986 = vpop.f32.mrb[0].mxu0
  %v2987 = vpop.f32.mrb[0].mxu0
  %v2988 = vadd.f32 0.0, %v2987
  %v2989 = vpop.f32.mrb[0].mxu0
  %2990 = vmatprep.mubr.bf16.mxu0 %v2819
  %2991 = vmatmul.mubr.bf16.gmra.mrb[0].mxu0 %v2818
  %v2992 = vpop.f32.mrb[0].mxu0
  %v2993 = vadd.f32 0.0, %v2992
  %v2994 = vpop.f32.mrb[0].mxu0
  %v2995 = vpop.f32.mrb[0].mxu0
  %v2996 = vadd.f32 0.0, %v2995
  %v2997 = vpop.f32.mrb[0].mxu0
  %2998 = vmatprep.mubr.bf16.mxu0 %v2828
  %2999 = vmatmul.mubr.bf16.gmra.mrb[0].mxu0 %v2827
  %v3000 = vpop.f32.mrb[0].mxu0
  %v3001 = vadd.f32 0.0, %v3000
  %v3002 = vpop.f32.mrb[0].mxu0
  %v3003 = vpop.f32.mrb[0].mxu0
  %v3004 = vadd.f32 0.0, %v3003
  %v3005 = vpop.f32.mrb[0].mxu0
  %3006 = vmatprep.mubr.bf16.mxu0 %v2837
  %3007 = vmatmul.mubr.bf16.gmra.mrb[0].mxu0 %v2836
  %v3008 = vpop.f32.mrb[0].mxu0
  %v3009 = vadd.f32 0.0, %v3008
  %v3010 = vpop.f32.mrb[0].mxu0
  %v3011 = vpop.f32.mrb[0].mxu0
  %v3012 = vadd.f32 0.0, %v3011
  %v3013 = vpop.f32.mrb[0].mxu0
  %3014 = vmatprep.mubr.bf16.mxu0 %v2846
  %3015 = vmatmul.mubr.bf16.gmra.mrb[0].mxu0 %v2845
  %v3016 = vpop.f32.mrb[0].mxu0
  %v3017 = vadd.f32 0.0, %v3016
  %v3018 = vpop.f32.mrb[0].mxu0
  %v3019 = vpop.f32.mrb[0].mxu0
  %v3020 = vadd.f32 0.0, %v3019
  %v3021 = vpop.f32.mrb[0].mxu0
  %3022 = vdwg.mxu0
  %3023 = vmatprep.subr.bf16.mxu0 0
  %3024 = vmatpush1.bf16.msra.mxu0 %v914
  %3025 = vmatprep.subr.bf16.mxu0 0
  %3026 = vmatpush1.bf16.msra.mxu0 %v915
  %3027 = vmatprep.subr.bf16.mxu0 0
  %3028 = vmatpush1.bf16.msra.mxu0 %v916
  %3029 = vmatprep.subr.bf16.mxu0 0
  %3030 = vmatpush1.bf16.msra.mxu0 %v917
  %3031 = vmatprep.subr.bf16.mxu0 0
  %3032 = vmatpush1.bf16.msra.mxu0 %v918
  %3033 = vmatprep.subr.bf16.mxu0 0
  %3034 = vmatpush1.bf16.msra.mxu0 %v919
  %3035 = vmatprep.subr.bf16.mxu0 0
  %3036 = vmatpush1.bf16.msra.mxu0 %v920
  %3037 = vmatprep.subr.bf16.mxu0 0
  %3038 = vmatpush1.bf16.msra.mxu0 %v921
  %3039 = vmatprep.subr.bf16.mxu0 0
  %3040 = vmatpush1.bf16.msra.mxu0 %v922
  %3041 = vmatprep.subr.bf16.mxu0 0
  %3042 = vmatpush1.bf16.msra.mxu0 %v923
  %3043 = vmatprep.subr.bf16.mxu0 0
  %3044 = vmatpush1.bf16.msra.mxu0 %v924
  %3045 = vmatprep.subr.bf16.mxu0 0
  %3046 = vmatpush1.bf16.msra.mxu0 %v925
  %3047 = vmatprep.subr.bf16.mxu0 0
  %3048 = vmatpush1.bf16.msra.mxu0 %v926
  %3049 = vmatprep.subr.bf16.mxu0 0
  %3050 = vmatpush1.bf16.msra.mxu0 %v927
  %3051 = vmatprep.subr.bf16.mxu0 0
  %3052 = vmatpush1.bf16.msra.mxu0 %v928
  %3053 = vmatprep.subr.bf16.mxu0 0
  %3054 = vmatpush1.bf16.msra.mxu0 %v929
  %3055 = vmatprep.mubr.bf16.mxu0 %v2785
  %3056 = vmatmul.mubr.bf16.gmra.mrb[0].mxu0 %v2784
  %v3057 = vpop.f32.mrb[0].mxu0
  %v3058 = vadd.f32 %v2961, %v3057
  %v3059 = vpop.f32.mrb[0].mxu0
  %v3060 = vpop.f32.mrb[0].mxu0
  %v3061 = vadd.f32 %v2964, %v3060
  %v3062 = vpop.f32.mrb[0].mxu0
  %3063 = vmatprep.mubr.bf16.mxu0 %v2794
  %3064 = vmatmul.mubr.bf16.gmra.mrb[0].mxu0 %v2793
  %v3065 = vpop.f32.mrb[0].mxu0
  %v3066 = vadd.f32 %v2969, %v3065
  %v3067 = vpop.f32.mrb[0].mxu0
  %v3068 = vpop.f32.mrb[0].mxu0
  %v3069 = vadd.f32 %v2972, %v3068
  %v3070 = vpop.f32.mrb[0].mxu0
  %3071 = vmatprep.mubr.bf16.mxu0 %v2803
  %3072 = vmatmul.mubr.bf16.gmra.mrb[0].mxu0 %v2802
  %v3073 = vpop.f32.mrb[0].mxu0
  %v3074 = vadd.f32 %v2977, %v3073
  %v3075 = vpop.f32.mrb[0].mxu0
  %v3076 = vpop.f32.mrb[0].mxu0
  %v3077 = vadd.f32 %v2980, %v3076
  %v3078 = vpop.f32.mrb[0].mxu0
  %3079 = vmatprep.mubr.bf16.mxu0 %v2812
  %3080 = vmatmul.mubr.bf16.gmra.mrb[0].mxu0 %v2811
  %v3081 = vpop.f32.mrb[0].mxu0
  %v3082 = vadd.f32 %v2985, %v3081
  %v3083 = vpop.f32.mrb[0].mxu0
  %v3084 = vpop.f32.mrb[0].mxu0
  %v3085 = vadd.f32 %v2988, %v3084
  %v3086 = vpop.f32.mrb[0].mxu0
  %3087 = vmatprep.mubr.bf16.mxu0 %v2821
  %3088 = vmatmul.mubr.bf16.gmra.mrb[0].mxu0 %v2820
  %v3089 = vpop.f32.mrb[0].mxu0
  %v3090 = vadd.f32 %v2993, %v3089
  %v3091 = vpop.f32.mrb[0].mxu0
  %v3092 = vpop.f32.mrb[0].mxu0
  %v3093 = vadd.f32 %v2996, %v3092
  %v3094 = vpop.f32.mrb[0].mxu0
  %3095 = vmatprep.mubr.bf16.mxu0 %v2830
  %3096 = vmatmul.mubr.bf16.gmra.mrb[0].mxu0 %v2829
  %v3097 = vpop.f32.mrb[0].mxu0
  %v3098 = vadd.f32 %v3001, %v3097
  %v3099 = vpop.f32.mrb[0].mxu0
  %v3100 = vpop.f32.mrb[0].mxu0
  %v3101 = vadd.f32 %v3004, %v3100
  %v3102 = vpop.f32.mrb[0].mxu0
  %3103 = vmatprep.mubr.bf16.mxu0 %v2839
  %3104 = vmatmul.mubr.bf16.gmra.mrb[0].mxu0 %v2838
  %v3105 = vpop.f32.mrb[0].mxu0
  %v3106 = vadd.f32 %v3009, %v3105
  %v3107 = vpop.f32.mrb[0].mxu0
  %v3108 = vpop.f32.mrb[0].mxu0
  %v3109 = vadd.f32 %v3012, %v3108
  %v3110 = vpop.f32.mrb[0].mxu0
  %3111 = vmatprep.mubr.bf16.mxu0 %v2848
  %3112 = vmatmul.mubr.bf16.gmra.mrb[0].mxu0 %v2847
  %v3113 = vpop.f32.mrb[0].mxu0
  %v3114 = vadd.f32 %v3017, %v3113
  %v3115 = vpop.f32.mrb[0].mxu0
  %v3116 = vpop.f32.mrb[0].mxu0
  %v3117 = vadd.f32 %v3020, %v3116
  %v3118 = vpop.f32.mrb[0].mxu0
  %3119 = vdwg.mxu0
  %3120 = vmatprep.subr.bf16.mxu0 0
  %3121 = vmatpush1.bf16.msra.mxu0 %v930
  %3122 = vmatprep.subr.bf16.mxu0 0
  %3123 = vmatpush1.bf16.msra.mxu0 %v931
  %3124 = vmatprep.subr.bf16.mxu0 0
  %3125 = vmatpush1.bf16.msra.mxu0 %v932
  %3126 = vmatprep.subr.bf16.mxu0 0
  %3127 = vmatpush1.bf16.msra.mxu0 %v933
  %3128 = vmatprep.subr.bf16.mxu0 0
  %3129 = vmatpush1.bf16.msra.mxu0 %v934
  %3130 = vmatprep.subr.bf16.mxu0 0
  %3131 = vmatpush1.bf16.msra.mxu0 %v935
  %3132 = vmatprep.subr.bf16.mxu0 0
  %3133 = vmatpush1.bf16.msra.mxu0 %v936
  %3134 = vmatprep.subr.bf16.mxu0 0
  %3135 = vmatpush1.bf16.msra.mxu0 %v937
  %3136 = vmatprep.subr.bf16.mxu0 0
  %3137 = vmatpush1.bf16.msra.mxu0 %v938
  %3138 = vmatprep.subr.bf16.mxu0 0
  %3139 = vmatpush1.bf16.msra.mxu0 %v939
  %3140 = vmatprep.subr.bf16.mxu0 0
  %3141 = vmatpush1.bf16.msra.mxu0 %v940
  %3142 = vmatprep.subr.bf16.mxu0 0
  %3143 = vmatpush1.bf16.msra.mxu0 %v941
  %3144 = vmatprep.subr.bf16.mxu0 0
  %3145 = vmatpush1.bf16.msra.mxu0 %v942
  %3146 = vmatprep.subr.bf16.mxu0 0
  %3147 = vmatpush1.bf16.msra.mxu0 %v943
  %3148 = vmatprep.subr.bf16.mxu0 0
  %3149 = vmatpush1.bf16.msra.mxu0 %v944
  %3150 = vmatprep.subr.bf16.mxu0 0
  %3151 = vmatpush1.bf16.msra.mxu0 %v945
  %3152 = vmatprep.mubr.bf16.mxu0 %v2787
  %3153 = vmatmul.mubr.bf16.gmra.mrb[0].mxu0 %v2786
  %v3154 = vpop.f32.mrb[0].mxu0
  %v3155 = vadd.f32 %v3058, %v3154
  %v3156 = vpop.f32.mrb[0].mxu0
  %v3157 = vpop.f32.mrb[0].mxu0
  %v3158 = vadd.f32 %v3061, %v3157
  %v3159 = vpop.f32.mrb[0].mxu0
  %3160 = vmatprep.mubr.bf16.mxu0 %v2796
  %3161 = vmatmul.mubr.bf16.gmra.mrb[0].mxu0 %v2795
  %v3162 = vpop.f32.mrb[0].mxu0
  %v3163 = vadd.f32 %v3066, %v3162
  %v3164 = vpop.f32.mrb[0].mxu0
  %v3165 = vpop.f32.mrb[0].mxu0
  %v3166 = vadd.f32 %v3069, %v3165
  %v3167 = vpop.f32.mrb[0].mxu0
  %3168 = vmatprep.mubr.bf16.mxu0 %v2805
  %3169 = vmatmul.mubr.bf16.gmra.mrb[0].mxu0 %v2804
  %v3170 = vpop.f32.mrb[0].mxu0
  %v3171 = vadd.f32 %v3074, %v3170
  %v3172 = vpop.f32.mrb[0].mxu0
  %v3173 = vpop.f32.mrb[0].mxu0
  %v3174 = vadd.f32 %v3077, %v3173
  %v3175 = vpop.f32.mrb[0].mxu0
  %3176 = vmatprep.mubr.bf16.mxu0 %v2814
  %3177 = vmatmul.mubr.bf16.gmra.mrb[0].mxu0 %v2813
  %v3178 = vpop.f32.mrb[0].mxu0
  %v3179 = vadd.f32 %v3082, %v3178
  %v3180 = vpop.f32.mrb[0].mxu0
  %v3181 = vpop.f32.mrb[0].mxu0
  %v3182 = vadd.f32 %v3085, %v3181
  %v3183 = vpop.f32.mrb[0].mxu0
  %3184 = vmatprep.mubr.bf16.mxu0 %v2823
  %3185 = vmatmul.mubr.bf16.gmra.mrb[0].mxu0 %v2822
  %v3186 = vpop.f32.mrb[0].mxu0
  %v3187 = vadd.f32 %v3090, %v3186
  %v3188 = vpop.f32.mrb[0].mxu0
  %v3189 = vpop.f32.mrb[0].mxu0
  %v3190 = vadd.f32 %v3093, %v3189
  %v3191 = vpop.f32.mrb[0].mxu0
  %3192 = vmatprep.mubr.bf16.mxu0 %v2832
  %3193 = vmatmul.mubr.bf16.gmra.mrb[0].mxu0 %v2831
  %v3194 = vpop.f32.mrb[0].mxu0
  %v3195 = vadd.f32 %v3098, %v3194
  %v3196 = vpop.f32.mrb[0].mxu0
  %v3197 = vpop.f32.mrb[0].mxu0
  %v3198 = vadd.f32 %v3101, %v3197
  %v3199 = vpop.f32.mrb[0].mxu0
  %3200 = vmatprep.mubr.bf16.mxu0 %v2841
  %3201 = vmatmul.mubr.bf16.gmra.mrb[0].mxu0 %v2840
  %v3202 = vpop.f32.mrb[0].mxu0
  %v3203 = vadd.f32 %v3106, %v3202
  %v3204 = vpop.f32.mrb[0].mxu0
  %v3205 = vpop.f32.mrb[0].mxu0
  %v3206 = vadd.f32 %v3109, %v3205
  %v3207 = vpop.f32.mrb[0].mxu0
  %3208 = vmatprep.mubr.bf16.mxu0 %v2850
  %3209 = vmatmul.mubr.bf16.gmra.mrb[0].mxu0 %v2849
  %v3210 = vpop.f32.mrb[0].mxu0
  %v3211 = vadd.f32 %v3114, %v3210
  %v3212 = vpop.f32.mrb[0].mxu0
  %v3213 = vpop.f32.mrb[0].mxu0
  %v3214 = vadd.f32 %v3117, %v3213
  %v3215 = vpop.f32.mrb[0].mxu0
  %3216 = vdwg.mxu0
  %3217 = vmatprep.subr.bf16.mxu0 0
  %3218 = vmatpush1.bf16.msra.mxu0 %v946
  %3219 = vmatprep.subr.bf16.mxu0 0
  %3220 = vmatpush1.bf16.msra.mxu0 %v947
  %3221 = vmatprep.subr.bf16.mxu0 0
  %3222 = vmatpush1.bf16.msra.mxu0 %v948
  %3223 = vmatprep.subr.bf16.mxu0 0
  %3224 = vmatpush1.bf16.msra.mxu0 %v949
  %3225 = vmatprep.subr.bf16.mxu0 0
  %3226 = vmatpush1.bf16.msra.mxu0 %v950
  %3227 = vmatprep.subr.bf16.mxu0 0
  %3228 = vmatpush1.bf16.msra.mxu0 %v951
  %3229 = vmatprep.subr.bf16.mxu0 0
  %3230 = vmatpush1.bf16.msra.mxu0 %v952
  %3231 = vmatprep.subr.bf16.mxu0 0
  %3232 = vmatpush1.bf16.msra.mxu0 %v953
  %3233 = vmatprep.subr.bf16.mxu0 0
  %3234 = vmatpush1.bf16.msra.mxu0 %v954
  %3235 = vmatprep.subr.bf16.mxu0 0
  %3236 = vmatpush1.bf16.msra.mxu0 %v955
  %3237 = vmatprep.subr.bf16.mxu0 0
  %3238 = vmatpush1.bf16.msra.mxu0 %v956
  %3239 = vmatprep.subr.bf16.mxu0 0
  %3240 = vmatpush1.bf16.msra.mxu0 %v957
  %3241 = vmatprep.subr.bf16.mxu0 0
  %3242 = vmatpush1.bf16.msra.mxu0 %v958
  %3243 = vmatprep.subr.bf16.mxu0 0
  %3244 = vmatpush1.bf16.msra.mxu0 %v959
  %3245 = vmatprep.subr.bf16.mxu0 0
  %3246 = vmatpush1.bf16.msra.mxu0 %v960
  %3247 = vmatprep.subr.bf16.mxu0 0
  %3248 = vmatpush1.bf16.msra.mxu0 %v961
  %3249 = vmatprep.mubr.bf16.mxu0 %v2789
  %3250 = vmatmul.mubr.bf16.gmra.mrb[0].mxu0 %v2788
  %v3251 = vpop.f32.mrb[0].mxu0
  %v3252 = vadd.f32 %v3155, %v3251
  %v3253 = vpop.f32.mrb[0].mxu0
  %v3254 = vpop.f32.mrb[0].mxu0
  %v3255 = vadd.f32 %v3158, %v3254
  %v3256 = vpop.f32.mrb[0].mxu0
  %3257 = vmatprep.mubr.bf16.mxu0 %v2798
  %3258 = vmatmul.mubr.bf16.gmra.mrb[0].mxu0 %v2797
  %v3259 = vpop.f32.mrb[0].mxu0
  %v3260 = vadd.f32 %v3163, %v3259
  %v3261 = vpop.f32.mrb[0].mxu0
  %v3262 = vpop.f32.mrb[0].mxu0
  %v3263 = vadd.f32 %v3166, %v3262
  %v3264 = vpop.f32.mrb[0].mxu0
  %3265 = vmatprep.mubr.bf16.mxu0 %v2807
  %3266 = vmatmul.mubr.bf16.gmra.mrb[0].mxu0 %v2806
  %v3267 = vpop.f32.mrb[0].mxu0
  %v3268 = vadd.f32 %v3171, %v3267
  %v3269 = vpop.f32.mrb[0].mxu0
  %v3270 = vpop.f32.mrb[0].mxu0
  %v3271 = vadd.f32 %v3174, %v3270
  %v3272 = vpop.f32.mrb[0].mxu0
  %3273 = vmatprep.mubr.bf16.mxu0 %v2816
  %3274 = vmatmul.mubr.bf16.gmra.mrb[0].mxu0 %v2815
  %v3275 = vpop.f32.mrb[0].mxu0
  %v3276 = vadd.f32 %v3179, %v3275
  %v3277 = vpop.f32.mrb[0].mxu0
  %v3278 = vpop.f32.mrb[0].mxu0
  %v3279 = vadd.f32 %v3182, %v3278
  %v3280 = vpop.f32.mrb[0].mxu0
  %3281 = vmatprep.mubr.bf16.mxu0 %v2825
  %3282 = vmatmul.mubr.bf16.gmra.mrb[0].mxu0 %v2824
  %v3283 = vpop.f32.mrb[0].mxu0
  %v3284 = vadd.f32 %v3187, %v3283
  %v3285 = vpop.f32.mrb[0].mxu0
  %v3286 = vpop.f32.mrb[0].mxu0
  %v3287 = vadd.f32 %v3190, %v3286
  %v3288 = vpop.f32.mrb[0].mxu0
  %3289 = vmatprep.mubr.bf16.mxu0 %v2834
  %3290 = vmatmul.mubr.bf16.gmra.mrb[0].mxu0 %v2833
  %v3291 = vpop.f32.mrb[0].mxu0
  %v3292 = vadd.f32 %v3195, %v3291
  %v3293 = vpop.f32.mrb[0].mxu0
  %v3294 = vpop.f32.mrb[0].mxu0
  %v3295 = vadd.f32 %v3198, %v3294
  %v3296 = vpop.f32.mrb[0].mxu0
  %3297 = vmatprep.mubr.bf16.mxu0 %v2843
  %3298 = vmatmul.mubr.bf16.gmra.mrb[0].mxu0 %v2842
  %v3299 = vpop.f32.mrb[0].mxu0
  %v3300 = vadd.f32 %v3203, %v3299
  %v3301 = vpop.f32.mrb[0].mxu0
  %v3302 = vpop.f32.mrb[0].mxu0
  %v3303 = vadd.f32 %v3206, %v3302
  %v3304 = vpop.f32.mrb[0].mxu0
  %3305 = vmatprep.mubr.bf16.mxu0 %v2852
  %3306 = vmatmul.mubr.bf16.gmra.mrb[0].mxu0 %v2851
  %v3307 = vpop.f32.mrb[0].mxu0
  %v3308 = vadd.f32 %v3211, %v3307
  %v3309 = vpop.f32.mrb[0].mxu0
  %v3310 = vpop.f32.mrb[0].mxu0
  %v3311 = vadd.f32 %v3214, %v3310
  %v3312 = vpop.f32.mrb[0].mxu0
  %3313 = vdwg.mxu0
  %3314 = vmatprep.subr.bf16.mxu0 0
  %3315 = vmatpush1.bf16.msra.mxu0 %v962
  %3316 = vmatprep.subr.bf16.mxu0 0
  %3317 = vmatpush1.bf16.msra.mxu0 %v963
  %3318 = vmatprep.subr.bf16.mxu0 0
  %3319 = vmatpush1.bf16.msra.mxu0 %v964
  %3320 = vmatprep.subr.bf16.mxu0 0
  %3321 = vmatpush1.bf16.msra.mxu0 %v965
  %3322 = vmatprep.subr.bf16.mxu0 0
  %3323 = vmatpush1.bf16.msra.mxu0 %v966
  %3324 = vmatprep.subr.bf16.mxu0 0
  %3325 = vmatpush1.bf16.msra.mxu0 %v967
  %3326 = vmatprep.subr.bf16.mxu0 0
  %3327 = vmatpush1.bf16.msra.mxu0 %v968
  %3328 = vmatprep.subr.bf16.mxu0 0
  %3329 = vmatpush1.bf16.msra.mxu0 %v969
  %3330 = vmatprep.subr.bf16.mxu0 0
  %3331 = vmatpush1.bf16.msra.mxu0 0
  %3332 = vmatprep.subr.bf16.mxu0 0
  %3333 = vmatpush1.bf16.msra.mxu0 0
  %3334 = vmatprep.subr.bf16.mxu0 0
  %3335 = vmatpush1.bf16.msra.mxu0 0
  %3336 = vmatprep.subr.bf16.mxu0 0
  %3337 = vmatpush1.bf16.msra.mxu0 0
  %3338 = vmatprep.subr.bf16.mxu0 0
  %3339 = vmatpush1.bf16.msra.mxu0 0
  %3340 = vmatprep.subr.bf16.mxu0 0
  %3341 = vmatpush1.bf16.msra.mxu0 0
  %3342 = vmatprep.subr.bf16.mxu0 0
  %3343 = vmatpush1.bf16.msra.mxu0 0
  %3344 = vmatprep.subr.bf16.mxu0 0
  %3345 = vmatpush1.bf16.msra.mxu0 0
  %3346 = vmatprep.mubr.bf16.mxu0 0
  %3347 = vmatmul.mubr.bf16.gmra.mrb[0].mxu0 %v2790
  %v3348 = vpop.f32.mrb[0].mxu0
  %v3349 = vadd.f32 %v3252, %v3348
  %v3350 = vpop.f32.mrb[0].mxu0
  %v3351 = vpop.f32.mrb[0].mxu0
  %v3352 = vadd.f32 %v3255, %v3351
  %v3353 = vpop.f32.mrb[0].mxu0
  %3354 = vmatprep.mubr.bf16.mxu0 0
  %3355 = vmatmul.mubr.bf16.gmra.mrb[0].mxu0 %v2799
  %v3356 = vpop.f32.mrb[0].mxu0
  %v3357 = vadd.f32 %v3260, %v3356
  %v3358 = vpop.f32.mrb[0].mxu0
  %v3359 = vpop.f32.mrb[0].mxu0
  %v3360 = vadd.f32 %v3263, %v3359
  %v3361 = vpop.f32.mrb[0].mxu0
  %3362 = vmatprep.mubr.bf16.mxu0 0
  %3363 = vmatmul.mubr.bf16.gmra.mrb[0].mxu0 %v2808
  %v3364 = vpop.f32.mrb[0].mxu0
  %v3365 = vadd.f32 %v3268, %v3364
  %v3366 = vpop.f32.mrb[0].mxu0
  %v3367 = vpop.f32.mrb[0].mxu0
  %v3368 = vadd.f32 %v3271, %v3367
  %v3369 = vpop.f32.mrb[0].mxu0
  %3370 = vmatprep.mubr.bf16.mxu0 0
  %3371 = vmatmul.mubr.bf16.gmra.mrb[0].mxu0 %v2817
  %v3372 = vpop.f32.mrb[0].mxu0
  %v3373 = vadd.f32 %v3276, %v3372
  %v3374 = vpop.f32.mrb[0].mxu0
  %v3375 = vpop.f32.mrb[0].mxu0
  %v3376 = vadd.f32 %v3279, %v3375
  %v3377 = vpop.f32.mrb[0].mxu0
  %3378 = vmatprep.mubr.bf16.mxu0 0
  %3379 = vmatmul.mubr.bf16.gmra.mrb[0].mxu0 %v2826
  %v3380 = vpop.f32.mrb[0].mxu0
  %v3381 = vadd.f32 %v3284, %v3380
  %v3382 = vpop.f32.mrb[0].mxu0
  %v3383 = vpop.f32.mrb[0].mxu0
  %v3384 = vadd.f32 %v3287, %v3383
  %v3385 = vpop.f32.mrb[0].mxu0
  %3386 = vmatprep.mubr.bf16.mxu0 0
  %3387 = vmatmul.mubr.bf16.gmra.mrb[0].mxu0 %v2835
  %v3388 = vpop.f32.mrb[0].mxu0
  %v3389 = vadd.f32 %v3292, %v3388
  %v3390 = vpop.f32.mrb[0].mxu0
  %v3391 = vpop.f32.mrb[0].mxu0
  %v3392 = vadd.f32 %v3295, %v3391
  %v3393 = vpop.f32.mrb[0].mxu0
  %3394 = vmatprep.mubr.bf16.mxu0 0
  %3395 = vmatmul.mubr.bf16.gmra.mrb[0].mxu0 %v2844
  %v3396 = vpop.f32.mrb[0].mxu0
  %v3397 = vadd.f32 %v3300, %v3396
  %v3398 = vpop.f32.mrb[0].mxu0
  %v3399 = vpop.f32.mrb[0].mxu0
  %v3400 = vadd.f32 %v3303, %v3399
  %v3401 = vpop.f32.mrb[0].mxu0
  %3402 = vmatprep.mubr.bf16.mxu0 0
  %3403 = vmatmul.mubr.bf16.gmra.mrb[0].mxu0 %v2853
  %v3404 = vpop.f32.mrb[0].mxu0
  %v3405 = vadd.f32 %v3308, %v3404
  %v3406 = vpop.f32.mrb[0].mxu0
  %v3407 = vpop.f32.mrb[0].mxu0
  %v3408 = vadd.f32 %v3311, %v3407
  %v3409 = vpop.f32.mrb[0].mxu0
  %3410 = vdwg.mxu0
  %v3411 = vmax.f32 %v2461, %v3349
  %v3412 = vmax.f32 %v2462, %v3352
  %v3413 = vmax.f32 %v2463, %v3357
  %v3414 = vmax.f32 %v2464, %v3360
  %v3415 = vmax.f32 %v2465, %v3365
  %v3416 = vmax.f32 %v2466, %v3368
  %v3417 = vmax.f32 %v2467, %v3373
  %v3418 = vmax.f32 %v2468, %v3376
  %v3419 = vmax.f32 %v2469, %v3381
  %v3420 = vmax.f32 %v2470, %v3384
  %v3421 = vmax.f32 %v2471, %v3389
  %v3422 = vmax.f32 %v2472, %v3392
  %v3423 = vmax.f32 %v2473, %v3397
  %v3424 = vmax.f32 %v2474, %v3400
  %v3425 = vmax.f32 %v2475, %v3405
  %v3426 = vmax.f32 %v2476, %v3408
  %s3427 = scalar_lea.vmem %s0, 1728
  %v3428 = vld [vmem:[%s3427] sm:$0xff]
  %v3429 = vld [vmem:[%s3427 + $0x8] sm:$0xff]
  %v3430 = vld [vmem:[%s3427 + $0x10] sm:$0xff]
  %v3431 = vld [vmem:[%s3427 + $0x18] sm:$0xff]
  %v3432 = vld [vmem:[%s3427 + $0x20] sm:$0xf]
  %v3433 = vld [vmem:[%s3427 + $0x24] sm:$0xff]
  %v3434 = vld [vmem:[%s3427 + $0x2c] sm:$0xff]
  %v3435 = vld [vmem:[%s3427 + $0x34] sm:$0xff]
  %v3436 = vld [vmem:[%s3427 + $0x3c] sm:$0xff]
  %v3437 = vld [vmem:[%s3427 + $0x44] sm:$0xf]
  %v3438 = vld [vmem:[%s3427 + $0x48] sm:$0xff]
  %v3439 = vld [vmem:[%s3427 + $0x50] sm:$0xff]
  %v3440 = vld [vmem:[%s3427 + $0x58] sm:$0xff]
  %v3441 = vld [vmem:[%s3427 + $0x60] sm:$0xff]
  %v3442 = vld [vmem:[%s3427 + $0x68] sm:$0xf]
  %v3443 = vld [vmem:[%s3427 + $0x6c] sm:$0xff]
  %v3444 = vld [vmem:[%s3427 + $0x74] sm:$0xff]
  %v3445 = vld [vmem:[%s3427 + $0x7c] sm:$0xff]
  %v3446 = vld [vmem:[%s3427 + $0x84] sm:$0xff]
  %v3447 = vld [vmem:[%s3427 + $0x8c] sm:$0xf]
  %v3448 = vld [vmem:[%s3427 + $0x90] sm:$0xff]
  %v3449 = vld [vmem:[%s3427 + $0x98] sm:$0xff]
  %v3450 = vld [vmem:[%s3427 + $0xa0] sm:$0xff]
  %v3451 = vld [vmem:[%s3427 + $0xa8] sm:$0xff]
  %v3452 = vld [vmem:[%s3427 + $0xb0] sm:$0xf]
  %v3453 = vld [vmem:[%s3427 + $0xb4] sm:$0xff]
  %v3454 = vld [vmem:[%s3427 + $0xbc] sm:$0xff]
  %v3455 = vld [vmem:[%s3427 + $0xc4] sm:$0xff]
  %v3456 = vld [vmem:[%s3427 + $0xcc] sm:$0xff]
  %v3457 = vld [vmem:[%s3427 + $0xd4] sm:$0xf]
  %v3458 = vld [vmem:[%s3427 + $0xd8] sm:$0xff]
  %v3459 = vld [vmem:[%s3427 + $0xe0] sm:$0xff]
  %v3460 = vld [vmem:[%s3427 + $0xe8] sm:$0xff]
  %v3461 = vld [vmem:[%s3427 + $0xf0] sm:$0xff]
  %v3462 = vld [vmem:[%s3427 + $0xf8] sm:$0xf]
  %v3463 = vld [vmem:[%s3427 + $0xfc] sm:$0xff]
  %v3464 = vld [vmem:[%s3427 + $0x104] sm:$0xff]
  %v3465 = vld [vmem:[%s3427 + $0x10c] sm:$0xff]
  %v3466 = vld [vmem:[%s3427 + $0x114] sm:$0xff]
  %v3467 = vld [vmem:[%s3427 + $0x11c] sm:$0xf]
  %v3468 = vld [vmem:[%s3427 + $0x120] sm:$0xff]
  %v3469 = vld [vmem:[%s3427 + $0x128] sm:$0xff]
  %v3470 = vld [vmem:[%s3427 + $0x130] sm:$0xff]
  %v3471 = vld [vmem:[%s3427 + $0x138] sm:$0xff]
  %v3472 = vld [vmem:[%s3427 + $0x140] sm:$0xf]
  %v3473 = vld [vmem:[%s3427 + $0x144] sm:$0xff]
  %v3474 = vld [vmem:[%s3427 + $0x14c] sm:$0xff]
  %v3475 = vld [vmem:[%s3427 + $0x154] sm:$0xff]
  %v3476 = vld [vmem:[%s3427 + $0x15c] sm:$0xff]
  %v3477 = vld [vmem:[%s3427 + $0x164] sm:$0xf]
  %v3478 = vld [vmem:[%s3427 + $0x168] sm:$0xff]
  %v3479 = vld [vmem:[%s3427 + $0x170] sm:$0xff]
  %v3480 = vld [vmem:[%s3427 + $0x178] sm:$0xff]
  %v3481 = vld [vmem:[%s3427 + $0x180] sm:$0xff]
  %v3482 = vld [vmem:[%s3427 + $0x188] sm:$0xf]
  %v3483 = vld [vmem:[%s3427 + $0x18c] sm:$0xff]
  %v3484 = vld [vmem:[%s3427 + $0x194] sm:$0xff]
  %v3485 = vld [vmem:[%s3427 + $0x19c] sm:$0xff]
  %v3486 = vld [vmem:[%s3427 + $0x1a4] sm:$0xff]
  %v3487 = vld [vmem:[%s3427 + $0x1ac] sm:$0xf]
  %v3488 = vld [vmem:[%s3427 + $0x1b0] sm:$0xff]
  %v3489 = vld [vmem:[%s3427 + $0x1b8] sm:$0xff]
  %v3490 = vld [vmem:[%s3427 + $0x1c0] sm:$0xff]
  %v3491 = vld [vmem:[%s3427 + $0x1c8] sm:$0xff]
  %v3492 = vld [vmem:[%s3427 + $0x1d0] sm:$0xf]
  %v3493 = vld [vmem:[%s3427 + $0x1d4] sm:$0xff]
  %v3494 = vld [vmem:[%s3427 + $0x1dc] sm:$0xff]
  %v3495 = vld [vmem:[%s3427 + $0x1e4] sm:$0xff]
  %v3496 = vld [vmem:[%s3427 + $0x1ec] sm:$0xff]
  %v3497 = vld [vmem:[%s3427 + $0x1f4] sm:$0xf]
  %v3498 = vld [vmem:[%s3427 + $0x1f8] sm:$0xff]
  %v3499 = vld [vmem:[%s3427 + $0x200] sm:$0xff]
  %v3500 = vld [vmem:[%s3427 + $0x208] sm:$0xff]
  %v3501 = vld [vmem:[%s3427 + $0x210] sm:$0xff]
  %v3502 = vld [vmem:[%s3427 + $0x218] sm:$0xf]
  %v3503 = vld [vmem:[%s3427 + $0x21c] sm:$0xff]
  %v3504 = vld [vmem:[%s3427 + $0x224] sm:$0xff]
  %v3505 = vld [vmem:[%s3427 + $0x22c] sm:$0xff]
  %v3506 = vld [vmem:[%s3427 + $0x234] sm:$0xff]
  %v3507 = vld [vmem:[%s3427 + $0x23c] sm:$0xf]
  %v3588 = vunpack.c.l.b16 %v3428
  %v3589 = vunpack.c.h.b16 %v3428
  %v3590 = vunpack.c.l.b16 %v3429
  %v3591 = vunpack.c.h.b16 %v3429
  %v3592 = vunpack.c.l.b16 %v3430
  %v3593 = vunpack.c.h.b16 %v3430
  %v3594 = vunpack.c.l.b16 %v3431
  %v3595 = vunpack.c.h.b16 %v3431
  %v3596 = vunpack.c.l.b16 %v3432
  %v3597 = vunpack.c.l.b16 %v3433
  %v3598 = vunpack.c.h.b16 %v3433
  %v3599 = vunpack.c.l.b16 %v3434
  %v3600 = vunpack.c.h.b16 %v3434
  %v3601 = vunpack.c.l.b16 %v3435
  %v3602 = vunpack.c.h.b16 %v3435
  %v3603 = vunpack.c.l.b16 %v3436
  %v3604 = vunpack.c.h.b16 %v3436
  %v3605 = vunpack.c.l.b16 %v3437
  %v3606 = vunpack.c.l.b16 %v3438
  %v3607 = vunpack.c.h.b16 %v3438
  %v3608 = vunpack.c.l.b16 %v3439
  %v3609 = vunpack.c.h.b16 %v3439
  %v3610 = vunpack.c.l.b16 %v3440
  %v3611 = vunpack.c.h.b16 %v3440
  %v3612 = vunpack.c.l.b16 %v3441
  %v3613 = vunpack.c.h.b16 %v3441
  %v3614 = vunpack.c.l.b16 %v3442
  %v3615 = vunpack.c.l.b16 %v3443
  %v3616 = vunpack.c.h.b16 %v3443
  %v3617 = vunpack.c.l.b16 %v3444
  %v3618 = vunpack.c.h.b16 %v3444
  %v3619 = vunpack.c.l.b16 %v3445
  %v3620 = vunpack.c.h.b16 %v3445
  %v3621 = vunpack.c.l.b16 %v3446
  %v3622 = vunpack.c.h.b16 %v3446
  %v3623 = vunpack.c.l.b16 %v3447
  %v3624 = vunpack.c.l.b16 %v3448
  %v3625 = vunpack.c.h.b16 %v3448
  %v3626 = vunpack.c.l.b16 %v3449
  %v3627 = vunpack.c.h.b16 %v3449
  %v3628 = vunpack.c.l.b16 %v3450
  %v3629 = vunpack.c.h.b16 %v3450
  %v3630 = vunpack.c.l.b16 %v3451
  %v3631 = vunpack.c.h.b16 %v3451
  %v3632 = vunpack.c.l.b16 %v3452
  %v3633 = vunpack.c.l.b16 %v3453
  %v3634 = vunpack.c.h.b16 %v3453
  %v3635 = vunpack.c.l.b16 %v3454
  %v3636 = vunpack.c.h.b16 %v3454
  %v3637 = vunpack.c.l.b16 %v3455
  %v3638 = vunpack.c.h.b16 %v3455
  %v3639 = vunpack.c.l.b16 %v3456
  %v3640 = vunpack.c.h.b16 %v3456
  %v3641 = vunpack.c.l.b16 %v3457
  %v3642 = vunpack.c.l.b16 %v3458
  %v3643 = vunpack.c.h.b16 %v3458
  %v3644 = vunpack.c.l.b16 %v3459
  %v3645 = vunpack.c.h.b16 %v3459
  %v3646 = vunpack.c.l.b16 %v3460
  %v3647 = vunpack.c.h.b16 %v3460
  %v3648 = vunpack.c.l.b16 %v3461
  %v3649 = vunpack.c.h.b16 %v3461
  %v3650 = vunpack.c.l.b16 %v3462
  %v3651 = vunpack.c.l.b16 %v3463
  %v3652 = vunpack.c.h.b16 %v3463
  %v3653 = vunpack.c.l.b16 %v3464
  %v3654 = vunpack.c.h.b16 %v3464
  %v3655 = vunpack.c.l.b16 %v3465
  %v3656 = vunpack.c.h.b16 %v3465
  %v3657 = vunpack.c.l.b16 %v3466
  %v3658 = vunpack.c.h.b16 %v3466
  %v3659 = vunpack.c.l.b16 %v3467
  %v3660 = vunpack.c.l.b16 %v3468
  %v3661 = vunpack.c.h.b16 %v3468
  %v3662 = vunpack.c.l.b16 %v3469
  %v3663 = vunpack.c.h.b16 %v3469
  %v3664 = vunpack.c.l.b16 %v3470
  %v3665 = vunpack.c.h.b16 %v3470
  %v3666 = vunpack.c.l.b16 %v3471
  %v3667 = vunpack.c.h.b16 %v3471
  %v3668 = vunpack.c.l.b16 %v3472
  %v3669 = vunpack.c.l.b16 %v3473
  %v3670 = vunpack.c.h.b16 %v3473
  %v3671 = vunpack.c.l.b16 %v3474
  %v3672 = vunpack.c.h.b16 %v3474
  %v3673 = vunpack.c.l.b16 %v3475
  %v3674 = vunpack.c.h.b16 %v3475
  %v3675 = vunpack.c.l.b16 %v3476
  %v3676 = vunpack.c.h.b16 %v3476
  %v3677 = vunpack.c.l.b16 %v3477
  %v3678 = vunpack.c.l.b16 %v3478
  %v3679 = vunpack.c.h.b16 %v3478
  %v3680 = vunpack.c.l.b16 %v3479
  %v3681 = vunpack.c.h.b16 %v3479
  %v3682 = vunpack.c.l.b16 %v3480
  %v3683 = vunpack.c.h.b16 %v3480
  %v3684 = vunpack.c.l.b16 %v3481
  %v3685 = vunpack.c.h.b16 %v3481
  %v3686 = vunpack.c.l.b16 %v3482
  %v3687 = vunpack.c.l.b16 %v3483
  %v3688 = vunpack.c.h.b16 %v3483
  %v3689 = vunpack.c.l.b16 %v3484
  %v3690 = vunpack.c.h.b16 %v3484
  %v3691 = vunpack.c.l.b16 %v3485
  %v3692 = vunpack.c.h.b16 %v3485
  %v3693 = vunpack.c.l.b16 %v3486
  %v3694 = vunpack.c.h.b16 %v3486
  %v3695 = vunpack.c.l.b16 %v3487
  %v3696 = vunpack.c.l.b16 %v3488
  %v3697 = vunpack.c.h.b16 %v3488
  %v3698 = vunpack.c.l.b16 %v3489
  %v3699 = vunpack.c.h.b16 %v3489
  %v3700 = vunpack.c.l.b16 %v3490
  %v3701 = vunpack.c.h.b16 %v3490
  %v3702 = vunpack.c.l.b16 %v3491
  %v3703 = vunpack.c.h.b16 %v3491
  %v3704 = vunpack.c.l.b16 %v3492
  %v3705 = vunpack.c.l.b16 %v3493
  %v3706 = vunpack.c.h.b16 %v3493
  %v3707 = vunpack.c.l.b16 %v3494
  %v3708 = vunpack.c.h.b16 %v3494
  %v3709 = vunpack.c.l.b16 %v3495
  %v3710 = vunpack.c.h.b16 %v3495
  %v3711 = vunpack.c.l.b16 %v3496
  %v3712 = vunpack.c.h.b16 %v3496
  %v3713 = vunpack.c.l.b16 %v3497
  %v3714 = vunpack.c.l.b16 %v3498
  %v3715 = vunpack.c.h.b16 %v3498
  %v3716 = vunpack.c.l.b16 %v3499
  %v3717 = vunpack.c.h.b16 %v3499
  %v3718 = vunpack.c.l.b16 %v3500
  %v3719 = vunpack.c.h.b16 %v3500
  %v3720 = vunpack.c.l.b16 %v3501
  %v3721 = vunpack.c.h.b16 %v3501
  %v3722 = vunpack.c.l.b16 %v3502
  %v3723 = vunpack.c.l.b16 %v3503
  %v3724 = vunpack.c.h.b16 %v3503
  %v3725 = vunpack.c.l.b16 %v3504
  %v3726 = vunpack.c.h.b16 %v3504
  %v3727 = vunpack.c.l.b16 %v3505
  %v3728 = vunpack.c.h.b16 %v3505
  %v3729 = vunpack.c.l.b16 %v3506
  %v3730 = vunpack.c.h.b16 %v3506
  %v3731 = vunpack.c.l.b16 %v3507
  %v3732 = vpack.c.b16 %v3597, %v3588
  %v3733 = vpack.c.b16 %v3598, %v3589
  %v3734 = vpack.c.b16 %v3599, %v3590
  %v3735 = vpack.c.b16 %v3600, %v3591
  %v3736 = vpack.c.b16 %v3601, %v3592
  %v3737 = vpack.c.b16 %v3602, %v3593
  %v3738 = vpack.c.b16 %v3603, %v3594
  %v3739 = vpack.c.b16 %v3604, %v3595
  %v3740 = vpack.c.b16 %v3605, %v3596
  %v3741 = vpack.c.b16 %v3615, %v3606
  %v3742 = vpack.c.b16 %v3616, %v3607
  %v3743 = vpack.c.b16 %v3617, %v3608
  %v3744 = vpack.c.b16 %v3618, %v3609
  %v3745 = vpack.c.b16 %v3619, %v3610
  %v3746 = vpack.c.b16 %v3620, %v3611
  %v3747 = vpack.c.b16 %v3621, %v3612
  %v3748 = vpack.c.b16 %v3622, %v3613
  %v3749 = vpack.c.b16 %v3623, %v3614
  %v3750 = vpack.c.b16 %v3633, %v3624
  %v3751 = vpack.c.b16 %v3634, %v3625
  %v3752 = vpack.c.b16 %v3635, %v3626
  %v3753 = vpack.c.b16 %v3636, %v3627
  %v3754 = vpack.c.b16 %v3637, %v3628
  %v3755 = vpack.c.b16 %v3638, %v3629
  %v3756 = vpack.c.b16 %v3639, %v3630
  %v3757 = vpack.c.b16 %v3640, %v3631
  %v3758 = vpack.c.b16 %v3641, %v3632
  %v3759 = vpack.c.b16 %v3651, %v3642
  %v3760 = vpack.c.b16 %v3652, %v3643
  %v3761 = vpack.c.b16 %v3653, %v3644
  %v3762 = vpack.c.b16 %v3654, %v3645
  %v3763 = vpack.c.b16 %v3655, %v3646
  %v3764 = vpack.c.b16 %v3656, %v3647
  %v3765 = vpack.c.b16 %v3657, %v3648
  %v3766 = vpack.c.b16 %v3658, %v3649
  %v3767 = vpack.c.b16 %v3659, %v3650
  %v3768 = vpack.c.b16 %v3669, %v3660
  %v3769 = vpack.c.b16 %v3670, %v3661
  %v3770 = vpack.c.b16 %v3671, %v3662
  %v3771 = vpack.c.b16 %v3672, %v3663
  %v3772 = vpack.c.b16 %v3673, %v3664
  %v3773 = vpack.c.b16 %v3674, %v3665
  %v3774 = vpack.c.b16 %v3675, %v3666
  %v3775 = vpack.c.b16 %v3676, %v3667
  %v3776 = vpack.c.b16 %v3677, %v3668
  %v3777 = vpack.c.b16 %v3687, %v3678
  %v3778 = vpack.c.b16 %v3688, %v3679
  %v3779 = vpack.c.b16 %v3689, %v3680
  %v3780 = vpack.c.b16 %v3690, %v3681
  %v3781 = vpack.c.b16 %v3691, %v3682
  %v3782 = vpack.c.b16 %v3692, %v3683
  %v3783 = vpack.c.b16 %v3693, %v3684
  %v3784 = vpack.c.b16 %v3694, %v3685
  %v3785 = vpack.c.b16 %v3695, %v3686
  %v3786 = vpack.c.b16 %v3705, %v3696
  %v3787 = vpack.c.b16 %v3706, %v3697
  %v3788 = vpack.c.b16 %v3707, %v3698
  %v3789 = vpack.c.b16 %v3708, %v3699
  %v3790 = vpack.c.b16 %v3709, %v3700
  %v3791 = vpack.c.b16 %v3710, %v3701
  %v3792 = vpack.c.b16 %v3711, %v3702
  %v3793 = vpack.c.b16 %v3712, %v3703
  %v3794 = vpack.c.b16 %v3713, %v3704
  %v3795 = vpack.c.b16 %v3723, %v3714
  %v3796 = vpack.c.b16 %v3724, %v3715
  %v3797 = vpack.c.b16 %v3725, %v3716
  %v3798 = vpack.c.b16 %v3726, %v3717
  %v3799 = vpack.c.b16 %v3727, %v3718
  %v3800 = vpack.c.b16 %v3728, %v3719
  %v3801 = vpack.c.b16 %v3729, %v3720
  %v3802 = vpack.c.b16 %v3730, %v3721
  %v3803 = vpack.c.b16 %v3731, %v3722
  %3876 = vmatprep.subr.bf16.mxu0 0
  %3877 = vmatpush1.bf16.msra.mxu0 %v898
  %3878 = vmatprep.subr.bf16.mxu0 0
  %3879 = vmatpush1.bf16.msra.mxu0 %v899
  %3880 = vmatprep.subr.bf16.mxu0 0
  %3881 = vmatpush1.bf16.msra.mxu0 %v900
  %3882 = vmatprep.subr.bf16.mxu0 0
  %3883 = vmatpush1.bf16.msra.mxu0 %v901
  %3884 = vmatprep.subr.bf16.mxu0 0
  %3885 = vmatpush1.bf16.msra.mxu0 %v902
  %3886 = vmatprep.subr.bf16.mxu0 0
  %3887 = vmatpush1.bf16.msra.mxu0 %v903
  %3888 = vmatprep.subr.bf16.mxu0 0
  %3889 = vmatpush1.bf16.msra.mxu0 %v904
  %3890 = vmatprep.subr.bf16.mxu0 0
  %3891 = vmatpush1.bf16.msra.mxu0 %v905
  %3892 = vmatprep.subr.bf16.mxu0 0
  %3893 = vmatpush1.bf16.msra.mxu0 %v906
  %3894 = vmatprep.subr.bf16.mxu0 0
  %3895 = vmatpush1.bf16.msra.mxu0 %v907
  %3896 = vmatprep.subr.bf16.mxu0 0
  %3897 = vmatpush1.bf16.msra.mxu0 %v908
  %3898 = vmatprep.subr.bf16.mxu0 0
  %3899 = vmatpush1.bf16.msra.mxu0 %v909
  %3900 = vmatprep.subr.bf16.mxu0 0
  %3901 = vmatpush1.bf16.msra.mxu0 %v910
  %3902 = vmatprep.subr.bf16.mxu0 0
  %3903 = vmatpush1.bf16.msra.mxu0 %v911
  %3904 = vmatprep.subr.bf16.mxu0 0
  %3905 = vmatpush1.bf16.msra.mxu0 %v912
  %3906 = vmatprep.subr.bf16.mxu0 0
  %3907 = vmatpush1.bf16.msra.mxu0 %v913
  %3908 = vmatprep.mubr.bf16.mxu0 %v3733
  %3909 = vmatmul.mubr.bf16.gmra.mrb[0].mxu0 %v3732
  %v3910 = vpop.f32.mrb[0].mxu0
  %v3911 = vadd.f32 0.0, %v3910
  %v3912 = vpop.f32.mrb[0].mxu0
  %v3913 = vpop.f32.mrb[0].mxu0
  %v3914 = vadd.f32 0.0, %v3913
  %v3915 = vpop.f32.mrb[0].mxu0
  %3916 = vmatprep.mubr.bf16.mxu0 %v3742
  %3917 = vmatmul.mubr.bf16.gmra.mrb[0].mxu0 %v3741
  %v3918 = vpop.f32.mrb[0].mxu0
  %v3919 = vadd.f32 0.0, %v3918
  %v3920 = vpop.f32.mrb[0].mxu0
  %v3921 = vpop.f32.mrb[0].mxu0
  %v3922 = vadd.f32 0.0, %v3921
  %v3923 = vpop.f32.mrb[0].mxu0
  %3924 = vmatprep.mubr.bf16.mxu0 %v3751
  %3925 = vmatmul.mubr.bf16.gmra.mrb[0].mxu0 %v3750
  %v3926 = vpop.f32.mrb[0].mxu0
  %v3927 = vadd.f32 0.0, %v3926
  %v3928 = vpop.f32.mrb[0].mxu0
  %v3929 = vpop.f32.mrb[0].mxu0
  %v3930 = vadd.f32 0.0, %v3929
  %v3931 = vpop.f32.mrb[0].mxu0
  %3932 = vmatprep.mubr.bf16.mxu0 %v3760
  %3933 = vmatmul.mubr.bf16.gmra.mrb[0].mxu0 %v3759
  %v3934 = vpop.f32.mrb[0].mxu0
  %v3935 = vadd.f32 0.0, %v3934
  %v3936 = vpop.f32.mrb[0].mxu0
  %v3937 = vpop.f32.mrb[0].mxu0
  %v3938 = vadd.f32 0.0, %v3937
  %v3939 = vpop.f32.mrb[0].mxu0
  %3940 = vmatprep.mubr.bf16.mxu0 %v3769
  %3941 = vmatmul.mubr.bf16.gmra.mrb[0].mxu0 %v3768
  %v3942 = vpop.f32.mrb[0].mxu0
  %v3943 = vadd.f32 0.0, %v3942
  %v3944 = vpop.f32.mrb[0].mxu0
  %v3945 = vpop.f32.mrb[0].mxu0
  %v3946 = vadd.f32 0.0, %v3945
  %v3947 = vpop.f32.mrb[0].mxu0
  %3948 = vmatprep.mubr.bf16.mxu0 %v3778
  %3949 = vmatmul.mubr.bf16.gmra.mrb[0].mxu0 %v3777
  %v3950 = vpop.f32.mrb[0].mxu0
  %v3951 = vadd.f32 0.0, %v3950
  %v3952 = vpop.f32.mrb[0].mxu0
  %v3953 = vpop.f32.mrb[0].mxu0
  %v3954 = vadd.f32 0.0, %v3953
  %v3955 = vpop.f32.mrb[0].mxu0
  %3956 = vmatprep.mubr.bf16.mxu0 %v3787
  %3957 = vmatmul.mubr.bf16.gmra.mrb[0].mxu0 %v3786
  %v3958 = vpop.f32.mrb[0].mxu0
  %v3959 = vadd.f32 0.0, %v3958
  %v3960 = vpop.f32.mrb[0].mxu0
  %v3961 = vpop.f32.mrb[0].mxu0
  %v3962 = vadd.f32 0.0, %v3961
  %v3963 = vpop.f32.mrb[0].mxu0
  %3964 = vmatprep.mubr.bf16.mxu0 %v3796
  %3965 = vmatmul.mubr.bf16.gmra.mrb[0].mxu0 %v3795
  %v3966 = vpop.f32.mrb[0].mxu0
  %v3967 = vadd.f32 0.0, %v3966
  %v3968 = vpop.f32.mrb[0].mxu0
  %v3969 = vpop.f32.mrb[0].mxu0
  %v3970 = vadd.f32 0.0, %v3969
  %v3971 = vpop.f32.mrb[0].mxu0
  %3972 = vdwg.mxu0
  %3973 = vmatprep.subr.bf16.mxu0 0
  %3974 = vmatpush1.bf16.msra.mxu0 %v914
  %3975 = vmatprep.subr.bf16.mxu0 0
  %3976 = vmatpush1.bf16.msra.mxu0 %v915
  %3977 = vmatprep.subr.bf16.mxu0 0
  %3978 = vmatpush1.bf16.msra.mxu0 %v916
  %3979 = vmatprep.subr.bf16.mxu0 0
  %3980 = vmatpush1.bf16.msra.mxu0 %v917
  %3981 = vmatprep.subr.bf16.mxu0 0
  %3982 = vmatpush1.bf16.msra.mxu0 %v918
  %3983 = vmatprep.subr.bf16.mxu0 0
  %3984 = vmatpush1.bf16.msra.mxu0 %v919
  %3985 = vmatprep.subr.bf16.mxu0 0
  %3986 = vmatpush1.bf16.msra.mxu0 %v920
  %3987 = vmatprep.subr.bf16.mxu0 0
  %3988 = vmatpush1.bf16.msra.mxu0 %v921
  %3989 = vmatprep.subr.bf16.mxu0 0
  %3990 = vmatpush1.bf16.msra.mxu0 %v922
  %3991 = vmatprep.subr.bf16.mxu0 0
  %3992 = vmatpush1.bf16.msra.mxu0 %v923
  %3993 = vmatprep.subr.bf16.mxu0 0
  %3994 = vmatpush1.bf16.msra.mxu0 %v924
  %3995 = vmatprep.subr.bf16.mxu0 0
  %3996 = vmatpush1.bf16.msra.mxu0 %v925
  %3997 = vmatprep.subr.bf16.mxu0 0
  %3998 = vmatpush1.bf16.msra.mxu0 %v926
  %3999 = vmatprep.subr.bf16.mxu0 0
  %4000 = vmatpush1.bf16.msra.mxu0 %v927
  %4001 = vmatprep.subr.bf16.mxu0 0
  %4002 = vmatpush1.bf16.msra.mxu0 %v928
  %4003 = vmatprep.subr.bf16.mxu0 0
  %4004 = vmatpush1.bf16.msra.mxu0 %v929
  %4005 = vmatprep.mubr.bf16.mxu0 %v3735
  %4006 = vmatmul.mubr.bf16.gmra.mrb[0].mxu0 %v3734
  %v4007 = vpop.f32.mrb[0].mxu0
  %v4008 = vadd.f32 %v3911, %v4007
  %v4009 = vpop.f32.mrb[0].mxu0
  %v4010 = vpop.f32.mrb[0].mxu0
  %v4011 = vadd.f32 %v3914, %v4010
  %v4012 = vpop.f32.mrb[0].mxu0
  %4013 = vmatprep.mubr.bf16.mxu0 %v3744
  %4014 = vmatmul.mubr.bf16.gmra.mrb[0].mxu0 %v3743
  %v4015 = vpop.f32.mrb[0].mxu0
  %v4016 = vadd.f32 %v3919, %v4015
  %v4017 = vpop.f32.mrb[0].mxu0
  %v4018 = vpop.f32.mrb[0].mxu0
  %v4019 = vadd.f32 %v3922, %v4018
  %v4020 = vpop.f32.mrb[0].mxu0
  %4021 = vmatprep.mubr.bf16.mxu0 %v3753
  %4022 = vmatmul.mubr.bf16.gmra.mrb[0].mxu0 %v3752
  %v4023 = vpop.f32.mrb[0].mxu0
  %v4024 = vadd.f32 %v3927, %v4023
  %v4025 = vpop.f32.mrb[0].mxu0
  %v4026 = vpop.f32.mrb[0].mxu0
  %v4027 = vadd.f32 %v3930, %v4026
  %v4028 = vpop.f32.mrb[0].mxu0
  %4029 = vmatprep.mubr.bf16.mxu0 %v3762
  %4030 = vmatmul.mubr.bf16.gmra.mrb[0].mxu0 %v3761
  %v4031 = vpop.f32.mrb[0].mxu0
  %v4032 = vadd.f32 %v3935, %v4031
  %v4033 = vpop.f32.mrb[0].mxu0
  %v4034 = vpop.f32.mrb[0].mxu0
  %v4035 = vadd.f32 %v3938, %v4034
  %v4036 = vpop.f32.mrb[0].mxu0
  %4037 = vmatprep.mubr.bf16.mxu0 %v3771
  %4038 = vmatmul.mubr.bf16.gmra.mrb[0].mxu0 %v3770
  %v4039 = vpop.f32.mrb[0].mxu0
  %v4040 = vadd.f32 %v3943, %v4039
  %v4041 = vpop.f32.mrb[0].mxu0
  %v4042 = vpop.f32.mrb[0].mxu0
  %v4043 = vadd.f32 %v3946, %v4042
  %v4044 = vpop.f32.mrb[0].mxu0
  %4045 = vmatprep.mubr.bf16.mxu0 %v3780
  %4046 = vmatmul.mubr.bf16.gmra.mrb[0].mxu0 %v3779
  %v4047 = vpop.f32.mrb[0].mxu0
  %v4048 = vadd.f32 %v3951, %v4047
  %v4049 = vpop.f32.mrb[0].mxu0
  %v4050 = vpop.f32.mrb[0].mxu0
  %v4051 = vadd.f32 %v3954, %v4050
  %v4052 = vpop.f32.mrb[0].mxu0
  %4053 = vmatprep.mubr.bf16.mxu0 %v3789
  %4054 = vmatmul.mubr.bf16.gmra.mrb[0].mxu0 %v3788
  %v4055 = vpop.f32.mrb[0].mxu0
  %v4056 = vadd.f32 %v3959, %v4055
  %v4057 = vpop.f32.mrb[0].mxu0
  %v4058 = vpop.f32.mrb[0].mxu0
  %v4059 = vadd.f32 %v3962, %v4058
  %v4060 = vpop.f32.mrb[0].mxu0
  %4061 = vmatprep.mubr.bf16.mxu0 %v3798
  %4062 = vmatmul.mubr.bf16.gmra.mrb[0].mxu0 %v3797
  %v4063 = vpop.f32.mrb[0].mxu0
  %v4064 = vadd.f32 %v3967, %v4063
  %v4065 = vpop.f32.mrb[0].mxu0
  %v4066 = vpop.f32.mrb[0].mxu0
  %v4067 = vadd.f32 %v3970, %v4066
  %v4068 = vpop.f32.mrb[0].mxu0
  %4069 = vdwg.mxu0
  %4070 = vmatprep.subr.bf16.mxu0 0
  %4071 = vmatpush1.bf16.msra.mxu0 %v930
  %4072 = vmatprep.subr.bf16.mxu0 0
  %4073 = vmatpush1.bf16.msra.mxu0 %v931
  %4074 = vmatprep.subr.bf16.mxu0 0
  %4075 = vmatpush1.bf16.msra.mxu0 %v932
  %4076 = vmatprep.subr.bf16.mxu0 0
  %4077 = vmatpush1.bf16.msra.mxu0 %v933
  %4078 = vmatprep.subr.bf16.mxu0 0
  %4079 = vmatpush1.bf16.msra.mxu0 %v934
  %4080 = vmatprep.subr.bf16.mxu0 0
  %4081 = vmatpush1.bf16.msra.mxu0 %v935
  %4082 = vmatprep.subr.bf16.mxu0 0
  %4083 = vmatpush1.bf16.msra.mxu0 %v936
  %4084 = vmatprep.subr.bf16.mxu0 0
  %4085 = vmatpush1.bf16.msra.mxu0 %v937
  %4086 = vmatprep.subr.bf16.mxu0 0
  %4087 = vmatpush1.bf16.msra.mxu0 %v938
  %4088 = vmatprep.subr.bf16.mxu0 0
  %4089 = vmatpush1.bf16.msra.mxu0 %v939
  %4090 = vmatprep.subr.bf16.mxu0 0
  %4091 = vmatpush1.bf16.msra.mxu0 %v940
  %4092 = vmatprep.subr.bf16.mxu0 0
  %4093 = vmatpush1.bf16.msra.mxu0 %v941
  %4094 = vmatprep.subr.bf16.mxu0 0
  %4095 = vmatpush1.bf16.msra.mxu0 %v942
  %4096 = vmatprep.subr.bf16.mxu0 0
  %4097 = vmatpush1.bf16.msra.mxu0 %v943
  %4098 = vmatprep.subr.bf16.mxu0 0
  %4099 = vmatpush1.bf16.msra.mxu0 %v944
  %4100 = vmatprep.subr.bf16.mxu0 0
  %4101 = vmatpush1.bf16.msra.mxu0 %v945
  %4102 = vmatprep.mubr.bf16.mxu0 %v3737
  %4103 = vmatmul.mubr.bf16.gmra.mrb[0].mxu0 %v3736
  %v4104 = vpop.f32.mrb[0].mxu0
  %v4105 = vadd.f32 %v4008, %v4104
  %v4106 = vpop.f32.mrb[0].mxu0
  %v4107 = vpop.f32.mrb[0].mxu0
  %v4108 = vadd.f32 %v4011, %v4107
  %v4109 = vpop.f32.mrb[0].mxu0
  %4110 = vmatprep.mubr.bf16.mxu0 %v3746
  %4111 = vmatmul.mubr.bf16.gmra.mrb[0].mxu0 %v3745
  %v4112 = vpop.f32.mrb[0].mxu0
  %v4113 = vadd.f32 %v4016, %v4112
  %v4114 = vpop.f32.mrb[0].mxu0
  %v4115 = vpop.f32.mrb[0].mxu0
  %v4116 = vadd.f32 %v4019, %v4115
  %v4117 = vpop.f32.mrb[0].mxu0
  %4118 = vmatprep.mubr.bf16.mxu0 %v3755
  %4119 = vmatmul.mubr.bf16.gmra.mrb[0].mxu0 %v3754
  %v4120 = vpop.f32.mrb[0].mxu0
  %v4121 = vadd.f32 %v4024, %v4120
  %v4122 = vpop.f32.mrb[0].mxu0
  %v4123 = vpop.f32.mrb[0].mxu0
  %v4124 = vadd.f32 %v4027, %v4123
  %v4125 = vpop.f32.mrb[0].mxu0
  %4126 = vmatprep.mubr.bf16.mxu0 %v3764
  %4127 = vmatmul.mubr.bf16.gmra.mrb[0].mxu0 %v3763
  %v4128 = vpop.f32.mrb[0].mxu0
  %v4129 = vadd.f32 %v4032, %v4128
  %v4130 = vpop.f32.mrb[0].mxu0
  %v4131 = vpop.f32.mrb[0].mxu0
  %v4132 = vadd.f32 %v4035, %v4131
  %v4133 = vpop.f32.mrb[0].mxu0
  %4134 = vmatprep.mubr.bf16.mxu0 %v3773
  %4135 = vmatmul.mubr.bf16.gmra.mrb[0].mxu0 %v3772
  %v4136 = vpop.f32.mrb[0].mxu0
  %v4137 = vadd.f32 %v4040, %v4136
  %v4138 = vpop.f32.mrb[0].mxu0
  %v4139 = vpop.f32.mrb[0].mxu0
  %v4140 = vadd.f32 %v4043, %v4139
  %v4141 = vpop.f32.mrb[0].mxu0
  %4142 = vmatprep.mubr.bf16.mxu0 %v3782
  %4143 = vmatmul.mubr.bf16.gmra.mrb[0].mxu0 %v3781
  %v4144 = vpop.f32.mrb[0].mxu0
  %v4145 = vadd.f32 %v4048, %v4144
  %v4146 = vpop.f32.mrb[0].mxu0
  %v4147 = vpop.f32.mrb[0].mxu0
  %v4148 = vadd.f32 %v4051, %v4147
  %v4149 = vpop.f32.mrb[0].mxu0
  %4150 = vmatprep.mubr.bf16.mxu0 %v3791
  %4151 = vmatmul.mubr.bf16.gmra.mrb[0].mxu0 %v3790
  %v4152 = vpop.f32.mrb[0].mxu0
  %v4153 = vadd.f32 %v4056, %v4152
  %v4154 = vpop.f32.mrb[0].mxu0
  %v4155 = vpop.f32.mrb[0].mxu0
  %v4156 = vadd.f32 %v4059, %v4155
  %v4157 = vpop.f32.mrb[0].mxu0
  %4158 = vmatprep.mubr.bf16.mxu0 %v3800
  %4159 = vmatmul.mubr.bf16.gmra.mrb[0].mxu0 %v3799
  %v4160 = vpop.f32.mrb[0].mxu0
  %v4161 = vadd.f32 %v4064, %v4160
  %v4162 = vpop.f32.mrb[0].mxu0
  %v4163 = vpop.f32.mrb[0].mxu0
  %v4164 = vadd.f32 %v4067, %v4163
  %v4165 = vpop.f32.mrb[0].mxu0
  %4166 = vdwg.mxu0
  %4167 = vmatprep.subr.bf16.mxu0 0
  %4168 = vmatpush1.bf16.msra.mxu0 %v946
  %4169 = vmatprep.subr.bf16.mxu0 0
  %4170 = vmatpush1.bf16.msra.mxu0 %v947
  %4171 = vmatprep.subr.bf16.mxu0 0
  %4172 = vmatpush1.bf16.msra.mxu0 %v948
  %4173 = vmatprep.subr.bf16.mxu0 0
  %4174 = vmatpush1.bf16.msra.mxu0 %v949
  %4175 = vmatprep.subr.bf16.mxu0 0
  %4176 = vmatpush1.bf16.msra.mxu0 %v950
  %4177 = vmatprep.subr.bf16.mxu0 0
  %4178 = vmatpush1.bf16.msra.mxu0 %v951
  %4179 = vmatprep.subr.bf16.mxu0 0
  %4180 = vmatpush1.bf16.msra.mxu0 %v952
  %4181 = vmatprep.subr.bf16.mxu0 0
  %4182 = vmatpush1.bf16.msra.mxu0 %v953
  %4183 = vmatprep.subr.bf16.mxu0 0
  %4184 = vmatpush1.bf16.msra.mxu0 %v954
  %4185 = vmatprep.subr.bf16.mxu0 0
  %4186 = vmatpush1.bf16.msra.mxu0 %v955
  %4187 = vmatprep.subr.bf16.mxu0 0
  %4188 = vmatpush1.bf16.msra.mxu0 %v956
  %4189 = vmatprep.subr.bf16.mxu0 0
  %4190 = vmatpush1.bf16.msra.mxu0 %v957
  %4191 = vmatprep.subr.bf16.mxu0 0
  %4192 = vmatpush1.bf16.msra.mxu0 %v958
  %4193 = vmatprep.subr.bf16.mxu0 0
  %4194 = vmatpush1.bf16.msra.mxu0 %v959
  %4195 = vmatprep.subr.bf16.mxu0 0
  %4196 = vmatpush1.bf16.msra.mxu0 %v960
  %4197 = vmatprep.subr.bf16.mxu0 0
  %4198 = vmatpush1.bf16.msra.mxu0 %v961
  %4199 = vmatprep.mubr.bf16.mxu0 %v3739
  %4200 = vmatmul.mubr.bf16.gmra.mrb[0].mxu0 %v3738
  %v4201 = vpop.f32.mrb[0].mxu0
  %v4202 = vadd.f32 %v4105, %v4201
  %v4203 = vpop.f32.mrb[0].mxu0
  %v4204 = vpop.f32.mrb[0].mxu0
  %v4205 = vadd.f32 %v4108, %v4204
  %v4206 = vpop.f32.mrb[0].mxu0
  %4207 = vmatprep.mubr.bf16.mxu0 %v3748
  %4208 = vmatmul.mubr.bf16.gmra.mrb[0].mxu0 %v3747
  %v4209 = vpop.f32.mrb[0].mxu0
  %v4210 = vadd.f32 %v4113, %v4209
  %v4211 = vpop.f32.mrb[0].mxu0
  %v4212 = vpop.f32.mrb[0].mxu0
  %v4213 = vadd.f32 %v4116, %v4212
  %v4214 = vpop.f32.mrb[0].mxu0
  %4215 = vmatprep.mubr.bf16.mxu0 %v3757
  %4216 = vmatmul.mubr.bf16.gmra.mrb[0].mxu0 %v3756
  %v4217 = vpop.f32.mrb[0].mxu0
  %v4218 = vadd.f32 %v4121, %v4217
  %v4219 = vpop.f32.mrb[0].mxu0
  %v4220 = vpop.f32.mrb[0].mxu0
  %v4221 = vadd.f32 %v4124, %v4220
  %v4222 = vpop.f32.mrb[0].mxu0
  %4223 = vmatprep.mubr.bf16.mxu0 %v3766
  %4224 = vmatmul.mubr.bf16.gmra.mrb[0].mxu0 %v3765
  %v4225 = vpop.f32.mrb[0].mxu0
  %v4226 = vadd.f32 %v4129, %v4225
  %v4227 = vpop.f32.mrb[0].mxu0
  %v4228 = vpop.f32.mrb[0].mxu0
  %v4229 = vadd.f32 %v4132, %v4228
  %v4230 = vpop.f32.mrb[0].mxu0
  %4231 = vmatprep.mubr.bf16.mxu0 %v3775
  %4232 = vmatmul.mubr.bf16.gmra.mrb[0].mxu0 %v3774
  %v4233 = vpop.f32.mrb[0].mxu0
  %v4234 = vadd.f32 %v4137, %v4233
  %v4235 = vpop.f32.mrb[0].mxu0
  %v4236 = vpop.f32.mrb[0].mxu0
  %v4237 = vadd.f32 %v4140, %v4236
  %v4238 = vpop.f32.mrb[0].mxu0
  %4239 = vmatprep.mubr.bf16.mxu0 %v3784
  %4240 = vmatmul.mubr.bf16.gmra.mrb[0].mxu0 %v3783
  %v4241 = vpop.f32.mrb[0].mxu0
  %v4242 = vadd.f32 %v4145, %v4241
  %v4243 = vpop.f32.mrb[0].mxu0
  %v4244 = vpop.f32.mrb[0].mxu0
  %v4245 = vadd.f32 %v4148, %v4244
  %v4246 = vpop.f32.mrb[0].mxu0
  %4247 = vmatprep.mubr.bf16.mxu0 %v3793
  %4248 = vmatmul.mubr.bf16.gmra.mrb[0].mxu0 %v3792
  %v4249 = vpop.f32.mrb[0].mxu0
  %v4250 = vadd.f32 %v4153, %v4249
  %v4251 = vpop.f32.mrb[0].mxu0
  %v4252 = vpop.f32.mrb[0].mxu0
  %v4253 = vadd.f32 %v4156, %v4252
  %v4254 = vpop.f32.mrb[0].mxu0
  %4255 = vmatprep.mubr.bf16.mxu0 %v3802
  %4256 = vmatmul.mubr.bf16.gmra.mrb[0].mxu0 %v3801
  %v4257 = vpop.f32.mrb[0].mxu0
  %v4258 = vadd.f32 %v4161, %v4257
  %v4259 = vpop.f32.mrb[0].mxu0
  %v4260 = vpop.f32.mrb[0].mxu0
  %v4261 = vadd.f32 %v4164, %v4260
  %v4262 = vpop.f32.mrb[0].mxu0
  %4263 = vdwg.mxu0
  %4264 = vmatprep.subr.bf16.mxu0 0
  %4265 = vmatpush1.bf16.msra.mxu0 %v962
  %4266 = vmatprep.subr.bf16.mxu0 0
  %4267 = vmatpush1.bf16.msra.mxu0 %v963
  %4268 = vmatprep.subr.bf16.mxu0 0
  %4269 = vmatpush1.bf16.msra.mxu0 %v964
  %4270 = vmatprep.subr.bf16.mxu0 0
  %4271 = vmatpush1.bf16.msra.mxu0 %v965
  %4272 = vmatprep.subr.bf16.mxu0 0
  %4273 = vmatpush1.bf16.msra.mxu0 %v966
  %4274 = vmatprep.subr.bf16.mxu0 0
  %4275 = vmatpush1.bf16.msra.mxu0 %v967
  %4276 = vmatprep.subr.bf16.mxu0 0
  %4277 = vmatpush1.bf16.msra.mxu0 %v968
  %4278 = vmatprep.subr.bf16.mxu0 0
  %4279 = vmatpush1.bf16.msra.mxu0 %v969
  %4280 = vmatprep.subr.bf16.mxu0 0
  %4281 = vmatpush1.bf16.msra.mxu0 0
  %4282 = vmatprep.subr.bf16.mxu0 0
  %4283 = vmatpush1.bf16.msra.mxu0 0
  %4284 = vmatprep.subr.bf16.mxu0 0
  %4285 = vmatpush1.bf16.msra.mxu0 0
  %4286 = vmatprep.subr.bf16.mxu0 0
  %4287 = vmatpush1.bf16.msra.mxu0 0
  %4288 = vmatprep.subr.bf16.mxu0 0
  %4289 = vmatpush1.bf16.msra.mxu0 0
  %4290 = vmatprep.subr.bf16.mxu0 0
  %4291 = vmatpush1.bf16.msra.mxu0 0
  %4292 = vmatprep.subr.bf16.mxu0 0
  %4293 = vmatpush1.bf16.msra.mxu0 0
  %4294 = vmatprep.subr.bf16.mxu0 0
  %4295 = vmatpush1.bf16.msra.mxu0 0
  %4296 = vmatprep.mubr.bf16.mxu0 0
  %4297 = vmatmul.mubr.bf16.gmra.mrb[0].mxu0 %v3740
  %v4298 = vpop.f32.mrb[0].mxu0
  %v4299 = vadd.f32 %v4202, %v4298
  %v4300 = vpop.f32.mrb[0].mxu0
  %v4301 = vpop.f32.mrb[0].mxu0
  %v4302 = vadd.f32 %v4205, %v4301
  %v4303 = vpop.f32.mrb[0].mxu0
  %4304 = vmatprep.mubr.bf16.mxu0 0
  %4305 = vmatmul.mubr.bf16.gmra.mrb[0].mxu0 %v3749
  %v4306 = vpop.f32.mrb[0].mxu0
  %v4307 = vadd.f32 %v4210, %v4306
  %v4308 = vpop.f32.mrb[0].mxu0
  %v4309 = vpop.f32.mrb[0].mxu0
  %v4310 = vadd.f32 %v4213, %v4309
  %v4311 = vpop.f32.mrb[0].mxu0
  %4312 = vmatprep.mubr.bf16.mxu0 0
  %4313 = vmatmul.mubr.bf16.gmra.mrb[0].mxu0 %v3758
  %v4314 = vpop.f32.mrb[0].mxu0
  %v4315 = vadd.f32 %v4218, %v4314
  %v4316 = vpop.f32.mrb[0].mxu0
  %v4317 = vpop.f32.mrb[0].mxu0
  %v4318 = vadd.f32 %v4221, %v4317
  %v4319 = vpop.f32.mrb[0].mxu0
  %4320 = vmatprep.mubr.bf16.mxu0 0
  %4321 = vmatmul.mubr.bf16.gmra.mrb[0].mxu0 %v3767
  %v4322 = vpop.f32.mrb[0].mxu0
  %v4323 = vadd.f32 %v4226, %v4322
  %v4324 = vpop.f32.mrb[0].mxu0
  %v4325 = vpop.f32.mrb[0].mxu0
  %v4326 = vadd.f32 %v4229, %v4325
  %v4327 = vpop.f32.mrb[0].mxu0
  %4328 = vmatprep.mubr.bf16.mxu0 0
  %4329 = vmatmul.mubr.bf16.gmra.mrb[0].mxu0 %v3776
  %v4330 = vpop.f32.mrb[0].mxu0
  %v4331 = vadd.f32 %v4234, %v4330
  %v4332 = vpop.f32.mrb[0].mxu0
  %v4333 = vpop.f32.mrb[0].mxu0
  %v4334 = vadd.f32 %v4237, %v4333
  %v4335 = vpop.f32.mrb[0].mxu0
  %4336 = vmatprep.mubr.bf16.mxu0 0
  %4337 = vmatmul.mubr.bf16.gmra.mrb[0].mxu0 %v3785
  %v4338 = vpop.f32.mrb[0].mxu0
  %v4339 = vadd.f32 %v4242, %v4338
  %v4340 = vpop.f32.mrb[0].mxu0
  %v4341 = vpop.f32.mrb[0].mxu0
  %v4342 = vadd.f32 %v4245, %v4341
  %v4343 = vpop.f32.mrb[0].mxu0
  %4344 = vmatprep.mubr.bf16.mxu0 0
  %4345 = vmatmul.mubr.bf16.gmra.mrb[0].mxu0 %v3794
  %v4346 = vpop.f32.mrb[0].mxu0
  %v4347 = vadd.f32 %v4250, %v4346
  %v4348 = vpop.f32.mrb[0].mxu0
  %v4349 = vpop.f32.mrb[0].mxu0
  %v4350 = vadd.f32 %v4253, %v4349
  %v4351 = vpop.f32.mrb[0].mxu0
  %4352 = vmatprep.mubr.bf16.mxu0 0
  %4353 = vmatmul.mubr.bf16.gmra.mrb[0].mxu0 %v3803
  %v4354 = vpop.f32.mrb[0].mxu0
  %v4355 = vadd.f32 %v4258, %v4354
  %v4356 = vpop.f32.mrb[0].mxu0
  %v4357 = vpop.f32.mrb[0].mxu0
  %v4358 = vadd.f32 %v4261, %v4357
  %v4359 = vpop.f32.mrb[0].mxu0
  %4360 = vdwg.mxu0
  %v4361 = vmax.f32 %v3411, %v4299
  %v4362 = vmax.f32 %v3412, %v4302
  %v4363 = vmax.f32 %v3413, %v4307
  %v4364 = vmax.f32 %v3414, %v4310
  %v4365 = vmax.f32 %v3415, %v4315
  %v4366 = vmax.f32 %v3416, %v4318
  %v4367 = vmax.f32 %v3417, %v4323
  %v4368 = vmax.f32 %v3418, %v4326
  %v4369 = vmax.f32 %v3419, %v4331
  %v4370 = vmax.f32 %v3420, %v4334
  %v4371 = vmax.f32 %v3421, %v4339
  %v4372 = vmax.f32 %v3422, %v4342
  %v4373 = vmax.f32 %v3423, %v4347
  %v4374 = vmax.f32 %v3424, %v4350
  %v4375 = vmax.f32 %v3425, %v4355
  %v4376 = vmax.f32 %v3426, %v4358
  %v4377 = vld [vmem:[%s2] sm:$0x1]
  %v4379 = vlaneseq
  %v4380 = vshrl.u32 %v4379, 7
  %v4381 = vsub.s32 0, %v4380
  %v4382 = vrot.slane %v4377, %v4381
  %v4384 = vmul.f32 %v4361, %v4382
  %v4385 = vmul.f32 %v4362, %v4382
  %v4386 = vmul.f32 %v4363, %v4382
  %v4387 = vmul.f32 %v4364, %v4382
  %v4388 = vmul.f32 %v4365, %v4382
  %v4389 = vmul.f32 %v4366, %v4382
  %v4390 = vmul.f32 %v4367, %v4382
  %v4391 = vmul.f32 %v4368, %v4382
  %v4392 = vmul.f32 %v4369, %v4382
  %v4393 = vmul.f32 %v4370, %v4382
  %v4394 = vmul.f32 %v4371, %v4382
  %v4395 = vmul.f32 %v4372, %v4382
  %v4396 = vmul.f32 %v4373, %v4382
  %v4397 = vmul.f32 %v4374, %v4382
  %v4398 = vmul.f32 %v4375, %v4382
  %v4399 = vmul.f32 %v4376, %v4382
  %v4400 = vld [vmem:[%s3] sm:$0x1]
  %v4402 = vlaneseq
  %v4403 = vshrl.u32 %v4402, 7
  %v4404 = vsub.s32 0, %v4403
  %v4405 = vrot.slane %v4400, %v4404
  %v4407 = vadd.f32 %v4384, %v4405
  %v4408 = vadd.f32 %v4385, %v4405
  %v4409 = vadd.f32 %v4386, %v4405
  %v4410 = vadd.f32 %v4387, %v4405
  %v4411 = vadd.f32 %v4388, %v4405
  %v4412 = vadd.f32 %v4389, %v4405
  %v4413 = vadd.f32 %v4390, %v4405
  %v4414 = vadd.f32 %v4391, %v4405
  %v4415 = vadd.f32 %v4392, %v4405
  %v4416 = vadd.f32 %v4393, %v4405
  %v4417 = vadd.f32 %v4394, %v4405
  %v4418 = vadd.f32 %v4395, %v4405
  %v4419 = vadd.f32 %v4396, %v4405
  %v4420 = vadd.f32 %v4397, %v4405
  %v4421 = vadd.f32 %v4398, %v4405
  %v4422 = vadd.f32 %v4399, %v4405
  %v4423 = vmax.f32 %v4407, 0.0
  %v4424 = vmax.f32 %v4408, 0.0
  %v4425 = vmax.f32 %v4409, 0.0
  %v4426 = vmax.f32 %v4410, 0.0
  %v4427 = vmax.f32 %v4411, 0.0
  %v4428 = vmax.f32 %v4412, 0.0
  %v4429 = vmax.f32 %v4413, 0.0
  %v4430 = vmax.f32 %v4414, 0.0
  %v4431 = vmax.f32 %v4415, 0.0
  %v4432 = vmax.f32 %v4416, 0.0
  %v4433 = vmax.f32 %v4417, 0.0
  %v4434 = vmax.f32 %v4418, 0.0
  %v4435 = vmax.f32 %v4419, 0.0
  %v4436 = vmax.f32 %v4420, 0.0
  %v4437 = vmax.f32 %v4421, 0.0
  %v4438 = vmax.f32 %v4422, 0.0
  %v4439 = vpack.c.bf16 %v4424, %v4423
  %v4440 = vpack.c.bf16 %v4426, %v4425
  %v4441 = vpack.c.bf16 %v4428, %v4427
  %v4442 = vpack.c.bf16 %v4430, %v4429
  %v4443 = vpack.c.bf16 %v4432, %v4431
  %v4444 = vpack.c.bf16 %v4434, %v4433
  %v4445 = vpack.c.bf16 %v4436, %v4435
  %v4446 = vpack.c.bf16 %v4438, %v4437
  %v4455 = vunpack.c.l.b16 %v4439
  %v4456 = vunpack.c.h.b16 %v4439
  %v4457 = vunpack.c.l.b16 %v4440
  %v4458 = vunpack.c.h.b16 %v4440
  %v4459 = vunpack.c.l.b16 %v4441
  %v4460 = vunpack.c.h.b16 %v4441
  %v4461 = vunpack.c.l.b16 %v4442
  %v4462 = vunpack.c.h.b16 %v4442
  %v4463 = vunpack.c.l.b16 %v4443
  %v4464 = vunpack.c.h.b16 %v4443
  %v4465 = vunpack.c.l.b16 %v4444
  %v4466 = vunpack.c.h.b16 %v4444
  %v4467 = vunpack.c.l.b16 %v4445
  %v4468 = vunpack.c.h.b16 %v4445
  %v4469 = vunpack.c.l.b16 %v4446
  %v4470 = vunpack.c.h.b16 %v4446
  %v4471 = vpack.c.b16 %v4455, %v4455
  %v4472 = vpack.c.b16 %v4456, %v4456
  %v4473 = vpack.c.b16 %v4457, %v4457
  %v4474 = vpack.c.b16 %v4458, %v4458
  %v4475 = vpack.c.b16 %v4459, %v4459
  %v4476 = vpack.c.b16 %v4460, %v4460
  %v4477 = vpack.c.b16 %v4461, %v4461
  %v4478 = vpack.c.b16 %v4462, %v4462
  %v4479 = vpack.c.b16 %v4463, %v4463
  %v4480 = vpack.c.b16 %v4464, %v4464
  %v4481 = vpack.c.b16 %v4465, %v4465
  %v4482 = vpack.c.b16 %v4466, %v4466
  %v4483 = vpack.c.b16 %v4467, %v4467
  %v4484 = vpack.c.b16 %v4468, %v4468
  %v4485 = vpack.c.b16 %v4469, %v4469
  %v4486 = vpack.c.b16 %v4470, %v4470
  %4503 = vst [vmem:[%s4] sm:$0xf] %v4471
  %4504 = vst [vmem:[%s4 + $0x4] sm:$0xf] %v4472
  %4505 = vst [vmem:[%s4 + $0x8] sm:$0xf] %v4473
  %4506 = vst [vmem:[%s4 + $0xc] sm:$0xf] %v4474
  %4507 = vst [vmem:[%s4 + $0x10] sm:$0xf] %v4475
  %4508 = vst [vmem:[%s4 + $0x14] sm:$0xf] %v4476
  %4509 = vst [vmem:[%s4 + $0x18] sm:$0xf] %v4477
  %4510 = vst [vmem:[%s4 + $0x1c] sm:$0xf] %v4478
  %4511 = vst [vmem:[%s4 + $0x20] sm:$0xf] %v4479
  %4512 = vst [vmem:[%s4 + $0x24] sm:$0xf] %v4480
  %4513 = vst [vmem:[%s4 + $0x28] sm:$0xf] %v4481
  %4514 = vst [vmem:[%s4 + $0x2c] sm:$0xf] %v4482
  %4515 = vst [vmem:[%s4 + $0x30] sm:$0xf] %v4483
  %4516 = vst [vmem:[%s4 + $0x34] sm:$0xf] %v4484
  %4517 = vst [vmem:[%s4 + $0x38] sm:$0xf] %v4485
  %4518 = vst [vmem:[%s4 + $0x3c] sm:$0xf] %v4486
  // Predicated region
  $region18: #{cnn_forward.5} parent=0 // pred_check
    _
  $region19: #{cnn_forward.5} parent=0 // pred_check_branch
    %4520 = sbr.rel (0) target = $region21
  $region20: #{cnn_forward.5} parent=0 // pred_region
    _
  $region21: #{cnn_forward.5} parent=0 // pred_fallthru
    _
  // Predicated region
  $region22: #{cnn_forward.5} parent=0 // pred_check
    _
  $region23: #{cnn_forward.5} parent=0 // pred_check_branch
    %4522 = sbr.rel (0) target = $region25
  $region24: #{cnn_forward.5} parent=0 // pred_region
    _
  $region25: #{cnn_forward.5} parent=0 // pred_fallthru
    _

// kernel: cnn_forward.7
$region0: #{cnn_forward.7}
  #allocation0 [shape = 'u32[]', space=smem, size = 0x4, offset = 0x4, fixed_abs, tag = 'smem constant byte address 0x4 - core index']
  #allocation1 [shape = 'u32[144,128]{1,0:T(1,128)}', space=vmem, size = 0x12000, scoped, tag = 'internal scratch']
  %s0 = inlined_call_operand.vmem [shape: bf16[4,8,1152], index: 0, kind: input, shape index: {}]
  %s1 = inlined_call_operand.vmem [shape: bf16[1152,128], index: 1, kind: input, shape index: {}]
  %s2 = inlined_call_operand.vmem [shape: f32[1,128], index: 2, kind: input, shape index: {}]
  %s3 = inlined_call_operand.vmem [shape: f32[1,128], index: 3, kind: input, shape index: {}]
  %s4 = inlined_call_operand.vmem [shape: bf16[128,128], index: 4, kind: input, shape index: {}]
  %s5 = inlined_call_operand.vmem [shape: f32[1,128], index: 5, kind: input, shape index: {}]
  %s6 = inlined_call_operand.hbm [shape: f32[2,128], index: 6, kind: output, shape index: {}]
  %s7 = sld [smem:[#allocation0]]
  $region34: #{cnn_forward.7} parent=0
    _
  %s9 = ssub.s32 1, %s7
  %s10 = scalar_select 0, %s9, %s7
  $region1: #{cnn_forward.7} parent=0
    #allocation2 [shape = 'u8[1024]{0}', space=vmem, size = 0x400, scoped, tag = 'output window, operand 0, single buffered']
    #allocation3 [shape = 's32[1]{0}', space=sflag, size = 0x4, scoped, tag = 'scoped memory for cnn_forward.7']
    %11 = vsyncpa [#allocation3], 0
    // Predicated region
    $region2: #{cnn_forward.7} parent=1 // pred_check
      _
    $region3: #{cnn_forward.7} parent=1 // pred_check_branch
      %13 = sbr.rel (0) target = $region5
    $region4: #{cnn_forward.7} parent=1 // pred_region
      _
    $region5: #{cnn_forward.7} parent=1 // pred_fallthru
      _
    // Predicated region
    $region6: #{cnn_forward.7} parent=1 // pred_check
      _
    $region7: #{cnn_forward.7} parent=1 // pred_check_branch
      %15 = sbr.rel (0) target = $region9
    $region8: #{cnn_forward.7} parent=1 // pred_region
      _
    $region9: #{cnn_forward.7} parent=1 // pred_fallthru
      _
    // Predicated region
    $region10: #{cnn_forward.7} parent=1 // pred_check
      _
    $region11: #{cnn_forward.7} parent=1 // pred_check_branch
      %17 = sbr.rel (0) target = $region13
    $region12: #{cnn_forward.7} parent=1 // pred_region
      _
    $region13: #{cnn_forward.7} parent=1 // pred_fallthru
      _
    // Predicated region
    $region14: #{cnn_forward.7} parent=1 // pred_check
      _
    $region15: #{cnn_forward.7} parent=1 // pred_check_branch
      %19 = sbr.rel (0) target = $region17
    $region16: #{cnn_forward.7} parent=1 // pred_region
      _
    $region17: #{cnn_forward.7} parent=1 // pred_fallthru
      _
    // Predicated region
    $region18: #{cnn_forward.7} parent=1 // pred_check
      _
    $region19: #{cnn_forward.7} parent=1 // pred_check_branch
      %21 = sbr.rel (0) target = $region21
    $region20: #{cnn_forward.7} parent=1 // pred_region
      _
    $region21: #{cnn_forward.7} parent=1 // pred_fallthru
      _
    // Predicated region
    $region22: #{cnn_forward.7} parent=1 // pred_check
      _
    $region23: #{cnn_forward.7} parent=1 // pred_check_branch
      %23 = sbr.rel (0) target = $region25
    $region24: #{cnn_forward.7} parent=1 // pred_region
      _
    $region25: #{cnn_forward.7} parent=1 // pred_fallthru
      _
    %v25 = vld [vmem:[%s1] sm:$0xf]
    %v26 = vld [vmem:[%s1 + $0x4] sm:$0xf]
    %v27 = vld [vmem:[%s1 + $0x8] sm:$0xf]
    %v28 = vld [vmem:[%s1 + $0xc] sm:$0xf]
    %v29 = vld [vmem:[%s1 + $0x10] sm:$0xf]
    %v30 = vld [vmem:[%s1 + $0x14] sm:$0xf]
    %v31 = vld [vmem:[%s1 + $0x18] sm:$0xf]
    %v32 = vld [vmem:[%s1 + $0x1c] sm:$0xf]
    %v33 = vld [vmem:[%s1 + $0x20] sm:$0xf]
    %v34 = vld [vmem:[%s1 + $0x24] sm:$0xf]
    %v35 = vld [vmem:[%s1 + $0x28] sm:$0xf]
    %v36 = vld [vmem:[%s1 + $0x2c] sm:$0xf]
    %v37 = vld [vmem:[%s1 + $0x30] sm:$0xf]
    %v38 = vld [vmem:[%s1 + $0x34] sm:$0xf]
    %v39 = vld [vmem:[%s1 + $0x38] sm:$0xf]
    %v40 = vld [vmem:[%s1 + $0x3c] sm:$0xf]
    %v41 = vld [vmem:[%s1 + $0x40] sm:$0xf]
    %v42 = vld [vmem:[%s1 + $0x44] sm:$0xf]
    %v43 = vld [vmem:[%s1 + $0x48] sm:$0xf]
    %v44 = vld [vmem:[%s1 + $0x4c] sm:$0xf]
    %v45 = vld [vmem:[%s1 + $0x50] sm:$0xf]
    %v46 = vld [vmem:[%s1 + $0x54] sm:$0xf]
    %v47 = vld [vmem:[%s1 + $0x58] sm:$0xf]
    %v48 = vld [vmem:[%s1 + $0x5c] sm:$0xf]
    %v49 = vld [vmem:[%s1 + $0x60] sm:$0xf]
    %v50 = vld [vmem:[%s1 + $0x64] sm:$0xf]
    %v51 = vld [vmem:[%s1 + $0x68] sm:$0xf]
    %v52 = vld [vmem:[%s1 + $0x6c] sm:$0xf]
    %v53 = vld [vmem:[%s1 + $0x70] sm:$0xf]
    %v54 = vld [vmem:[%s1 + $0x74] sm:$0xf]
    %v55 = vld [vmem:[%s1 + $0x78] sm:$0xf]
    %v56 = vld [vmem:[%s1 + $0x7c] sm:$0xf]
    %v57 = vld [vmem:[%s1 + $0x80] sm:$0xf]
    %v58 = vld [vmem:[%s1 + $0x84] sm:$0xf]
    %v59 = vld [vmem:[%s1 + $0x88] sm:$0xf]
    %v60 = vld [vmem:[%s1 + $0x8c] sm:$0xf]
    %v61 = vld [vmem:[%s1 + $0x90] sm:$0xf]
    %v62 = vld [vmem:[%s1 + $0x94] sm:$0xf]
    %v63 = vld [vmem:[%s1 + $0x98] sm:$0xf]
    %v64 = vld [vmem:[%s1 + $0x9c] sm:$0xf]
    %v65 = vld [vmem:[%s1 + $0xa0] sm:$0xf]
    %v66 = vld [vmem:[%s1 + $0xa4] sm:$0xf]
    %v67 = vld [vmem:[%s1 + $0xa8] sm:$0xf]
    %v68 = vld [vmem:[%s1 + $0xac] sm:$0xf]
    %v69 = vld [vmem:[%s1 + $0xb0] sm:$0xf]
    %v70 = vld [vmem:[%s1 + $0xb4] sm:$0xf]
    %v71 = vld [vmem:[%s1 + $0xb8] sm:$0xf]
    %v72 = vld [vmem:[%s1 + $0xbc] sm:$0xf]
    %v73 = vld [vmem:[%s1 + $0xc0] sm:$0xf]
    %v74 = vld [vmem:[%s1 + $0xc4] sm:$0xf]
    %v75 = vld [vmem:[%s1 + $0xc8] sm:$0xf]
    %v76 = vld [vmem:[%s1 + $0xcc] sm:$0xf]
    %v77 = vld [vmem:[%s1 + $0xd0] sm:$0xf]
    %v78 = vld [vmem:[%s1 + $0xd4] sm:$0xf]
    %v79 = vld [vmem:[%s1 + $0xd8] sm:$0xf]
    %v80 = vld [vmem:[%s1 + $0xdc] sm:$0xf]
    %v81 = vld [vmem:[%s1 + $0xe0] sm:$0xf]
    %v82 = vld [vmem:[%s1 + $0xe4] sm:$0xf]
    %v83 = vld [vmem:[%s1 + $0xe8] sm:$0xf]
    %v84 = vld [vmem:[%s1 + $0xec] sm:$0xf]
    %v85 = vld [vmem:[%s1 + $0xf0] sm:$0xf]
    %v86 = vld [vmem:[%s1 + $0xf4] sm:$0xf]
    %v87 = vld [vmem:[%s1 + $0xf8] sm:$0xf]
    %v88 = vld [vmem:[%s1 + $0xfc] sm:$0xf]
    %v89 = vld [vmem:[%s1 + $0x100] sm:$0xf]
    %v90 = vld [vmem:[%s1 + $0x104] sm:$0xf]
    %v91 = vld [vmem:[%s1 + $0x108] sm:$0xf]
    %v92 = vld [vmem:[%s1 + $0x10c] sm:$0xf]
    %v93 = vld [vmem:[%s1 + $0x110] sm:$0xf]
    %v94 = vld [vmem:[%s1 + $0x114] sm:$0xf]
    %v95 = vld [vmem:[%s1 + $0x118] sm:$0xf]
    %v96 = vld [vmem:[%s1 + $0x11c] sm:$0xf]
    %v97 = vld [vmem:[%s1 + $0x120] sm:$0xf]
    %v98 = vld [vmem:[%s1 + $0x124] sm:$0xf]
    %v99 = vld [vmem:[%s1 + $0x128] sm:$0xf]
    %v100 = vld [vmem:[%s1 + $0x12c] sm:$0xf]
    %v101 = vld [vmem:[%s1 + $0x130] sm:$0xf]
    %v102 = vld [vmem:[%s1 + $0x134] sm:$0xf]
    %v103 = vld [vmem:[%s1 + $0x138] sm:$0xf]
    %v104 = vld [vmem:[%s1 + $0x13c] sm:$0xf]
    %v105 = vld [vmem:[%s1 + $0x140] sm:$0xf]
    %v106 = vld [vmem:[%s1 + $0x144] sm:$0xf]
    %v107 = vld [vmem:[%s1 + $0x148] sm:$0xf]
    %v108 = vld [vmem:[%s1 + $0x14c] sm:$0xf]
    %v109 = vld [vmem:[%s1 + $0x150] sm:$0xf]
    %v110 = vld [vmem:[%s1 + $0x154] sm:$0xf]
    %v111 = vld [vmem:[%s1 + $0x158] sm:$0xf]
    %v112 = vld [vmem:[%s1 + $0x15c] sm:$0xf]
    %v113 = vld [vmem:[%s1 + $0x160] sm:$0xf]
    %v114 = vld [vmem:[%s1 + $0x164] sm:$0xf]
    %v115 = vld [vmem:[%s1 + $0x168] sm:$0xf]
    %v116 = vld [vmem:[%s1 + $0x16c] sm:$0xf]
    %v117 = vld [vmem:[%s1 + $0x170] sm:$0xf]
    %v118 = vld [vmem:[%s1 + $0x174] sm:$0xf]
    %v119 = vld [vmem:[%s1 + $0x178] sm:$0xf]
    %v120 = vld [vmem:[%s1 + $0x17c] sm:$0xf]
    %v121 = vld [vmem:[%s1 + $0x180] sm:$0xf]
    %v122 = vld [vmem:[%s1 + $0x184] sm:$0xf]
    %v123 = vld [vmem:[%s1 + $0x188] sm:$0xf]
    %v124 = vld [vmem:[%s1 + $0x18c] sm:$0xf]
    %v125 = vld [vmem:[%s1 + $0x190] sm:$0xf]
    %v126 = vld [vmem:[%s1 + $0x194] sm:$0xf]
    %v127 = vld [vmem:[%s1 + $0x198] sm:$0xf]
    %v128 = vld [vmem:[%s1 + $0x19c] sm:$0xf]
    %v129 = vld [vmem:[%s1 + $0x1a0] sm:$0xf]
    %v130 = vld [vmem:[%s1 + $0x1a4] sm:$0xf]
    %v131 = vld [vmem:[%s1 + $0x1a8] sm:$0xf]
    %v132 = vld [vmem:[%s1 + $0x1ac] sm:$0xf]
    %v133 = vld [vmem:[%s1 + $0x1b0] sm:$0xf]
    %v134 = vld [vmem:[%s1 + $0x1b4] sm:$0xf]
    %v135 = vld [vmem:[%s1 + $0x1b8] sm:$0xf]
    %v136 = vld [vmem:[%s1 + $0x1bc] sm:$0xf]
    %v137 = vld [vmem:[%s1 + $0x1c0] sm:$0xf]
    %v138 = vld [vmem:[%s1 + $0x1c4] sm:$0xf]
    %v139 = vld [vmem:[%s1 + $0x1c8] sm:$0xf]
    %v140 = vld [vmem:[%s1 + $0x1cc] sm:$0xf]
    %v141 = vld [vmem:[%s1 + $0x1d0] sm:$0xf]
    %v142 = vld [vmem:[%s1 + $0x1d4] sm:$0xf]
    %v143 = vld [vmem:[%s1 + $0x1d8] sm:$0xf]
    %v144 = vld [vmem:[%s1 + $0x1dc] sm:$0xf]
    %v145 = vld [vmem:[%s1 + $0x1e0] sm:$0xf]
    %v146 = vld [vmem:[%s1 + $0x1e4] sm:$0xf]
    %v147 = vld [vmem:[%s1 + $0x1e8] sm:$0xf]
    %v148 = vld [vmem:[%s1 + $0x1ec] sm:$0xf]
    %v149 = vld [vmem:[%s1 + $0x1f0] sm:$0xf]
    %v150 = vld [vmem:[%s1 + $0x1f4] sm:$0xf]
    %v151 = vld [vmem:[%s1 + $0x1f8] sm:$0xf]
    %v152 = vld [vmem:[%s1 + $0x1fc] sm:$0xf]
    %v153 = vld [vmem:[%s1 + $0x200] sm:$0xf]
    %v154 = vld [vmem:[%s1 + $0x204] sm:$0xf]
    %v155 = vld [vmem:[%s1 + $0x208] sm:$0xf]
    %v156 = vld [vmem:[%s1 + $0x20c] sm:$0xf]
    %v157 = vld [vmem:[%s1 + $0x210] sm:$0xf]
    %v158 = vld [vmem:[%s1 + $0x214] sm:$0xf]
    %v159 = vld [vmem:[%s1 + $0x218] sm:$0xf]
    %v160 = vld [vmem:[%s1 + $0x21c] sm:$0xf]
    %v161 = vld [vmem:[%s1 + $0x220] sm:$0xf]
    %v162 = vld [vmem:[%s1 + $0x224] sm:$0xf]
    %v163 = vld [vmem:[%s1 + $0x228] sm:$0xf]
    %v164 = vld [vmem:[%s1 + $0x22c] sm:$0xf]
    %v165 = vld [vmem:[%s1 + $0x230] sm:$0xf]
    %v166 = vld [vmem:[%s1 + $0x234] sm:$0xf]
    %v167 = vld [vmem:[%s1 + $0x238] sm:$0xf]
    %v168 = vld [vmem:[%s1 + $0x23c] sm:$0xf]
    %v169 = vld [vmem:[%s0] sm:$0xff]
    %v170 = vld [vmem:[%s0 + $0x8] sm:$0xff]
    %v171 = vld [vmem:[%s0 + $0x10] sm:$0xff]
    %v172 = vld [vmem:[%s0 + $0x18] sm:$0xff]
    %v173 = vld [vmem:[%s0 + $0x20] sm:$0xf]
    %v179 = vunpack.c.l.b16 %v169
    %v180 = vunpack.c.h.b16 %v169
    %v181 = vunpack.c.l.b16 %v170
    %v182 = vunpack.c.h.b16 %v170
    %v183 = vunpack.c.l.b16 %v171
    %v184 = vunpack.c.h.b16 %v171
    %v185 = vunpack.c.l.b16 %v172
    %v186 = vunpack.c.h.b16 %v172
    %v187 = vunpack.c.l.b16 %v173
    %v188 = vpack.c.b16 %v179, %v179
    %v189 = vpack.c.b16 %v180, %v180
    %v190 = vpack.c.b16 %v181, %v181
    %v191 = vpack.c.b16 %v182, %v182
    %v192 = vpack.c.b16 %v183, %v183
    %v193 = vpack.c.b16 %v184, %v184
    %v194 = vpack.c.b16 %v185, %v185
    %v195 = vpack.c.b16 %v186, %v186
    %v196 = vpack.c.b16 %v187, %v187
    %v350 = vunpack.c.l.b16 %v25
    %v351 = vunpack.c.l.b16 %v26
    %v352 = vunpack.c.l.b16 %v27
    %v353 = vunpack.c.l.b16 %v28
    %v354 = vunpack.c.l.b16 %v29
    %v355 = vunpack.c.l.b16 %v30
    %v356 = vunpack.c.l.b16 %v31
    %v357 = vunpack.c.l.b16 %v32
    %v358 = vunpack.c.l.b16 %v33
    %v359 = vunpack.c.l.b16 %v34
    %v360 = vunpack.c.l.b16 %v35
    %v361 = vunpack.c.l.b16 %v36
    %v362 = vunpack.c.l.b16 %v37
    %v363 = vunpack.c.l.b16 %v38
    %v364 = vunpack.c.l.b16 %v39
    %v365 = vunpack.c.l.b16 %v40
    %v366 = vunpack.c.l.b16 %v41
    %v367 = vunpack.c.l.b16 %v42
    %v368 = vunpack.c.l.b16 %v43
    %v369 = vunpack.c.l.b16 %v44
    %v370 = vunpack.c.l.b16 %v45
    %v371 = vunpack.c.l.b16 %v46
    %v372 = vunpack.c.l.b16 %v47
    %v373 = vunpack.c.l.b16 %v48
    %v374 = vunpack.c.l.b16 %v49
    %v375 = vunpack.c.l.b16 %v50
    %v376 = vunpack.c.l.b16 %v51
    %v377 = vunpack.c.l.b16 %v52
    %v378 = vunpack.c.l.b16 %v53
    %v379 = vunpack.c.l.b16 %v54
    %v380 = vunpack.c.l.b16 %v55
    %v381 = vunpack.c.l.b16 %v56
    %v382 = vunpack.c.l.b16 %v57
    %v383 = vunpack.c.l.b16 %v58
    %v384 = vunpack.c.l.b16 %v59
    %v385 = vunpack.c.l.b16 %v60
    %v386 = vunpack.c.l.b16 %v61
    %v387 = vunpack.c.l.b16 %v62
    %v388 = vunpack.c.l.b16 %v63
    %v389 = vunpack.c.l.b16 %v64
    %v390 = vunpack.c.l.b16 %v65
    %v391 = vunpack.c.l.b16 %v66
    %v392 = vunpack.c.l.b16 %v67
    %v393 = vunpack.c.l.b16 %v68
    %v394 = vunpack.c.l.b16 %v69
    %v395 = vunpack.c.l.b16 %v70
    %v396 = vunpack.c.l.b16 %v71
    %v397 = vunpack.c.l.b16 %v72
    %v398 = vunpack.c.l.b16 %v73
    %v399 = vunpack.c.l.b16 %v74
    %v400 = vunpack.c.l.b16 %v75
    %v401 = vunpack.c.l.b16 %v76
    %v402 = vunpack.c.l.b16 %v77
    %v403 = vunpack.c.l.b16 %v78
    %v404 = vunpack.c.l.b16 %v79
    %v405 = vunpack.c.l.b16 %v80
    %v406 = vunpack.c.l.b16 %v81
    %v407 = vunpack.c.l.b16 %v82
    %v408 = vunpack.c.l.b16 %v83
    %v409 = vunpack.c.l.b16 %v84
    %v410 = vunpack.c.l.b16 %v85
    %v411 = vunpack.c.l.b16 %v86
    %v412 = vunpack.c.l.b16 %v87
    %v413 = vunpack.c.l.b16 %v88
    %v414 = vunpack.c.l.b16 %v89
    %v415 = vunpack.c.l.b16 %v90
    %v416 = vunpack.c.l.b16 %v91
    %v417 = vunpack.c.l.b16 %v92
    %v418 = vunpack.c.l.b16 %v93
    %v419 = vunpack.c.l.b16 %v94
    %v420 = vunpack.c.l.b16 %v95
    %v421 = vunpack.c.l.b16 %v96
    %v422 = vunpack.c.l.b16 %v97
    %v423 = vunpack.c.l.b16 %v98
    %v424 = vunpack.c.l.b16 %v99
    %v425 = vunpack.c.l.b16 %v100
    %v426 = vunpack.c.l.b16 %v101
    %v427 = vunpack.c.l.b16 %v102
    %v428 = vunpack.c.l.b16 %v103
    %v429 = vunpack.c.l.b16 %v104
    %v430 = vunpack.c.l.b16 %v105
    %v431 = vunpack.c.l.b16 %v106
    %v432 = vunpack.c.l.b16 %v107
    %v433 = vunpack.c.l.b16 %v108
    %v434 = vunpack.c.l.b16 %v109
    %v435 = vunpack.c.l.b16 %v110
    %v436 = vunpack.c.l.b16 %v111
    %v437 = vunpack.c.l.b16 %v112
    %v438 = vunpack.c.l.b16 %v113
    %v439 = vunpack.c.l.b16 %v114
    %v440 = vunpack.c.l.b16 %v115
    %v441 = vunpack.c.l.b16 %v116
    %v442 = vunpack.c.l.b16 %v117
    %v443 = vunpack.c.l.b16 %v118
    %v444 = vunpack.c.l.b16 %v119
    %v445 = vunpack.c.l.b16 %v120
    %v446 = vunpack.c.l.b16 %v121
    %v447 = vunpack.c.l.b16 %v122
    %v448 = vunpack.c.l.b16 %v123
    %v449 = vunpack.c.l.b16 %v124
    %v450 = vunpack.c.l.b16 %v125
    %v451 = vunpack.c.l.b16 %v126
    %v452 = vunpack.c.l.b16 %v127
    %v453 = vunpack.c.l.b16 %v128
    %v454 = vunpack.c.l.b16 %v129
    %v455 = vunpack.c.l.b16 %v130
    %v456 = vunpack.c.l.b16 %v131
    %v457 = vunpack.c.l.b16 %v132
    %v458 = vunpack.c.l.b16 %v133
    %v459 = vunpack.c.l.b16 %v134
    %v460 = vunpack.c.l.b16 %v135
    %v461 = vunpack.c.l.b16 %v136
    %v462 = vunpack.c.l.b16 %v137
    %v463 = vunpack.c.l.b16 %v138
    %v464 = vunpack.c.l.b16 %v139
    %v465 = vunpack.c.l.b16 %v140
    %v466 = vunpack.c.l.b16 %v141
    %v467 = vunpack.c.l.b16 %v142
    %v468 = vunpack.c.l.b16 %v143
    %v469 = vunpack.c.l.b16 %v144
    %v470 = vunpack.c.l.b16 %v145
    %v471 = vunpack.c.l.b16 %v146
    %v472 = vunpack.c.l.b16 %v147
    %v473 = vunpack.c.l.b16 %v148
    %v474 = vunpack.c.l.b16 %v149
    %v475 = vunpack.c.l.b16 %v150
    %v476 = vunpack.c.l.b16 %v151
    %v477 = vunpack.c.l.b16 %v152
    %v478 = vunpack.c.l.b16 %v153
    %v479 = vunpack.c.l.b16 %v154
    %v480 = vunpack.c.l.b16 %v155
    %v481 = vunpack.c.l.b16 %v156
    %v482 = vunpack.c.l.b16 %v157
    %v483 = vunpack.c.l.b16 %v158
    %v484 = vunpack.c.l.b16 %v159
    %v485 = vunpack.c.l.b16 %v160
    %v486 = vunpack.c.l.b16 %v161
    %v487 = vunpack.c.l.b16 %v162
    %v488 = vunpack.c.l.b16 %v163
    %v489 = vunpack.c.l.b16 %v164
    %v490 = vunpack.c.l.b16 %v165
    %v491 = vunpack.c.l.b16 %v166
    %v492 = vunpack.c.l.b16 %v167
    %v493 = vunpack.c.l.b16 %v168
    %v494 = vpack.c.b16 %v351, %v350
    %v495 = vpack.c.b16 %v353, %v352
    %v496 = vpack.c.b16 %v355, %v354
    %v497 = vpack.c.b16 %v357, %v356
    %v498 = vpack.c.b16 %v359, %v358
    %v499 = vpack.c.b16 %v361, %v360
    %v500 = vpack.c.b16 %v363, %v362
    %v501 = vpack.c.b16 %v365, %v364
    %v502 = vpack.c.b16 %v367, %v366
    %v503 = vpack.c.b16 %v369, %v368
    %v504 = vpack.c.b16 %v371, %v370
    %v505 = vpack.c.b16 %v373, %v372
    %v506 = vpack.c.b16 %v375, %v374
    %v507 = vpack.c.b16 %v377, %v376
    %v508 = vpack.c.b16 %v379, %v378
    %v509 = vpack.c.b16 %v381, %v380
    %v510 = vpack.c.b16 %v383, %v382
    %v511 = vpack.c.b16 %v385, %v384
    %v512 = vpack.c.b16 %v387, %v386
    %v513 = vpack.c.b16 %v389, %v388
    %v514 = vpack.c.b16 %v391, %v390
    %v515 = vpack.c.b16 %v393, %v392
    %v516 = vpack.c.b16 %v395, %v394
    %v517 = vpack.c.b16 %v397, %v396
    %v518 = vpack.c.b16 %v399, %v398
    %v519 = vpack.c.b16 %v401, %v400
    %v520 = vpack.c.b16 %v403, %v402
    %v521 = vpack.c.b16 %v405, %v404
    %v522 = vpack.c.b16 %v407, %v406
    %v523 = vpack.c.b16 %v409, %v408
    %v524 = vpack.c.b16 %v411, %v410
    %v525 = vpack.c.b16 %v413, %v412
    %v526 = vpack.c.b16 %v415, %v414
    %v527 = vpack.c.b16 %v417, %v416
    %v528 = vpack.c.b16 %v419, %v418
    %v529 = vpack.c.b16 %v421, %v420
    %v530 = vpack.c.b16 %v423, %v422
    %v531 = vpack.c.b16 %v425, %v424
    %v532 = vpack.c.b16 %v427, %v426
    %v533 = vpack.c.b16 %v429, %v428
    %v534 = vpack.c.b16 %v431, %v430
    %v535 = vpack.c.b16 %v433, %v432
    %v536 = vpack.c.b16 %v435, %v434
    %v537 = vpack.c.b16 %v437, %v436
    %v538 = vpack.c.b16 %v439, %v438
    %v539 = vpack.c.b16 %v441, %v440
    %v540 = vpack.c.b16 %v443, %v442
    %v541 = vpack.c.b16 %v445, %v444
    %v542 = vpack.c.b16 %v447, %v446
    %v543 = vpack.c.b16 %v449, %v448
    %v544 = vpack.c.b16 %v451, %v450
    %v545 = vpack.c.b16 %v453, %v452
    %v546 = vpack.c.b16 %v455, %v454
    %v547 = vpack.c.b16 %v457, %v456
    %v548 = vpack.c.b16 %v459, %v458
    %v549 = vpack.c.b16 %v461, %v460
    %v550 = vpack.c.b16 %v463, %v462
    %v551 = vpack.c.b16 %v465, %v464
    %v552 = vpack.c.b16 %v467, %v466
    %v553 = vpack.c.b16 %v469, %v468
    %v554 = vpack.c.b16 %v471, %v470
    %v555 = vpack.c.b16 %v473, %v472
    %v556 = vpack.c.b16 %v475, %v474
    %v557 = vpack.c.b16 %v477, %v476
    %v558 = vpack.c.b16 %v479, %v478
    %v559 = vpack.c.b16 %v481, %v480
    %v560 = vpack.c.b16 %v483, %v482
    %v561 = vpack.c.b16 %v485, %v484
    %v562 = vpack.c.b16 %v487, %v486
    %v563 = vpack.c.b16 %v489, %v488
    %v564 = vpack.c.b16 %v491, %v490
    %v565 = vpack.c.b16 %v493, %v492
    %638 = vmatprep.subr.bf16.mxu0 0
    %639 = vmatpush1.bf16.msra.mxu0 %v494
    %640 = vmatprep.subr.bf16.mxu0 0
    %641 = vmatpush1.bf16.msra.mxu0 %v495
    %642 = vmatprep.subr.bf16.mxu0 0
    %643 = vmatpush1.bf16.msra.mxu0 %v496
    %644 = vmatprep.subr.bf16.mxu0 0
    %645 = vmatpush1.bf16.msra.mxu0 %v497
    %646 = vmatprep.subr.bf16.mxu0 0
    %647 = vmatpush1.bf16.msra.mxu0 %v498
    %648 = vmatprep.subr.bf16.mxu0 0
    %649 = vmatpush1.bf16.msra.mxu0 %v499
    %650 = vmatprep.subr.bf16.mxu0 0
    %651 = vmatpush1.bf16.msra.mxu0 %v500
    %652 = vmatprep.subr.bf16.mxu0 0
    %653 = vmatpush1.bf16.msra.mxu0 %v501
    %654 = vmatprep.subr.bf16.mxu0 0
    %655 = vmatpush1.bf16.msra.mxu0 %v502
    %656 = vmatprep.subr.bf16.mxu0 0
    %657 = vmatpush1.bf16.msra.mxu0 %v503
    %658 = vmatprep.subr.bf16.mxu0 0
    %659 = vmatpush1.bf16.msra.mxu0 %v504
    %660 = vmatprep.subr.bf16.mxu0 0
    %661 = vmatpush1.bf16.msra.mxu0 %v505
    %662 = vmatprep.subr.bf16.mxu0 0
    %663 = vmatpush1.bf16.msra.mxu0 %v506
    %664 = vmatprep.subr.bf16.mxu0 0
    %665 = vmatpush1.bf16.msra.mxu0 %v507
    %666 = vmatprep.subr.bf16.mxu0 0
    %667 = vmatpush1.bf16.msra.mxu0 %v508
    %668 = vmatprep.subr.bf16.mxu0 0
    %669 = vmatpush1.bf16.msra.mxu0 %v509
    %670 = vmatprep.mubr.bf16.mxu0 %v189
    %671 = vmatmul.mubr.bf16.gmra.mrb[0].mxu0 %v188
    %v672 = vpop.f32.mrb[0].mxu0
    %v673 = vadd.f32 0.0, %v672
    %v674 = vpop.f32.mrb[0].mxu0
    %v675 = vpop.f32.mrb[0].mxu0
    %v676 = vpop.f32.mrb[0].mxu0
    %677 = vdwg.mxu0
    %678 = vmatprep.subr.bf16.mxu0 0
    %679 = vmatpush1.bf16.msra.mxu0 %v510
    %680 = vmatprep.subr.bf16.mxu0 0
    %681 = vmatpush1.bf16.msra.mxu0 %v511
    %682 = vmatprep.subr.bf16.mxu0 0
    %683 = vmatpush1.bf16.msra.mxu0 %v512
    %684 = vmatprep.subr.bf16.mxu0 0
    %685 = vmatpush1.bf16.msra.mxu0 %v513
    %686 = vmatprep.subr.bf16.mxu0 0
    %687 = vmatpush1.bf16.msra.mxu0 %v514
    %688 = vmatprep.subr.bf16.mxu0 0
    %689 = vmatpush1.bf16.msra.mxu0 %v515
    %690 = vmatprep.subr.bf16.mxu0 0
    %691 = vmatpush1.bf16.msra.mxu0 %v516
    %692 = vmatprep.subr.bf16.mxu0 0
    %693 = vmatpush1.bf16.msra.mxu0 %v517
    %694 = vmatprep.subr.bf16.mxu0 0
    %695 = vmatpush1.bf16.msra.mxu0 %v518
    %696 = vmatprep.subr.bf16.mxu0 0
    %697 = vmatpush1.bf16.msra.mxu0 %v519
    %698 = vmatprep.subr.bf16.mxu0 0
    %699 = vmatpush1.bf16.msra.mxu0 %v520
    %700 = vmatprep.subr.bf16.mxu0 0
    %701 = vmatpush1.bf16.msra.mxu0 %v521
    %702 = vmatprep.subr.bf16.mxu0 0
    %703 = vmatpush1.bf16.msra.mxu0 %v522
    %704 = vmatprep.subr.bf16.mxu0 0
    %705 = vmatpush1.bf16.msra.mxu0 %v523
    %706 = vmatprep.subr.bf16.mxu0 0
    %707 = vmatpush1.bf16.msra.mxu0 %v524
    %708 = vmatprep.subr.bf16.mxu0 0
    %709 = vmatpush1.bf16.msra.mxu0 %v525
    %710 = vmatprep.mubr.bf16.mxu0 %v191
    %711 = vmatmul.mubr.bf16.gmra.mrb[0].mxu0 %v190
    %v712 = vpop.f32.mrb[0].mxu0
    %v713 = vadd.f32 %v673, %v712
    %v714 = vpop.f32.mrb[0].mxu0
    %v715 = vpop.f32.mrb[0].mxu0
    %v716 = vpop.f32.mrb[0].mxu0
    %717 = vdwg.mxu0
    %718 = vmatprep.subr.bf16.mxu0 0
    %719 = vmatpush1.bf16.msra.mxu0 %v526
    %720 = vmatprep.subr.bf16.mxu0 0
    %721 = vmatpush1.bf16.msra.mxu0 %v527
    %722 = vmatprep.subr.bf16.mxu0 0
    %723 = vmatpush1.bf16.msra.mxu0 %v528
    %724 = vmatprep.subr.bf16.mxu0 0
    %725 = vmatpush1.bf16.msra.mxu0 %v529
    %726 = vmatprep.subr.bf16.mxu0 0
    %727 = vmatpush1.bf16.msra.mxu0 %v530
    %728 = vmatprep.subr.bf16.mxu0 0
    %729 = vmatpush1.bf16.msra.mxu0 %v531
    %730 = vmatprep.subr.bf16.mxu0 0
    %731 = vmatpush1.bf16.msra.mxu0 %v532
    %732 = vmatprep.subr.bf16.mxu0 0
    %733 = vmatpush1.bf16.msra.mxu0 %v533
    %734 = vmatprep.subr.bf16.mxu0 0
    %735 = vmatpush1.bf16.msra.mxu0 %v534
    %736 = vmatprep.subr.bf16.mxu0 0
    %737 = vmatpush1.bf16.msra.mxu0 %v535
    %738 = vmatprep.subr.bf16.mxu0 0
    %739 = vmatpush1.bf16.msra.mxu0 %v536
    %740 = vmatprep.subr.bf16.mxu0 0
    %741 = vmatpush1.bf16.msra.mxu0 %v537
    %742 = vmatprep.subr.bf16.mxu0 0
    %743 = vmatpush1.bf16.msra.mxu0 %v538
    %744 = vmatprep.subr.bf16.mxu0 0
    %745 = vmatpush1.bf16.msra.mxu0 %v539
    %746 = vmatprep.subr.bf16.mxu0 0
    %747 = vmatpush1.bf16.msra.mxu0 %v540
    %748 = vmatprep.subr.bf16.mxu0 0
    %749 = vmatpush1.bf16.msra.mxu0 %v541
    %750 = vmatprep.mubr.bf16.mxu0 %v193
    %751 = vmatmul.mubr.bf16.gmra.mrb[0].mxu0 %v192
    %v752 = vpop.f32.mrb[0].mxu0
    %v753 = vadd.f32 %v713, %v752
    %v754 = vpop.f32.mrb[0].mxu0
    %v755 = vpop.f32.mrb[0].mxu0
    %v756 = vpop.f32.mrb[0].mxu0
    %757 = vdwg.mxu0
    %758 = vmatprep.subr.bf16.mxu0 0
    %759 = vmatpush1.bf16.msra.mxu0 %v542
    %760 = vmatprep.subr.bf16.mxu0 0
    %761 = vmatpush1.bf16.msra.mxu0 %v543
    %762 = vmatprep.subr.bf16.mxu0 0
    %763 = vmatpush1.bf16.msra.mxu0 %v544
    %764 = vmatprep.subr.bf16.mxu0 0
    %765 = vmatpush1.bf16.msra.mxu0 %v545
    %766 = vmatprep.subr.bf16.mxu0 0
    %767 = vmatpush1.bf16.msra.mxu0 %v546
    %768 = vmatprep.subr.bf16.mxu0 0
    %769 = vmatpush1.bf16.msra.mxu0 %v547
    %770 = vmatprep.subr.bf16.mxu0 0
    %771 = vmatpush1.bf16.msra.mxu0 %v548
    %772 = vmatprep.subr.bf16.mxu0 0
    %773 = vmatpush1.bf16.msra.mxu0 %v549
    %774 = vmatprep.subr.bf16.mxu0 0
    %775 = vmatpush1.bf16.msra.mxu0 %v550
    %776 = vmatprep.subr.bf16.mxu0 0
    %777 = vmatpush1.bf16.msra.mxu0 %v551
    %778 = vmatprep.subr.bf16.mxu0 0
    %779 = vmatpush1.bf16.msra.mxu0 %v552
    %780 = vmatprep.subr.bf16.mxu0 0
    %781 = vmatpush1.bf16.msra.mxu0 %v553
    %782 = vmatprep.subr.bf16.mxu0 0
    %783 = vmatpush1.bf16.msra.mxu0 %v554
    %784 = vmatprep.subr.bf16.mxu0 0
    %785 = vmatpush1.bf16.msra.mxu0 %v555
    %786 = vmatprep.subr.bf16.mxu0 0
    %787 = vmatpush1.bf16.msra.mxu0 %v556
    %788 = vmatprep.subr.bf16.mxu0 0
    %789 = vmatpush1.bf16.msra.mxu0 %v557
    %790 = vmatprep.mubr.bf16.mxu0 %v195
    %791 = vmatmul.mubr.bf16.gmra.mrb[0].mxu0 %v194
    %v792 = vpop.f32.mrb[0].mxu0
    %v793 = vadd.f32 %v753, %v792
    %v794 = vpop.f32.mrb[0].mxu0
    %v795 = vpop.f32.mrb[0].mxu0
    %v796 = vpop.f32.mrb[0].mxu0
    %797 = vdwg.mxu0
    %798 = vmatprep.subr.bf16.mxu0 0
    %799 = vmatpush1.bf16.msra.mxu0 %v558
    %800 = vmatprep.subr.bf16.mxu0 0
    %801 = vmatpush1.bf16.msra.mxu0 %v559
    %802 = vmatprep.subr.bf16.mxu0 0
    %803 = vmatpush1.bf16.msra.mxu0 %v560
    %804 = vmatprep.subr.bf16.mxu0 0
    %805 = vmatpush1.bf16.msra.mxu0 %v561
    %806 = vmatprep.subr.bf16.mxu0 0
    %807 = vmatpush1.bf16.msra.mxu0 %v562
    %808 = vmatprep.subr.bf16.mxu0 0
    %809 = vmatpush1.bf16.msra.mxu0 %v563
    %810 = vmatprep.subr.bf16.mxu0 0
    %811 = vmatpush1.bf16.msra.mxu0 %v564
    %812 = vmatprep.subr.bf16.mxu0 0
    %813 = vmatpush1.bf16.msra.mxu0 %v565
    %814 = vmatprep.subr.bf16.mxu0 0
    %815 = vmatpush1.bf16.msra.mxu0 0
    %816 = vmatprep.subr.bf16.mxu0 0
    %817 = vmatpush1.bf16.msra.mxu0 0
    %818 = vmatprep.subr.bf16.mxu0 0
    %819 = vmatpush1.bf16.msra.mxu0 0
    %820 = vmatprep.subr.bf16.mxu0 0
    %821 = vmatpush1.bf16.msra.mxu0 0
    %822 = vmatprep.subr.bf16.mxu0 0
    %823 = vmatpush1.bf16.msra.mxu0 0
    %824 = vmatprep.subr.bf16.mxu0 0
    %825 = vmatpush1.bf16.msra.mxu0 0
    %826 = vmatprep.subr.bf16.mxu0 0
    %827 = vmatpush1.bf16.msra.mxu0 0
    %828 = vmatprep.subr.bf16.mxu0 0
    %829 = vmatpush1.bf16.msra.mxu0 0
    %830 = vmatprep.mubr.bf16.mxu0 0
    %831 = vmatmul.mubr.bf16.gmra.mrb[0].mxu0 %v196
    %v832 = vpop.f32.mrb[0].mxu0
    %v833 = vadd.f32 %v793, %v832
    %v834 = vpop.f32.mrb[0].mxu0
    %v835 = vpop.f32.mrb[0].mxu0
    %v836 = vpop.f32.mrb[0].mxu0
    %837 = vdwg.mxu0
    %s838 = scalar_lea.vmem %s0, 36
    %v839 = vld [vmem:[%s838] sm:$0xff]
    %v840 = vld [vmem:[%s838 + $0x8] sm:$0xff]
    %v841 = vld [vmem:[%s838 + $0x10] sm:$0xff]
    %v842 = vld [vmem:[%s838 + $0x18] sm:$0xff]
    %v843 = vld [vmem:[%s838 + $0x20] sm:$0xf]
    %v849 = vunpack.c.l.b16 %v839
    %v850 = vunpack.c.h.b16 %v839
    %v851 = vunpack.c.l.b16 %v840
    %v852 = vunpack.c.h.b16 %v840
    %v853 = vunpack.c.l.b16 %v841
    %v854 = vunpack.c.h.b16 %v841
    %v855 = vunpack.c.l.b16 %v842
    %v856 = vunpack.c.h.b16 %v842
    %v857 = vunpack.c.l.b16 %v843
    %v858 = vpack.c.b16 %v849, %v849
    %v859 = vpack.c.b16 %v850, %v850
    %v860 = vpack.c.b16 %v851, %v851
    %v861 = vpack.c.b16 %v852, %v852
    %v862 = vpack.c.b16 %v853, %v853
    %v863 = vpack.c.b16 %v854, %v854
    %v864 = vpack.c.b16 %v855, %v855
    %v865 = vpack.c.b16 %v856, %v856
    %v866 = vpack.c.b16 %v857, %v857
    %876 = vmatprep.subr.bf16.mxu0 0
    %877 = vmatpush1.bf16.msra.mxu0 %v494
    %878 = vmatprep.subr.bf16.mxu0 0
    %879 = vmatpush1.bf16.msra.mxu0 %v495
    %880 = vmatprep.subr.bf16.mxu0 0
    %881 = vmatpush1.bf16.msra.mxu0 %v496
    %882 = vmatprep.subr.bf16.mxu0 0
    %883 = vmatpush1.bf16.msra.mxu0 %v497
    %884 = vmatprep.subr.bf16.mxu0 0
    %885 = vmatpush1.bf16.msra.mxu0 %v498
    %886 = vmatprep.subr.bf16.mxu0 0
    %887 = vmatpush1.bf16.msra.mxu0 %v499
    %888 = vmatprep.subr.bf16.mxu0 0
    %889 = vmatpush1.bf16.msra.mxu0 %v500
    %890 = vmatprep.subr.bf16.mxu0 0
    %891 = vmatpush1.bf16.msra.mxu0 %v501
    %892 = vmatprep.subr.bf16.mxu0 0
    %893 = vmatpush1.bf16.msra.mxu0 %v502
    %894 = vmatprep.subr.bf16.mxu0 0
    %895 = vmatpush1.bf16.msra.mxu0 %v503
    %896 = vmatprep.subr.bf16.mxu0 0
    %897 = vmatpush1.bf16.msra.mxu0 %v504
    %898 = vmatprep.subr.bf16.mxu0 0
    %899 = vmatpush1.bf16.msra.mxu0 %v505
    %900 = vmatprep.subr.bf16.mxu0 0
    %901 = vmatpush1.bf16.msra.mxu0 %v506
    %902 = vmatprep.subr.bf16.mxu0 0
    %903 = vmatpush1.bf16.msra.mxu0 %v507
    %904 = vmatprep.subr.bf16.mxu0 0
    %905 = vmatpush1.bf16.msra.mxu0 %v508
    %906 = vmatprep.subr.bf16.mxu0 0
    %907 = vmatpush1.bf16.msra.mxu0 %v509
    %908 = vmatprep.mubr.bf16.mxu0 %v859
    %909 = vmatmul.mubr.bf16.gmra.mrb[0].mxu0 %v858
    %v910 = vpop.f32.mrb[0].mxu0
    %v911 = vadd.f32 0.0, %v910
    %v912 = vpop.f32.mrb[0].mxu0
    %v913 = vpop.f32.mrb[0].mxu0
    %v914 = vpop.f32.mrb[0].mxu0
    %915 = vdwg.mxu0
    %916 = vmatprep.subr.bf16.mxu0 0
    %917 = vmatpush1.bf16.msra.mxu0 %v510
    %918 = vmatprep.subr.bf16.mxu0 0
    %919 = vmatpush1.bf16.msra.mxu0 %v511
    %920 = vmatprep.subr.bf16.mxu0 0
    %921 = vmatpush1.bf16.msra.mxu0 %v512
    %922 = vmatprep.subr.bf16.mxu0 0
    %923 = vmatpush1.bf16.msra.mxu0 %v513
    %924 = vmatprep.subr.bf16.mxu0 0
    %925 = vmatpush1.bf16.msra.mxu0 %v514
    %926 = vmatprep.subr.bf16.mxu0 0
    %927 = vmatpush1.bf16.msra.mxu0 %v515
    %928 = vmatprep.subr.bf16.mxu0 0
    %929 = vmatpush1.bf16.msra.mxu0 %v516
    %930 = vmatprep.subr.bf16.mxu0 0
    %931 = vmatpush1.bf16.msra.mxu0 %v517
    %932 = vmatprep.subr.bf16.mxu0 0
    %933 = vmatpush1.bf16.msra.mxu0 %v518
    %934 = vmatprep.subr.bf16.mxu0 0
    %935 = vmatpush1.bf16.msra.mxu0 %v519
    %936 = vmatprep.subr.bf16.mxu0 0
    %937 = vmatpush1.bf16.msra.mxu0 %v520
    %938 = vmatprep.subr.bf16.mxu0 0
    %939 = vmatpush1.bf16.msra.mxu0 %v521
    %940 = vmatprep.subr.bf16.mxu0 0
    %941 = vmatpush1.bf16.msra.mxu0 %v522
    %942 = vmatprep.subr.bf16.mxu0 0
    %943 = vmatpush1.bf16.msra.mxu0 %v523
    %944 = vmatprep.subr.bf16.mxu0 0
    %945 = vmatpush1.bf16.msra.mxu0 %v524
    %946 = vmatprep.subr.bf16.mxu0 0
    %947 = vmatpush1.bf16.msra.mxu0 %v525
    %948 = vmatprep.mubr.bf16.mxu0 %v861
    %949 = vmatmul.mubr.bf16.gmra.mrb[0].mxu0 %v860
    %v950 = vpop.f32.mrb[0].mxu0
    %v951 = vadd.f32 %v911, %v950
    %v952 = vpop.f32.mrb[0].mxu0
    %v953 = vpop.f32.mrb[0].mxu0
    %v954 = vpop.f32.mrb[0].mxu0
    %955 = vdwg.mxu0
    %956 = vmatprep.subr.bf16.mxu0 0
    %957 = vmatpush1.bf16.msra.mxu0 %v526
    %958 = vmatprep.subr.bf16.mxu0 0
    %959 = vmatpush1.bf16.msra.mxu0 %v527
    %960 = vmatprep.subr.bf16.mxu0 0
    %961 = vmatpush1.bf16.msra.mxu0 %v528
    %962 = vmatprep.subr.bf16.mxu0 0
    %963 = vmatpush1.bf16.msra.mxu0 %v529
    %964 = vmatprep.subr.bf16.mxu0 0
    %965 = vmatpush1.bf16.msra.mxu0 %v530
    %966 = vmatprep.subr.bf16.mxu0 0
    %967 = vmatpush1.bf16.msra.mxu0 %v531
    %968 = vmatprep.subr.bf16.mxu0 0
    %969 = vmatpush1.bf16.msra.mxu0 %v532
    %970 = vmatprep.subr.bf16.mxu0 0
    %971 = vmatpush1.bf16.msra.mxu0 %v533
    %972 = vmatprep.subr.bf16.mxu0 0
    %973 = vmatpush1.bf16.msra.mxu0 %v534
    %974 = vmatprep.subr.bf16.mxu0 0
    %975 = vmatpush1.bf16.msra.mxu0 %v535
    %976 = vmatprep.subr.bf16.mxu0 0
    %977 = vmatpush1.bf16.msra.mxu0 %v536
    %978 = vmatprep.subr.bf16.mxu0 0
    %979 = vmatpush1.bf16.msra.mxu0 %v537
    %980 = vmatprep.subr.bf16.mxu0 0
    %981 = vmatpush1.bf16.msra.mxu0 %v538
    %982 = vmatprep.subr.bf16.mxu0 0
    %983 = vmatpush1.bf16.msra.mxu0 %v539
    %984 = vmatprep.subr.bf16.mxu0 0
    %985 = vmatpush1.bf16.msra.mxu0 %v540
    %986 = vmatprep.subr.bf16.mxu0 0
    %987 = vmatpush1.bf16.msra.mxu0 %v541
    %988 = vmatprep.mubr.bf16.mxu0 %v863
    %989 = vmatmul.mubr.bf16.gmra.mrb[0].mxu0 %v862
    %v990 = vpop.f32.mrb[0].mxu0
    %v991 = vadd.f32 %v951, %v990
    %v992 = vpop.f32.mrb[0].mxu0
    %v993 = vpop.f32.mrb[0].mxu0
    %v994 = vpop.f32.mrb[0].mxu0
    %995 = vdwg.mxu0
    %996 = vmatprep.subr.bf16.mxu0 0
    %997 = vmatpush1.bf16.msra.mxu0 %v542
    %998 = vmatprep.subr.bf16.mxu0 0
    %999 = vmatpush1.bf16.msra.mxu0 %v543
    %1000 = vmatprep.subr.bf16.mxu0 0
    %1001 = vmatpush1.bf16.msra.mxu0 %v544
    %1002 = vmatprep.subr.bf16.mxu0 0
    %1003 = vmatpush1.bf16.msra.mxu0 %v545
    %1004 = vmatprep.subr.bf16.mxu0 0
    %1005 = vmatpush1.bf16.msra.mxu0 %v546
    %1006 = vmatprep.subr.bf16.mxu0 0
    %1007 = vmatpush1.bf16.msra.mxu0 %v547
    %1008 = vmatprep.subr.bf16.mxu0 0
    %1009 = vmatpush1.bf16.msra.mxu0 %v548
    %1010 = vmatprep.subr.bf16.mxu0 0
    %1011 = vmatpush1.bf16.msra.mxu0 %v549
    %1012 = vmatprep.subr.bf16.mxu0 0
    %1013 = vmatpush1.bf16.msra.mxu0 %v550
    %1014 = vmatprep.subr.bf16.mxu0 0
    %1015 = vmatpush1.bf16.msra.mxu0 %v551
    %1016 = vmatprep.subr.bf16.mxu0 0
    %1017 = vmatpush1.bf16.msra.mxu0 %v552
    %1018 = vmatprep.subr.bf16.mxu0 0
    %1019 = vmatpush1.bf16.msra.mxu0 %v553
    %1020 = vmatprep.subr.bf16.mxu0 0
    %1021 = vmatpush1.bf16.msra.mxu0 %v554
    %1022 = vmatprep.subr.bf16.mxu0 0
    %1023 = vmatpush1.bf16.msra.mxu0 %v555
    %1024 = vmatprep.subr.bf16.mxu0 0
    %1025 = vmatpush1.bf16.msra.mxu0 %v556
    %1026 = vmatprep.subr.bf16.mxu0 0
    %1027 = vmatpush1.bf16.msra.mxu0 %v557
    %1028 = vmatprep.mubr.bf16.mxu0 %v865
    %1029 = vmatmul.mubr.bf16.gmra.mrb[0].mxu0 %v864
    %v1030 = vpop.f32.mrb[0].mxu0
    %v1031 = vadd.f32 %v991, %v1030
    %v1032 = vpop.f32.mrb[0].mxu0
    %v1033 = vpop.f32.mrb[0].mxu0
    %v1034 = vpop.f32.mrb[0].mxu0
    %1035 = vdwg.mxu0
    %1036 = vmatprep.subr.bf16.mxu0 0
    %1037 = vmatpush1.bf16.msra.mxu0 %v558
    %1038 = vmatprep.subr.bf16.mxu0 0
    %1039 = vmatpush1.bf16.msra.mxu0 %v559
    %1040 = vmatprep.subr.bf16.mxu0 0
    %1041 = vmatpush1.bf16.msra.mxu0 %v560
    %1042 = vmatprep.subr.bf16.mxu0 0
    %1043 = vmatpush1.bf16.msra.mxu0 %v561
    %1044 = vmatprep.subr.bf16.mxu0 0
    %1045 = vmatpush1.bf16.msra.mxu0 %v562
    %1046 = vmatprep.subr.bf16.mxu0 0
    %1047 = vmatpush1.bf16.msra.mxu0 %v563
    %1048 = vmatprep.subr.bf16.mxu0 0
    %1049 = vmatpush1.bf16.msra.mxu0 %v564
    %1050 = vmatprep.subr.bf16.mxu0 0
    %1051 = vmatpush1.bf16.msra.mxu0 %v565
    %1052 = vmatprep.subr.bf16.mxu0 0
    %1053 = vmatpush1.bf16.msra.mxu0 0
    %1054 = vmatprep.subr.bf16.mxu0 0
    %1055 = vmatpush1.bf16.msra.mxu0 0
    %1056 = vmatprep.subr.bf16.mxu0 0
    %1057 = vmatpush1.bf16.msra.mxu0 0
    %1058 = vmatprep.subr.bf16.mxu0 0
    %1059 = vmatpush1.bf16.msra.mxu0 0
    %1060 = vmatprep.subr.bf16.mxu0 0
    %1061 = vmatpush1.bf16.msra.mxu0 0
    %1062 = vmatprep.subr.bf16.mxu0 0
    %1063 = vmatpush1.bf16.msra.mxu0 0
    %1064 = vmatprep.subr.bf16.mxu0 0
    %1065 = vmatpush1.bf16.msra.mxu0 0
    %1066 = vmatprep.subr.bf16.mxu0 0
    %1067 = vmatpush1.bf16.msra.mxu0 0
    %1068 = vmatprep.mubr.bf16.mxu0 0
    %1069 = vmatmul.mubr.bf16.gmra.mrb[0].mxu0 %v866
    %v1070 = vpop.f32.mrb[0].mxu0
    %v1071 = vadd.f32 %v1031, %v1070
    %v1072 = vpop.f32.mrb[0].mxu0
    %v1073 = vpop.f32.mrb[0].mxu0
    %v1074 = vpop.f32.mrb[0].mxu0
    %1075 = vdwg.mxu0
    %v1076 = vmax.f32 %v833, %v1071
    %s1077 = scalar_lea.vmem %s0, 72
    %v1078 = vld [vmem:[%s1077] sm:$0xff]
    %v1079 = vld [vmem:[%s1077 + $0x8] sm:$0xff]
    %v1080 = vld [vmem:[%s1077 + $0x10] sm:$0xff]
    %v1081 = vld [vmem:[%s1077 + $0x18] sm:$0xff]
    %v1082 = vld [vmem:[%s1077 + $0x20] sm:$0xf]
    %v1088 = vunpack.c.l.b16 %v1078
    %v1089 = vunpack.c.h.b16 %v1078
    %v1090 = vunpack.c.l.b16 %v1079
    %v1091 = vunpack.c.h.b16 %v1079
    %v1092 = vunpack.c.l.b16 %v1080
    %v1093 = vunpack.c.h.b16 %v1080
    %v1094 = vunpack.c.l.b16 %v1081
    %v1095 = vunpack.c.h.b16 %v1081
    %v1096 = vunpack.c.l.b16 %v1082
    %v1097 = vpack.c.b16 %v1088, %v1088
    %v1098 = vpack.c.b16 %v1089, %v1089
    %v1099 = vpack.c.b16 %v1090, %v1090
    %v1100 = vpack.c.b16 %v1091, %v1091
    %v1101 = vpack.c.b16 %v1092, %v1092
    %v1102 = vpack.c.b16 %v1093, %v1093
    %v1103 = vpack.c.b16 %v1094, %v1094
    %v1104 = vpack.c.b16 %v1095, %v1095
    %v1105 = vpack.c.b16 %v1096, %v1096
    %1115 = vmatprep.subr.bf16.mxu0 0
    %1116 = vmatpush1.bf16.msra.mxu0 %v494
    %1117 = vmatprep.subr.bf16.mxu0 0
    %1118 = vmatpush1.bf16.msra.mxu0 %v495
    %1119 = vmatprep.subr.bf16.mxu0 0
    %1120 = vmatpush1.bf16.msra.mxu0 %v496
    %1121 = vmatprep.subr.bf16.mxu0 0
    %1122 = vmatpush1.bf16.msra.mxu0 %v497
    %1123 = vmatprep.subr.bf16.mxu0 0
    %1124 = vmatpush1.bf16.msra.mxu0 %v498
    %1125 = vmatprep.subr.bf16.mxu0 0
    %1126 = vmatpush1.bf16.msra.mxu0 %v499
    %1127 = vmatprep.subr.bf16.mxu0 0
    %1128 = vmatpush1.bf16.msra.mxu0 %v500
    %1129 = vmatprep.subr.bf16.mxu0 0
    %1130 = vmatpush1.bf16.msra.mxu0 %v501
    %1131 = vmatprep.subr.bf16.mxu0 0
    %1132 = vmatpush1.bf16.msra.mxu0 %v502
    %1133 = vmatprep.subr.bf16.mxu0 0
    %1134 = vmatpush1.bf16.msra.mxu0 %v503
    %1135 = vmatprep.subr.bf16.mxu0 0
    %1136 = vmatpush1.bf16.msra.mxu0 %v504
    %1137 = vmatprep.subr.bf16.mxu0 0
    %1138 = vmatpush1.bf16.msra.mxu0 %v505
    %1139 = vmatprep.subr.bf16.mxu0 0
    %1140 = vmatpush1.bf16.msra.mxu0 %v506
    %1141 = vmatprep.subr.bf16.mxu0 0
    %1142 = vmatpush1.bf16.msra.mxu0 %v507
    %1143 = vmatprep.subr.bf16.mxu0 0
    %1144 = vmatpush1.bf16.msra.mxu0 %v508
    %1145 = vmatprep.subr.bf16.mxu0 0
    %1146 = vmatpush1.bf16.msra.mxu0 %v509
    %1147 = vmatprep.mubr.bf16.mxu0 %v1098
    %1148 = vmatmul.mubr.bf16.gmra.mrb[0].mxu0 %v1097
    %v1149 = vpop.f32.mrb[0].mxu0
    %v1150 = vadd.f32 0.0, %v1149
    %v1151 = vpop.f32.mrb[0].mxu0
    %v1152 = vpop.f32.mrb[0].mxu0
    %v1153 = vpop.f32.mrb[0].mxu0
    %1154 = vdwg.mxu0
    %1155 = vmatprep.subr.bf16.mxu0 0
    %1156 = vmatpush1.bf16.msra.mxu0 %v510
    %1157 = vmatprep.subr.bf16.mxu0 0
    %1158 = vmatpush1.bf16.msra.mxu0 %v511
    %1159 = vmatprep.subr.bf16.mxu0 0
    %1160 = vmatpush1.bf16.msra.mxu0 %v512
    %1161 = vmatprep.subr.bf16.mxu0 0
    %1162 = vmatpush1.bf16.msra.mxu0 %v513
    %1163 = vmatprep.subr.bf16.mxu0 0
    %1164 = vmatpush1.bf16.msra.mxu0 %v514
    %1165 = vmatprep.subr.bf16.mxu0 0
    %1166 = vmatpush1.bf16.msra.mxu0 %v515
    %1167 = vmatprep.subr.bf16.mxu0 0
    %1168 = vmatpush1.bf16.msra.mxu0 %v516
    %1169 = vmatprep.subr.bf16.mxu0 0
    %1170 = vmatpush1.bf16.msra.mxu0 %v517
    %1171 = vmatprep.subr.bf16.mxu0 0
    %1172 = vmatpush1.bf16.msra.mxu0 %v518
    %1173 = vmatprep.subr.bf16.mxu0 0
    %1174 = vmatpush1.bf16.msra.mxu0 %v519
    %1175 = vmatprep.subr.bf16.mxu0 0
    %1176 = vmatpush1.bf16.msra.mxu0 %v520
    %1177 = vmatprep.subr.bf16.mxu0 0
    %1178 = vmatpush1.bf16.msra.mxu0 %v521
    %1179 = vmatprep.subr.bf16.mxu0 0
    %1180 = vmatpush1.bf16.msra.mxu0 %v522
    %1181 = vmatprep.subr.bf16.mxu0 0
    %1182 = vmatpush1.bf16.msra.mxu0 %v523
    %1183 = vmatprep.subr.bf16.mxu0 0
    %1184 = vmatpush1.bf16.msra.mxu0 %v524
    %1185 = vmatprep.subr.bf16.mxu0 0
    %1186 = vmatpush1.bf16.msra.mxu0 %v525
    %1187 = vmatprep.mubr.bf16.mxu0 %v1100
    %1188 = vmatmul.mubr.bf16.gmra.mrb[0].mxu0 %v1099
    %v1189 = vpop.f32.mrb[0].mxu0
    %v1190 = vadd.f32 %v1150, %v1189
    %v1191 = vpop.f32.mrb[0].mxu0
    %v1192 = vpop.f32.mrb[0].mxu0
    %v1193 = vpop.f32.mrb[0].mxu0
    %1194 = vdwg.mxu0
    %1195 = vmatprep.subr.bf16.mxu0 0
    %1196 = vmatpush1.bf16.msra.mxu0 %v526
    %1197 = vmatprep.subr.bf16.mxu0 0
    %1198 = vmatpush1.bf16.msra.mxu0 %v527
    %1199 = vmatprep.subr.bf16.mxu0 0
    %1200 = vmatpush1.bf16.msra.mxu0 %v528
    %1201 = vmatprep.subr.bf16.mxu0 0
    %1202 = vmatpush1.bf16.msra.mxu0 %v529
    %1203 = vmatprep.subr.bf16.mxu0 0
    %1204 = vmatpush1.bf16.msra.mxu0 %v530
    %1205 = vmatprep.subr.bf16.mxu0 0
    %1206 = vmatpush1.bf16.msra.mxu0 %v531
    %1207 = vmatprep.subr.bf16.mxu0 0
    %1208 = vmatpush1.bf16.msra.mxu0 %v532
    %1209 = vmatprep.subr.bf16.mxu0 0
    %1210 = vmatpush1.bf16.msra.mxu0 %v533
    %1211 = vmatprep.subr.bf16.mxu0 0
    %1212 = vmatpush1.bf16.msra.mxu0 %v534
    %1213 = vmatprep.subr.bf16.mxu0 0
    %1214 = vmatpush1.bf16.msra.mxu0 %v535
    %1215 = vmatprep.subr.bf16.mxu0 0
    %1216 = vmatpush1.bf16.msra.mxu0 %v536
    %1217 = vmatprep.subr.bf16.mxu0 0
    %1218 = vmatpush1.bf16.msra.mxu0 %v537
    %1219 = vmatprep.subr.bf16.mxu0 0
    %1220 = vmatpush1.bf16.msra.mxu0 %v538
    %1221 = vmatprep.subr.bf16.mxu0 0
    %1222 = vmatpush1.bf16.msra.mxu0 %v539
    %1223 = vmatprep.subr.bf16.mxu0 0
    %1224 = vmatpush1.bf16.msra.mxu0 %v540
    %1225 = vmatprep.subr.bf16.mxu0 0
    %1226 = vmatpush1.bf16.msra.mxu0 %v541
    %1227 = vmatprep.mubr.bf16.mxu0 %v1102
    %1228 = vmatmul.mubr.bf16.gmra.mrb[0].mxu0 %v1101
    %v1229 = vpop.f32.mrb[0].mxu0
    %v1230 = vadd.f32 %v1190, %v1229
    %v1231 = vpop.f32.mrb[0].mxu0
    %v1232 = vpop.f32.mrb[0].mxu0
    %v1233 = vpop.f32.mrb[0].mxu0
    %1234 = vdwg.mxu0
    %1235 = vmatprep.subr.bf16.mxu0 0
    %1236 = vmatpush1.bf16.msra.mxu0 %v542
    %1237 = vmatprep.subr.bf16.mxu0 0
    %1238 = vmatpush1.bf16.msra.mxu0 %v543
    %1239 = vmatprep.subr.bf16.mxu0 0
    %1240 = vmatpush1.bf16.msra.mxu0 %v544
    %1241 = vmatprep.subr.bf16.mxu0 0
    %1242 = vmatpush1.bf16.msra.mxu0 %v545
    %1243 = vmatprep.subr.bf16.mxu0 0
    %1244 = vmatpush1.bf16.msra.mxu0 %v546
    %1245 = vmatprep.subr.bf16.mxu0 0
    %1246 = vmatpush1.bf16.msra.mxu0 %v547
    %1247 = vmatprep.subr.bf16.mxu0 0
    %1248 = vmatpush1.bf16.msra.mxu0 %v548
    %1249 = vmatprep.subr.bf16.mxu0 0
    %1250 = vmatpush1.bf16.msra.mxu0 %v549
    %1251 = vmatprep.subr.bf16.mxu0 0
    %1252 = vmatpush1.bf16.msra.mxu0 %v550
    %1253 = vmatprep.subr.bf16.mxu0 0
    %1254 = vmatpush1.bf16.msra.mxu0 %v551
    %1255 = vmatprep.subr.bf16.mxu0 0
    %1256 = vmatpush1.bf16.msra.mxu0 %v552
    %1257 = vmatprep.subr.bf16.mxu0 0
    %1258 = vmatpush1.bf16.msra.mxu0 %v553
    %1259 = vmatprep.subr.bf16.mxu0 0
    %1260 = vmatpush1.bf16.msra.mxu0 %v554
    %1261 = vmatprep.subr.bf16.mxu0 0
    %1262 = vmatpush1.bf16.msra.mxu0 %v555
    %1263 = vmatprep.subr.bf16.mxu0 0
    %1264 = vmatpush1.bf16.msra.mxu0 %v556
    %1265 = vmatprep.subr.bf16.mxu0 0
    %1266 = vmatpush1.bf16.msra.mxu0 %v557
    %1267 = vmatprep.mubr.bf16.mxu0 %v1104
    %1268 = vmatmul.mubr.bf16.gmra.mrb[0].mxu0 %v1103
    %v1269 = vpop.f32.mrb[0].mxu0
    %v1270 = vadd.f32 %v1230, %v1269
    %v1271 = vpop.f32.mrb[0].mxu0
    %v1272 = vpop.f32.mrb[0].mxu0
    %v1273 = vpop.f32.mrb[0].mxu0
    %1274 = vdwg.mxu0
    %1275 = vmatprep.subr.bf16.mxu0 0
    %1276 = vmatpush1.bf16.msra.mxu0 %v558
    %1277 = vmatprep.subr.bf16.mxu0 0
    %1278 = vmatpush1.bf16.msra.mxu0 %v559
    %1279 = vmatprep.subr.bf16.mxu0 0
    %1280 = vmatpush1.bf16.msra.mxu0 %v560
    %1281 = vmatprep.subr.bf16.mxu0 0
    %1282 = vmatpush1.bf16.msra.mxu0 %v561
    %1283 = vmatprep.subr.bf16.mxu0 0
    %1284 = vmatpush1.bf16.msra.mxu0 %v562
    %1285 = vmatprep.subr.bf16.mxu0 0
    %1286 = vmatpush1.bf16.msra.mxu0 %v563
    %1287 = vmatprep.subr.bf16.mxu0 0
    %1288 = vmatpush1.bf16.msra.mxu0 %v564
    %1289 = vmatprep.subr.bf16.mxu0 0
    %1290 = vmatpush1.bf16.msra.mxu0 %v565
    %1291 = vmatprep.subr.bf16.mxu0 0
    %1292 = vmatpush1.bf16.msra.mxu0 0
    %1293 = vmatprep.subr.bf16.mxu0 0
    %1294 = vmatpush1.bf16.msra.mxu0 0
    %1295 = vmatprep.subr.bf16.mxu0 0
    %1296 = vmatpush1.bf16.msra.mxu0 0
    %1297 = vmatprep.subr.bf16.mxu0 0
    %1298 = vmatpush1.bf16.msra.mxu0 0
    %1299 = vmatprep.subr.bf16.mxu0 0
    %1300 = vmatpush1.bf16.msra.mxu0 0
    %1301 = vmatprep.subr.bf16.mxu0 0
    %1302 = vmatpush1.bf16.msra.mxu0 0
    %1303 = vmatprep.subr.bf16.mxu0 0
    %1304 = vmatpush1.bf16.msra.mxu0 0
    %1305 = vmatprep.subr.bf16.mxu0 0
    %1306 = vmatpush1.bf16.msra.mxu0 0
    %1307 = vmatprep.mubr.bf16.mxu0 0
    %1308 = vmatmul.mubr.bf16.gmra.mrb[0].mxu0 %v1105
    %v1309 = vpop.f32.mrb[0].mxu0
    %v1310 = vadd.f32 %v1270, %v1309
    %v1311 = vpop.f32.mrb[0].mxu0
    %v1312 = vpop.f32.mrb[0].mxu0
    %v1313 = vpop.f32.mrb[0].mxu0
    %1314 = vdwg.mxu0
    %v1315 = vmax.f32 %v1076, %v1310
    %s1316 = scalar_lea.vmem %s0, 108
    %v1317 = vld [vmem:[%s1316] sm:$0xff]
    %v1318 = vld [vmem:[%s1316 + $0x8] sm:$0xff]
    %v1319 = vld [vmem:[%s1316 + $0x10] sm:$0xff]
    %v1320 = vld [vmem:[%s1316 + $0x18] sm:$0xff]
    %v1321 = vld [vmem:[%s1316 + $0x20] sm:$0xf]
    %v1327 = vunpack.c.l.b16 %v1317
    %v1328 = vunpack.c.h.b16 %v1317
    %v1329 = vunpack.c.l.b16 %v1318
    %v1330 = vunpack.c.h.b16 %v1318
    %v1331 = vunpack.c.l.b16 %v1319
    %v1332 = vunpack.c.h.b16 %v1319
    %v1333 = vunpack.c.l.b16 %v1320
    %v1334 = vunpack.c.h.b16 %v1320
    %v1335 = vunpack.c.l.b16 %v1321
    %v1336 = vpack.c.b16 %v1327, %v1327
    %v1337 = vpack.c.b16 %v1328, %v1328
    %v1338 = vpack.c.b16 %v1329, %v1329
    %v1339 = vpack.c.b16 %v1330, %v1330
    %v1340 = vpack.c.b16 %v1331, %v1331
    %v1341 = vpack.c.b16 %v1332, %v1332
    %v1342 = vpack.c.b16 %v1333, %v1333
    %v1343 = vpack.c.b16 %v1334, %v1334
    %v1344 = vpack.c.b16 %v1335, %v1335
    %1354 = vmatprep.subr.bf16.mxu0 0
    %1355 = vmatpush1.bf16.msra.mxu0 %v494
    %1356 = vmatprep.subr.bf16.mxu0 0
    %1357 = vmatpush1.bf16.msra.mxu0 %v495
    %1358 = vmatprep.subr.bf16.mxu0 0
    %1359 = vmatpush1.bf16.msra.mxu0 %v496
    %1360 = vmatprep.subr.bf16.mxu0 0
    %1361 = vmatpush1.bf16.msra.mxu0 %v497
    %1362 = vmatprep.subr.bf16.mxu0 0
    %1363 = vmatpush1.bf16.msra.mxu0 %v498
    %1364 = vmatprep.subr.bf16.mxu0 0
    %1365 = vmatpush1.bf16.msra.mxu0 %v499
    %1366 = vmatprep.subr.bf16.mxu0 0
    %1367 = vmatpush1.bf16.msra.mxu0 %v500
    %1368 = vmatprep.subr.bf16.mxu0 0
    %1369 = vmatpush1.bf16.msra.mxu0 %v501
    %1370 = vmatprep.subr.bf16.mxu0 0
    %1371 = vmatpush1.bf16.msra.mxu0 %v502
    %1372 = vmatprep.subr.bf16.mxu0 0
    %1373 = vmatpush1.bf16.msra.mxu0 %v503
    %1374 = vmatprep.subr.bf16.mxu0 0
    %1375 = vmatpush1.bf16.msra.mxu0 %v504
    %1376 = vmatprep.subr.bf16.mxu0 0
    %1377 = vmatpush1.bf16.msra.mxu0 %v505
    %1378 = vmatprep.subr.bf16.mxu0 0
    %1379 = vmatpush1.bf16.msra.mxu0 %v506
    %1380 = vmatprep.subr.bf16.mxu0 0
    %1381 = vmatpush1.bf16.msra.mxu0 %v507
    %1382 = vmatprep.subr.bf16.mxu0 0
    %1383 = vmatpush1.bf16.msra.mxu0 %v508
    %1384 = vmatprep.subr.bf16.mxu0 0
    %1385 = vmatpush1.bf16.msra.mxu0 %v509
    %1386 = vmatprep.mubr.bf16.mxu0 %v1337
    %1387 = vmatmul.mubr.bf16.gmra.mrb[0].mxu0 %v1336
    %v1388 = vpop.f32.mrb[0].mxu0
    %v1389 = vadd.f32 0.0, %v1388
    %v1390 = vpop.f32.mrb[0].mxu0
    %v1391 = vpop.f32.mrb[0].mxu0
    %v1392 = vpop.f32.mrb[0].mxu0
    %1393 = vdwg.mxu0
    %1394 = vmatprep.subr.bf16.mxu0 0
    %1395 = vmatpush1.bf16.msra.mxu0 %v510
    %1396 = vmatprep.subr.bf16.mxu0 0
    %1397 = vmatpush1.bf16.msra.mxu0 %v511
    %1398 = vmatprep.subr.bf16.mxu0 0
    %1399 = vmatpush1.bf16.msra.mxu0 %v512
    %1400 = vmatprep.subr.bf16.mxu0 0
    %1401 = vmatpush1.bf16.msra.mxu0 %v513
    %1402 = vmatprep.subr.bf16.mxu0 0
    %1403 = vmatpush1.bf16.msra.mxu0 %v514
    %1404 = vmatprep.subr.bf16.mxu0 0
    %1405 = vmatpush1.bf16.msra.mxu0 %v515
    %1406 = vmatprep.subr.bf16.mxu0 0
    %1407 = vmatpush1.bf16.msra.mxu0 %v516
    %1408 = vmatprep.subr.bf16.mxu0 0
    %1409 = vmatpush1.bf16.msra.mxu0 %v517
    %1410 = vmatprep.subr.bf16.mxu0 0
    %1411 = vmatpush1.bf16.msra.mxu0 %v518
    %1412 = vmatprep.subr.bf16.mxu0 0
    %1413 = vmatpush1.bf16.msra.mxu0 %v519
    %1414 = vmatprep.subr.bf16.mxu0 0
    %1415 = vmatpush1.bf16.msra.mxu0 %v520
    %1416 = vmatprep.subr.bf16.mxu0 0
    %1417 = vmatpush1.bf16.msra.mxu0 %v521
    %1418 = vmatprep.subr.bf16.mxu0 0
    %1419 = vmatpush1.bf16.msra.mxu0 %v522
    %1420 = vmatprep.subr.bf16.mxu0 0
    %1421 = vmatpush1.bf16.msra.mxu0 %v523
    %1422 = vmatprep.subr.bf16.mxu0 0
    %1423 = vmatpush1.bf16.msra.mxu0 %v524
    %1424 = vmatprep.subr.bf16.mxu0 0
    %1425 = vmatpush1.bf16.msra.mxu0 %v525
    %1426 = vmatprep.mubr.bf16.mxu0 %v1339
    %1427 = vmatmul.mubr.bf16.gmra.mrb[0].mxu0 %v1338
    %v1428 = vpop.f32.mrb[0].mxu0
    %v1429 = vadd.f32 %v1389, %v1428
    %v1430 = vpop.f32.mrb[0].mxu0
    %v1431 = vpop.f32.mrb[0].mxu0
    %v1432 = vpop.f32.mrb[0].mxu0
    %1433 = vdwg.mxu0
    %1434 = vmatprep.subr.bf16.mxu0 0
    %1435 = vmatpush1.bf16.msra.mxu0 %v526
    %1436 = vmatprep.subr.bf16.mxu0 0
    %1437 = vmatpush1.bf16.msra.mxu0 %v527
    %1438 = vmatprep.subr.bf16.mxu0 0
    %1439 = vmatpush1.bf16.msra.mxu0 %v528
    %1440 = vmatprep.subr.bf16.mxu0 0
    %1441 = vmatpush1.bf16.msra.mxu0 %v529
    %1442 = vmatprep.subr.bf16.mxu0 0
    %1443 = vmatpush1.bf16.msra.mxu0 %v530
    %1444 = vmatprep.subr.bf16.mxu0 0
    %1445 = vmatpush1.bf16.msra.mxu0 %v531
    %1446 = vmatprep.subr.bf16.mxu0 0
    %1447 = vmatpush1.bf16.msra.mxu0 %v532
    %1448 = vmatprep.subr.bf16.mxu0 0
    %1449 = vmatpush1.bf16.msra.mxu0 %v533
    %1450 = vmatprep.subr.bf16.mxu0 0
    %1451 = vmatpush1.bf16.msra.mxu0 %v534
    %1452 = vmatprep.subr.bf16.mxu0 0
    %1453 = vmatpush1.bf16.msra.mxu0 %v535
    %1454 = vmatprep.subr.bf16.mxu0 0
    %1455 = vmatpush1.bf16.msra.mxu0 %v536
    %1456 = vmatprep.subr.bf16.mxu0 0
    %1457 = vmatpush1.bf16.msra.mxu0 %v537
    %1458 = vmatprep.subr.bf16.mxu0 0
    %1459 = vmatpush1.bf16.msra.mxu0 %v538
    %1460 = vmatprep.subr.bf16.mxu0 0
    %1461 = vmatpush1.bf16.msra.mxu0 %v539
    %1462 = vmatprep.subr.bf16.mxu0 0
    %1463 = vmatpush1.bf16.msra.mxu0 %v540
    %1464 = vmatprep.subr.bf16.mxu0 0
    %1465 = vmatpush1.bf16.msra.mxu0 %v541
    %1466 = vmatprep.mubr.bf16.mxu0 %v1341
    %1467 = vmatmul.mubr.bf16.gmra.mrb[0].mxu0 %v1340
    %v1468 = vpop.f32.mrb[0].mxu0
    %v1469 = vadd.f32 %v1429, %v1468
    %v1470 = vpop.f32.mrb[0].mxu0
    %v1471 = vpop.f32.mrb[0].mxu0
    %v1472 = vpop.f32.mrb[0].mxu0
    %1473 = vdwg.mxu0
    %1474 = vmatprep.subr.bf16.mxu0 0
    %1475 = vmatpush1.bf16.msra.mxu0 %v542
    %1476 = vmatprep.subr.bf16.mxu0 0
    %1477 = vmatpush1.bf16.msra.mxu0 %v543
    %1478 = vmatprep.subr.bf16.mxu0 0
    %1479 = vmatpush1.bf16.msra.mxu0 %v544
    %1480 = vmatprep.subr.bf16.mxu0 0
    %1481 = vmatpush1.bf16.msra.mxu0 %v545
    %1482 = vmatprep.subr.bf16.mxu0 0
    %1483 = vmatpush1.bf16.msra.mxu0 %v546
    %1484 = vmatprep.subr.bf16.mxu0 0
    %1485 = vmatpush1.bf16.msra.mxu0 %v547
    %1486 = vmatprep.subr.bf16.mxu0 0
    %1487 = vmatpush1.bf16.msra.mxu0 %v548
    %1488 = vmatprep.subr.bf16.mxu0 0
    %1489 = vmatpush1.bf16.msra.mxu0 %v549
    %1490 = vmatprep.subr.bf16.mxu0 0
    %1491 = vmatpush1.bf16.msra.mxu0 %v550
    %1492 = vmatprep.subr.bf16.mxu0 0
    %1493 = vmatpush1.bf16.msra.mxu0 %v551
    %1494 = vmatprep.subr.bf16.mxu0 0
    %1495 = vmatpush1.bf16.msra.mxu0 %v552
    %1496 = vmatprep.subr.bf16.mxu0 0
    %1497 = vmatpush1.bf16.msra.mxu0 %v553
    %1498 = vmatprep.subr.bf16.mxu0 0
    %1499 = vmatpush1.bf16.msra.mxu0 %v554
    %1500 = vmatprep.subr.bf16.mxu0 0
    %1501 = vmatpush1.bf16.msra.mxu0 %v555
    %1502 = vmatprep.subr.bf16.mxu0 0
    %1503 = vmatpush1.bf16.msra.mxu0 %v556
    %1504 = vmatprep.subr.bf16.mxu0 0
    %1505 = vmatpush1.bf16.msra.mxu0 %v557
    %1506 = vmatprep.mubr.bf16.mxu0 %v1343
    %1507 = vmatmul.mubr.bf16.gmra.mrb[0].mxu0 %v1342
    %v1508 = vpop.f32.mrb[0].mxu0
    %v1509 = vadd.f32 %v1469, %v1508
    %v1510 = vpop.f32.mrb[0].mxu0
    %v1511 = vpop.f32.mrb[0].mxu0
    %v1512 = vpop.f32.mrb[0].mxu0
    %1513 = vdwg.mxu0
    %1514 = vmatprep.subr.bf16.mxu0 0
    %1515 = vmatpush1.bf16.msra.mxu0 %v558
    %1516 = vmatprep.subr.bf16.mxu0 0
    %1517 = vmatpush1.bf16.msra.mxu0 %v559
    %1518 = vmatprep.subr.bf16.mxu0 0
    %1519 = vmatpush1.bf16.msra.mxu0 %v560
    %1520 = vmatprep.subr.bf16.mxu0 0
    %1521 = vmatpush1.bf16.msra.mxu0 %v561
    %1522 = vmatprep.subr.bf16.mxu0 0
    %1523 = vmatpush1.bf16.msra.mxu0 %v562
    %1524 = vmatprep.subr.bf16.mxu0 0
    %1525 = vmatpush1.bf16.msra.mxu0 %v563
    %1526 = vmatprep.subr.bf16.mxu0 0
    %1527 = vmatpush1.bf16.msra.mxu0 %v564
    %1528 = vmatprep.subr.bf16.mxu0 0
    %1529 = vmatpush1.bf16.msra.mxu0 %v565
    %1530 = vmatprep.subr.bf16.mxu0 0
    %1531 = vmatpush1.bf16.msra.mxu0 0
    %1532 = vmatprep.subr.bf16.mxu0 0
    %1533 = vmatpush1.bf16.msra.mxu0 0
    %1534 = vmatprep.subr.bf16.mxu0 0
    %1535 = vmatpush1.bf16.msra.mxu0 0
    %1536 = vmatprep.subr.bf16.mxu0 0
    %1537 = vmatpush1.bf16.msra.mxu0 0
    %1538 = vmatprep.subr.bf16.mxu0 0
    %1539 = vmatpush1.bf16.msra.mxu0 0
    %1540 = vmatprep.subr.bf16.mxu0 0
    %1541 = vmatpush1.bf16.msra.mxu0 0
    %1542 = vmatprep.subr.bf16.mxu0 0
    %1543 = vmatpush1.bf16.msra.mxu0 0
    %1544 = vmatprep.subr.bf16.mxu0 0
    %1545 = vmatpush1.bf16.msra.mxu0 0
    %1546 = vmatprep.mubr.bf16.mxu0 0
    %1547 = vmatmul.mubr.bf16.gmra.mrb[0].mxu0 %v1344
    %v1548 = vpop.f32.mrb[0].mxu0
    %v1549 = vadd.f32 %v1509, %v1548
    %v1550 = vpop.f32.mrb[0].mxu0
    %v1551 = vpop.f32.mrb[0].mxu0
    %v1552 = vpop.f32.mrb[0].mxu0
    %1553 = vdwg.mxu0
    %v1554 = vmax.f32 %v1315, %v1549
    %v1555 = vld [vmem:[%s2] sm:$0x1]
    %v1557 = vlaneseq
    %v1558 = vshrl.u32 %v1557, 7
    %v1559 = vsub.s32 0, %v1558
    %v1560 = vrot.slane %v1555, %v1559
    %v1562 = vmul.f32 %v1554, %v1560
    %v1563 = vld [vmem:[%s3] sm:$0x1]
    %v1565 = vlaneseq
    %v1566 = vshrl.u32 %v1565, 7
    %v1567 = vsub.s32 0, %v1566
    %v1568 = vrot.slane %v1563, %v1567
    %v1570 = vadd.f32 %v1562, %v1568
    %v1571 = vmax.f32 %v1570, 0.0
    %vm1572 = vcmask 1043456
    %v1573 = vsel %vm1572, %v1571, 0.0
    %v1574 = vrot.slane %v1573, 4
    %v1575 = vadd.f32 %v1573, %v1574
    %v1576 = vrot.slane %v1575, 2
    %v1577 = vadd.f32 %v1575, %v1576
    %v1578 = vrot.slane %v1577, 1
    %v1579 = vadd.f32 %v1577, %v1578
    %v1581 = vrot.slane %v1571, 4
    %v1583 = vsel %vm1572, %v1581, 0.0
    %v1584 = vrot.slane %v1583, 4
    %v1585 = vadd.f32 %v1583, %v1584
    %v1586 = vrot.slane %v1585, 2
    %v1587 = vadd.f32 %v1585, %v1586
    %v1588 = vrot.slane %v1587, 1
    %v1589 = vadd.f32 %v1587, %v1588
    %vm1590 = vcmask 1040384
    %v1591 = vsel %vm1590, %v1579, %v1589
    %v1592 = vmul.f32 %v1591, 0.25
    %v1593 = vpack.c.bf16 %v1592, %v1592
    %v1594 = vld [vmem:[%s4] sm:$0xf]
    %v1595 = vld [vmem:[%s4 + $0x4] sm:$0xf]
    %v1596 = vld [vmem:[%s4 + $0x8] sm:$0xf]
    %v1597 = vld [vmem:[%s4 + $0xc] sm:$0xf]
    %v1598 = vld [vmem:[%s4 + $0x10] sm:$0xf]
    %v1599 = vld [vmem:[%s4 + $0x14] sm:$0xf]
    %v1600 = vld [vmem:[%s4 + $0x18] sm:$0xf]
    %v1601 = vld [vmem:[%s4 + $0x1c] sm:$0xf]
    %v1602 = vld [vmem:[%s4 + $0x20] sm:$0xf]
    %v1603 = vld [vmem:[%s4 + $0x24] sm:$0xf]
    %v1604 = vld [vmem:[%s4 + $0x28] sm:$0xf]
    %v1605 = vld [vmem:[%s4 + $0x2c] sm:$0xf]
    %v1606 = vld [vmem:[%s4 + $0x30] sm:$0xf]
    %v1607 = vld [vmem:[%s4 + $0x34] sm:$0xf]
    %v1608 = vld [vmem:[%s4 + $0x38] sm:$0xf]
    %v1609 = vld [vmem:[%s4 + $0x3c] sm:$0xf]
    %v1610 = vld [vmem:[%s5] sm:$0x1]
    %v1612 = vlaneseq
    %v1613 = vshrl.u32 %v1612, 7
    %v1614 = vsub.s32 0, %v1613
    %v1615 = vrot.slane %v1610, %v1614
    %v1633 = vunpack.c.l.b16 %v1594
    %v1634 = vunpack.c.l.b16 %v1595
    %v1635 = vunpack.c.l.b16 %v1596
    %v1636 = vunpack.c.l.b16 %v1597
    %v1637 = vunpack.c.l.b16 %v1598
    %v1638 = vunpack.c.l.b16 %v1599
    %v1639 = vunpack.c.l.b16 %v1600
    %v1640 = vunpack.c.l.b16 %v1601
    %v1641 = vunpack.c.l.b16 %v1602
    %v1642 = vunpack.c.l.b16 %v1603
    %v1643 = vunpack.c.l.b16 %v1604
    %v1644 = vunpack.c.l.b16 %v1605
    %v1645 = vunpack.c.l.b16 %v1606
    %v1646 = vunpack.c.l.b16 %v1607
    %v1647 = vunpack.c.l.b16 %v1608
    %v1648 = vunpack.c.l.b16 %v1609
    %v1649 = vpack.c.b16 %v1634, %v1633
    %v1650 = vpack.c.b16 %v1636, %v1635
    %v1651 = vpack.c.b16 %v1638, %v1637
    %v1652 = vpack.c.b16 %v1640, %v1639
    %v1653 = vpack.c.b16 %v1642, %v1641
    %v1654 = vpack.c.b16 %v1644, %v1643
    %v1655 = vpack.c.b16 %v1646, %v1645
    %v1656 = vpack.c.b16 %v1648, %v1647
    %1665 = vmatprep.subr.bf16.mxu0 0
    %1666 = vmatpush1.bf16.msra.mxu0 %v1649
    %1667 = vmatprep.subr.bf16.mxu0 0
    %1668 = vmatpush1.bf16.msra.mxu0 %v1650
    %1669 = vmatprep.subr.bf16.mxu0 0
    %1670 = vmatpush1.bf16.msra.mxu0 %v1651
    %1671 = vmatprep.subr.bf16.mxu0 0
    %1672 = vmatpush1.bf16.msra.mxu0 %v1652
    %1673 = vmatprep.subr.bf16.mxu0 0
    %1674 = vmatpush1.bf16.msra.mxu0 %v1653
    %1675 = vmatprep.subr.bf16.mxu0 0
    %1676 = vmatpush1.bf16.msra.mxu0 %v1654
    %1677 = vmatprep.subr.bf16.mxu0 0
    %1678 = vmatpush1.bf16.msra.mxu0 %v1655
    %1679 = vmatprep.subr.bf16.mxu0 0
    %1680 = vmatpush1.bf16.msra.mxu0 %v1656
    %1681 = vmatprep.subr.bf16.mxu0 0
    %1682 = vmatpush1.bf16.msra.mxu0 0
    %1683 = vmatprep.subr.bf16.mxu0 0
    %1684 = vmatpush1.bf16.msra.mxu0 0
    %1685 = vmatprep.subr.bf16.mxu0 0
    %1686 = vmatpush1.bf16.msra.mxu0 0
    %1687 = vmatprep.subr.bf16.mxu0 0
    %1688 = vmatpush1.bf16.msra.mxu0 0
    %1689 = vmatprep.subr.bf16.mxu0 0
    %1690 = vmatpush1.bf16.msra.mxu0 0
    %1691 = vmatprep.subr.bf16.mxu0 0
    %1692 = vmatpush1.bf16.msra.mxu0 0
    %1693 = vmatprep.subr.bf16.mxu0 0
    %1694 = vmatpush1.bf16.msra.mxu0 0
    %1695 = vmatprep.subr.bf16.mxu0 0
    %1696 = vmatpush1.bf16.msra.mxu0 0
    %1697 = vmatprep.mubr.bf16.mxu0 0
    %1698 = vmatmul.mubr.bf16.gmra.mrb[0].mxu0 %v1593
    %v1699 = vpop.f32.mrb[0].mxu0
    %v1700 = vadd.f32 %v1615, %v1699
    %v1701 = vpop.f32.mrb[0].mxu0
    %v1702 = vpop.f32.mrb[0].mxu0
    %v1703 = vpop.f32.mrb[0].mxu0
    %1704 = vdwg.mxu0
    %1705 = vst [vmem:[#allocation2] sm:$0x3] %v1700
    // Predicated region
    $region26: #{cnn_forward.7} parent=1 // pred_check
      _
    $region27: #{cnn_forward.7} parent=1 // pred_check_branch
      %1707 = sbr.rel (0) target = $region29
    $region28: #{cnn_forward.7} parent=1 // pred_region
      %s1709 = ssub.s32 32, 32
      %1710 = vsyncadd [#allocation3], %s1709
      %s1712 = sshll.u32 [#allocation2], 4
      %s1713 = int_to_ptr.vmem [resolvable:$true] %s1712
      %1715 = dma.vmem_to_hbm [thread:$0]  %s1713, 32, %s6, [#allocation3]
    $region29: #{cnn_forward.7} parent=1 // pred_fallthru
      _
    // Predicated region
    $region30: #{cnn_forward.7} parent=1 // pred_check
      _
    $region31: #{cnn_forward.7} parent=1 // pred_check_branch
      %1717 = sbr.rel (0) target = $region33
    $region32: #{cnn_forward.7} parent=1 // pred_region
      %1718 = dma.done [#allocation3], 32
    $region33: #{cnn_forward.7} parent=1 // pred_fallthru
      _
    %1719 = vsyncpa [#allocation3], 1

</llo_original>
